<compile_context>
chip_gen: v6e
topology: v6e:2x2x1
jax: 0.10.0
libtpu: 0.0.40
codegen_flags: <defaults>
</compile_context>

<pallas_src>
import functools
import math

import jax
import jax.numpy as jnp
from jax.experimental import pallas as pl
from jax.experimental.pallas import tpu as pltpu


# ---------------------------------------------------------------------------
# In-kernel GELU: exact (erf-based) GELU == torch.nn.GELU(approximate='none').
# erf uses the Abramowitz & Stegun 7.1.26 polynomial (|abs err| <= 1.5e-7).
# After fusion, GELU only runs on the *pooled* result (<= Cout x PH*PW ~ 6K elems),
# so the exact f32 divide below is far off the critical path (keeping accuracy
# instead of switching to the approximate EUP reciprocal).
# ---------------------------------------------------------------------------
def _erf(x):
    a1, a2, a3, a4, a5 = (0.254829592, -0.284496736, 1.421413741,
                          -1.453152027, 1.061405429)
    p = 0.3275911
    s = jnp.where(x < 0.0, -1.0, 1.0)
    ax = jnp.abs(x)
    t = 1.0 / (1.0 + p * ax)
    poly = ((((a5 * t + a4) * t + a3) * t + a2) * t + a1) * t
    return s * (1.0 - poly * jnp.exp(-ax * ax))


def _gelu(x):
    return 0.5 * x * (1.0 + _erf(x * (1.0 / math.sqrt(2.0))))


# ---------------------------------------------------------------------------
# Gather-free patch extraction (im2col) helpers.
# Every conv in this module has stride | kernel, so the sliding window decomposes
# into phases:  x[s*o + d]  with  d = s*q_off + r  ->  x_phase[r][o + q_off].
# The reordering is pad / reshape / unit-stride slice / stack / one transpose --
# no gather HLO and no dense identity convolution.
# TODO(synk): the im2col reordering itself still runs as XLA slices/transpose in the
# wrapper; a fully in-kernel unfold (pl.ANY input + manual DMA) could cut the
# remaining ~8 MB bf16 patch round trip of the peripheral conv1.
# ---------------------------------------------------------------------------
def _phase_cube(x, k, s):
    """x: (B,C,H,W) -> cube (B, C, OH, k, OW, k), cube[b,c,oy,dy,ox,dx] =
    x[b, c, s*oy+dy, s*ox+dx]."""
    B, C, H, W = x.shape
    k, s = int(k), int(s)
    assert k % s == 0
    q = k // s
    OH = (H - k) // s + 1
    OW = (W - k) // s + 1
    Hp = -(-H // s) * s
    Wp = -(-W // s) * s
    xp = jnp.pad(x, ((0, 0), (0, 0), (0, Hp - H), (0, Wp - W)))
    xr = xp.reshape(B, C, Hp // s, s, Wp // s, s)                 # (B,C,I,ry,J,rx)
    cols = jnp.stack([xr[:, :, :, :, j:j + OW, :] for j in range(q)], axis=5)
    # (B, C, I, ry, OW, qx, rx)
    rows = jnp.stack([cols[:, :, i:i + OH] for i in range(q)], axis=3)
    # (B, C, OH, qy, ry, OW, qx, rx)
    cube = rows.reshape(B, C, OH, k, OW, k)                       # dy=(qy,ry), dx=(qx,rx)
    return cube, OH, OW


def _patches_gmax(x, k, s):
    """-> (B, C*k*k, OH*OW): K-major patches (PyTorch (C,dy,dx) K-order)."""
    B, C = x.shape[:2]
    cube, OH, OW = _phase_cube(x, k, s)
    pat = cube.transpose(0, 1, 3, 5, 2, 4)                        # (B, C, dy, dx, OH, OW)
    return pat.reshape(B, C * k * k, OH * OW), OH * OW


def _patches_pooled(x, k, s, pool):
    """-> (B, C*k*k, pool*pool*PH*PW): K-major patches with the M axis ordered
    (pool_row_phase, pool_col_phase, PH, PW) so MaxPool2d(pool) becomes a max over
    pool*pool static lane slices inside the kernel."""
    B, C = x.shape[:2]
    cube, OH, OW = _phase_cube(x, k, s)
    PH, PW = OH // pool, OW // pool
    cube = cube[:, :, :PH * pool, :, :PW * pool, :]
    cube = cube.reshape(B, C, PH, pool, k, PW, pool, k)
    pat = cube.transpose(0, 1, 4, 7, 3, 6, 2, 5)                  # (B,C,dy,dx,r,c,PH,PW)
    return pat.reshape(B, C * k * k, pool * pool * PH * PW), PH, PW


# ---------------------------------------------------------------------------
# Pallas kernel 1: fused conv-matmul + bias + MaxPool2d(pool) + exact GELU.
# Operands are transposed so the big M = OH*OW dimension is lane-dense.
# ---------------------------------------------------------------------------
def _conv_pool_gelu_kernel(x_ref, w_ref, b_ref, o_ref, *, n_pool, mp):
    # x_ref: (1, K, n_pool*mp)  patches^T, M grouped by pooling phase
    # w_ref: (N, K)    b_ref: (N, 1)    o_ref: (1, N, mp)
    y = jnp.dot(w_ref[...], x_ref[0],
                preferred_element_type=jnp.float32) + b_ref[...]   # (N, M) f32
    m = y[:, :mp]
    for j in range(1, n_pool):                                     # static unroll
        m = jnp.maximum(m, y[:, j * mp:(j + 1) * mp])
    o_ref[0] = _gelu(m)


def conv_pool_gelu(x, w, b, *, stride, pool, compute_dtype=jnp.float32):
    """Conv2d(valid, stride) -> MaxPool2d(pool, pool) -> GELU, one pallas_call.
    x: (B, C, H, W) NCHW.  Returns (B, Cout, PH, PW) float32 NCHW."""
    B, C = x.shape[0], x.shape[1]
    Cout, Cin, k, _ = w.shape
    assert C == Cin
    pat, PH, PW = _patches_pooled(x.astype(compute_dtype), k, stride, pool)
    K = Cin * k * k
    MP = PH * PW
    M = pool * pool * MP
    wm = w.reshape(Cout, K).astype(compute_dtype)
    bm = b.reshape(Cout, 1).astype(jnp.float32)
    kern = functools.partial(_conv_pool_gelu_kernel, n_pool=pool * pool, mp=MP)
    out = pl.pallas_call(
        kern,
        out_shape=jax.ShapeDtypeStruct((B, Cout, MP), jnp.float32),
        grid=(B,),
        in_specs=[
            pl.BlockSpec((1, K, M), lambda i: (i, 0, 0)),
            pl.BlockSpec((Cout, K), lambda i: (0, 0)),
            pl.BlockSpec((Cout, 1), lambda i: (0, 0)),
        ],
        out_specs=pl.BlockSpec((1, Cout, MP), lambda i: (i, 0, 0)),
        compiler_params=pltpu.CompilerParams(dimension_semantics=("parallel",)),
    )(pat, wm, bm)
    return out.reshape(B, Cout, PH, PW)


# ---------------------------------------------------------------------------
# Pallas kernel 2: fused conv-matmul + bias + AdaptiveMaxPool2d((1,1)) + GELU.
# ---------------------------------------------------------------------------
def _conv_gmax_gelu_kernel(x_ref, w_ref, b_ref, o_ref):
    # x_ref: (1, K, S)   w_ref: (N, K)   b_ref: (N, 1)   o_ref: (1, N, 1)
    y = jnp.dot(w_ref[...], x_ref[0],
                preferred_element_type=jnp.float32) + b_ref[...]   # (N, S)
    o_ref[0] = _gelu(jnp.max(y, axis=1, keepdims=True))


def conv_gmax_gelu(x, w, b, *, stride, compute_dtype=jnp.float32):
    """Conv2d(valid, stride) -> global max -> GELU -> flatten, one pallas_call."""
    B = x.shape[0]
    Cout, Cin, k, _ = w.shape
    pat, S = _patches_gmax(x.astype(compute_dtype), k, stride)
    K = Cin * k * k
    wm = w.reshape(Cout, K).astype(compute_dtype)
    bm = b.reshape(Cout, 1).astype(jnp.float32)
    out = pl.pallas_call(
        _conv_gmax_gelu_kernel,
        out_shape=jax.ShapeDtypeStruct((B, Cout, 1), jnp.float32),
        grid=(B,),
        in_specs=[
            pl.BlockSpec((1, K, S), lambda i: (i, 0, 0)),
            pl.BlockSpec((Cout, K), lambda i: (0, 0)),
            pl.BlockSpec((Cout, 1), lambda i: (0, 0)),
        ],
        out_specs=pl.BlockSpec((1, Cout, 1), lambda i: (i, 0, 0)),
        compiler_params=pltpu.CompilerParams(dimension_semantics=("parallel",)),
    )(pat, wm, bm)
    return out[:, :, 0]                                            # (B, Cout)


# ---------------------------------------------------------------------------
# Pallas kernel 3: seq-len-1 multi-head self-attention.
# Softmax over a single key position is exactly 1, so the attention output equals
# the value projection and the whole module is exactly out_proj(v_proj(x)).
# Only the V slice of the in-projection is loaded (no q/k/score/exp work).
# ---------------------------------------------------------------------------
def _mha_seq1_kernel(x_ref, wv_ref, bv_ref, wo_ref, bo_ref, o_ref):
    v = jnp.dot(x_ref[...], wv_ref[...],
                preferred_element_type=jnp.float32) + bv_ref[...]
    o_ref[...] = jnp.dot(v, wo_ref[...],
                         preferred_element_type=jnp.float32) + bo_ref[...]


def mha_seq1(x, w_in, b_in, w_out, b_out):
    B, E = x.shape
    wv = w_in[:, 2 * E:]                        # value projection only
    bv = b_in[2 * E:].reshape(1, E)
    bo = b_out.reshape(1, E)
    return pl.pallas_call(
        _mha_seq1_kernel,
        out_shape=jax.ShapeDtypeStruct((B, E), jnp.float32),
        grid=(1,),
        in_specs=[
            pl.BlockSpec((B, E), lambda i: (0, 0)),
            pl.BlockSpec((E, E), lambda i: (0, 0)),
            pl.BlockSpec((1, E), lambda i: (0, 0)),
            pl.BlockSpec((E, E), lambda i: (0, 0)),
            pl.BlockSpec((1, E), lambda i: (0, 0)),
        ],
        out_specs=pl.BlockSpec((B, E), lambda i: (0, 0)),
    )(x, wv, bv, w_out, bo)


# ---------------------------------------------------------------------------
# Module forwards.
# ---------------------------------------------------------------------------
def rgb_to_grayscale(x):
    """torchvision rgb_to_grayscale: (B,3,H,W) -> (B,1,H,W)."""
    r, g, b = x[:, 0:1], x[:, 1:2], x[:, 2:3]
    return 0.2989 * r + 0.587 * g + 0.114 * b


def foveated_forward(p, x_roi):
    x = conv_pool_gelu(x_roi, p["f_w1"], p["f_b1"], stride=1, pool=2)
    x = conv_pool_gelu(x, p["f_w2"], p["f_b2"], stride=1, pool=2)
    return conv_gmax_gelu(x, p["f_w3"], p["f_b3"], stride=1)       # (B, out_channels)


def peripheral_forward(p, gray):
    # bf16 inputs / f32 MXU accumulation for the big 24x24, stride-3 conv: halves the
    # patch traffic and runs at native MXU rate on v5e/v6e/v7x.
    x = conv_pool_gelu(gray, p["p_w1"], p["p_b1"], stride=3, pool=3,
                       compute_dtype=jnp.bfloat16)                 # (B, 16, 15, 26)
    return conv_gmax_gelu(x, p["p_w2"], p["p_b2"], stride=2)       # (B, out_channels)


def visual_perception_forward(p, x_img, x_roi):
    gray = rgb_to_grayscale(x_img)
    fov = foveated_forward(p, x_roi)
    per = peripheral_forward(p, gray)
    combined = jnp.concatenate([fov, per], axis=1)                 # (B, 2*out_channels)
    # combined.view(B, 1, -1) -> MHA(seq_len=1) -> squeeze(1)
    return mha_seq1(combined, p["a_w_in"], p["a_b_in"],
                    p["a_w_out"], p["a_b_out"])                    # (B, 2*out_channels)


# ---------------------------------------------------------------------------
# Deterministic synthetic parameters (shapes follow the PyTorch __init__).
# ---------------------------------------------------------------------------
def init_params(key, out_channels=32):
    c1 = out_channels // 3          # 10
    c2 = 2 * out_channels // 3      # 21
    q1 = out_channels // 2          # 16
    E = 2 * out_channels            # 64
    ks = jax.random.split(key, 13)

    def conv_init(kw_key, kb_key, cout, cin, kh, kw):
        fan = cin * kh * kw
        w = jax.random.normal(kw_key, (cout, cin, kh, kw), jnp.float32) / math.sqrt(fan)
        b = 0.01 * jax.random.normal(kb_key, (cout,), jnp.float32)
        return w, b

    f_w1, f_b1 = conv_init(ks[0], ks[1], c1, 3, 3, 3)
    f_w2, f_b2 = conv_init(ks[2], ks[3], c2, c1, 3, 3)
    f_w3, f_b3 = conv_init(ks[4], ks[5], out_channels, c2, 3, 3)
    p_w1, p_b1 = conv_init(ks[6], ks[7], q1, 1, 24, 24)
    p_w2, p_b2 = conv_init(ks[8], ks[9], out_channels, q1, 12, 12)
    # MultiheadAttention: in_proj stored transposed (E, 3E), out_proj transposed (E, E).
    a_w_in = jax.random.normal(ks[10], (E, 3 * E), jnp.float32) / math.sqrt(E)
    a_b_in = 0.01 * jax.random.normal(ks[11], (3 * E,), jnp.float32)
    kwo, kbo = jax.random.split(ks[12])
    a_w_out = jax.random.normal(kwo, (E, E), jnp.float32) / math.sqrt(E)
    a_b_out = 0.01 * jax.random.normal(kbo, (E,), jnp.float32)
    return dict(f_w1=f_w1, f_b1=f_b1, f_w2=f_w2, f_b2=f_b2, f_w3=f_w3, f_b3=f_b3,
                p_w1=p_w1, p_b1=p_b1, p_w2=p_w2, p_b2=p_b2,
                a_w_in=a_w_in, a_b_in=a_b_in, a_w_out=a_w_out, a_b_out=a_b_out)


if __name__ == "__main__":
    key = jax.random.PRNGKey(0)
    pkey, ikey, rkey = jax.random.split(key, 3)
    params = init_params(pkey, out_channels=32)

    # x_img: environment image (BS, 3, 160, 256); x_roi: foveated region of interest.
    x_img = jax.random.normal(ikey, (2, 3, 160, 256), jnp.float32)
    x_roi = jax.random.normal(rkey, (2, 3, 32, 32), jnp.float32)

    fwd = jax.jit(functools.partial(visual_perception_forward, params))
    out = fwd(x_img, x_roi)
    jax.block_until_ready(out)
    assert out.shape == (2, 64), out.shape
    assert bool(jnp.all(jnp.isfinite(out)))
    print("KERNEL_OK")
</pallas_src>

<mosaic_0001>
module attributes {stable_mosaic.version = 11 : i64} {
  func.func @_conv_pool_gelu_kernel(%arg0: i32, %arg1: memref<1x576x3510xbf16, #tpu.memory_space<vmem>>, %arg2: memref<16x576xbf16, #tpu.memory_space<vmem>>, %arg3: memref<16x1xf32, #tpu.memory_space<vmem>>, %arg4: memref<1x16x390xf32, #tpu.memory_space<vmem>>) attributes {dimension_semantics = [#tpu.dimension_semantics<parallel>], iteration_bounds = array<i64: 2>, scalar_prefetch = 0 : i64, scratch_operands = 0 : i64, tpu.core_type = #tpu.core_type<tc>, window_params = [{transform_indices = @transform_0, window_bounds = array<i64: 1, 576, 3510>}, {pipeline_mode = #tpu.pipeline_mode<synchronous>, transform_indices = @transform_1, window_bounds = array<i64: 16, 576>}, {pipeline_mode = #tpu.pipeline_mode<synchronous>, transform_indices = @transform_2, window_bounds = array<i64: 16, 1>}, {transform_indices = @transform_3, window_bounds = array<i64: 1, 16, 390>}]} {
    %c0 = arith.constant 0 : index
    %c0_0 = arith.constant 0 : index
    %0 = vector.load %arg2[%c0, %c0_0] : memref<16x576xbf16, #tpu.memory_space<vmem>>, vector<16x576xbf16>
    %c0_1 = arith.constant 0 : index
    %c0_2 = arith.constant 0 : index
    %c0_3 = arith.constant 0 : index
    %1 = vector.load %arg1[%c0_1, %c0_2, %c0_3] : memref<1x576x3510xbf16, #tpu.memory_space<vmem>>, vector<1x576x3510xbf16>
    %2 = vector.shape_cast %1 : vector<1x576x3510xbf16> to vector<576x3510xbf16>
    %cst = arith.constant dense<0.000000e+00> : vector<16x3510xf32>
    %3 = tpu.matmul %0, %2, %cst {dimension_numbers = #tpu.dot_dimension_numbers<[1], [0], [0], [1], [0, 0, 1, 1], [], []>} : vector<16x576xbf16>, vector<576x3510xbf16>, vector<16x3510xf32> -> vector<16x3510xf32>
    %c0_4 = arith.constant 0 : index
    %c0_5 = arith.constant 0 : index
    %4 = vector.load %arg3[%c0_4, %c0_5] : memref<16x1xf32, #tpu.memory_space<vmem>>, vector<16x1xf32>
    %5 = vector.broadcast %4 : vector<16x1xf32> to vector<16x3510xf32>
    %6 = arith.addf %3, %5 : vector<16x3510xf32>
    %7 = vector.extract_strided_slice %6 {offsets = [0, 0], sizes = [16, 390], strides = [1, 1]} : vector<16x3510xf32> to vector<16x390xf32>
    %8 = vector.extract_strided_slice %6 {offsets = [0, 390], sizes = [16, 390], strides = [1, 1]} : vector<16x3510xf32> to vector<16x390xf32>
    %9 = arith.maximumf %7, %8 : vector<16x390xf32>
    %10 = vector.extract_strided_slice %6 {offsets = [0, 780], sizes = [16, 390], strides = [1, 1]} : vector<16x3510xf32> to vector<16x390xf32>
    %11 = arith.maximumf %9, %10 : vector<16x390xf32>
    %12 = vector.extract_strided_slice %6 {offsets = [0, 1170], sizes = [16, 390], strides = [1, 1]} : vector<16x3510xf32> to vector<16x390xf32>
    %13 = arith.maximumf %11, %12 : vector<16x390xf32>
    %14 = vector.extract_strided_slice %6 {offsets = [0, 1560], sizes = [16, 390], strides = [1, 1]} : vector<16x3510xf32> to vector<16x390xf32>
    %15 = arith.maximumf %13, %14 : vector<16x390xf32>
    %16 = vector.extract_strided_slice %6 {offsets = [0, 1950], sizes = [16, 390], strides = [1, 1]} : vector<16x3510xf32> to vector<16x390xf32>
    %17 = arith.maximumf %15, %16 : vector<16x390xf32>
    %18 = vector.extract_strided_slice %6 {offsets = [0, 2340], sizes = [16, 390], strides = [1, 1]} : vector<16x3510xf32> to vector<16x390xf32>
    %19 = arith.maximumf %17, %18 : vector<16x390xf32>
    %20 = vector.extract_strided_slice %6 {offsets = [0, 2730], sizes = [16, 390], strides = [1, 1]} : vector<16x3510xf32> to vector<16x390xf32>
    %21 = arith.maximumf %19, %20 : vector<16x390xf32>
    %22 = vector.extract_strided_slice %6 {offsets = [0, 3120], sizes = [16, 390], strides = [1, 1]} : vector<16x3510xf32> to vector<16x390xf32>
    %23 = arith.maximumf %21, %22 : vector<16x390xf32>
    %cst_6 = arith.constant 5.000000e-01 : f32
    %24 = vector.broadcast %cst_6 : f32 to vector<16x390xf32>
    %25 = arith.mulf %24, %23 : vector<16x390xf32>
    %cst_7 = arith.constant 0.707106769 : f32
    %26 = vector.broadcast %cst_7 : f32 to vector<16x390xf32>
    %27 = arith.mulf %23, %26 : vector<16x390xf32>
    %cst_8 = arith.constant 0.000000e+00 : f32
    %28 = vector.broadcast %cst_8 : f32 to vector<16x390xf32>
    %29 = arith.cmpf olt, %27, %28 : vector<16x390xf32>
    %cst_9 = arith.constant -1.000000e+00 : f32
    %cst_10 = arith.constant 1.000000e+00 : f32
    %30 = vector.broadcast %cst_9 : f32 to vector<16x390xf32>
    %31 = vector.broadcast %cst_10 : f32 to vector<16x390xf32>
    %32 = arith.select %29, %30, %31 : vector<16x390xi1>, vector<16x390xf32>
    %33 = math.absf %27 : vector<16x390xf32>
    %cst_11 = arith.constant 0.327591091 : f32
    %34 = vector.broadcast %cst_11 : f32 to vector<16x390xf32>
    %35 = arith.mulf %34, %33 : vector<16x390xf32>
    %cst_12 = arith.constant 1.000000e+00 : f32
    %36 = vector.broadcast %cst_12 : f32 to vector<16x390xf32>
    %37 = arith.addf %36, %35 : vector<16x390xf32>
    %cst_13 = arith.constant 1.000000e+00 : f32
    %38 = vector.broadcast %cst_13 : f32 to vector<16x390xf32>
    %39 = arith.divf %38, %37 : vector<16x390xf32>
    %cst_14 = arith.constant 1.06140542 : f32
    %40 = vector.broadcast %cst_14 : f32 to vector<16x390xf32>
    %41 = arith.mulf %40, %39 : vector<16x390xf32>
    %cst_15 = arith.constant -1.45315206 : f32
    %42 = vector.broadcast %cst_15 : f32 to vector<16x390xf32>
    %43 = arith.addf %41, %42 : vector<16x390xf32>
    %44 = arith.mulf %43, %39 : vector<16x390xf32>
    %cst_16 = arith.constant 1.42141378 : f32
    %45 = vector.broadcast %cst_16 : f32 to vector<16x390xf32>
    %46 = arith.addf %44, %45 : vector<16x390xf32>
    %47 = arith.mulf %46, %39 : vector<16x390xf32>
    %cst_17 = arith.constant -0.284496725 : f32
    %48 = vector.broadcast %cst_17 : f32 to vector<16x390xf32>
    %49 = arith.addf %47, %48 : vector<16x390xf32>
    %50 = arith.mulf %49, %39 : vector<16x390xf32>
    %cst_18 = arith.constant 0.254829586 : f32
    %51 = vector.broadcast %cst_18 : f32 to vector<16x390xf32>
    %52 = arith.addf %50, %51 : vector<16x390xf32>
    %53 = arith.mulf %52, %39 : vector<16x390xf32>
    %cst_19 = arith.constant 0.000000e+00 : f32
    %54 = vector.broadcast %cst_19 : f32 to vector<16x390xf32>
    %55 = arith.subf %54, %33 : vector<16x390xf32>
    %56 = arith.mulf %55, %33 : vector<16x390xf32>
    %57 = math.exp %56 : vector<16x390xf32>
    %58 = arith.mulf %53, %57 : vector<16x390xf32>
    %cst_20 = arith.constant 1.000000e+00 : f32
    %59 = vector.broadcast %cst_20 : f32 to vector<16x390xf32>
    %60 = arith.subf %59, %58 : vector<16x390xf32>
    %61 = arith.mulf %32, %60 : vector<16x390xf32>
    %cst_21 = arith.constant 1.000000e+00 : f32
    %62 = vector.broadcast %cst_21 : f32 to vector<16x390xf32>
    %63 = arith.addf %62, %61 : vector<16x390xf32>
    %64 = arith.mulf %25, %63 : vector<16x390xf32>
    %c0_22 = arith.constant 0 : index
    %c0_23 = arith.constant 0 : index
    %c0_24 = arith.constant 0 : index
    %65 = vector.load %arg4[%c0_22, %c0_23, %c0_24] : memref<1x16x390xf32, #tpu.memory_space<vmem>>, vector<1x16x390xf32>
    %66 = vector.shape_cast %65 : vector<1x16x390xf32> to vector<16x390xf32>
    %67 = vector.shape_cast %64 : vector<16x390xf32> to vector<1x16x390xf32>
    tpu.vector_store %arg4[%c0_22, %c0_23, %c0_24], %67 {strides = array<i32>} : memref<1x16x390xf32, #tpu.memory_space<vmem>>, vector<1x16x390xf32>,
    return
  }
  func.func @transform_0(%arg0: i32) -> (i32, i32, i32) {
    %c0_i32 = arith.constant 0 : i32
    %c0_i32_0 = arith.constant 0 : i32
    %c0_i32_1 = arith.constant 0 : i32
    return %arg0, %c0_i32, %c0_i32_0 : i32, i32, i32
  }
  func.func @transform_1(%arg0: i32) -> (i32, i32) {
    %c0_i32 = arith.constant 0 : i32
    %c0_i32_0 = arith.constant 0 : i32
    %c0_i32_1 = arith.constant 0 : i32
    return %c0_i32, %c0_i32_0 : i32, i32
  }
  func.func @transform_2(%arg0: i32) -> (i32, i32) {
    %c0_i32 = arith.constant 0 : i32
    %c0_i32_0 = arith.constant 0 : i32
    %c0_i32_1 = arith.constant 0 : i32
    return %c0_i32, %c0_i32_0 : i32, i32
  }
  func.func @transform_3(%arg0: i32) -> (i32, i32, i32) {
    %c0_i32 = arith.constant 0 : i32
    %c0_i32_0 = arith.constant 0 : i32
    %c0_i32_1 = arith.constant 0 : i32
    return %arg0, %c0_i32, %c0_i32_0 : i32, i32, i32
  }
}

module attributes {stable_mosaic.version = 11 : i64} {
  func.func @_conv_gmax_gelu_kernel(%arg0: i32, %arg1: memref<1x2304x16xf32, #tpu.memory_space<vmem>>, %arg2: memref<32x2304xf32, #tpu.memory_space<vmem>>, %arg3: memref<32x1xf32, #tpu.memory_space<vmem>>, %arg4: memref<1x32x1xf32, #tpu.memory_space<vmem>>) attributes {dimension_semantics = [#tpu.dimension_semantics<parallel>], iteration_bounds = array<i64: 2>, scalar_prefetch = 0 : i64, scratch_operands = 0 : i64, tpu.core_type = #tpu.core_type<tc>, window_params = [{transform_indices = @transform_0, window_bounds = array<i64: 1, 2304, 16>}, {pipeline_mode = #tpu.pipeline_mode<synchronous>, transform_indices = @transform_1, window_bounds = array<i64: 32, 2304>}, {pipeline_mode = #tpu.pipeline_mode<synchronous>, transform_indices = @transform_2, window_bounds = array<i64: 32, 1>}, {transform_indices = @transform_3, window_bounds = array<i64: 1, 32, 1>}]} {
    %c0 = arith.constant 0 : index
    %c0_0 = arith.constant 0 : index
    %0 = vector.load %arg2[%c0, %c0_0] : memref<32x2304xf32, #tpu.memory_space<vmem>>, vector<32x2304xf32>
    %c0_1 = arith.constant 0 : index
    %c0_2 = arith.constant 0 : index
    %c0_3 = arith.constant 0 : index
    %1 = vector.load %arg1[%c0_1, %c0_2, %c0_3] : memref<1x2304x16xf32, #tpu.memory_space<vmem>>, vector<1x2304x16xf32>
    %2 = vector.shape_cast %1 : vector<1x2304x16xf32> to vector<2304x16xf32>
    %cst = arith.constant dense<0.000000e+00> : vector<32x16xf32>
    %3 = tpu.matmul %0, %2, %cst {dimension_numbers = #tpu.dot_dimension_numbers<[1], [0], [0], [1], [0, 0, 1, 1], [], []>} : vector<32x2304xf32>, vector<2304x16xf32>, vector<32x16xf32> -> vector<32x16xf32>
    %c0_4 = arith.constant 0 : index
    %c0_5 = arith.constant 0 : index
    %4 = vector.load %arg3[%c0_4, %c0_5] : memref<32x1xf32, #tpu.memory_space<vmem>>, vector<32x1xf32>
    %5 = vector.broadcast %4 : vector<32x1xf32> to vector<32x16xf32>
    %6 = arith.addf %3, %5 : vector<32x16xf32>
    %cst_6 = arith.constant dense<0xFF800000> : vector<32xf32>
    %7 = vector.multi_reduction <maximumf>, %6, %cst_6 [1] : vector<32x16xf32> to vector<32xf32>
    %8 = vector.shape_cast %7 : vector<32xf32> to vector<32x1xf32>
    %cst_7 = arith.constant 5.000000e-01 : f32
    %9 = vector.broadcast %cst_7 : f32 to vector<32x1xf32>
    %10 = arith.mulf %9, %8 : vector<32x1xf32>
    %cst_8 = arith.constant 0.707106769 : f32
    %11 = vector.broadcast %cst_8 : f32 to vector<32x1xf32>
    %12 = arith.mulf %8, %11 : vector<32x1xf32>
    %cst_9 = arith.constant 0.000000e+00 : f32
    %13 = vector.broadcast %cst_9 : f32 to vector<32x1xf32>
    %14 = arith.cmpf olt, %12, %13 : vector<32x1xf32>
    %cst_10 = arith.constant -1.000000e+00 : f32
    %cst_11 = arith.constant 1.000000e+00 : f32
    %15 = vector.broadcast %cst_10 : f32 to vector<32x1xf32>
    %16 = vector.broadcast %cst_11 : f32 to vector<32x1xf32>
    %17 = arith.select %14, %15, %16 : vector<32x1xi1>, vector<32x1xf32>
    %18 = math.absf %12 : vector<32x1xf32>
    %cst_12 = arith.constant 0.327591091 : f32
    %19 = vector.broadcast %cst_12 : f32 to vector<32x1xf32>
    %20 = arith.mulf %19, %18 : vector<32x1xf32>
    %cst_13 = arith.constant 1.000000e+00 : f32
    %21 = vector.broadcast %cst_13 : f32 to vector<32x1xf32>
    %22 = arith.addf %21, %20 : vector<32x1xf32>
    %cst_14 = arith.constant 1.000000e+00 : f32
    %23 = vector.broadcast %cst_14 : f32 to vector<32x1xf32>
    %24 = arith.divf %23, %22 : vector<32x1xf32>
    %cst_15 = arith.constant 1.06140542 : f32
    %25 = vector.broadcast %cst_15 : f32 to vector<32x1xf32>
    %26 = arith.mulf %25, %24 : vector<32x1xf32>
    %cst_16 = arith.constant -1.45315206 : f32
    %27 = vector.broadcast %cst_16 : f32 to vector<32x1xf32>
    %28 = arith.addf %26, %27 : vector<32x1xf32>
    %29 = arith.mulf %28, %24 : vector<32x1xf32>
    %cst_17 = arith.constant 1.42141378 : f32
    %30 = vector.broadcast %cst_17 : f32 to vector<32x1xf32>
    %31 = arith.addf %29, %30 : vector<32x1xf32>
    %32 = arith.mulf %31, %24 : vector<32x1xf32>
    %cst_18 = arith.constant -0.284496725 : f32
    %33 = vector.broadcast %cst_18 : f32 to vector<32x1xf32>
    %34 = arith.addf %32, %33 : vector<32x1xf32>
    %35 = arith.mulf %34, %24 : vector<32x1xf32>
    %cst_19 = arith.constant 0.254829586 : f32
    %36 = vector.broadcast %cst_19 : f32 to vector<32x1xf32>
    %37 = arith.addf %35, %36 : vector<32x1xf32>
    %38 = arith.mulf %37, %24 : vector<32x1xf32>
    %cst_20 = arith.constant 0.000000e+00 : f32
    %39 = vector.broadcast %cst_20 : f32 to vector<32x1xf32>
    %40 = arith.subf %39, %18 : vector<32x1xf32>
    %41 = arith.mulf %40, %18 : vector<32x1xf32>
    %42 = math.exp %41 : vector<32x1xf32>
    %43 = arith.mulf %38, %42 : vector<32x1xf32>
    %cst_21 = arith.constant 1.000000e+00 : f32
    %44 = vector.broadcast %cst_21 : f32 to vector<32x1xf32>
    %45 = arith.subf %44, %43 : vector<32x1xf32>
    %46 = arith.mulf %17, %45 : vector<32x1xf32>
    %cst_22 = arith.constant 1.000000e+00 : f32
    %47 = vector.broadcast %cst_22 : f32 to vector<32x1xf32>
    %48 = arith.addf %47, %46 : vector<32x1xf32>
    %49 = arith.mulf %10, %48 : vector<32x1xf32>
    %c0_23 = arith.constant 0 : index
    %c0_24 = arith.constant 0 : index
    %c0_25 = arith.constant 0 : index
    %50 = vector.load %arg4[%c0_23, %c0_24, %c0_25] : memref<1x32x1xf32, #tpu.memory_space<vmem>>, vector<1x32x1xf32>
    %51 = vector.shape_cast %50 : vector<1x32x1xf32> to vector<32x1xf32>
    %52 = vector.shape_cast %49 : vector<32x1xf32> to vector<1x32x1xf32>
    tpu.vector_store %arg4[%c0_23, %c0_24, %c0_25], %52 {strides = array<i32>} : memref<1x32x1xf32, #tpu.memory_space<vmem>>, vector<1x32x1xf32>,
    return
  }
  func.func @transform_0(%arg0: i32) -> (i32, i32, i32) {
    %c0_i32 = arith.constant 0 : i32
    %c0_i32_0 = arith.constant 0 : i32
    %c0_i32_1 = arith.constant 0 : i32
    return %arg0, %c0_i32, %c0_i32_0 : i32, i32, i32
  }
  func.func @transform_1(%arg0: i32) -> (i32, i32) {
    %c0_i32 = arith.constant 0 : i32
    %c0_i32_0 = arith.constant 0 : i32
    %c0_i32_1 = arith.constant 0 : i32
    return %c0_i32, %c0_i32_0 : i32, i32
  }
  func.func @transform_2(%arg0: i32) -> (i32, i32) {
    %c0_i32 = arith.constant 0 : i32
    %c0_i32_0 = arith.constant 0 : i32
    %c0_i32_1 = arith.constant 0 : i32
    return %c0_i32, %c0_i32_0 : i32, i32
  }
  func.func @transform_3(%arg0: i32) -> (i32, i32, i32) {
    %c0_i32 = arith.constant 0 : i32
    %c0_i32_0 = arith.constant 0 : i32
    %c0_i32_1 = arith.constant 0 : i32
    return %arg0, %c0_i32, %c0_i32_0 : i32, i32, i32
  }
}

module attributes {stable_mosaic.version = 11 : i64} {
  func.func @_conv_pool_gelu_kernel(%arg0: i32, %arg1: memref<1x27x900xf32, #tpu.memory_space<vmem>>, %arg2: memref<10x27xf32, #tpu.memory_space<vmem>>, %arg3: memref<10x1xf32, #tpu.memory_space<vmem>>, %arg4: memref<1x10x225xf32, #tpu.memory_space<vmem>>) attributes {dimension_semantics = [#tpu.dimension_semantics<parallel>], iteration_bounds = array<i64: 2>, scalar_prefetch = 0 : i64, scratch_operands = 0 : i64, tpu.core_type = #tpu.core_type<tc>, window_params = [{transform_indices = @transform_0, window_bounds = array<i64: 1, 27, 900>}, {pipeline_mode = #tpu.pipeline_mode<synchronous>, transform_indices = @transform_1, window_bounds = array<i64: 10, 27>}, {pipeline_mode = #tpu.pipeline_mode<synchronous>, transform_indices = @transform_2, window_bounds = array<i64: 10, 1>}, {transform_indices = @transform_3, window_bounds = array<i64: 1, 10, 225>}]} {
    %c0 = arith.constant 0 : index
    %c0_0 = arith.constant 0 : index
    %0 = vector.load %arg2[%c0, %c0_0] : memref<10x27xf32, #tpu.memory_space<vmem>>, vector<10x27xf32>
    %c0_1 = arith.constant 0 : index
    %c0_2 = arith.constant 0 : index
    %c0_3 = arith.constant 0 : index
    %1 = vector.load %arg1[%c0_1, %c0_2, %c0_3] : memref<1x27x900xf32, #tpu.memory_space<vmem>>, vector<1x27x900xf32>
    %2 = vector.shape_cast %1 : vector<1x27x900xf32> to vector<27x900xf32>
    %cst = arith.constant dense<0.000000e+00> : vector<10x900xf32>
    %3 = tpu.matmul %0, %2, %cst {dimension_numbers = #tpu.dot_dimension_numbers<[1], [0], [0], [1], [0, 0, 1, 1], [], []>} : vector<10x27xf32>, vector<27x900xf32>, vector<10x900xf32> -> vector<10x900xf32>
    %c0_4 = arith.constant 0 : index
    %c0_5 = arith.constant 0 : index
    %4 = vector.load %arg3[%c0_4, %c0_5] : memref<10x1xf32, #tpu.memory_space<vmem>>, vector<10x1xf32>
    %5 = vector.broadcast %4 : vector<10x1xf32> to vector<10x900xf32>
    %6 = arith.addf %3, %5 : vector<10x900xf32>
    %7 = vector.extract_strided_slice %6 {offsets = [0, 0], sizes = [10, 225], strides = [1, 1]} : vector<10x900xf32> to vector<10x225xf32>
    %8 = vector.extract_strided_slice %6 {offsets = [0, 225], sizes = [10, 225], strides = [1, 1]} : vector<10x900xf32> to vector<10x225xf32>
    %9 = arith.maximumf %7, %8 : vector<10x225xf32>
    %10 = vector.extract_strided_slice %6 {offsets = [0, 450], sizes = [10, 225], strides = [1, 1]} : vector<10x900xf32> to vector<10x225xf32>
    %11 = arith.maximumf %9, %10 : vector<10x225xf32>
    %12 = vector.extract_strided_slice %6 {offsets = [0, 675], sizes = [10, 225], strides = [1, 1]} : vector<10x900xf32> to vector<10x225xf32>
    %13 = arith.maximumf %11, %12 : vector<10x225xf32>
    %cst_6 = arith.constant 5.000000e-01 : f32
    %14 = vector.broadcast %cst_6 : f32 to vector<10x225xf32>
    %15 = arith.mulf %14, %13 : vector<10x225xf32>
    %cst_7 = arith.constant 0.707106769 : f32
    %16 = vector.broadcast %cst_7 : f32 to vector<10x225xf32>
    %17 = arith.mulf %13, %16 : vector<10x225xf32>
    %cst_8 = arith.constant 0.000000e+00 : f32
    %18 = vector.broadcast %cst_8 : f32 to vector<10x225xf32>
    %19 = arith.cmpf olt, %17, %18 : vector<10x225xf32>
    %cst_9 = arith.constant -1.000000e+00 : f32
    %cst_10 = arith.constant 1.000000e+00 : f32
    %20 = vector.broadcast %cst_9 : f32 to vector<10x225xf32>
    %21 = vector.broadcast %cst_10 : f32 to vector<10x225xf32>
    %22 = arith.select %19, %20, %21 : vector<10x225xi1>, vector<10x225xf32>
    %23 = math.absf %17 : vector<10x225xf32>
    %cst_11 = arith.constant 0.327591091 : f32
    %24 = vector.broadcast %cst_11 : f32 to vector<10x225xf32>
    %25 = arith.mulf %24, %23 : vector<10x225xf32>
    %cst_12 = arith.constant 1.000000e+00 : f32
    %26 = vector.broadcast %cst_12 : f32 to vector<10x225xf32>
    %27 = arith.addf %26, %25 : vector<10x225xf32>
    %cst_13 = arith.constant 1.000000e+00 : f32
    %28 = vector.broadcast %cst_13 : f32 to vector<10x225xf32>
    %29 = arith.divf %28, %27 : vector<10x225xf32>
    %cst_14 = arith.constant 1.06140542 : f32
    %30 = vector.broadcast %cst_14 : f32 to vector<10x225xf32>
    %31 = arith.mulf %30, %29 : vector<10x225xf32>
    %cst_15 = arith.constant -1.45315206 : f32
    %32 = vector.broadcast %cst_15 : f32 to vector<10x225xf32>
    %33 = arith.addf %31, %32 : vector<10x225xf32>
    %34 = arith.mulf %33, %29 : vector<10x225xf32>
    %cst_16 = arith.constant 1.42141378 : f32
    %35 = vector.broadcast %cst_16 : f32 to vector<10x225xf32>
    %36 = arith.addf %34, %35 : vector<10x225xf32>
    %37 = arith.mulf %36, %29 : vector<10x225xf32>
    %cst_17 = arith.constant -0.284496725 : f32
    %38 = vector.broadcast %cst_17 : f32 to vector<10x225xf32>
    %39 = arith.addf %37, %38 : vector<10x225xf32>
    %40 = arith.mulf %39, %29 : vector<10x225xf32>
    %cst_18 = arith.constant 0.254829586 : f32
    %41 = vector.broadcast %cst_18 : f32 to vector<10x225xf32>
    %42 = arith.addf %40, %41 : vector<10x225xf32>
    %43 = arith.mulf %42, %29 : vector<10x225xf32>
    %cst_19 = arith.constant 0.000000e+00 : f32
    %44 = vector.broadcast %cst_19 : f32 to vector<10x225xf32>
    %45 = arith.subf %44, %23 : vector<10x225xf32>
    %46 = arith.mulf %45, %23 : vector<10x225xf32>
    %47 = math.exp %46 : vector<10x225xf32>
    %48 = arith.mulf %43, %47 : vector<10x225xf32>
    %cst_20 = arith.constant 1.000000e+00 : f32
    %49 = vector.broadcast %cst_20 : f32 to vector<10x225xf32>
    %50 = arith.subf %49, %48 : vector<10x225xf32>
    %51 = arith.mulf %22, %50 : vector<10x225xf32>
    %cst_21 = arith.constant 1.000000e+00 : f32
    %52 = vector.broadcast %cst_21 : f32 to vector<10x225xf32>
    %53 = arith.addf %52, %51 : vector<10x225xf32>
    %54 = arith.mulf %15, %53 : vector<10x225xf32>
    %c0_22 = arith.constant 0 : index
    %c0_23 = arith.constant 0 : index
    %c0_24 = arith.constant 0 : index
    %55 = vector.load %arg4[%c0_22, %c0_23, %c0_24] : memref<1x10x225xf32, #tpu.memory_space<vmem>>, vector<1x10x225xf32>
    %56 = vector.shape_cast %55 : vector<1x10x225xf32> to vector<10x225xf32>
    %57 = vector.shape_cast %54 : vector<10x225xf32> to vector<1x10x225xf32>
    tpu.vector_store %arg4[%c0_22, %c0_23, %c0_24], %57 {strides = array<i32>} : memref<1x10x225xf32, #tpu.memory_space<vmem>>, vector<1x10x225xf32>,
    return
  }
  func.func @transform_0(%arg0: i32) -> (i32, i32, i32) {
    %c0_i32 = arith.constant 0 : i32
    %c0_i32_0 = arith.constant 0 : i32
    %c0_i32_1 = arith.constant 0 : i32
    return %arg0, %c0_i32, %c0_i32_0 : i32, i32, i32
  }
  func.func @transform_1(%arg0: i32) -> (i32, i32) {
    %c0_i32 = arith.constant 0 : i32
    %c0_i32_0 = arith.constant 0 : i32
    %c0_i32_1 = arith.constant 0 : i32
    return %c0_i32, %c0_i32_0 : i32, i32
  }
  func.func @transform_2(%arg0: i32) -> (i32, i32) {
    %c0_i32 = arith.constant 0 : i32
    %c0_i32_0 = arith.constant 0 : i32
    %c0_i32_1 = arith.constant 0 : i32
    return %c0_i32, %c0_i32_0 : i32, i32
  }
  func.func @transform_3(%arg0: i32) -> (i32, i32, i32) {
    %c0_i32 = arith.constant 0 : i32
    %c0_i32_0 = arith.constant 0 : i32
    %c0_i32_1 = arith.constant 0 : i32
    return %arg0, %c0_i32, %c0_i32_0 : i32, i32, i32
  }
}

module attributes {stable_mosaic.version = 11 : i64} {
  func.func @_conv_pool_gelu_kernel(%arg0: i32, %arg1: memref<1x90x144xf32, #tpu.memory_space<vmem>>, %arg2: memref<21x90xf32, #tpu.memory_space<vmem>>, %arg3: memref<21x1xf32, #tpu.memory_space<vmem>>, %arg4: memref<1x21x36xf32, #tpu.memory_space<vmem>>) attributes {dimension_semantics = [#tpu.dimension_semantics<parallel>], iteration_bounds = array<i64: 2>, scalar_prefetch = 0 : i64, scratch_operands = 0 : i64, tpu.core_type = #tpu.core_type<tc>, window_params = [{transform_indices = @transform_0, window_bounds = array<i64: 1, 90, 144>}, {pipeline_mode = #tpu.pipeline_mode<synchronous>, transform_indices = @transform_1, window_bounds = array<i64: 21, 90>}, {pipeline_mode = #tpu.pipeline_mode<synchronous>, transform_indices = @transform_2, window_bounds = array<i64: 21, 1>}, {transform_indices = @transform_3, window_bounds = array<i64: 1, 21, 36>}]} {
    %c0 = arith.constant 0 : index
    %c0_0 = arith.constant 0 : index
    %0 = vector.load %arg2[%c0, %c0_0] : memref<21x90xf32, #tpu.memory_space<vmem>>, vector<21x90xf32>
    %c0_1 = arith.constant 0 : index
    %c0_2 = arith.constant 0 : index
    %c0_3 = arith.constant 0 : index
    %1 = vector.load %arg1[%c0_1, %c0_2, %c0_3] : memref<1x90x144xf32, #tpu.memory_space<vmem>>, vector<1x90x144xf32>
    %2 = vector.shape_cast %1 : vector<1x90x144xf32> to vector<90x144xf32>
    %cst = arith.constant dense<0.000000e+00> : vector<21x144xf32>
    %3 = tpu.matmul %0, %2, %cst {dimension_numbers = #tpu.dot_dimension_numbers<[1], [0], [0], [1], [0, 0, 1, 1], [], []>} : vector<21x90xf32>, vector<90x144xf32>, vector<21x144xf32> -> vector<21x144xf32>
    %c0_4 = arith.constant 0 : index
    %c0_5 = arith.constant 0 : index
    %4 = vector.load %arg3[%c0_4, %c0_5] : memref<21x1xf32, #tpu.memory_space<vmem>>, vector<21x1xf32>
    %5 = vector.broadcast %4 : vector<21x1xf32> to vector<21x144xf32>
    %6 = arith.addf %3, %5 : vector<21x144xf32>
    %7 = vector.extract_strided_slice %6 {offsets = [0, 0], sizes = [21, 36], strides = [1, 1]} : vector<21x144xf32> to vector<21x36xf32>
    %8 = vector.extract_strided_slice %6 {offsets = [0, 36], sizes = [21, 36], strides = [1, 1]} : vector<21x144xf32> to vector<21x36xf32>
    %9 = arith.maximumf %7, %8 : vector<21x36xf32>
    %10 = vector.extract_strided_slice %6 {offsets = [0, 72], sizes = [21, 36], strides = [1, 1]} : vector<21x144xf32> to vector<21x36xf32>
    %11 = arith.maximumf %9, %10 : vector<21x36xf32>
    %12 = vector.extract_strided_slice %6 {offsets = [0, 108], sizes = [21, 36], strides = [1, 1]} : vector<21x144xf32> to vector<21x36xf32>
    %13 = arith.maximumf %11, %12 : vector<21x36xf32>
    %cst_6 = arith.constant 5.000000e-01 : f32
    %14 = vector.broadcast %cst_6 : f32 to vector<21x36xf32>
    %15 = arith.mulf %14, %13 : vector<21x36xf32>
    %cst_7 = arith.constant 0.707106769 : f32
    %16 = vector.broadcast %cst_7 : f32 to vector<21x36xf32>
    %17 = arith.mulf %13, %16 : vector<21x36xf32>
    %cst_8 = arith.constant 0.000000e+00 : f32
    %18 = vector.broadcast %cst_8 : f32 to vector<21x36xf32>
    %19 = arith.cmpf olt, %17, %18 : vector<21x36xf32>
    %cst_9 = arith.constant -1.000000e+00 : f32
    %cst_10 = arith.constant 1.000000e+00 : f32
    %20 = vector.broadcast %cst_9 : f32 to vector<21x36xf32>
    %21 = vector.broadcast %cst_10 : f32 to vector<21x36xf32>
    %22 = arith.select %19, %20, %21 : vector<21x36xi1>, vector<21x36xf32>
    %23 = math.absf %17 : vector<21x36xf32>
    %cst_11 = arith.constant 0.327591091 : f32
    %24 = vector.broadcast %cst_11 : f32 to vector<21x36xf32>
    %25 = arith.mulf %24, %23 : vector<21x36xf32>
    %cst_12 = arith.constant 1.000000e+00 : f32
    %26 = vector.broadcast %cst_12 : f32 to vector<21x36xf32>
    %27 = arith.addf %26, %25 : vector<21x36xf32>
    %cst_13 = arith.constant 1.000000e+00 : f32
    %28 = vector.broadcast %cst_13 : f32 to vector<21x36xf32>
    %29 = arith.divf %28, %27 : vector<21x36xf32>
    %cst_14 = arith.constant 1.06140542 : f32
    %30 = vector.broadcast %cst_14 : f32 to vector<21x36xf32>
    %31 = arith.mulf %30, %29 : vector<21x36xf32>
    %cst_15 = arith.constant -1.45315206 : f32
    %32 = vector.broadcast %cst_15 : f32 to vector<21x36xf32>
    %33 = arith.addf %31, %32 : vector<21x36xf32>
    %34 = arith.mulf %33, %29 : vector<21x36xf32>
    %cst_16 = arith.constant 1.42141378 : f32
    %35 = vector.broadcast %cst_16 : f32 to vector<21x36xf32>
    %36 = arith.addf %34, %35 : vector<21x36xf32>
    %37 = arith.mulf %36, %29 : vector<21x36xf32>
    %cst_17 = arith.constant -0.284496725 : f32
    %38 = vector.broadcast %cst_17 : f32 to vector<21x36xf32>
    %39 = arith.addf %37, %38 : vector<21x36xf32>
    %40 = arith.mulf %39, %29 : vector<21x36xf32>
    %cst_18 = arith.constant 0.254829586 : f32
    %41 = vector.broadcast %cst_18 : f32 to vector<21x36xf32>
    %42 = arith.addf %40, %41 : vector<21x36xf32>
    %43 = arith.mulf %42, %29 : vector<21x36xf32>
    %cst_19 = arith.constant 0.000000e+00 : f32
    %44 = vector.broadcast %cst_19 : f32 to vector<21x36xf32>
    %45 = arith.subf %44, %23 : vector<21x36xf32>
    %46 = arith.mulf %45, %23 : vector<21x36xf32>
    %47 = math.exp %46 : vector<21x36xf32>
    %48 = arith.mulf %43, %47 : vector<21x36xf32>
    %cst_20 = arith.constant 1.000000e+00 : f32
    %49 = vector.broadcast %cst_20 : f32 to vector<21x36xf32>
    %50 = arith.subf %49, %48 : vector<21x36xf32>
    %51 = arith.mulf %22, %50 : vector<21x36xf32>
    %cst_21 = arith.constant 1.000000e+00 : f32
    %52 = vector.broadcast %cst_21 : f32 to vector<21x36xf32>
    %53 = arith.addf %52, %51 : vector<21x36xf32>
    %54 = arith.mulf %15, %53 : vector<21x36xf32>
    %c0_22 = arith.constant 0 : index
    %c0_23 = arith.constant 0 : index
    %c0_24 = arith.constant 0 : index
    %55 = vector.load %arg4[%c0_22, %c0_23, %c0_24] : memref<1x21x36xf32, #tpu.memory_space<vmem>>, vector<1x21x36xf32>
    %56 = vector.shape_cast %55 : vector<1x21x36xf32> to vector<21x36xf32>
    %57 = vector.shape_cast %54 : vector<21x36xf32> to vector<1x21x36xf32>
    tpu.vector_store %arg4[%c0_22, %c0_23, %c0_24], %57 {strides = array<i32>} : memref<1x21x36xf32, #tpu.memory_space<vmem>>, vector<1x21x36xf32>,
    return
  }
  func.func @transform_0(%arg0: i32) -> (i32, i32, i32) {
    %c0_i32 = arith.constant 0 : i32
    %c0_i32_0 = arith.constant 0 : i32
    %c0_i32_1 = arith.constant 0 : i32
    return %arg0, %c0_i32, %c0_i32_0 : i32, i32, i32
  }
  func.func @transform_1(%arg0: i32) -> (i32, i32) {
    %c0_i32 = arith.constant 0 : i32
    %c0_i32_0 = arith.constant 0 : i32
    %c0_i32_1 = arith.constant 0 : i32
    return %c0_i32, %c0_i32_0 : i32, i32
  }
  func.func @transform_2(%arg0: i32) -> (i32, i32) {
    %c0_i32 = arith.constant 0 : i32
    %c0_i32_0 = arith.constant 0 : i32
    %c0_i32_1 = arith.constant 0 : i32
    return %c0_i32, %c0_i32_0 : i32, i32
  }
  func.func @transform_3(%arg0: i32) -> (i32, i32, i32) {
    %c0_i32 = arith.constant 0 : i32
    %c0_i32_0 = arith.constant 0 : i32
    %c0_i32_1 = arith.constant 0 : i32
    return %arg0, %c0_i32, %c0_i32_0 : i32, i32, i32
  }
}

module attributes {stable_mosaic.version = 11 : i64} {
  func.func @_conv_gmax_gelu_kernel(%arg0: i32, %arg1: memref<1x189x16xf32, #tpu.memory_space<vmem>>, %arg2: memref<32x189xf32, #tpu.memory_space<vmem>>, %arg3: memref<32x1xf32, #tpu.memory_space<vmem>>, %arg4: memref<1x32x1xf32, #tpu.memory_space<vmem>>) attributes {dimension_semantics = [#tpu.dimension_semantics<parallel>], iteration_bounds = array<i64: 2>, scalar_prefetch = 0 : i64, scratch_operands = 0 : i64, tpu.core_type = #tpu.core_type<tc>, window_params = [{transform_indices = @transform_0, window_bounds = array<i64: 1, 189, 16>}, {pipeline_mode = #tpu.pipeline_mode<synchronous>, transform_indices = @transform_1, window_bounds = array<i64: 32, 189>}, {pipeline_mode = #tpu.pipeline_mode<synchronous>, transform_indices = @transform_2, window_bounds = array<i64: 32, 1>}, {transform_indices = @transform_3, window_bounds = array<i64: 1, 32, 1>}]} {
    %c0 = arith.constant 0 : index
    %c0_0 = arith.constant 0 : index
    %0 = vector.load %arg2[%c0, %c0_0] : memref<32x189xf32, #tpu.memory_space<vmem>>, vector<32x189xf32>
    %c0_1 = arith.constant 0 : index
    %c0_2 = arith.constant 0 : index
    %c0_3 = arith.constant 0 : index
    %1 = vector.load %arg1[%c0_1, %c0_2, %c0_3] : memref<1x189x16xf32, #tpu.memory_space<vmem>>, vector<1x189x16xf32>
    %2 = vector.shape_cast %1 : vector<1x189x16xf32> to vector<189x16xf32>
    %cst = arith.constant dense<0.000000e+00> : vector<32x16xf32>
    %3 = tpu.matmul %0, %2, %cst {dimension_numbers = #tpu.dot_dimension_numbers<[1], [0], [0], [1], [0, 0, 1, 1], [], []>} : vector<32x189xf32>, vector<189x16xf32>, vector<32x16xf32> -> vector<32x16xf32>
    %c0_4 = arith.constant 0 : index
    %c0_5 = arith.constant 0 : index
    %4 = vector.load %arg3[%c0_4, %c0_5] : memref<32x1xf32, #tpu.memory_space<vmem>>, vector<32x1xf32>
    %5 = vector.broadcast %4 : vector<32x1xf32> to vector<32x16xf32>
    %6 = arith.addf %3, %5 : vector<32x16xf32>
    %cst_6 = arith.constant dense<0xFF800000> : vector<32xf32>
    %7 = vector.multi_reduction <maximumf>, %6, %cst_6 [1] : vector<32x16xf32> to vector<32xf32>
    %8 = vector.shape_cast %7 : vector<32xf32> to vector<32x1xf32>
    %cst_7 = arith.constant 5.000000e-01 : f32
    %9 = vector.broadcast %cst_7 : f32 to vector<32x1xf32>
    %10 = arith.mulf %9, %8 : vector<32x1xf32>
    %cst_8 = arith.constant 0.707106769 : f32
    %11 = vector.broadcast %cst_8 : f32 to vector<32x1xf32>
    %12 = arith.mulf %8, %11 : vector<32x1xf32>
    %cst_9 = arith.constant 0.000000e+00 : f32
    %13 = vector.broadcast %cst_9 : f32 to vector<32x1xf32>
    %14 = arith.cmpf olt, %12, %13 : vector<32x1xf32>
    %cst_10 = arith.constant -1.000000e+00 : f32
    %cst_11 = arith.constant 1.000000e+00 : f32
    %15 = vector.broadcast %cst_10 : f32 to vector<32x1xf32>
    %16 = vector.broadcast %cst_11 : f32 to vector<32x1xf32>
    %17 = arith.select %14, %15, %16 : vector<32x1xi1>, vector<32x1xf32>
    %18 = math.absf %12 : vector<32x1xf32>
    %cst_12 = arith.constant 0.327591091 : f32
    %19 = vector.broadcast %cst_12 : f32 to vector<32x1xf32>
    %20 = arith.mulf %19, %18 : vector<32x1xf32>
    %cst_13 = arith.constant 1.000000e+00 : f32
    %21 = vector.broadcast %cst_13 : f32 to vector<32x1xf32>
    %22 = arith.addf %21, %20 : vector<32x1xf32>
    %cst_14 = arith.constant 1.000000e+00 : f32
    %23 = vector.broadcast %cst_14 : f32 to vector<32x1xf32>
    %24 = arith.divf %23, %22 : vector<32x1xf32>
    %cst_15 = arith.constant 1.06140542 : f32
    %25 = vector.broadcast %cst_15 : f32 to vector<32x1xf32>
    %26 = arith.mulf %25, %24 : vector<32x1xf32>
    %cst_16 = arith.constant -1.45315206 : f32
    %27 = vector.broadcast %cst_16 : f32 to vector<32x1xf32>
    %28 = arith.addf %26, %27 : vector<32x1xf32>
    %29 = arith.mulf %28, %24 : vector<32x1xf32>
    %cst_17 = arith.constant 1.42141378 : f32
    %30 = vector.broadcast %cst_17 : f32 to vector<32x1xf32>
    %31 = arith.addf %29, %30 : vector<32x1xf32>
    %32 = arith.mulf %31, %24 : vector<32x1xf32>
    %cst_18 = arith.constant -0.284496725 : f32
    %33 = vector.broadcast %cst_18 : f32 to vector<32x1xf32>
    %34 = arith.addf %32, %33 : vector<32x1xf32>
    %35 = arith.mulf %34, %24 : vector<32x1xf32>
    %cst_19 = arith.constant 0.254829586 : f32
    %36 = vector.broadcast %cst_19 : f32 to vector<32x1xf32>
    %37 = arith.addf %35, %36 : vector<32x1xf32>
    %38 = arith.mulf %37, %24 : vector<32x1xf32>
    %cst_20 = arith.constant 0.000000e+00 : f32
    %39 = vector.broadcast %cst_20 : f32 to vector<32x1xf32>
    %40 = arith.subf %39, %18 : vector<32x1xf32>
    %41 = arith.mulf %40, %18 : vector<32x1xf32>
    %42 = math.exp %41 : vector<32x1xf32>
    %43 = arith.mulf %38, %42 : vector<32x1xf32>
    %cst_21 = arith.constant 1.000000e+00 : f32
    %44 = vector.broadcast %cst_21 : f32 to vector<32x1xf32>
    %45 = arith.subf %44, %43 : vector<32x1xf32>
    %46 = arith.mulf %17, %45 : vector<32x1xf32>
    %cst_22 = arith.constant 1.000000e+00 : f32
    %47 = vector.broadcast %cst_22 : f32 to vector<32x1xf32>
    %48 = arith.addf %47, %46 : vector<32x1xf32>
    %49 = arith.mulf %10, %48 : vector<32x1xf32>
    %c0_23 = arith.constant 0 : index
    %c0_24 = arith.constant 0 : index
    %c0_25 = arith.constant 0 : index
    %50 = vector.load %arg4[%c0_23, %c0_24, %c0_25] : memref<1x32x1xf32, #tpu.memory_space<vmem>>, vector<1x32x1xf32>
    %51 = vector.shape_cast %50 : vector<1x32x1xf32> to vector<32x1xf32>
    %52 = vector.shape_cast %49 : vector<32x1xf32> to vector<1x32x1xf32>
    tpu.vector_store %arg4[%c0_23, %c0_24, %c0_25], %52 {strides = array<i32>} : memref<1x32x1xf32, #tpu.memory_space<vmem>>, vector<1x32x1xf32>,
    return
  }
  func.func @transform_0(%arg0: i32) -> (i32, i32, i32) {
    %c0_i32 = arith.constant 0 : i32
    %c0_i32_0 = arith.constant 0 : i32
    %c0_i32_1 = arith.constant 0 : i32
    return %arg0, %c0_i32, %c0_i32_0 : i32, i32, i32
  }
  func.func @transform_1(%arg0: i32) -> (i32, i32) {
    %c0_i32 = arith.constant 0 : i32
    %c0_i32_0 = arith.constant 0 : i32
    %c0_i32_1 = arith.constant 0 : i32
    return %c0_i32, %c0_i32_0 : i32, i32
  }
  func.func @transform_2(%arg0: i32) -> (i32, i32) {
    %c0_i32 = arith.constant 0 : i32
    %c0_i32_0 = arith.constant 0 : i32
    %c0_i32_1 = arith.constant 0 : i32
    return %c0_i32, %c0_i32_0 : i32, i32
  }
  func.func @transform_3(%arg0: i32) -> (i32, i32, i32) {
    %c0_i32 = arith.constant 0 : i32
    %c0_i32_0 = arith.constant 0 : i32
    %c0_i32_1 = arith.constant 0 : i32
    return %arg0, %c0_i32, %c0_i32_0 : i32, i32, i32
  }
}

module attributes {stable_mosaic.version = 11 : i64} {
  func.func @_mha_seq1_kernel(%arg0: i32, %arg1: memref<2x64xf32, #tpu.memory_space<vmem>>, %arg2: memref<64x64xf32, #tpu.memory_space<vmem>>, %arg3: memref<1x64xf32, #tpu.memory_space<vmem>>, %arg4: memref<64x64xf32, #tpu.memory_space<vmem>>, %arg5: memref<1x64xf32, #tpu.memory_space<vmem>>, %arg6: memref<2x64xf32, #tpu.memory_space<vmem>>) attributes {dimension_semantics = [#tpu.dimension_semantics<arbitrary>], iteration_bounds = array<i64: 1>, scalar_prefetch = 0 : i64, scratch_operands = 0 : i64, tpu.core_type = #tpu.core_type<tc>, window_params = [{pipeline_mode = #tpu.pipeline_mode<synchronous>, transform_indices = @transform_0, window_bounds = array<i64: 2, 64>}, {pipeline_mode = #tpu.pipeline_mode<synchronous>, transform_indices = @transform_1, window_bounds = array<i64: 64, 64>}, {pipeline_mode = #tpu.pipeline_mode<synchronous>, transform_indices = @transform_2, window_bounds = array<i64: 1, 64>}, {pipeline_mode = #tpu.pipeline_mode<synchronous>, transform_indices = @transform_3, window_bounds = array<i64: 64, 64>}, {pipeline_mode = #tpu.pipeline_mode<synchronous>, transform_indices = @transform_4, window_bounds = array<i64: 1, 64>}, {pipeline_mode = #tpu.pipeline_mode<synchronous>, transform_indices = @transform_5, window_bounds = array<i64: 2, 64>}]} {
    %c0 = arith.constant 0 : index
    %c0_0 = arith.constant 0 : index
    %0 = vector.load %arg1[%c0, %c0_0] : memref<2x64xf32, #tpu.memory_space<vmem>>, vector<2x64xf32>
    %c0_1 = arith.constant 0 : index
    %c0_2 = arith.constant 0 : index
    %1 = vector.load %arg2[%c0_1, %c0_2] : memref<64x64xf32, #tpu.memory_space<vmem>>, vector<64x64xf32>
    %cst = arith.constant dense<0.000000e+00> : vector<2x64xf32>
    %2 = tpu.matmul %0, %1, %cst {dimension_numbers = #tpu.dot_dimension_numbers<[1], [0], [0], [1], [0, 0, 1, 1], [], []>} : vector<2x64xf32>, vector<64x64xf32>, vector<2x64xf32> -> vector<2x64xf32>
    %c0_3 = arith.constant 0 : index
    %c0_4 = arith.constant 0 : index
    %3 = vector.load %arg3[%c0_3, %c0_4] : memref<1x64xf32, #tpu.memory_space<vmem>>, vector<1x64xf32>
    %4 = vector.broadcast %3 : vector<1x64xf32> to vector<2x64xf32>
    %5 = arith.addf %2, %4 : vector<2x64xf32>
    %c0_5 = arith.constant 0 : index
    %c0_6 = arith.constant 0 : index
    %6 = vector.load %arg4[%c0_5, %c0_6] : memref<64x64xf32, #tpu.memory_space<vmem>>, vector<64x64xf32>
    %cst_7 = arith.constant dense<0.000000e+00> : vector<2x64xf32>
    %7 = tpu.matmul %5, %6, %cst_7 {dimension_numbers = #tpu.dot_dimension_numbers<[1], [0], [0], [1], [0, 0, 1, 1], [], []>} : vector<2x64xf32>, vector<64x64xf32>, vector<2x64xf32> -> vector<2x64xf32>
    %c0_8 = arith.constant 0 : index
    %c0_9 = arith.constant 0 : index
    %8 = vector.load %arg5[%c0_8, %c0_9] : memref<1x64xf32, #tpu.memory_space<vmem>>, vector<1x64xf32>
    %9 = vector.broadcast %8 : vector<1x64xf32> to vector<2x64xf32>
    %10 = arith.addf %7, %9 : vector<2x64xf32>
    %c0_10 = arith.constant 0 : index
    %c0_11 = arith.constant 0 : index
    %11 = vector.load %arg6[%c0_10, %c0_11] : memref<2x64xf32, #tpu.memory_space<vmem>>, vector<2x64xf32>
    tpu.vector_store %arg6[%c0_10, %c0_11], %10 {strides = array<i32>} : memref<2x64xf32, #tpu.memory_space<vmem>>, vector<2x64xf32>,
    return
  }
  func.func @transform_0(%arg0: i32) -> (i32, i32) {
    %c0_i32 = arith.constant 0 : i32
    %c0_i32_0 = arith.constant 0 : i32
    %c0_i32_1 = arith.constant 0 : i32
    return %c0_i32, %c0_i32_0 : i32, i32
  }
  func.func @transform_1(%arg0: i32) -> (i32, i32) {
    %c0_i32 = arith.constant 0 : i32
    %c0_i32_0 = arith.constant 0 : i32
    %c0_i32_1 = arith.constant 0 : i32
    return %c0_i32, %c0_i32_0 : i32, i32
  }
  func.func @transform_2(%arg0: i32) -> (i32, i32) {
    %c0_i32 = arith.constant 0 : i32
    %c0_i32_0 = arith.constant 0 : i32
    %c0_i32_1 = arith.constant 0 : i32
    return %c0_i32, %c0_i32_0 : i32, i32
  }
  func.func @transform_3(%arg0: i32) -> (i32, i32) {
    %c0_i32 = arith.constant 0 : i32
    %c0_i32_0 = arith.constant 0 : i32
    %c0_i32_1 = arith.constant 0 : i32
    return %c0_i32, %c0_i32_0 : i32, i32
  }
  func.func @transform_4(%arg0: i32) -> (i32, i32) {
    %c0_i32 = arith.constant 0 : i32
    %c0_i32_0 = arith.constant 0 : i32
    %c0_i32_1 = arith.constant 0 : i32
    return %c0_i32, %c0_i32_0 : i32, i32
  }
  func.func @transform_5(%arg0: i32) -> (i32, i32) {
    %c0_i32 = arith.constant 0 : i32
    %c0_i32_0 = arith.constant 0 : i32
    %c0_i32_1 = arith.constant 0 : i32
    return %c0_i32, %c0_i32_0 : i32, i32
  }
}

</mosaic_0001>

<llo_original>
// kernel: visual_perception_forward.9
$region0: #{visual_perception_forward.9}
  #allocation0 [shape = 'u32[]', space=smem, size = 0x4, offset = 0x4, fixed_abs, tag = 'smem constant byte address 0x4 - core index']
  #allocation1 [shape = 'u32[144,128]{1,0:T(1,128)}', space=vmem, size = 0x12000, scoped, tag = 'internal scratch']
  %s0 = inlined_call_operand.vmem [shape: bf16[2,576,3510], index: 0, kind: input, shape index: {}]
  %s1 = inlined_call_operand.vmem [shape: bf16[16,576], index: 1, kind: input, shape index: {}]
  %s2 = inlined_call_operand.vmem [shape: f32[16,1], index: 2, kind: input, shape index: {}]
  %s3 = inlined_call_operand.vmem [shape: f32[2,16,390], index: 3, kind: output, shape index: {}]
  %s4 = sld [smem:[#allocation0]]
  $region45: #{visual_perception_forward.9} parent=0
    _
  %s6 = ssub.s32 1, %s4
  %s7 = scalar_select 0, %s6, %s4
  loop: start=0, step=1, limit=4
  $region2: #{visual_perception_forward.9} parent=0 // loop_pre_header
    _
  $region3: #{visual_perception_forward.9} parent=0 // loop_header
    %s9 = sphi 0, %s13
    %p10 = scmp.ge.s32.totalorder %s9, 4
    %s19 = sphi 0, %s21
    %s22 = sphi 0, %s19
    %s23 = sphi 0, %s22
    %s39 = sphi 0, %s23
    %s43 = sphi 0, %s43
    %s45 = sphi 0, %s43
    %s46 = sphi 0, %s45
    %s60 = sphi 0, %s46
    %s64 = sphi 0, %s64
    %s66 = sphi 0, %s64
    %s67 = sphi 0, %s66
    %s81 = sphi 0, %s67
    %s87 = sphi 0, %s89
    %s90 = sphi 0, %s87
    %s91 = sphi 0, %s90
    %s107 = sphi 0, %s91
  $region4: #{visual_perception_forward.9} parent=0 // loop_header_branch
    %12 = sbr.rel (%p10) target = $region8
  $region5: #{visual_perception_forward.9} parent=0 // loop_body
    %s14 = ssub.s32 %s9, 1
    %s15 = ssub.s32 %s9, 2
    %s16 = sadd.s32 %s9, 1
    %s17 = ssub.s32 %s9, %s16
    %p18 = scmp.eq.s32.totalorder %s17, 0
    %s20 = sadd.s32 %s19, 1
    %s21 = scalar_select %p18, %s19, %s20
    %p24 = pneg %p18
    %p25 = scmp.eq.s32.totalorder %s9, 1
    %p26 = por %p24, %p25
    %p27 = scmp.ne.s32.totalorder %s19, %s22
    %p28 = scmp.eq.s32.totalorder %s9, 0
    %p29 = por %p27, %p28
    %p30 = scmp.ne.s32.totalorder %s19, %s22
    %p31 = scmp.eq.s32.totalorder %s14, 1
    %p32 = por %p30, %p31
    %p33 = scmp.ne.s32.totalorder %s22, %s23
    %p34 = scmp.eq.s32.totalorder %s14, 0
    %p35 = por %p33, %p34
    %p36 = scmp.ne.s32.totalorder %s22, %s23
    %p37 = scmp.eq.s32.totalorder %s15, 1
    %p38 = por %p36, %p37
    %p40 = scmp.ne.s32.totalorder %s23, %s39
    %p41 = scmp.eq.s32.totalorder %s15, 0
    %p42 = por %p40, %p41
    %s44 = sadd.s32 %s43, 1
    %p47 = scmp.eq.s32.totalorder %s9, 1
    %p48 = scmp.ne.s32.totalorder %s43, %s45
    %p49 = scmp.eq.s32.totalorder %s9, 0
    %p50 = por %p48, %p49
    %p51 = scmp.ne.s32.totalorder %s43, %s45
    %p52 = scmp.eq.s32.totalorder %s14, 1
    %p53 = por %p51, %p52
    %p54 = scmp.ne.s32.totalorder %s45, %s46
    %p55 = scmp.eq.s32.totalorder %s14, 0
    %p56 = por %p54, %p55
    %p57 = scmp.ne.s32.totalorder %s45, %s46
    %p58 = scmp.eq.s32.totalorder %s15, 1
    %p59 = por %p57, %p58
    %p61 = scmp.ne.s32.totalorder %s46, %s60
    %p62 = scmp.eq.s32.totalorder %s15, 0
    %p63 = por %p61, %p62
    %s65 = sadd.s32 %s64, 1
    %p68 = scmp.eq.s32.totalorder %s9, 1
    %p69 = scmp.ne.s32.totalorder %s64, %s66
    %p70 = scmp.eq.s32.totalorder %s9, 0
    %p71 = por %p69, %p70
    %p72 = scmp.ne.s32.totalorder %s64, %s66
    %p73 = scmp.eq.s32.totalorder %s14, 1
    %p74 = por %p72, %p73
    %p75 = scmp.ne.s32.totalorder %s66, %s67
    %p76 = scmp.eq.s32.totalorder %s14, 0
    %p77 = por %p75, %p76
    %p78 = scmp.ne.s32.totalorder %s66, %s67
    %p79 = scmp.eq.s32.totalorder %s15, 1
    %p80 = por %p78, %p79
    %p82 = scmp.ne.s32.totalorder %s67, %s81
    %p83 = scmp.eq.s32.totalorder %s15, 0
    %p84 = por %p82, %p83
    %s85 = ssub.s32 %s9, %s16
    %p86 = scmp.eq.s32.totalorder %s85, 0
    %s88 = sadd.s32 %s87, 1
    %s89 = scalar_select %p86, %s87, %s88
    %p92 = pneg %p86
    %p93 = scmp.eq.s32.totalorder %s9, 1
    %p94 = por %p92, %p93
    %p95 = scmp.ne.s32.totalorder %s87, %s90
    %p96 = scmp.eq.s32.totalorder %s9, 0
    %p97 = por %p95, %p96
    %p98 = scmp.ne.s32.totalorder %s87, %s90
    %p99 = scmp.eq.s32.totalorder %s14, 1
    %p100 = por %p98, %p99
    %p101 = scmp.ne.s32.totalorder %s90, %s91
    %p102 = scmp.eq.s32.totalorder %s14, 0
    %p103 = por %p101, %p102
    %p104 = scmp.ne.s32.totalorder %s90, %s91
    %p105 = scmp.eq.s32.totalorder %s15, 1
    %p106 = por %p104, %p105
    %p108 = scmp.ne.s32.totalorder %s91, %s107
    %p109 = scmp.eq.s32.totalorder %s15, 0
    %p110 = por %p108, %p109
    %p111 = scmp.le.s32.totalorder 1, %s9
    %p112 = scmp.lt.s32.totalorder %s9, 3
    %p113 = pnand %p111, %p112
    %p114 = pneg %p113
    // Predicated region
    $region9: #{visual_perception_forward.9} parent=5 // pred_check
      _
    $region10: #{visual_perception_forward.9} parent=5 // pred_check_branch
      %116 = sbr.rel (%p113) target = $region12
    $region11: #{visual_perception_forward.9} parent=5 // pred_region
      %s117 = ssub.s32 %s9, 1
      // Predicated region
      $region13: #{visual_perception_forward.9} parent=11 // pred_check
        %p118 = pneg %p56
      $region14: #{visual_perception_forward.9} parent=11 // pred_check_branch
        %120 = sbr.rel (%p118) target = $region16
      $region15: #{visual_perception_forward.9} parent=11 // pred_region
        _
      $region16: #{visual_perception_forward.9} parent=11 // pred_fallthru
        _
      // Predicated region
      $region17: #{visual_perception_forward.9} parent=11 // pred_check
        %p121 = pneg %p77
      $region18: #{visual_perception_forward.9} parent=11 // pred_check_branch
        %123 = sbr.rel (%p121) target = $region20
      $region19: #{visual_perception_forward.9} parent=11 // pred_region
        _
      $region20: #{visual_perception_forward.9} parent=11 // pred_fallthru
        _
    $region12: #{visual_perception_forward.9} parent=5 // pred_fallthru
      _
    %p124 = scmp.lt.s32.totalorder %s9, 2
    // Predicated region
    $region21: #{visual_perception_forward.9} parent=5 // pred_check
      %p125 = pneg %p124
    $region22: #{visual_perception_forward.9} parent=5 // pred_check_branch
      %127 = sbr.rel (%p125) target = $region24
    $region23: #{visual_perception_forward.9} parent=5 // pred_region
      // Predicated region
      $region25: #{visual_perception_forward.9} parent=23 // pred_check
        %p128 = pneg %p29
      $region26: #{visual_perception_forward.9} parent=23 // pred_check_branch
        %130 = sbr.rel (%p128) target = $region28
      $region27: #{visual_perception_forward.9} parent=23 // pred_region
        %p131 = scmp.lt.s32.totalorder %s9, 1
        %s132 = scalar_select %p131, %s9, 1
        %s133 = smul.addr %s132, 2016
        %s134 = smul.addr %s133, 4
        %s135 = scalar_lea.vmem %s0, %s134
      $region28: #{visual_perception_forward.9} parent=23 // pred_fallthru
        _
    $region24: #{visual_perception_forward.9} parent=5 // pred_fallthru
      _
    %p136 = scmp.le.s32.totalorder 1, %s9
    %p137 = scmp.lt.s32.totalorder %s9, 3
    %p138 = pnand %p136, %p137
    %p139 = pneg %p138
    // Predicated region
    $region29: #{visual_perception_forward.9} parent=5 // pred_check
      _
    $region30: #{visual_perception_forward.9} parent=5 // pred_check_branch
      %141 = sbr.rel (%p138) target = $region32
    $region31: #{visual_perception_forward.9} parent=5 // pred_region
      %s142 = ssub.s32 %s9, 1
      %p143 = scmp.lt.s32.totalorder %s14, 1
      %s144 = scalar_select %p143, %s14, 1
      %s145 = smul.addr %s144, 2016
      %s146 = smul.addr %s145, 4
      %s147 = scalar_lea.vmem %s0, %s146
      %p148 = pneg %p35
      %p149 = pneg %p32
      %p150 = pneg %p56
      %p151 = pneg %p53
      %p152 = pneg %p77
      %p153 = pneg %p74
      %p154 = pneg %p103
      %p155 = pneg %p100
      %p156 = scmp.lt.s32.totalorder %s14, 1
      %s157 = scalar_select %p156, %s14, 1
      %s158 = smul.addr %s157, 8
      %s159 = smul.addr %s158, 8
      %s160 = scalar_lea.vmem %s3, %s159
      %p161 = scmp.lt.s32.totalorder %s14, 1
      %s162 = scalar_select %p161, %s14, 1
      %s163 = smul.addr %s162, 2016
      %s164 = smul.addr %s163, 4
      %s165 = scalar_lea.vmem %s0, %s164
      %p166 = scmp.lt.s32.totalorder %s14, 1
      %s167 = scalar_select %p166, %s14, 1
      %s168 = smul.addr %s167, 8
      %s169 = smul.addr %s168, 8
      %s170 = scalar_lea.vmem %s3, %s169
      %v172 = vld [vmem:[%s1] sm:$0xff]
      %v173 = vld [vmem:[%s1 + $0x8] sm:$0xff]
      %v174 = vld [vmem:[%s1 + $0x10] sm:$0xf]
      %v175 = vld [vmem:[%s1 + $0x14] sm:$0xff]
      %v176 = vld [vmem:[%s1 + $0x1c] sm:$0xff]
      %v177 = vld [vmem:[%s1 + $0x24] sm:$0xf]
      %v178 = vld [vmem:[%s165] sm:$0xff]
      %v179 = vld [vmem:[%s165 + $0x8] sm:$0xff]
      %v180 = vld [vmem:[%s165 + $0x10] sm:$0xff]
      %v181 = vld [vmem:[%s165 + $0x18] sm:$0xff]
      %v182 = vld [vmem:[%s165 + $0x20] sm:$0xff]
      %v183 = vld [vmem:[%s165 + $0x28] sm:$0xff]
      %v184 = vld [vmem:[%s165 + $0x30] sm:$0xff]
      %v185 = vld [vmem:[%s165 + $0x38] sm:$0xff]
      %v186 = vld [vmem:[%s165 + $0x40] sm:$0xff]
      %v187 = vld [vmem:[%s165 + $0x48] sm:$0xff]
      %v188 = vld [vmem:[%s165 + $0x50] sm:$0xff]
      %v189 = vld [vmem:[%s165 + $0x58] sm:$0xff]
      %v190 = vld [vmem:[%s165 + $0x60] sm:$0xff]
      %v191 = vld [vmem:[%s165 + $0x68] sm:$0xff]
      %v192 = vld [vmem:[%s165 + $0x70] sm:$0xff]
      %v193 = vld [vmem:[%s165 + $0x78] sm:$0xff]
      %v194 = vld [vmem:[%s165 + $0x80] sm:$0xff]
      %v195 = vld [vmem:[%s165 + $0x88] sm:$0xff]
      %v196 = vld [vmem:[%s165 + $0x90] sm:$0xff]
      %v197 = vld [vmem:[%s165 + $0x98] sm:$0xff]
      %v198 = vld [vmem:[%s165 + $0xa0] sm:$0xff]
      %v199 = vld [vmem:[%s165 + $0xa8] sm:$0xff]
      %v200 = vld [vmem:[%s165 + $0xb0] sm:$0xff]
      %v201 = vld [vmem:[%s165 + $0xb8] sm:$0xff]
      %v202 = vld [vmem:[%s165 + $0xc0] sm:$0xff]
      %v203 = vld [vmem:[%s165 + $0xc8] sm:$0xff]
      %v204 = vld [vmem:[%s165 + $0xd0] sm:$0xff]
      %v205 = vld [vmem:[%s165 + $0xd8] sm:$0xff]
      %v206 = vld [vmem:[%s165 + $0xe0] sm:$0xff]
      %v207 = vld [vmem:[%s165 + $0xe8] sm:$0xff]
      %v208 = vld [vmem:[%s165 + $0xf0] sm:$0xff]
      %v209 = vld [vmem:[%s165 + $0xf8] sm:$0xff]
      %v210 = vld [vmem:[%s165 + $0x100] sm:$0xff]
      %v211 = vld [vmem:[%s165 + $0x108] sm:$0xff]
      %v212 = vld [vmem:[%s165 + $0x110] sm:$0xff]
      %v213 = vld [vmem:[%s165 + $0x118] sm:$0xff]
      %v214 = vld [vmem:[%s165 + $0x120] sm:$0xff]
      %v215 = vld [vmem:[%s165 + $0x128] sm:$0xff]
      %v216 = vld [vmem:[%s165 + $0x130] sm:$0xff]
      %v217 = vld [vmem:[%s165 + $0x138] sm:$0xff]
      %v218 = vld [vmem:[%s165 + $0x140] sm:$0xff]
      %v219 = vld [vmem:[%s165 + $0x148] sm:$0xff]
      %v220 = vld [vmem:[%s165 + $0x150] sm:$0xff]
      %v221 = vld [vmem:[%s165 + $0x158] sm:$0xff]
      %v222 = vld [vmem:[%s165 + $0x160] sm:$0xff]
      %v223 = vld [vmem:[%s165 + $0x168] sm:$0xff]
      %v224 = vld [vmem:[%s165 + $0x170] sm:$0xff]
      %v225 = vld [vmem:[%s165 + $0x178] sm:$0xff]
      %v226 = vld [vmem:[%s165 + $0x180] sm:$0xff]
      %v227 = vld [vmem:[%s165 + $0x188] sm:$0xff]
      %v228 = vld [vmem:[%s165 + $0x190] sm:$0xff]
      %v229 = vld [vmem:[%s165 + $0x198] sm:$0xff]
      %v230 = vld [vmem:[%s165 + $0x1a0] sm:$0xff]
      %v231 = vld [vmem:[%s165 + $0x1a8] sm:$0xff]
      %v232 = vld [vmem:[%s165 + $0x1b0] sm:$0xff]
      %v233 = vld [vmem:[%s165 + $0x1b8] sm:$0xff]
      %v234 = vld [vmem:[%s165 + $0x1c0] sm:$0xff]
      %v235 = vld [vmem:[%s165 + $0x1c8] sm:$0xff]
      %v236 = vld [vmem:[%s165 + $0x1d0] sm:$0xff]
      %v237 = vld [vmem:[%s165 + $0x1d8] sm:$0xff]
      %v238 = vld [vmem:[%s165 + $0x1e0] sm:$0xff]
      %v239 = vld [vmem:[%s165 + $0x1e8] sm:$0xff]
      %v240 = vld [vmem:[%s165 + $0x1f0] sm:$0xff]
      %v241 = vld [vmem:[%s165 + $0x1f8] sm:$0xff]
      %v242 = vld [vmem:[%s165 + $0x200] sm:$0xff]
      %v243 = vld [vmem:[%s165 + $0x208] sm:$0xff]
      %v244 = vld [vmem:[%s165 + $0x210] sm:$0xff]
      %v245 = vld [vmem:[%s165 + $0x218] sm:$0xff]
      %v246 = vld [vmem:[%s165 + $0x220] sm:$0xff]
      %v247 = vld [vmem:[%s165 + $0x228] sm:$0xff]
      %v248 = vld [vmem:[%s165 + $0x230] sm:$0xff]
      %v249 = vld [vmem:[%s165 + $0x238] sm:$0xff]
      %v250 = vld [vmem:[%s165 + $0x240] sm:$0xff]
      %v251 = vld [vmem:[%s165 + $0x248] sm:$0xff]
      %v252 = vld [vmem:[%s165 + $0x250] sm:$0xff]
      %v253 = vld [vmem:[%s165 + $0x258] sm:$0xff]
      %v254 = vld [vmem:[%s165 + $0x260] sm:$0xff]
      %v255 = vld [vmem:[%s165 + $0x268] sm:$0xff]
      %v256 = vld [vmem:[%s165 + $0x270] sm:$0xff]
      %v257 = vld [vmem:[%s165 + $0x278] sm:$0xff]
      %v258 = vld [vmem:[%s165 + $0x280] sm:$0xff]
      %v259 = vld [vmem:[%s165 + $0x288] sm:$0xff]
      %v260 = vld [vmem:[%s165 + $0x290] sm:$0xff]
      %v261 = vld [vmem:[%s165 + $0x298] sm:$0xff]
      %v262 = vld [vmem:[%s165 + $0x2a0] sm:$0xff]
      %v263 = vld [vmem:[%s165 + $0x2a8] sm:$0xff]
      %v264 = vld [vmem:[%s165 + $0x2b0] sm:$0xff]
      %v265 = vld [vmem:[%s165 + $0x2b8] sm:$0xff]
      %v266 = vld [vmem:[%s165 + $0x2c0] sm:$0xff]
      %v267 = vld [vmem:[%s165 + $0x2c8] sm:$0xff]
      %v268 = vld [vmem:[%s165 + $0x2d0] sm:$0xff]
      %v269 = vld [vmem:[%s165 + $0x2d8] sm:$0xff]
      %v270 = vld [vmem:[%s165 + $0x2e0] sm:$0xff]
      %v271 = vld [vmem:[%s165 + $0x2e8] sm:$0xff]
      %v272 = vld [vmem:[%s165 + $0x2f0] sm:$0xff]
      %v273 = vld [vmem:[%s165 + $0x2f8] sm:$0xff]
      %v274 = vld [vmem:[%s165 + $0x300] sm:$0xff]
      %v275 = vld [vmem:[%s165 + $0x308] sm:$0xff]
      %v276 = vld [vmem:[%s165 + $0x310] sm:$0xff]
      %v277 = vld [vmem:[%s165 + $0x318] sm:$0xff]
      %v278 = vld [vmem:[%s165 + $0x320] sm:$0xff]
      %v279 = vld [vmem:[%s165 + $0x328] sm:$0xff]
      %v280 = vld [vmem:[%s165 + $0x330] sm:$0xff]
      %v281 = vld [vmem:[%s165 + $0x338] sm:$0xff]
      %v282 = vld [vmem:[%s165 + $0x340] sm:$0xff]
      %v283 = vld [vmem:[%s165 + $0x348] sm:$0xff]
      %v284 = vld [vmem:[%s165 + $0x350] sm:$0xff]
      %v285 = vld [vmem:[%s165 + $0x358] sm:$0xff]
      %v286 = vld [vmem:[%s165 + $0x360] sm:$0xff]
      %v287 = vld [vmem:[%s165 + $0x368] sm:$0xff]
      %v288 = vld [vmem:[%s165 + $0x370] sm:$0xff]
      %v289 = vld [vmem:[%s165 + $0x378] sm:$0xff]
      %v290 = vld [vmem:[%s165 + $0x380] sm:$0xff]
      %v291 = vld [vmem:[%s165 + $0x388] sm:$0xff]
      %v292 = vld [vmem:[%s165 + $0x390] sm:$0xff]
      %v293 = vld [vmem:[%s165 + $0x398] sm:$0xff]
      %v294 = vld [vmem:[%s165 + $0x3a0] sm:$0xff]
      %v295 = vld [vmem:[%s165 + $0x3a8] sm:$0xff]
      %v296 = vld [vmem:[%s165 + $0x3b0] sm:$0xff]
      %v297 = vld [vmem:[%s165 + $0x3b8] sm:$0xff]
      %v298 = vld [vmem:[%s165 + $0x3c0] sm:$0xff]
      %v299 = vld [vmem:[%s165 + $0x3c8] sm:$0xff]
      %v300 = vld [vmem:[%s165 + $0x3d0] sm:$0xff]
      %v301 = vld [vmem:[%s165 + $0x3d8] sm:$0xff]
      %v302 = vld [vmem:[%s165 + $0x3e0] sm:$0xff]
      %v303 = vld [vmem:[%s165 + $0x3e8] sm:$0xff]
      %v304 = vld [vmem:[%s165 + $0x3f0] sm:$0xff]
      %v305 = vld [vmem:[%s165 + $0x3f8] sm:$0xff]
      %v306 = vld [vmem:[%s165 + $0x400] sm:$0xff]
      %v307 = vld [vmem:[%s165 + $0x408] sm:$0xff]
      %v308 = vld [vmem:[%s165 + $0x410] sm:$0xff]
      %v309 = vld [vmem:[%s165 + $0x418] sm:$0xff]
      %v310 = vld [vmem:[%s165 + $0x420] sm:$0xff]
      %v311 = vld [vmem:[%s165 + $0x428] sm:$0xff]
      %v312 = vld [vmem:[%s165 + $0x430] sm:$0xff]
      %v313 = vld [vmem:[%s165 + $0x438] sm:$0xff]
      %v314 = vld [vmem:[%s165 + $0x440] sm:$0xff]
      %v315 = vld [vmem:[%s165 + $0x448] sm:$0xff]
      %v316 = vld [vmem:[%s165 + $0x450] sm:$0xff]
      %v317 = vld [vmem:[%s165 + $0x458] sm:$0xff]
      %v318 = vld [vmem:[%s165 + $0x460] sm:$0xff]
      %v319 = vld [vmem:[%s165 + $0x468] sm:$0xff]
      %v320 = vld [vmem:[%s165 + $0x470] sm:$0xff]
      %v321 = vld [vmem:[%s165 + $0x478] sm:$0xff]
      %v322 = vld [vmem:[%s165 + $0x480] sm:$0xff]
      %v323 = vld [vmem:[%s165 + $0x488] sm:$0xff]
      %v324 = vld [vmem:[%s165 + $0x490] sm:$0xff]
      %v325 = vld [vmem:[%s165 + $0x498] sm:$0xff]
      %v326 = vld [vmem:[%s165 + $0x4a0] sm:$0xff]
      %v327 = vld [vmem:[%s165 + $0x4a8] sm:$0xff]
      %v328 = vld [vmem:[%s165 + $0x4b0] sm:$0xff]
      %v329 = vld [vmem:[%s165 + $0x4b8] sm:$0xff]
      %v330 = vld [vmem:[%s165 + $0x4c0] sm:$0xff]
      %v331 = vld [vmem:[%s165 + $0x4c8] sm:$0xff]
      %v332 = vld [vmem:[%s165 + $0x4d0] sm:$0xff]
      %v333 = vld [vmem:[%s165 + $0x4d8] sm:$0xff]
      %v334 = vld [vmem:[%s165 + $0x4e0] sm:$0xff]
      %v335 = vld [vmem:[%s165 + $0x4e8] sm:$0xff]
      %v336 = vld [vmem:[%s165 + $0x4f0] sm:$0xff]
      %v337 = vld [vmem:[%s165 + $0x4f8] sm:$0xff]
      %v338 = vld [vmem:[%s165 + $0x500] sm:$0xff]
      %v339 = vld [vmem:[%s165 + $0x508] sm:$0xff]
      %v340 = vld [vmem:[%s165 + $0x510] sm:$0xff]
      %v341 = vld [vmem:[%s165 + $0x518] sm:$0xff]
      %v342 = vld [vmem:[%s165 + $0x520] sm:$0xff]
      %v343 = vld [vmem:[%s165 + $0x528] sm:$0xff]
      %v344 = vld [vmem:[%s165 + $0x530] sm:$0xff]
      %v345 = vld [vmem:[%s165 + $0x538] sm:$0xff]
      %v346 = vld [vmem:[%s165 + $0x540] sm:$0xff]
      %v347 = vld [vmem:[%s165 + $0x548] sm:$0xff]
      %v348 = vld [vmem:[%s165 + $0x550] sm:$0xff]
      %v349 = vld [vmem:[%s165 + $0x558] sm:$0xff]
      %v350 = vld [vmem:[%s165 + $0x560] sm:$0xff]
      %v351 = vld [vmem:[%s165 + $0x568] sm:$0xff]
      %v352 = vld [vmem:[%s165 + $0x570] sm:$0xff]
      %v353 = vld [vmem:[%s165 + $0x578] sm:$0xff]
      %v354 = vld [vmem:[%s165 + $0x580] sm:$0xff]
      %v355 = vld [vmem:[%s165 + $0x588] sm:$0xff]
      %v356 = vld [vmem:[%s165 + $0x590] sm:$0xff]
      %v357 = vld [vmem:[%s165 + $0x598] sm:$0xff]
      %v358 = vld [vmem:[%s165 + $0x5a0] sm:$0xff]
      %v359 = vld [vmem:[%s165 + $0x5a8] sm:$0xff]
      %v360 = vld [vmem:[%s165 + $0x5b0] sm:$0xff]
      %v361 = vld [vmem:[%s165 + $0x5b8] sm:$0xff]
      %v362 = vld [vmem:[%s165 + $0x5c0] sm:$0xff]
      %v363 = vld [vmem:[%s165 + $0x5c8] sm:$0xff]
      %v364 = vld [vmem:[%s165 + $0x5d0] sm:$0xff]
      %v365 = vld [vmem:[%s165 + $0x5d8] sm:$0xff]
      %v366 = vld [vmem:[%s165 + $0x5e0] sm:$0xff]
      %v367 = vld [vmem:[%s165 + $0x5e8] sm:$0xff]
      %v368 = vld [vmem:[%s165 + $0x5f0] sm:$0xff]
      %v369 = vld [vmem:[%s165 + $0x5f8] sm:$0xff]
      %v370 = vld [vmem:[%s165 + $0x600] sm:$0xff]
      %v371 = vld [vmem:[%s165 + $0x608] sm:$0xff]
      %v372 = vld [vmem:[%s165 + $0x610] sm:$0xff]
      %v373 = vld [vmem:[%s165 + $0x618] sm:$0xff]
      %v374 = vld [vmem:[%s165 + $0x620] sm:$0xff]
      %v375 = vld [vmem:[%s165 + $0x628] sm:$0xff]
      %v376 = vld [vmem:[%s165 + $0x630] sm:$0xff]
      %v377 = vld [vmem:[%s165 + $0x638] sm:$0xff]
      %v378 = vld [vmem:[%s165 + $0x640] sm:$0xff]
      %v379 = vld [vmem:[%s165 + $0x648] sm:$0xff]
      %v380 = vld [vmem:[%s165 + $0x650] sm:$0xff]
      %v381 = vld [vmem:[%s165 + $0x658] sm:$0xff]
      %v382 = vld [vmem:[%s165 + $0x660] sm:$0xff]
      %v383 = vld [vmem:[%s165 + $0x668] sm:$0xff]
      %v384 = vld [vmem:[%s165 + $0x670] sm:$0xff]
      %v385 = vld [vmem:[%s165 + $0x678] sm:$0xff]
      %v386 = vld [vmem:[%s165 + $0x680] sm:$0xff]
      %v387 = vld [vmem:[%s165 + $0x688] sm:$0xff]
      %v388 = vld [vmem:[%s165 + $0x690] sm:$0xff]
      %v389 = vld [vmem:[%s165 + $0x698] sm:$0xff]
      %v390 = vld [vmem:[%s165 + $0x6a0] sm:$0xff]
      %v391 = vld [vmem:[%s165 + $0x6a8] sm:$0xff]
      %v392 = vld [vmem:[%s165 + $0x6b0] sm:$0xff]
      %v393 = vld [vmem:[%s165 + $0x6b8] sm:$0xff]
      %v394 = vld [vmem:[%s165 + $0x6c0] sm:$0xff]
      %v395 = vld [vmem:[%s165 + $0x6c8] sm:$0xff]
      %v396 = vld [vmem:[%s165 + $0x6d0] sm:$0xff]
      %v397 = vld [vmem:[%s165 + $0x6d8] sm:$0xff]
      %v398 = vld [vmem:[%s165 + $0x6e0] sm:$0xff]
      %v399 = vld [vmem:[%s165 + $0x6e8] sm:$0xff]
      %v400 = vld [vmem:[%s165 + $0x6f0] sm:$0xff]
      %v401 = vld [vmem:[%s165 + $0x6f8] sm:$0xff]
      %v402 = vld [vmem:[%s165 + $0x700] sm:$0xff]
      %v403 = vld [vmem:[%s165 + $0x708] sm:$0xff]
      %v404 = vld [vmem:[%s165 + $0x710] sm:$0xff]
      %v405 = vld [vmem:[%s165 + $0x718] sm:$0xff]
      %v406 = vld [vmem:[%s165 + $0x720] sm:$0xff]
      %v407 = vld [vmem:[%s165 + $0x728] sm:$0xff]
      %v408 = vld [vmem:[%s165 + $0x730] sm:$0xff]
      %v409 = vld [vmem:[%s165 + $0x738] sm:$0xff]
      %v410 = vld [vmem:[%s165 + $0x740] sm:$0xff]
      %v411 = vld [vmem:[%s165 + $0x748] sm:$0xff]
      %v412 = vld [vmem:[%s165 + $0x750] sm:$0xff]
      %v413 = vld [vmem:[%s165 + $0x758] sm:$0xff]
      %v414 = vld [vmem:[%s165 + $0x760] sm:$0xff]
      %v415 = vld [vmem:[%s165 + $0x768] sm:$0xff]
      %v416 = vld [vmem:[%s165 + $0x770] sm:$0xff]
      %v417 = vld [vmem:[%s165 + $0x778] sm:$0xff]
      %v418 = vld [vmem:[%s165 + $0x780] sm:$0xff]
      %v419 = vld [vmem:[%s165 + $0x788] sm:$0xff]
      %v420 = vld [vmem:[%s165 + $0x790] sm:$0xff]
      %v421 = vld [vmem:[%s165 + $0x798] sm:$0xff]
      %v422 = vld [vmem:[%s165 + $0x7a0] sm:$0xff]
      %v423 = vld [vmem:[%s165 + $0x7a8] sm:$0xff]
      %v424 = vld [vmem:[%s165 + $0x7b0] sm:$0xff]
      %v425 = vld [vmem:[%s165 + $0x7b8] sm:$0xff]
      %v426 = vld [vmem:[%s165 + $0x7c0] sm:$0xff]
      %v427 = vld [vmem:[%s165 + $0x7c8] sm:$0xff]
      %v428 = vld [vmem:[%s165 + $0x7d0] sm:$0xff]
      %v429 = vld [vmem:[%s165 + $0x7d8] sm:$0xff]
      %v430 = vld [vmem:[%s165 + $0x7e0] sm:$0xff]
      %v431 = vld [vmem:[%s165 + $0x7e8] sm:$0xff]
      %v432 = vld [vmem:[%s165 + $0x7f0] sm:$0xff]
      %v433 = vld [vmem:[%s165 + $0x7f8] sm:$0xff]
      %v434 = vld [vmem:[%s165 + $0x800] sm:$0xff]
      %v435 = vld [vmem:[%s165 + $0x808] sm:$0xff]
      %v436 = vld [vmem:[%s165 + $0x810] sm:$0xff]
      %v437 = vld [vmem:[%s165 + $0x818] sm:$0xff]
      %v438 = vld [vmem:[%s165 + $0x820] sm:$0xff]
      %v439 = vld [vmem:[%s165 + $0x828] sm:$0xff]
      %v440 = vld [vmem:[%s165 + $0x830] sm:$0xff]
      %v441 = vld [vmem:[%s165 + $0x838] sm:$0xff]
      %v442 = vld [vmem:[%s165 + $0x840] sm:$0xff]
      %v443 = vld [vmem:[%s165 + $0x848] sm:$0xff]
      %v444 = vld [vmem:[%s165 + $0x850] sm:$0xff]
      %v445 = vld [vmem:[%s165 + $0x858] sm:$0xff]
      %v446 = vld [vmem:[%s165 + $0x860] sm:$0xff]
      %v447 = vld [vmem:[%s165 + $0x868] sm:$0xff]
      %v448 = vld [vmem:[%s165 + $0x870] sm:$0xff]
      %v449 = vld [vmem:[%s165 + $0x878] sm:$0xff]
      %v450 = vld [vmem:[%s165 + $0x880] sm:$0xff]
      %v451 = vld [vmem:[%s165 + $0x888] sm:$0xff]
      %v452 = vld [vmem:[%s165 + $0x890] sm:$0xff]
      %v453 = vld [vmem:[%s165 + $0x898] sm:$0xff]
      %v454 = vld [vmem:[%s165 + $0x8a0] sm:$0xff]
      %v455 = vld [vmem:[%s165 + $0x8a8] sm:$0xff]
      %v456 = vld [vmem:[%s165 + $0x8b0] sm:$0xff]
      %v457 = vld [vmem:[%s165 + $0x8b8] sm:$0xff]
      %v458 = vld [vmem:[%s165 + $0x8c0] sm:$0xff]
      %v459 = vld [vmem:[%s165 + $0x8c8] sm:$0xff]
      %v460 = vld [vmem:[%s165 + $0x8d0] sm:$0xff]
      %v461 = vld [vmem:[%s165 + $0x8d8] sm:$0xff]
      %v462 = vld [vmem:[%s165 + $0x8e0] sm:$0xff]
      %v463 = vld [vmem:[%s165 + $0x8e8] sm:$0xff]
      %v464 = vld [vmem:[%s165 + $0x8f0] sm:$0xff]
      %v465 = vld [vmem:[%s165 + $0x8f8] sm:$0xff]
      %v466 = vld [vmem:[%s165 + $0x900] sm:$0xff]
      %v467 = vld [vmem:[%s165 + $0x908] sm:$0xff]
      %v468 = vld [vmem:[%s165 + $0x910] sm:$0xff]
      %v469 = vld [vmem:[%s165 + $0x918] sm:$0xff]
      %v470 = vld [vmem:[%s165 + $0x920] sm:$0xff]
      %v471 = vld [vmem:[%s165 + $0x928] sm:$0xff]
      %v472 = vld [vmem:[%s165 + $0x930] sm:$0xff]
      %v473 = vld [vmem:[%s165 + $0x938] sm:$0xff]
      %v474 = vld [vmem:[%s165 + $0x940] sm:$0xff]
      %v475 = vld [vmem:[%s165 + $0x948] sm:$0xff]
      %v476 = vld [vmem:[%s165 + $0x950] sm:$0xff]
      %v477 = vld [vmem:[%s165 + $0x958] sm:$0xff]
      %v478 = vld [vmem:[%s165 + $0x960] sm:$0xff]
      %v479 = vld [vmem:[%s165 + $0x968] sm:$0xff]
      %v480 = vld [vmem:[%s165 + $0x970] sm:$0xff]
      %v481 = vld [vmem:[%s165 + $0x978] sm:$0xff]
      %v482 = vld [vmem:[%s165 + $0x980] sm:$0xff]
      %v483 = vld [vmem:[%s165 + $0x988] sm:$0xff]
      %v484 = vld [vmem:[%s165 + $0x990] sm:$0xff]
      %v485 = vld [vmem:[%s165 + $0x998] sm:$0xff]
      %v486 = vld [vmem:[%s165 + $0x9a0] sm:$0xff]
      %v487 = vld [vmem:[%s165 + $0x9a8] sm:$0xff]
      %v488 = vld [vmem:[%s165 + $0x9b0] sm:$0xff]
      %v489 = vld [vmem:[%s165 + $0x9b8] sm:$0xff]
      %v490 = vld [vmem:[%s165 + $0x9c0] sm:$0xff]
      %v491 = vld [vmem:[%s165 + $0x9c8] sm:$0xff]
      %v492 = vld [vmem:[%s165 + $0x9d0] sm:$0xff]
      %v493 = vld [vmem:[%s165 + $0x9d8] sm:$0xff]
      %v494 = vld [vmem:[%s165 + $0x9e0] sm:$0xff]
      %v495 = vld [vmem:[%s165 + $0x9e8] sm:$0xff]
      %v496 = vld [vmem:[%s165 + $0x9f0] sm:$0xff]
      %v497 = vld [vmem:[%s165 + $0x9f8] sm:$0xff]
      %v498 = vld [vmem:[%s165 + $0xa00] sm:$0xff]
      %v499 = vld [vmem:[%s165 + $0xa08] sm:$0xff]
      %v500 = vld [vmem:[%s165 + $0xa10] sm:$0xff]
      %v501 = vld [vmem:[%s165 + $0xa18] sm:$0xff]
      %v502 = vld [vmem:[%s165 + $0xa20] sm:$0xff]
      %v503 = vld [vmem:[%s165 + $0xa28] sm:$0xff]
      %v504 = vld [vmem:[%s165 + $0xa30] sm:$0xff]
      %v505 = vld [vmem:[%s165 + $0xa38] sm:$0xff]
      %v506 = vld [vmem:[%s165 + $0xa40] sm:$0xff]
      %v507 = vld [vmem:[%s165 + $0xa48] sm:$0xff]
      %v508 = vld [vmem:[%s165 + $0xa50] sm:$0xff]
      %v509 = vld [vmem:[%s165 + $0xa58] sm:$0xff]
      %v510 = vld [vmem:[%s165 + $0xa60] sm:$0xff]
      %v511 = vld [vmem:[%s165 + $0xa68] sm:$0xff]
      %v512 = vld [vmem:[%s165 + $0xa70] sm:$0xff]
      %v513 = vld [vmem:[%s165 + $0xa78] sm:$0xff]
      %v514 = vld [vmem:[%s165 + $0xa80] sm:$0xff]
      %v515 = vld [vmem:[%s165 + $0xa88] sm:$0xff]
      %v516 = vld [vmem:[%s165 + $0xa90] sm:$0xff]
      %v517 = vld [vmem:[%s165 + $0xa98] sm:$0xff]
      %v518 = vld [vmem:[%s165 + $0xaa0] sm:$0xff]
      %v519 = vld [vmem:[%s165 + $0xaa8] sm:$0xff]
      %v520 = vld [vmem:[%s165 + $0xab0] sm:$0xff]
      %v521 = vld [vmem:[%s165 + $0xab8] sm:$0xff]
      %v522 = vld [vmem:[%s165 + $0xac0] sm:$0xff]
      %v523 = vld [vmem:[%s165 + $0xac8] sm:$0xff]
      %v524 = vld [vmem:[%s165 + $0xad0] sm:$0xff]
      %v525 = vld [vmem:[%s165 + $0xad8] sm:$0xff]
      %v526 = vld [vmem:[%s165 + $0xae0] sm:$0xff]
      %v527 = vld [vmem:[%s165 + $0xae8] sm:$0xff]
      %v528 = vld [vmem:[%s165 + $0xaf0] sm:$0xff]
      %v529 = vld [vmem:[%s165 + $0xaf8] sm:$0xff]
      %v530 = vld [vmem:[%s165 + $0xb00] sm:$0xff]
      %v531 = vld [vmem:[%s165 + $0xb08] sm:$0xff]
      %v532 = vld [vmem:[%s165 + $0xb10] sm:$0xff]
      %v533 = vld [vmem:[%s165 + $0xb18] sm:$0xff]
      %v534 = vld [vmem:[%s165 + $0xb20] sm:$0xff]
      %v535 = vld [vmem:[%s165 + $0xb28] sm:$0xff]
      %v536 = vld [vmem:[%s165 + $0xb30] sm:$0xff]
      %v537 = vld [vmem:[%s165 + $0xb38] sm:$0xff]
      %v538 = vld [vmem:[%s165 + $0xb40] sm:$0xff]
      %v539 = vld [vmem:[%s165 + $0xb48] sm:$0xff]
      %v540 = vld [vmem:[%s165 + $0xb50] sm:$0xff]
      %v541 = vld [vmem:[%s165 + $0xb58] sm:$0xff]
      %v542 = vld [vmem:[%s165 + $0xb60] sm:$0xff]
      %v543 = vld [vmem:[%s165 + $0xb68] sm:$0xff]
      %v544 = vld [vmem:[%s165 + $0xb70] sm:$0xff]
      %v545 = vld [vmem:[%s165 + $0xb78] sm:$0xff]
      %v546 = vld [vmem:[%s165 + $0xb80] sm:$0xff]
      %v547 = vld [vmem:[%s165 + $0xb88] sm:$0xff]
      %v548 = vld [vmem:[%s165 + $0xb90] sm:$0xff]
      %v549 = vld [vmem:[%s165 + $0xb98] sm:$0xff]
      %v550 = vld [vmem:[%s165 + $0xba0] sm:$0xff]
      %v551 = vld [vmem:[%s165 + $0xba8] sm:$0xff]
      %v552 = vld [vmem:[%s165 + $0xbb0] sm:$0xff]
      %v553 = vld [vmem:[%s165 + $0xbb8] sm:$0xff]
      %v554 = vld [vmem:[%s165 + $0xbc0] sm:$0xff]
      %v555 = vld [vmem:[%s165 + $0xbc8] sm:$0xff]
      %v556 = vld [vmem:[%s165 + $0xbd0] sm:$0xff]
      %v557 = vld [vmem:[%s165 + $0xbd8] sm:$0xff]
      %v558 = vld [vmem:[%s165 + $0xbe0] sm:$0xff]
      %v559 = vld [vmem:[%s165 + $0xbe8] sm:$0xff]
      %v560 = vld [vmem:[%s165 + $0xbf0] sm:$0xff]
      %v561 = vld [vmem:[%s165 + $0xbf8] sm:$0xff]
      %v562 = vld [vmem:[%s165 + $0xc00] sm:$0xff]
      %v563 = vld [vmem:[%s165 + $0xc08] sm:$0xff]
      %v564 = vld [vmem:[%s165 + $0xc10] sm:$0xff]
      %v565 = vld [vmem:[%s165 + $0xc18] sm:$0xff]
      %v566 = vld [vmem:[%s165 + $0xc20] sm:$0xff]
      %v567 = vld [vmem:[%s165 + $0xc28] sm:$0xff]
      %v568 = vld [vmem:[%s165 + $0xc30] sm:$0xff]
      %v569 = vld [vmem:[%s165 + $0xc38] sm:$0xff]
      %v570 = vld [vmem:[%s165 + $0xc40] sm:$0xff]
      %v571 = vld [vmem:[%s165 + $0xc48] sm:$0xff]
      %v572 = vld [vmem:[%s165 + $0xc50] sm:$0xff]
      %v573 = vld [vmem:[%s165 + $0xc58] sm:$0xff]
      %v574 = vld [vmem:[%s165 + $0xc60] sm:$0xff]
      %v575 = vld [vmem:[%s165 + $0xc68] sm:$0xff]
      %v576 = vld [vmem:[%s165 + $0xc70] sm:$0xff]
      %v577 = vld [vmem:[%s165 + $0xc78] sm:$0xff]
      %v578 = vld [vmem:[%s165 + $0xc80] sm:$0xff]
      %v579 = vld [vmem:[%s165 + $0xc88] sm:$0xff]
      %v580 = vld [vmem:[%s165 + $0xc90] sm:$0xff]
      %v581 = vld [vmem:[%s165 + $0xc98] sm:$0xff]
      %v582 = vld [vmem:[%s165 + $0xca0] sm:$0xff]
      %v583 = vld [vmem:[%s165 + $0xca8] sm:$0xff]
      %v584 = vld [vmem:[%s165 + $0xcb0] sm:$0xff]
      %v585 = vld [vmem:[%s165 + $0xcb8] sm:$0xff]
      %v586 = vld [vmem:[%s165 + $0xcc0] sm:$0xff]
      %v587 = vld [vmem:[%s165 + $0xcc8] sm:$0xff]
      %v588 = vld [vmem:[%s165 + $0xcd0] sm:$0xff]
      %v589 = vld [vmem:[%s165 + $0xcd8] sm:$0xff]
      %v590 = vld [vmem:[%s165 + $0xce0] sm:$0xff]
      %v591 = vld [vmem:[%s165 + $0xce8] sm:$0xff]
      %v592 = vld [vmem:[%s165 + $0xcf0] sm:$0xff]
      %v593 = vld [vmem:[%s165 + $0xcf8] sm:$0xff]
      %v594 = vld [vmem:[%s165 + $0xd00] sm:$0xff]
      %v595 = vld [vmem:[%s165 + $0xd08] sm:$0xff]
      %v596 = vld [vmem:[%s165 + $0xd10] sm:$0xff]
      %v597 = vld [vmem:[%s165 + $0xd18] sm:$0xff]
      %v598 = vld [vmem:[%s165 + $0xd20] sm:$0xff]
      %v599 = vld [vmem:[%s165 + $0xd28] sm:$0xff]
      %v600 = vld [vmem:[%s165 + $0xd30] sm:$0xff]
      %v601 = vld [vmem:[%s165 + $0xd38] sm:$0xff]
      %v602 = vld [vmem:[%s165 + $0xd40] sm:$0xff]
      %v603 = vld [vmem:[%s165 + $0xd48] sm:$0xff]
      %v604 = vld [vmem:[%s165 + $0xd50] sm:$0xff]
      %v605 = vld [vmem:[%s165 + $0xd58] sm:$0xff]
      %v606 = vld [vmem:[%s165 + $0xd60] sm:$0xff]
      %v607 = vld [vmem:[%s165 + $0xd68] sm:$0xff]
      %v608 = vld [vmem:[%s165 + $0xd70] sm:$0xff]
      %v609 = vld [vmem:[%s165 + $0xd78] sm:$0xff]
      %v610 = vld [vmem:[%s165 + $0xd80] sm:$0xff]
      %v611 = vld [vmem:[%s165 + $0xd88] sm:$0xff]
      %v612 = vld [vmem:[%s165 + $0xd90] sm:$0xff]
      %v613 = vld [vmem:[%s165 + $0xd98] sm:$0xff]
      %v614 = vld [vmem:[%s165 + $0xda0] sm:$0xff]
      %v615 = vld [vmem:[%s165 + $0xda8] sm:$0xff]
      %v616 = vld [vmem:[%s165 + $0xdb0] sm:$0xff]
      %v617 = vld [vmem:[%s165 + $0xdb8] sm:$0xff]
      %v618 = vld [vmem:[%s165 + $0xdc0] sm:$0xff]
      %v619 = vld [vmem:[%s165 + $0xdc8] sm:$0xff]
      %v620 = vld [vmem:[%s165 + $0xdd0] sm:$0xff]
      %v621 = vld [vmem:[%s165 + $0xdd8] sm:$0xff]
      %v622 = vld [vmem:[%s165 + $0xde0] sm:$0xff]
      %v623 = vld [vmem:[%s165 + $0xde8] sm:$0xff]
      %v624 = vld [vmem:[%s165 + $0xdf0] sm:$0xff]
      %v625 = vld [vmem:[%s165 + $0xdf8] sm:$0xff]
      %v626 = vld [vmem:[%s165 + $0xe00] sm:$0xff]
      %v627 = vld [vmem:[%s165 + $0xe08] sm:$0xff]
      %v628 = vld [vmem:[%s165 + $0xe10] sm:$0xff]
      %v629 = vld [vmem:[%s165 + $0xe18] sm:$0xff]
      %v630 = vld [vmem:[%s165 + $0xe20] sm:$0xff]
      %v631 = vld [vmem:[%s165 + $0xe28] sm:$0xff]
      %v632 = vld [vmem:[%s165 + $0xe30] sm:$0xff]
      %v633 = vld [vmem:[%s165 + $0xe38] sm:$0xff]
      %v634 = vld [vmem:[%s165 + $0xe40] sm:$0xff]
      %v635 = vld [vmem:[%s165 + $0xe48] sm:$0xff]
      %v636 = vld [vmem:[%s165 + $0xe50] sm:$0xff]
      %v637 = vld [vmem:[%s165 + $0xe58] sm:$0xff]
      %v638 = vld [vmem:[%s165 + $0xe60] sm:$0xff]
      %v639 = vld [vmem:[%s165 + $0xe68] sm:$0xff]
      %v640 = vld [vmem:[%s165 + $0xe70] sm:$0xff]
      %v641 = vld [vmem:[%s165 + $0xe78] sm:$0xff]
      %v642 = vld [vmem:[%s165 + $0xe80] sm:$0xff]
      %v643 = vld [vmem:[%s165 + $0xe88] sm:$0xff]
      %v644 = vld [vmem:[%s165 + $0xe90] sm:$0xff]
      %v645 = vld [vmem:[%s165 + $0xe98] sm:$0xff]
      %v646 = vld [vmem:[%s165 + $0xea0] sm:$0xff]
      %v647 = vld [vmem:[%s165 + $0xea8] sm:$0xff]
      %v648 = vld [vmem:[%s165 + $0xeb0] sm:$0xff]
      %v649 = vld [vmem:[%s165 + $0xeb8] sm:$0xff]
      %v650 = vld [vmem:[%s165 + $0xec0] sm:$0xff]
      %v651 = vld [vmem:[%s165 + $0xec8] sm:$0xff]
      %v652 = vld [vmem:[%s165 + $0xed0] sm:$0xff]
      %v653 = vld [vmem:[%s165 + $0xed8] sm:$0xff]
      %v654 = vld [vmem:[%s165 + $0xee0] sm:$0xff]
      %v655 = vld [vmem:[%s165 + $0xee8] sm:$0xff]
      %v656 = vld [vmem:[%s165 + $0xef0] sm:$0xff]
      %v657 = vld [vmem:[%s165 + $0xef8] sm:$0xff]
      %v658 = vld [vmem:[%s165 + $0xf00] sm:$0xff]
      %v659 = vld [vmem:[%s165 + $0xf08] sm:$0xff]
      %v660 = vld [vmem:[%s165 + $0xf10] sm:$0xff]
      %v661 = vld [vmem:[%s165 + $0xf18] sm:$0xff]
      %v662 = vld [vmem:[%s165 + $0xf20] sm:$0xff]
      %v663 = vld [vmem:[%s165 + $0xf28] sm:$0xff]
      %v664 = vld [vmem:[%s165 + $0xf30] sm:$0xff]
      %v665 = vld [vmem:[%s165 + $0xf38] sm:$0xff]
      %v666 = vld [vmem:[%s165 + $0xf40] sm:$0xff]
      %v667 = vld [vmem:[%s165 + $0xf48] sm:$0xff]
      %v668 = vld [vmem:[%s165 + $0xf50] sm:$0xff]
      %v669 = vld [vmem:[%s165 + $0xf58] sm:$0xff]
      %v670 = vld [vmem:[%s165 + $0xf60] sm:$0xff]
      %v671 = vld [vmem:[%s165 + $0xf68] sm:$0xff]
      %v672 = vld [vmem:[%s165 + $0xf70] sm:$0xff]
      %v673 = vld [vmem:[%s165 + $0xf78] sm:$0xff]
      %v674 = vld [vmem:[%s165 + $0xf80] sm:$0xff]
      %v675 = vld [vmem:[%s165 + $0xf88] sm:$0xff]
      %v676 = vld [vmem:[%s165 + $0xf90] sm:$0xff]
      %v677 = vld [vmem:[%s165 + $0xf98] sm:$0xff]
      %v678 = vld [vmem:[%s165 + $0xfa0] sm:$0xff]
      %v679 = vld [vmem:[%s165 + $0xfa8] sm:$0xff]
      %v680 = vld [vmem:[%s165 + $0xfb0] sm:$0xff]
      %v681 = vld [vmem:[%s165 + $0xfb8] sm:$0xff]
      %v682 = vld [vmem:[%s165 + $0xfc0] sm:$0xff]
      %v683 = vld [vmem:[%s165 + $0xfc8] sm:$0xff]
      %v684 = vld [vmem:[%s165 + $0xfd0] sm:$0xff]
      %v685 = vld [vmem:[%s165 + $0xfd8] sm:$0xff]
      %v686 = vld [vmem:[%s165 + $0xfe0] sm:$0xff]
      %v687 = vld [vmem:[%s165 + $0xfe8] sm:$0xff]
      %v688 = vld [vmem:[%s165 + $0xff0] sm:$0xff]
      %v689 = vld [vmem:[%s165 + $0xff8] sm:$0xff]
      %v690 = vld [vmem:[%s165 + $0x1000] sm:$0xff]
      %v691 = vld [vmem:[%s165 + $0x1008] sm:$0xff]
      %v692 = vld [vmem:[%s165 + $0x1010] sm:$0xff]
      %v693 = vld [vmem:[%s165 + $0x1018] sm:$0xff]
      %v694 = vld [vmem:[%s165 + $0x1020] sm:$0xff]
      %v695 = vld [vmem:[%s165 + $0x1028] sm:$0xff]
      %v696 = vld [vmem:[%s165 + $0x1030] sm:$0xff]
      %v697 = vld [vmem:[%s165 + $0x1038] sm:$0xff]
      %v698 = vld [vmem:[%s165 + $0x1040] sm:$0xff]
      %v699 = vld [vmem:[%s165 + $0x1048] sm:$0xff]
      %v700 = vld [vmem:[%s165 + $0x1050] sm:$0xff]
      %v701 = vld [vmem:[%s165 + $0x1058] sm:$0xff]
      %v702 = vld [vmem:[%s165 + $0x1060] sm:$0xff]
      %v703 = vld [vmem:[%s165 + $0x1068] sm:$0xff]
      %v704 = vld [vmem:[%s165 + $0x1070] sm:$0xff]
      %v705 = vld [vmem:[%s165 + $0x1078] sm:$0xff]
      %v706 = vld [vmem:[%s165 + $0x1080] sm:$0xff]
      %v707 = vld [vmem:[%s165 + $0x1088] sm:$0xff]
      %v708 = vld [vmem:[%s165 + $0x1090] sm:$0xff]
      %v709 = vld [vmem:[%s165 + $0x1098] sm:$0xff]
      %v710 = vld [vmem:[%s165 + $0x10a0] sm:$0xff]
      %v711 = vld [vmem:[%s165 + $0x10a8] sm:$0xff]
      %v712 = vld [vmem:[%s165 + $0x10b0] sm:$0xff]
      %v713 = vld [vmem:[%s165 + $0x10b8] sm:$0xff]
      %v714 = vld [vmem:[%s165 + $0x10c0] sm:$0xff]
      %v715 = vld [vmem:[%s165 + $0x10c8] sm:$0xff]
      %v716 = vld [vmem:[%s165 + $0x10d0] sm:$0xff]
      %v717 = vld [vmem:[%s165 + $0x10d8] sm:$0xff]
      %v718 = vld [vmem:[%s165 + $0x10e0] sm:$0xff]
      %v719 = vld [vmem:[%s165 + $0x10e8] sm:$0xff]
      %v720 = vld [vmem:[%s165 + $0x10f0] sm:$0xff]
      %v721 = vld [vmem:[%s165 + $0x10f8] sm:$0xff]
      %v722 = vld [vmem:[%s165 + $0x1100] sm:$0xff]
      %v723 = vld [vmem:[%s165 + $0x1108] sm:$0xff]
      %v724 = vld [vmem:[%s165 + $0x1110] sm:$0xff]
      %v725 = vld [vmem:[%s165 + $0x1118] sm:$0xff]
      %v726 = vld [vmem:[%s165 + $0x1120] sm:$0xff]
      %v727 = vld [vmem:[%s165 + $0x1128] sm:$0xff]
      %v728 = vld [vmem:[%s165 + $0x1130] sm:$0xff]
      %v729 = vld [vmem:[%s165 + $0x1138] sm:$0xff]
      %v730 = vld [vmem:[%s165 + $0x1140] sm:$0xff]
      %v731 = vld [vmem:[%s165 + $0x1148] sm:$0xff]
      %v732 = vld [vmem:[%s165 + $0x1150] sm:$0xff]
      %v733 = vld [vmem:[%s165 + $0x1158] sm:$0xff]
      %v734 = vld [vmem:[%s165 + $0x1160] sm:$0xff]
      %v735 = vld [vmem:[%s165 + $0x1168] sm:$0xff]
      %v736 = vld [vmem:[%s165 + $0x1170] sm:$0xff]
      %v737 = vld [vmem:[%s165 + $0x1178] sm:$0xff]
      %v738 = vld [vmem:[%s165 + $0x1180] sm:$0xff]
      %v739 = vld [vmem:[%s165 + $0x1188] sm:$0xff]
      %v740 = vld [vmem:[%s165 + $0x1190] sm:$0xff]
      %v741 = vld [vmem:[%s165 + $0x1198] sm:$0xff]
      %v742 = vld [vmem:[%s165 + $0x11a0] sm:$0xff]
      %v743 = vld [vmem:[%s165 + $0x11a8] sm:$0xff]
      %v744 = vld [vmem:[%s165 + $0x11b0] sm:$0xff]
      %v745 = vld [vmem:[%s165 + $0x11b8] sm:$0xff]
      %v746 = vld [vmem:[%s165 + $0x11c0] sm:$0xff]
      %v747 = vld [vmem:[%s165 + $0x11c8] sm:$0xff]
      %v748 = vld [vmem:[%s165 + $0x11d0] sm:$0xff]
      %v749 = vld [vmem:[%s165 + $0x11d8] sm:$0xff]
      %v750 = vld [vmem:[%s165 + $0x11e0] sm:$0xff]
      %v751 = vld [vmem:[%s165 + $0x11e8] sm:$0xff]
      %v752 = vld [vmem:[%s165 + $0x11f0] sm:$0xff]
      %v753 = vld [vmem:[%s165 + $0x11f8] sm:$0xff]
      %v754 = vld [vmem:[%s165 + $0x1200] sm:$0xff]
      %v755 = vld [vmem:[%s165 + $0x1208] sm:$0xff]
      %v756 = vld [vmem:[%s165 + $0x1210] sm:$0xff]
      %v757 = vld [vmem:[%s165 + $0x1218] sm:$0xff]
      %v758 = vld [vmem:[%s165 + $0x1220] sm:$0xff]
      %v759 = vld [vmem:[%s165 + $0x1228] sm:$0xff]
      %v760 = vld [vmem:[%s165 + $0x1230] sm:$0xff]
      %v761 = vld [vmem:[%s165 + $0x1238] sm:$0xff]
      %v762 = vld [vmem:[%s165 + $0x1240] sm:$0xff]
      %v763 = vld [vmem:[%s165 + $0x1248] sm:$0xff]
      %v764 = vld [vmem:[%s165 + $0x1250] sm:$0xff]
      %v765 = vld [vmem:[%s165 + $0x1258] sm:$0xff]
      %v766 = vld [vmem:[%s165 + $0x1260] sm:$0xff]
      %v767 = vld [vmem:[%s165 + $0x1268] sm:$0xff]
      %v768 = vld [vmem:[%s165 + $0x1270] sm:$0xff]
      %v769 = vld [vmem:[%s165 + $0x1278] sm:$0xff]
      %v770 = vld [vmem:[%s165 + $0x1280] sm:$0xff]
      %v771 = vld [vmem:[%s165 + $0x1288] sm:$0xff]
      %v772 = vld [vmem:[%s165 + $0x1290] sm:$0xff]
      %v773 = vld [vmem:[%s165 + $0x1298] sm:$0xff]
      %v774 = vld [vmem:[%s165 + $0x12a0] sm:$0xff]
      %v775 = vld [vmem:[%s165 + $0x12a8] sm:$0xff]
      %v776 = vld [vmem:[%s165 + $0x12b0] sm:$0xff]
      %v777 = vld [vmem:[%s165 + $0x12b8] sm:$0xff]
      %v778 = vld [vmem:[%s165 + $0x12c0] sm:$0xff]
      %v779 = vld [vmem:[%s165 + $0x12c8] sm:$0xff]
      %v780 = vld [vmem:[%s165 + $0x12d0] sm:$0xff]
      %v781 = vld [vmem:[%s165 + $0x12d8] sm:$0xff]
      %v782 = vld [vmem:[%s165 + $0x12e0] sm:$0xff]
      %v783 = vld [vmem:[%s165 + $0x12e8] sm:$0xff]
      %v784 = vld [vmem:[%s165 + $0x12f0] sm:$0xff]
      %v785 = vld [vmem:[%s165 + $0x12f8] sm:$0xff]
      %v786 = vld [vmem:[%s165 + $0x1300] sm:$0xff]
      %v787 = vld [vmem:[%s165 + $0x1308] sm:$0xff]
      %v788 = vld [vmem:[%s165 + $0x1310] sm:$0xff]
      %v789 = vld [vmem:[%s165 + $0x1318] sm:$0xff]
      %v790 = vld [vmem:[%s165 + $0x1320] sm:$0xff]
      %v791 = vld [vmem:[%s165 + $0x1328] sm:$0xff]
      %v792 = vld [vmem:[%s165 + $0x1330] sm:$0xff]
      %v793 = vld [vmem:[%s165 + $0x1338] sm:$0xff]
      %v794 = vld [vmem:[%s165 + $0x1340] sm:$0xff]
      %v795 = vld [vmem:[%s165 + $0x1348] sm:$0xff]
      %v796 = vld [vmem:[%s165 + $0x1350] sm:$0xff]
      %v797 = vld [vmem:[%s165 + $0x1358] sm:$0xff]
      %v798 = vld [vmem:[%s165 + $0x1360] sm:$0xff]
      %v799 = vld [vmem:[%s165 + $0x1368] sm:$0xff]
      %v800 = vld [vmem:[%s165 + $0x1370] sm:$0xff]
      %v801 = vld [vmem:[%s165 + $0x1378] sm:$0xff]
      %v802 = vld [vmem:[%s165 + $0x1380] sm:$0xff]
      %v803 = vld [vmem:[%s165 + $0x1388] sm:$0xff]
      %v804 = vld [vmem:[%s165 + $0x1390] sm:$0xff]
      %v805 = vld [vmem:[%s165 + $0x1398] sm:$0xff]
      %v806 = vld [vmem:[%s165 + $0x13a0] sm:$0xff]
      %v807 = vld [vmem:[%s165 + $0x13a8] sm:$0xff]
      %v808 = vld [vmem:[%s165 + $0x13b0] sm:$0xff]
      %v809 = vld [vmem:[%s165 + $0x13b8] sm:$0xff]
      %v810 = vld [vmem:[%s165 + $0x13c0] sm:$0xff]
      %v811 = vld [vmem:[%s165 + $0x13c8] sm:$0xff]
      %v812 = vld [vmem:[%s165 + $0x13d0] sm:$0xff]
      %v813 = vld [vmem:[%s165 + $0x13d8] sm:$0xff]
      %v814 = vld [vmem:[%s165 + $0x13e0] sm:$0xff]
      %v815 = vld [vmem:[%s165 + $0x13e8] sm:$0xff]
      %v816 = vld [vmem:[%s165 + $0x13f0] sm:$0xff]
      %v817 = vld [vmem:[%s165 + $0x13f8] sm:$0xff]
      %v818 = vld [vmem:[%s165 + $0x1400] sm:$0xff]
      %v819 = vld [vmem:[%s165 + $0x1408] sm:$0xff]
      %v820 = vld [vmem:[%s165 + $0x1410] sm:$0xff]
      %v821 = vld [vmem:[%s165 + $0x1418] sm:$0xff]
      %v822 = vld [vmem:[%s165 + $0x1420] sm:$0xff]
      %v823 = vld [vmem:[%s165 + $0x1428] sm:$0xff]
      %v824 = vld [vmem:[%s165 + $0x1430] sm:$0xff]
      %v825 = vld [vmem:[%s165 + $0x1438] sm:$0xff]
      %v826 = vld [vmem:[%s165 + $0x1440] sm:$0xff]
      %v827 = vld [vmem:[%s165 + $0x1448] sm:$0xff]
      %v828 = vld [vmem:[%s165 + $0x1450] sm:$0xff]
      %v829 = vld [vmem:[%s165 + $0x1458] sm:$0xff]
      %v830 = vld [vmem:[%s165 + $0x1460] sm:$0xff]
      %v831 = vld [vmem:[%s165 + $0x1468] sm:$0xff]
      %v832 = vld [vmem:[%s165 + $0x1470] sm:$0xff]
      %v833 = vld [vmem:[%s165 + $0x1478] sm:$0xff]
      %v834 = vld [vmem:[%s165 + $0x1480] sm:$0xff]
      %v835 = vld [vmem:[%s165 + $0x1488] sm:$0xff]
      %v836 = vld [vmem:[%s165 + $0x1490] sm:$0xff]
      %v837 = vld [vmem:[%s165 + $0x1498] sm:$0xff]
      %v838 = vld [vmem:[%s165 + $0x14a0] sm:$0xff]
      %v839 = vld [vmem:[%s165 + $0x14a8] sm:$0xff]
      %v840 = vld [vmem:[%s165 + $0x14b0] sm:$0xff]
      %v841 = vld [vmem:[%s165 + $0x14b8] sm:$0xff]
      %v842 = vld [vmem:[%s165 + $0x14c0] sm:$0xff]
      %v843 = vld [vmem:[%s165 + $0x14c8] sm:$0xff]
      %v844 = vld [vmem:[%s165 + $0x14d0] sm:$0xff]
      %v845 = vld [vmem:[%s165 + $0x14d8] sm:$0xff]
      %v846 = vld [vmem:[%s165 + $0x14e0] sm:$0xff]
      %v847 = vld [vmem:[%s165 + $0x14e8] sm:$0xff]
      %v848 = vld [vmem:[%s165 + $0x14f0] sm:$0xff]
      %v849 = vld [vmem:[%s165 + $0x14f8] sm:$0xff]
      %v850 = vld [vmem:[%s165 + $0x1500] sm:$0xff]
      %v851 = vld [vmem:[%s165 + $0x1508] sm:$0xff]
      %v852 = vld [vmem:[%s165 + $0x1510] sm:$0xff]
      %v853 = vld [vmem:[%s165 + $0x1518] sm:$0xff]
      %v854 = vld [vmem:[%s165 + $0x1520] sm:$0xff]
      %v855 = vld [vmem:[%s165 + $0x1528] sm:$0xff]
      %v856 = vld [vmem:[%s165 + $0x1530] sm:$0xff]
      %v857 = vld [vmem:[%s165 + $0x1538] sm:$0xff]
      %v858 = vld [vmem:[%s165 + $0x1540] sm:$0xff]
      %v859 = vld [vmem:[%s165 + $0x1548] sm:$0xff]
      %v860 = vld [vmem:[%s165 + $0x1550] sm:$0xff]
      %v861 = vld [vmem:[%s165 + $0x1558] sm:$0xff]
      %v862 = vld [vmem:[%s165 + $0x1560] sm:$0xff]
      %v863 = vld [vmem:[%s165 + $0x1568] sm:$0xff]
      %v864 = vld [vmem:[%s165 + $0x1570] sm:$0xff]
      %v865 = vld [vmem:[%s165 + $0x1578] sm:$0xff]
      %v866 = vld [vmem:[%s165 + $0x1580] sm:$0xff]
      %v867 = vld [vmem:[%s165 + $0x1588] sm:$0xff]
      %v868 = vld [vmem:[%s165 + $0x1590] sm:$0xff]
      %v869 = vld [vmem:[%s165 + $0x1598] sm:$0xff]
      %v870 = vld [vmem:[%s165 + $0x15a0] sm:$0xff]
      %v871 = vld [vmem:[%s165 + $0x15a8] sm:$0xff]
      %v872 = vld [vmem:[%s165 + $0x15b0] sm:$0xff]
      %v873 = vld [vmem:[%s165 + $0x15b8] sm:$0xff]
      %v874 = vld [vmem:[%s165 + $0x15c0] sm:$0xff]
      %v875 = vld [vmem:[%s165 + $0x15c8] sm:$0xff]
      %v876 = vld [vmem:[%s165 + $0x15d0] sm:$0xff]
      %v877 = vld [vmem:[%s165 + $0x15d8] sm:$0xff]
      %v878 = vld [vmem:[%s165 + $0x15e0] sm:$0xff]
      %v879 = vld [vmem:[%s165 + $0x15e8] sm:$0xff]
      %v880 = vld [vmem:[%s165 + $0x15f0] sm:$0xff]
      %v881 = vld [vmem:[%s165 + $0x15f8] sm:$0xff]
      %v882 = vld [vmem:[%s165 + $0x1600] sm:$0xff]
      %v883 = vld [vmem:[%s165 + $0x1608] sm:$0xff]
      %v884 = vld [vmem:[%s165 + $0x1610] sm:$0xff]
      %v885 = vld [vmem:[%s165 + $0x1618] sm:$0xff]
      %v886 = vld [vmem:[%s165 + $0x1620] sm:$0xff]
      %v887 = vld [vmem:[%s165 + $0x1628] sm:$0xff]
      %v888 = vld [vmem:[%s165 + $0x1630] sm:$0xff]
      %v889 = vld [vmem:[%s165 + $0x1638] sm:$0xff]
      %v890 = vld [vmem:[%s165 + $0x1640] sm:$0xff]
      %v891 = vld [vmem:[%s165 + $0x1648] sm:$0xff]
      %v892 = vld [vmem:[%s165 + $0x1650] sm:$0xff]
      %v893 = vld [vmem:[%s165 + $0x1658] sm:$0xff]
      %v894 = vld [vmem:[%s165 + $0x1660] sm:$0xff]
      %v895 = vld [vmem:[%s165 + $0x1668] sm:$0xff]
      %v896 = vld [vmem:[%s165 + $0x1670] sm:$0xff]
      %v897 = vld [vmem:[%s165 + $0x1678] sm:$0xff]
      %v898 = vld [vmem:[%s165 + $0x1680] sm:$0xff]
      %v899 = vld [vmem:[%s165 + $0x1688] sm:$0xff]
      %v900 = vld [vmem:[%s165 + $0x1690] sm:$0xff]
      %v901 = vld [vmem:[%s165 + $0x1698] sm:$0xff]
      %v902 = vld [vmem:[%s165 + $0x16a0] sm:$0xff]
      %v903 = vld [vmem:[%s165 + $0x16a8] sm:$0xff]
      %v904 = vld [vmem:[%s165 + $0x16b0] sm:$0xff]
      %v905 = vld [vmem:[%s165 + $0x16b8] sm:$0xff]
      %v906 = vld [vmem:[%s165 + $0x16c0] sm:$0xff]
      %v907 = vld [vmem:[%s165 + $0x16c8] sm:$0xff]
      %v908 = vld [vmem:[%s165 + $0x16d0] sm:$0xff]
      %v909 = vld [vmem:[%s165 + $0x16d8] sm:$0xff]
      %v910 = vld [vmem:[%s165 + $0x16e0] sm:$0xff]
      %v911 = vld [vmem:[%s165 + $0x16e8] sm:$0xff]
      %v912 = vld [vmem:[%s165 + $0x16f0] sm:$0xff]
      %v913 = vld [vmem:[%s165 + $0x16f8] sm:$0xff]
      %v914 = vld [vmem:[%s165 + $0x1700] sm:$0xff]
      %v915 = vld [vmem:[%s165 + $0x1708] sm:$0xff]
      %v916 = vld [vmem:[%s165 + $0x1710] sm:$0xff]
      %v917 = vld [vmem:[%s165 + $0x1718] sm:$0xff]
      %v918 = vld [vmem:[%s165 + $0x1720] sm:$0xff]
      %v919 = vld [vmem:[%s165 + $0x1728] sm:$0xff]
      %v920 = vld [vmem:[%s165 + $0x1730] sm:$0xff]
      %v921 = vld [vmem:[%s165 + $0x1738] sm:$0xff]
      %v922 = vld [vmem:[%s165 + $0x1740] sm:$0xff]
      %v923 = vld [vmem:[%s165 + $0x1748] sm:$0xff]
      %v924 = vld [vmem:[%s165 + $0x1750] sm:$0xff]
      %v925 = vld [vmem:[%s165 + $0x1758] sm:$0xff]
      %v926 = vld [vmem:[%s165 + $0x1760] sm:$0xff]
      %v927 = vld [vmem:[%s165 + $0x1768] sm:$0xff]
      %v928 = vld [vmem:[%s165 + $0x1770] sm:$0xff]
      %v929 = vld [vmem:[%s165 + $0x1778] sm:$0xff]
      %v930 = vld [vmem:[%s165 + $0x1780] sm:$0xff]
      %v931 = vld [vmem:[%s165 + $0x1788] sm:$0xff]
      %v932 = vld [vmem:[%s165 + $0x1790] sm:$0xff]
      %v933 = vld [vmem:[%s165 + $0x1798] sm:$0xff]
      %v934 = vld [vmem:[%s165 + $0x17a0] sm:$0xff]
      %v935 = vld [vmem:[%s165 + $0x17a8] sm:$0xff]
      %v936 = vld [vmem:[%s165 + $0x17b0] sm:$0xff]
      %v937 = vld [vmem:[%s165 + $0x17b8] sm:$0xff]
      %v938 = vld [vmem:[%s165 + $0x17c0] sm:$0xff]
      %v939 = vld [vmem:[%s165 + $0x17c8] sm:$0xff]
      %v940 = vld [vmem:[%s165 + $0x17d0] sm:$0xff]
      %v941 = vld [vmem:[%s165 + $0x17d8] sm:$0xff]
      %v942 = vld [vmem:[%s165 + $0x17e0] sm:$0xff]
      %v943 = vld [vmem:[%s165 + $0x17e8] sm:$0xff]
      %v944 = vld [vmem:[%s165 + $0x17f0] sm:$0xff]
      %v945 = vld [vmem:[%s165 + $0x17f8] sm:$0xff]
      %v946 = vld [vmem:[%s165 + $0x1800] sm:$0xff]
      %v947 = vld [vmem:[%s165 + $0x1808] sm:$0xff]
      %v948 = vld [vmem:[%s165 + $0x1810] sm:$0xff]
      %v949 = vld [vmem:[%s165 + $0x1818] sm:$0xff]
      %v950 = vld [vmem:[%s165 + $0x1820] sm:$0xff]
      %v951 = vld [vmem:[%s165 + $0x1828] sm:$0xff]
      %v952 = vld [vmem:[%s165 + $0x1830] sm:$0xff]
      %v953 = vld [vmem:[%s165 + $0x1838] sm:$0xff]
      %v954 = vld [vmem:[%s165 + $0x1840] sm:$0xff]
      %v955 = vld [vmem:[%s165 + $0x1848] sm:$0xff]
      %v956 = vld [vmem:[%s165 + $0x1850] sm:$0xff]
      %v957 = vld [vmem:[%s165 + $0x1858] sm:$0xff]
      %v958 = vld [vmem:[%s165 + $0x1860] sm:$0xff]
      %v959 = vld [vmem:[%s165 + $0x1868] sm:$0xff]
      %v960 = vld [vmem:[%s165 + $0x1870] sm:$0xff]
      %v961 = vld [vmem:[%s165 + $0x1878] sm:$0xff]
      %v962 = vld [vmem:[%s165 + $0x1880] sm:$0xff]
      %v963 = vld [vmem:[%s165 + $0x1888] sm:$0xff]
      %v964 = vld [vmem:[%s165 + $0x1890] sm:$0xff]
      %v965 = vld [vmem:[%s165 + $0x1898] sm:$0xff]
      %v966 = vld [vmem:[%s165 + $0x18a0] sm:$0xff]
      %v967 = vld [vmem:[%s165 + $0x18a8] sm:$0xff]
      %v968 = vld [vmem:[%s165 + $0x18b0] sm:$0xff]
      %v969 = vld [vmem:[%s165 + $0x18b8] sm:$0xff]
      %v970 = vld [vmem:[%s165 + $0x18c0] sm:$0xff]
      %v971 = vld [vmem:[%s165 + $0x18c8] sm:$0xff]
      %v972 = vld [vmem:[%s165 + $0x18d0] sm:$0xff]
      %v973 = vld [vmem:[%s165 + $0x18d8] sm:$0xff]
      %v974 = vld [vmem:[%s165 + $0x18e0] sm:$0xff]
      %v975 = vld [vmem:[%s165 + $0x18e8] sm:$0xff]
      %v976 = vld [vmem:[%s165 + $0x18f0] sm:$0xff]
      %v977 = vld [vmem:[%s165 + $0x18f8] sm:$0xff]
      %v978 = vld [vmem:[%s165 + $0x1900] sm:$0xff]
      %v979 = vld [vmem:[%s165 + $0x1908] sm:$0xff]
      %v980 = vld [vmem:[%s165 + $0x1910] sm:$0xff]
      %v981 = vld [vmem:[%s165 + $0x1918] sm:$0xff]
      %v982 = vld [vmem:[%s165 + $0x1920] sm:$0xff]
      %v983 = vld [vmem:[%s165 + $0x1928] sm:$0xff]
      %v984 = vld [vmem:[%s165 + $0x1930] sm:$0xff]
      %v985 = vld [vmem:[%s165 + $0x1938] sm:$0xff]
      %v986 = vld [vmem:[%s165 + $0x1940] sm:$0xff]
      %v987 = vld [vmem:[%s165 + $0x1948] sm:$0xff]
      %v988 = vld [vmem:[%s165 + $0x1950] sm:$0xff]
      %v989 = vld [vmem:[%s165 + $0x1958] sm:$0xff]
      %v990 = vld [vmem:[%s165 + $0x1960] sm:$0xff]
      %v991 = vld [vmem:[%s165 + $0x1968] sm:$0xff]
      %v992 = vld [vmem:[%s165 + $0x1970] sm:$0xff]
      %v993 = vld [vmem:[%s165 + $0x1978] sm:$0xff]
      %v994 = vld [vmem:[%s165 + $0x1980] sm:$0xff]
      %v995 = vld [vmem:[%s165 + $0x1988] sm:$0xff]
      %v996 = vld [vmem:[%s165 + $0x1990] sm:$0xff]
      %v997 = vld [vmem:[%s165 + $0x1998] sm:$0xff]
      %v998 = vld [vmem:[%s165 + $0x19a0] sm:$0xff]
      %v999 = vld [vmem:[%s165 + $0x19a8] sm:$0xff]
      %v1000 = vld [vmem:[%s165 + $0x19b0] sm:$0xff]
      %v1001 = vld [vmem:[%s165 + $0x19b8] sm:$0xff]
      %v1002 = vld [vmem:[%s165 + $0x19c0] sm:$0xff]
      %v1003 = vld [vmem:[%s165 + $0x19c8] sm:$0xff]
      %v1004 = vld [vmem:[%s165 + $0x19d0] sm:$0xff]
      %v1005 = vld [vmem:[%s165 + $0x19d8] sm:$0xff]
      %v1006 = vld [vmem:[%s165 + $0x19e0] sm:$0xff]
      %v1007 = vld [vmem:[%s165 + $0x19e8] sm:$0xff]
      %v1008 = vld [vmem:[%s165 + $0x19f0] sm:$0xff]
      %v1009 = vld [vmem:[%s165 + $0x19f8] sm:$0xff]
      %v1010 = vld [vmem:[%s165 + $0x1a00] sm:$0xff]
      %v1011 = vld [vmem:[%s165 + $0x1a08] sm:$0xff]
      %v1012 = vld [vmem:[%s165 + $0x1a10] sm:$0xff]
      %v1013 = vld [vmem:[%s165 + $0x1a18] sm:$0xff]
      %v1014 = vld [vmem:[%s165 + $0x1a20] sm:$0xff]
      %v1015 = vld [vmem:[%s165 + $0x1a28] sm:$0xff]
      %v1016 = vld [vmem:[%s165 + $0x1a30] sm:$0xff]
      %v1017 = vld [vmem:[%s165 + $0x1a38] sm:$0xff]
      %v1018 = vld [vmem:[%s165 + $0x1a40] sm:$0xff]
      %v1019 = vld [vmem:[%s165 + $0x1a48] sm:$0xff]
      %v1020 = vld [vmem:[%s165 + $0x1a50] sm:$0xff]
      %v1021 = vld [vmem:[%s165 + $0x1a58] sm:$0xff]
      %v1022 = vld [vmem:[%s165 + $0x1a60] sm:$0xff]
      %v1023 = vld [vmem:[%s165 + $0x1a68] sm:$0xff]
      %v1024 = vld [vmem:[%s165 + $0x1a70] sm:$0xff]
      %v1025 = vld [vmem:[%s165 + $0x1a78] sm:$0xff]
      %v1026 = vld [vmem:[%s165 + $0x1a80] sm:$0xff]
      %v1027 = vld [vmem:[%s165 + $0x1a88] sm:$0xff]
      %v1028 = vld [vmem:[%s165 + $0x1a90] sm:$0xff]
      %v1029 = vld [vmem:[%s165 + $0x1a98] sm:$0xff]
      %v1030 = vld [vmem:[%s165 + $0x1aa0] sm:$0xff]
      %v1031 = vld [vmem:[%s165 + $0x1aa8] sm:$0xff]
      %v1032 = vld [vmem:[%s165 + $0x1ab0] sm:$0xff]
      %v1033 = vld [vmem:[%s165 + $0x1ab8] sm:$0xff]
      %v1034 = vld [vmem:[%s165 + $0x1ac0] sm:$0xff]
      %v1035 = vld [vmem:[%s165 + $0x1ac8] sm:$0xff]
      %v1036 = vld [vmem:[%s165 + $0x1ad0] sm:$0xff]
      %v1037 = vld [vmem:[%s165 + $0x1ad8] sm:$0xff]
      %v1038 = vld [vmem:[%s165 + $0x1ae0] sm:$0xff]
      %v1039 = vld [vmem:[%s165 + $0x1ae8] sm:$0xff]
      %v1040 = vld [vmem:[%s165 + $0x1af0] sm:$0xff]
      %v1041 = vld [vmem:[%s165 + $0x1af8] sm:$0xff]
      %v1042 = vld [vmem:[%s165 + $0x1b00] sm:$0xff]
      %v1043 = vld [vmem:[%s165 + $0x1b08] sm:$0xff]
      %v1044 = vld [vmem:[%s165 + $0x1b10] sm:$0xff]
      %v1045 = vld [vmem:[%s165 + $0x1b18] sm:$0xff]
      %v1046 = vld [vmem:[%s165 + $0x1b20] sm:$0xff]
      %v1047 = vld [vmem:[%s165 + $0x1b28] sm:$0xff]
      %v1048 = vld [vmem:[%s165 + $0x1b30] sm:$0xff]
      %v1049 = vld [vmem:[%s165 + $0x1b38] sm:$0xff]
      %v1050 = vld [vmem:[%s165 + $0x1b40] sm:$0xff]
      %v1051 = vld [vmem:[%s165 + $0x1b48] sm:$0xff]
      %v1052 = vld [vmem:[%s165 + $0x1b50] sm:$0xff]
      %v1053 = vld [vmem:[%s165 + $0x1b58] sm:$0xff]
      %v1054 = vld [vmem:[%s165 + $0x1b60] sm:$0xff]
      %v1055 = vld [vmem:[%s165 + $0x1b68] sm:$0xff]
      %v1056 = vld [vmem:[%s165 + $0x1b70] sm:$0xff]
      %v1057 = vld [vmem:[%s165 + $0x1b78] sm:$0xff]
      %v1058 = vld [vmem:[%s165 + $0x1b80] sm:$0xff]
      %v1059 = vld [vmem:[%s165 + $0x1b88] sm:$0xff]
      %v1060 = vld [vmem:[%s165 + $0x1b90] sm:$0xff]
      %v1061 = vld [vmem:[%s165 + $0x1b98] sm:$0xff]
      %v1062 = vld [vmem:[%s165 + $0x1ba0] sm:$0xff]
      %v1063 = vld [vmem:[%s165 + $0x1ba8] sm:$0xff]
      %v1064 = vld [vmem:[%s165 + $0x1bb0] sm:$0xff]
      %v1065 = vld [vmem:[%s165 + $0x1bb8] sm:$0xff]
      %v1066 = vld [vmem:[%s165 + $0x1bc0] sm:$0xff]
      %v1067 = vld [vmem:[%s165 + $0x1bc8] sm:$0xff]
      %v1068 = vld [vmem:[%s165 + $0x1bd0] sm:$0xff]
      %v1069 = vld [vmem:[%s165 + $0x1bd8] sm:$0xff]
      %v1070 = vld [vmem:[%s165 + $0x1be0] sm:$0xff]
      %v1071 = vld [vmem:[%s165 + $0x1be8] sm:$0xff]
      %v1072 = vld [vmem:[%s165 + $0x1bf0] sm:$0xff]
      %v1073 = vld [vmem:[%s165 + $0x1bf8] sm:$0xff]
      %v1074 = vld [vmem:[%s165 + $0x1c00] sm:$0xff]
      %v1075 = vld [vmem:[%s165 + $0x1c08] sm:$0xff]
      %v1076 = vld [vmem:[%s165 + $0x1c10] sm:$0xff]
      %v1077 = vld [vmem:[%s165 + $0x1c18] sm:$0xff]
      %v1078 = vld [vmem:[%s165 + $0x1c20] sm:$0xff]
      %v1079 = vld [vmem:[%s165 + $0x1c28] sm:$0xff]
      %v1080 = vld [vmem:[%s165 + $0x1c30] sm:$0xff]
      %v1081 = vld [vmem:[%s165 + $0x1c38] sm:$0xff]
      %v1082 = vld [vmem:[%s165 + $0x1c40] sm:$0xff]
      %v1083 = vld [vmem:[%s165 + $0x1c48] sm:$0xff]
      %v1084 = vld [vmem:[%s165 + $0x1c50] sm:$0xff]
      %v1085 = vld [vmem:[%s165 + $0x1c58] sm:$0xff]
      %v1086 = vld [vmem:[%s165 + $0x1c60] sm:$0xff]
      %v1087 = vld [vmem:[%s165 + $0x1c68] sm:$0xff]
      %v1088 = vld [vmem:[%s165 + $0x1c70] sm:$0xff]
      %v1089 = vld [vmem:[%s165 + $0x1c78] sm:$0xff]
      %v1090 = vld [vmem:[%s165 + $0x1c80] sm:$0xff]
      %v1091 = vld [vmem:[%s165 + $0x1c88] sm:$0xff]
      %v1092 = vld [vmem:[%s165 + $0x1c90] sm:$0xff]
      %v1093 = vld [vmem:[%s165 + $0x1c98] sm:$0xff]
      %v1094 = vld [vmem:[%s165 + $0x1ca0] sm:$0xff]
      %v1095 = vld [vmem:[%s165 + $0x1ca8] sm:$0xff]
      %v1096 = vld [vmem:[%s165 + $0x1cb0] sm:$0xff]
      %v1097 = vld [vmem:[%s165 + $0x1cb8] sm:$0xff]
      %v1098 = vld [vmem:[%s165 + $0x1cc0] sm:$0xff]
      %v1099 = vld [vmem:[%s165 + $0x1cc8] sm:$0xff]
      %v1100 = vld [vmem:[%s165 + $0x1cd0] sm:$0xff]
      %v1101 = vld [vmem:[%s165 + $0x1cd8] sm:$0xff]
      %v1102 = vld [vmem:[%s165 + $0x1ce0] sm:$0xff]
      %v1103 = vld [vmem:[%s165 + $0x1ce8] sm:$0xff]
      %v1104 = vld [vmem:[%s165 + $0x1cf0] sm:$0xff]
      %v1105 = vld [vmem:[%s165 + $0x1cf8] sm:$0xff]
      %v1106 = vld [vmem:[%s165 + $0x1d00] sm:$0xff]
      %v1107 = vld [vmem:[%s165 + $0x1d08] sm:$0xff]
      %v1108 = vld [vmem:[%s165 + $0x1d10] sm:$0xff]
      %v1109 = vld [vmem:[%s165 + $0x1d18] sm:$0xff]
      %v1110 = vld [vmem:[%s165 + $0x1d20] sm:$0xff]
      %v1111 = vld [vmem:[%s165 + $0x1d28] sm:$0xff]
      %v1112 = vld [vmem:[%s165 + $0x1d30] sm:$0xff]
      %v1113 = vld [vmem:[%s165 + $0x1d38] sm:$0xff]
      %v1114 = vld [vmem:[%s165 + $0x1d40] sm:$0xff]
      %v1115 = vld [vmem:[%s165 + $0x1d48] sm:$0xff]
      %v1116 = vld [vmem:[%s165 + $0x1d50] sm:$0xff]
      %v1117 = vld [vmem:[%s165 + $0x1d58] sm:$0xff]
      %v1118 = vld [vmem:[%s165 + $0x1d60] sm:$0xff]
      %v1119 = vld [vmem:[%s165 + $0x1d68] sm:$0xff]
      %v1120 = vld [vmem:[%s165 + $0x1d70] sm:$0xff]
      %v1121 = vld [vmem:[%s165 + $0x1d78] sm:$0xff]
      %v1122 = vld [vmem:[%s165 + $0x1d80] sm:$0xff]
      %v1123 = vld [vmem:[%s165 + $0x1d88] sm:$0xff]
      %v1124 = vld [vmem:[%s165 + $0x1d90] sm:$0xff]
      %v1125 = vld [vmem:[%s165 + $0x1d98] sm:$0xff]
      %v1126 = vld [vmem:[%s165 + $0x1da0] sm:$0xff]
      %v1127 = vld [vmem:[%s165 + $0x1da8] sm:$0xff]
      %v1128 = vld [vmem:[%s165 + $0x1db0] sm:$0xff]
      %v1129 = vld [vmem:[%s165 + $0x1db8] sm:$0xff]
      %v1130 = vld [vmem:[%s165 + $0x1dc0] sm:$0xff]
      %v1131 = vld [vmem:[%s165 + $0x1dc8] sm:$0xff]
      %v1132 = vld [vmem:[%s165 + $0x1dd0] sm:$0xff]
      %v1133 = vld [vmem:[%s165 + $0x1dd8] sm:$0xff]
      %v1134 = vld [vmem:[%s165 + $0x1de0] sm:$0xff]
      %v1135 = vld [vmem:[%s165 + $0x1de8] sm:$0xff]
      %v1136 = vld [vmem:[%s165 + $0x1df0] sm:$0xff]
      %v1137 = vld [vmem:[%s165 + $0x1df8] sm:$0xff]
      %v1138 = vld [vmem:[%s165 + $0x1e00] sm:$0xff]
      %v1139 = vld [vmem:[%s165 + $0x1e08] sm:$0xff]
      %v1140 = vld [vmem:[%s165 + $0x1e10] sm:$0xff]
      %v1141 = vld [vmem:[%s165 + $0x1e18] sm:$0xff]
      %v1142 = vld [vmem:[%s165 + $0x1e20] sm:$0xff]
      %v1143 = vld [vmem:[%s165 + $0x1e28] sm:$0xff]
      %v1144 = vld [vmem:[%s165 + $0x1e30] sm:$0xff]
      %v1145 = vld [vmem:[%s165 + $0x1e38] sm:$0xff]
      %v1146 = vld [vmem:[%s165 + $0x1e40] sm:$0xff]
      %v1147 = vld [vmem:[%s165 + $0x1e48] sm:$0xff]
      %v1148 = vld [vmem:[%s165 + $0x1e50] sm:$0xff]
      %v1149 = vld [vmem:[%s165 + $0x1e58] sm:$0xff]
      %v1150 = vld [vmem:[%s165 + $0x1e60] sm:$0xff]
      %v1151 = vld [vmem:[%s165 + $0x1e68] sm:$0xff]
      %v1152 = vld [vmem:[%s165 + $0x1e70] sm:$0xff]
      %v1153 = vld [vmem:[%s165 + $0x1e78] sm:$0xff]
      %v1154 = vld [vmem:[%s165 + $0x1e80] sm:$0xff]
      %v1155 = vld [vmem:[%s165 + $0x1e88] sm:$0xff]
      %v1156 = vld [vmem:[%s165 + $0x1e90] sm:$0xff]
      %v1157 = vld [vmem:[%s165 + $0x1e98] sm:$0xff]
      %v1158 = vld [vmem:[%s165 + $0x1ea0] sm:$0xff]
      %v1159 = vld [vmem:[%s165 + $0x1ea8] sm:$0xff]
      %v1160 = vld [vmem:[%s165 + $0x1eb0] sm:$0xff]
      %v1161 = vld [vmem:[%s165 + $0x1eb8] sm:$0xff]
      %v1162 = vld [vmem:[%s165 + $0x1ec0] sm:$0xff]
      %v1163 = vld [vmem:[%s165 + $0x1ec8] sm:$0xff]
      %v1164 = vld [vmem:[%s165 + $0x1ed0] sm:$0xff]
      %v1165 = vld [vmem:[%s165 + $0x1ed8] sm:$0xff]
      %v1166 = vld [vmem:[%s165 + $0x1ee0] sm:$0xff]
      %v1167 = vld [vmem:[%s165 + $0x1ee8] sm:$0xff]
      %v1168 = vld [vmem:[%s165 + $0x1ef0] sm:$0xff]
      %v1169 = vld [vmem:[%s165 + $0x1ef8] sm:$0xff]
      %v1170 = vld [vmem:[%s165 + $0x1f00] sm:$0xff]
      %v1171 = vld [vmem:[%s165 + $0x1f08] sm:$0xff]
      %v1172 = vld [vmem:[%s165 + $0x1f10] sm:$0xff]
      %v1173 = vld [vmem:[%s165 + $0x1f18] sm:$0xff]
      %v1174 = vld [vmem:[%s165 + $0x1f20] sm:$0xff]
      %v1175 = vld [vmem:[%s165 + $0x1f28] sm:$0xff]
      %v1176 = vld [vmem:[%s165 + $0x1f30] sm:$0xff]
      %v1177 = vld [vmem:[%s165 + $0x1f38] sm:$0xff]
      %v1178 = vld [vmem:[%s165 + $0x1f40] sm:$0xff]
      %v1179 = vld [vmem:[%s165 + $0x1f48] sm:$0xff]
      %v1180 = vld [vmem:[%s165 + $0x1f50] sm:$0xff]
      %v1181 = vld [vmem:[%s165 + $0x1f58] sm:$0xff]
      %v1182 = vld [vmem:[%s165 + $0x1f60] sm:$0xff]
      %v1183 = vld [vmem:[%s165 + $0x1f68] sm:$0xff]
      %v1184 = vld [vmem:[%s165 + $0x1f70] sm:$0xff]
      %v1185 = vld [vmem:[%s165 + $0x1f78] sm:$0xff]
      %v1186 = vld [vmem:[%s2] sm:$0xff]
      %v1187 = vld [vmem:[%s2 + $0x8] sm:$0xff]
      %1189 = vset.pattern.permute.xlu0 0
      %1190 = vperm.xlu0 %1189, %v1186
      %v1191 = vpop.permute.xlu0 %1190
      %1194 = vset.pattern.permute.xlu0 0
      %1195 = vperm.xlu0 %1194, %v1187
      %v1196 = vpop.permute.xlu0 %1195
      %v1204 = vunpack.c.l.b16 %v172
      %v1205 = vunpack.c.h.b16 %v172
      %v1206 = vunpack.c.l.b16 %v173
      %v1207 = vunpack.c.h.b16 %v173
      %v1208 = vunpack.c.l.b16 %v174
      %v1209 = vunpack.c.l.b16 %v175
      %v1210 = vunpack.c.h.b16 %v175
      %v1211 = vunpack.c.l.b16 %v176
      %v1212 = vunpack.c.h.b16 %v176
      %v1213 = vunpack.c.l.b16 %v177
      %v1214 = vpack.c.b16 %v1209, %v1204
      %v1215 = vpack.c.b16 %v1210, %v1205
      %v1216 = vpack.c.b16 %v1211, %v1206
      %v1217 = vpack.c.b16 %v1212, %v1207
      %v1218 = vpack.c.b16 %v1213, %v1208
      %v2231 = vunpack.c.l.b16 %v178
      %v2232 = vunpack.c.h.b16 %v178
      %v2233 = vunpack.c.l.b16 %v179
      %v2234 = vunpack.c.h.b16 %v179
      %v2235 = vunpack.c.l.b16 %v180
      %v2236 = vunpack.c.h.b16 %v180
      %v2237 = vunpack.c.l.b16 %v181
      %v2238 = vunpack.c.h.b16 %v181
      %v2239 = vunpack.c.l.b16 %v182
      %v2240 = vunpack.c.h.b16 %v182
      %v2241 = vunpack.c.l.b16 %v183
      %v2242 = vunpack.c.h.b16 %v183
      %v2243 = vunpack.c.l.b16 %v184
      %v2244 = vunpack.c.h.b16 %v184
      %v2245 = vunpack.c.l.b16 %v185
      %v2246 = vunpack.c.h.b16 %v185
      %v2247 = vunpack.c.l.b16 %v186
      %v2248 = vunpack.c.h.b16 %v186
      %v2249 = vunpack.c.l.b16 %v187
      %v2250 = vunpack.c.h.b16 %v187
      %v2251 = vunpack.c.l.b16 %v188
      %v2252 = vunpack.c.h.b16 %v188
      %v2253 = vunpack.c.l.b16 %v189
      %v2254 = vunpack.c.h.b16 %v189
      %v2255 = vunpack.c.l.b16 %v190
      %v2256 = vunpack.c.h.b16 %v190
      %v2257 = vunpack.c.l.b16 %v191
      %v2258 = vunpack.c.h.b16 %v191
      %v2259 = vunpack.c.l.b16 %v192
      %v2260 = vunpack.c.h.b16 %v192
      %v2261 = vunpack.c.l.b16 %v193
      %v2262 = vunpack.c.h.b16 %v193
      %v2263 = vunpack.c.l.b16 %v194
      %v2264 = vunpack.c.h.b16 %v194
      %v2265 = vunpack.c.l.b16 %v195
      %v2266 = vunpack.c.h.b16 %v195
      %v2267 = vunpack.c.l.b16 %v196
      %v2268 = vunpack.c.h.b16 %v196
      %v2269 = vunpack.c.l.b16 %v197
      %v2270 = vunpack.c.h.b16 %v197
      %v2271 = vunpack.c.l.b16 %v198
      %v2272 = vunpack.c.h.b16 %v198
      %v2273 = vunpack.c.l.b16 %v199
      %v2274 = vunpack.c.h.b16 %v199
      %v2275 = vunpack.c.l.b16 %v200
      %v2276 = vunpack.c.h.b16 %v200
      %v2277 = vunpack.c.l.b16 %v201
      %v2278 = vunpack.c.h.b16 %v201
      %v2279 = vunpack.c.l.b16 %v202
      %v2280 = vunpack.c.h.b16 %v202
      %v2281 = vunpack.c.l.b16 %v203
      %v2282 = vunpack.c.h.b16 %v203
      %v2283 = vunpack.c.l.b16 %v204
      %v2284 = vunpack.c.h.b16 %v204
      %v2285 = vunpack.c.l.b16 %v205
      %v2286 = vunpack.c.h.b16 %v205
      %v2287 = vunpack.c.l.b16 %v206
      %v2288 = vunpack.c.h.b16 %v206
      %v2289 = vunpack.c.l.b16 %v207
      %v2290 = vunpack.c.h.b16 %v207
      %v2291 = vunpack.c.l.b16 %v208
      %v2292 = vunpack.c.h.b16 %v208
      %v2293 = vunpack.c.l.b16 %v209
      %v2294 = vunpack.c.h.b16 %v209
      %v2295 = vunpack.c.l.b16 %v210
      %v2296 = vunpack.c.h.b16 %v210
      %v2297 = vunpack.c.l.b16 %v211
      %v2298 = vunpack.c.h.b16 %v211
      %v2299 = vunpack.c.l.b16 %v212
      %v2300 = vunpack.c.h.b16 %v212
      %v2301 = vunpack.c.l.b16 %v213
      %v2302 = vunpack.c.h.b16 %v213
      %v2303 = vunpack.c.l.b16 %v214
      %v2304 = vunpack.c.h.b16 %v214
      %v2305 = vunpack.c.l.b16 %v215
      %v2306 = vunpack.c.h.b16 %v215
      %v2307 = vunpack.c.l.b16 %v216
      %v2308 = vunpack.c.h.b16 %v216
      %v2309 = vunpack.c.l.b16 %v217
      %v2310 = vunpack.c.h.b16 %v217
      %v2311 = vunpack.c.l.b16 %v218
      %v2312 = vunpack.c.h.b16 %v218
      %v2313 = vunpack.c.l.b16 %v219
      %v2314 = vunpack.c.h.b16 %v219
      %v2315 = vunpack.c.l.b16 %v220
      %v2316 = vunpack.c.h.b16 %v220
      %v2317 = vunpack.c.l.b16 %v221
      %v2318 = vunpack.c.h.b16 %v221
      %v2319 = vunpack.c.l.b16 %v222
      %v2320 = vunpack.c.h.b16 %v222
      %v2321 = vunpack.c.l.b16 %v223
      %v2322 = vunpack.c.h.b16 %v223
      %v2323 = vunpack.c.l.b16 %v224
      %v2324 = vunpack.c.h.b16 %v224
      %v2325 = vunpack.c.l.b16 %v225
      %v2326 = vunpack.c.h.b16 %v225
      %v2327 = vunpack.c.l.b16 %v226
      %v2328 = vunpack.c.h.b16 %v226
      %v2329 = vunpack.c.l.b16 %v227
      %v2330 = vunpack.c.h.b16 %v227
      %v2331 = vunpack.c.l.b16 %v228
      %v2332 = vunpack.c.h.b16 %v228
      %v2333 = vunpack.c.l.b16 %v229
      %v2334 = vunpack.c.h.b16 %v229
      %v2335 = vunpack.c.l.b16 %v230
      %v2336 = vunpack.c.h.b16 %v230
      %v2337 = vunpack.c.l.b16 %v231
      %v2338 = vunpack.c.h.b16 %v231
      %v2339 = vunpack.c.l.b16 %v232
      %v2340 = vunpack.c.h.b16 %v232
      %v2341 = vunpack.c.l.b16 %v233
      %v2342 = vunpack.c.h.b16 %v233
      %v2343 = vunpack.c.l.b16 %v234
      %v2344 = vunpack.c.h.b16 %v234
      %v2345 = vunpack.c.l.b16 %v235
      %v2346 = vunpack.c.h.b16 %v235
      %v2347 = vunpack.c.l.b16 %v236
      %v2348 = vunpack.c.h.b16 %v236
      %v2349 = vunpack.c.l.b16 %v237
      %v2350 = vunpack.c.h.b16 %v237
      %v2351 = vunpack.c.l.b16 %v238
      %v2352 = vunpack.c.h.b16 %v238
      %v2353 = vunpack.c.l.b16 %v239
      %v2354 = vunpack.c.h.b16 %v239
      %v2355 = vunpack.c.l.b16 %v240
      %v2356 = vunpack.c.h.b16 %v240
      %v2357 = vunpack.c.l.b16 %v241
      %v2358 = vunpack.c.h.b16 %v241
      %v2359 = vunpack.c.l.b16 %v242
      %v2360 = vunpack.c.h.b16 %v242
      %v2361 = vunpack.c.l.b16 %v243
      %v2362 = vunpack.c.h.b16 %v243
      %v2363 = vunpack.c.l.b16 %v244
      %v2364 = vunpack.c.h.b16 %v244
      %v2365 = vunpack.c.l.b16 %v245
      %v2366 = vunpack.c.h.b16 %v245
      %v2367 = vunpack.c.l.b16 %v246
      %v2368 = vunpack.c.h.b16 %v246
      %v2369 = vunpack.c.l.b16 %v247
      %v2370 = vunpack.c.h.b16 %v247
      %v2371 = vunpack.c.l.b16 %v248
      %v2372 = vunpack.c.h.b16 %v248
      %v2373 = vunpack.c.l.b16 %v249
      %v2374 = vunpack.c.h.b16 %v249
      %v2375 = vunpack.c.l.b16 %v250
      %v2376 = vunpack.c.h.b16 %v250
      %v2377 = vunpack.c.l.b16 %v251
      %v2378 = vunpack.c.h.b16 %v251
      %v2379 = vunpack.c.l.b16 %v252
      %v2380 = vunpack.c.h.b16 %v252
      %v2381 = vunpack.c.l.b16 %v253
      %v2382 = vunpack.c.h.b16 %v253
      %v2383 = vunpack.c.l.b16 %v254
      %v2384 = vunpack.c.h.b16 %v254
      %v2385 = vunpack.c.l.b16 %v255
      %v2386 = vunpack.c.h.b16 %v255
      %v2387 = vunpack.c.l.b16 %v256
      %v2388 = vunpack.c.h.b16 %v256
      %v2389 = vunpack.c.l.b16 %v257
      %v2390 = vunpack.c.h.b16 %v257
      %v2391 = vunpack.c.l.b16 %v258
      %v2392 = vunpack.c.h.b16 %v258
      %v2393 = vunpack.c.l.b16 %v259
      %v2394 = vunpack.c.h.b16 %v259
      %v2395 = vunpack.c.l.b16 %v260
      %v2396 = vunpack.c.h.b16 %v260
      %v2397 = vunpack.c.l.b16 %v261
      %v2398 = vunpack.c.h.b16 %v261
      %v2399 = vunpack.c.l.b16 %v262
      %v2400 = vunpack.c.h.b16 %v262
      %v2401 = vunpack.c.l.b16 %v263
      %v2402 = vunpack.c.h.b16 %v263
      %v2403 = vunpack.c.l.b16 %v264
      %v2404 = vunpack.c.h.b16 %v264
      %v2405 = vunpack.c.l.b16 %v265
      %v2406 = vunpack.c.h.b16 %v265
      %v2407 = vunpack.c.l.b16 %v266
      %v2408 = vunpack.c.h.b16 %v266
      %v2409 = vunpack.c.l.b16 %v267
      %v2410 = vunpack.c.h.b16 %v267
      %v2411 = vunpack.c.l.b16 %v268
      %v2412 = vunpack.c.h.b16 %v268
      %v2413 = vunpack.c.l.b16 %v269
      %v2414 = vunpack.c.h.b16 %v269
      %v2415 = vunpack.c.l.b16 %v270
      %v2416 = vunpack.c.h.b16 %v270
      %v2417 = vunpack.c.l.b16 %v271
      %v2418 = vunpack.c.h.b16 %v271
      %v2419 = vunpack.c.l.b16 %v272
      %v2420 = vunpack.c.h.b16 %v272
      %v2421 = vunpack.c.l.b16 %v273
      %v2422 = vunpack.c.h.b16 %v273
      %v2423 = vunpack.c.l.b16 %v274
      %v2424 = vunpack.c.h.b16 %v274
      %v2425 = vunpack.c.l.b16 %v275
      %v2426 = vunpack.c.h.b16 %v275
      %v2427 = vunpack.c.l.b16 %v276
      %v2428 = vunpack.c.h.b16 %v276
      %v2429 = vunpack.c.l.b16 %v277
      %v2430 = vunpack.c.h.b16 %v277
      %v2431 = vunpack.c.l.b16 %v278
      %v2432 = vunpack.c.h.b16 %v278
      %v2433 = vunpack.c.l.b16 %v279
      %v2434 = vunpack.c.h.b16 %v279
      %v2435 = vunpack.c.l.b16 %v280
      %v2436 = vunpack.c.h.b16 %v280
      %v2437 = vunpack.c.l.b16 %v281
      %v2438 = vunpack.c.h.b16 %v281
      %v2439 = vunpack.c.l.b16 %v282
      %v2440 = vunpack.c.h.b16 %v282
      %v2441 = vunpack.c.l.b16 %v283
      %v2442 = vunpack.c.h.b16 %v283
      %v2443 = vunpack.c.l.b16 %v284
      %v2444 = vunpack.c.h.b16 %v284
      %v2445 = vunpack.c.l.b16 %v285
      %v2446 = vunpack.c.h.b16 %v285
      %v2447 = vunpack.c.l.b16 %v286
      %v2448 = vunpack.c.h.b16 %v286
      %v2449 = vunpack.c.l.b16 %v287
      %v2450 = vunpack.c.h.b16 %v287
      %v2451 = vunpack.c.l.b16 %v288
      %v2452 = vunpack.c.h.b16 %v288
      %v2453 = vunpack.c.l.b16 %v289
      %v2454 = vunpack.c.h.b16 %v289
      %v2455 = vunpack.c.l.b16 %v290
      %v2456 = vunpack.c.h.b16 %v290
      %v2457 = vunpack.c.l.b16 %v291
      %v2458 = vunpack.c.h.b16 %v291
      %v2459 = vunpack.c.l.b16 %v292
      %v2460 = vunpack.c.h.b16 %v292
      %v2461 = vunpack.c.l.b16 %v293
      %v2462 = vunpack.c.h.b16 %v293
      %v2463 = vunpack.c.l.b16 %v294
      %v2464 = vunpack.c.h.b16 %v294
      %v2465 = vunpack.c.l.b16 %v295
      %v2466 = vunpack.c.h.b16 %v295
      %v2467 = vunpack.c.l.b16 %v296
      %v2468 = vunpack.c.h.b16 %v296
      %v2469 = vunpack.c.l.b16 %v297
      %v2470 = vunpack.c.h.b16 %v297
      %v2471 = vunpack.c.l.b16 %v298
      %v2472 = vunpack.c.h.b16 %v298
      %v2473 = vunpack.c.l.b16 %v299
      %v2474 = vunpack.c.h.b16 %v299
      %v2475 = vunpack.c.l.b16 %v300
      %v2476 = vunpack.c.h.b16 %v300
      %v2477 = vunpack.c.l.b16 %v301
      %v2478 = vunpack.c.h.b16 %v301
      %v2479 = vunpack.c.l.b16 %v302
      %v2480 = vunpack.c.h.b16 %v302
      %v2481 = vunpack.c.l.b16 %v303
      %v2482 = vunpack.c.h.b16 %v303
      %v2483 = vunpack.c.l.b16 %v304
      %v2484 = vunpack.c.h.b16 %v304
      %v2485 = vunpack.c.l.b16 %v305
      %v2486 = vunpack.c.h.b16 %v305
      %v2487 = vunpack.c.l.b16 %v306
      %v2488 = vunpack.c.h.b16 %v306
      %v2489 = vunpack.c.l.b16 %v307
      %v2490 = vunpack.c.h.b16 %v307
      %v2491 = vunpack.c.l.b16 %v308
      %v2492 = vunpack.c.h.b16 %v308
      %v2493 = vunpack.c.l.b16 %v309
      %v2494 = vunpack.c.h.b16 %v309
      %v2495 = vunpack.c.l.b16 %v310
      %v2496 = vunpack.c.h.b16 %v310
      %v2497 = vunpack.c.l.b16 %v311
      %v2498 = vunpack.c.h.b16 %v311
      %v2499 = vunpack.c.l.b16 %v312
      %v2500 = vunpack.c.h.b16 %v312
      %v2501 = vunpack.c.l.b16 %v313
      %v2502 = vunpack.c.h.b16 %v313
      %v2503 = vunpack.c.l.b16 %v314
      %v2504 = vunpack.c.h.b16 %v314
      %v2505 = vunpack.c.l.b16 %v315
      %v2506 = vunpack.c.h.b16 %v315
      %v2507 = vunpack.c.l.b16 %v316
      %v2508 = vunpack.c.h.b16 %v316
      %v2509 = vunpack.c.l.b16 %v317
      %v2510 = vunpack.c.h.b16 %v317
      %v2511 = vunpack.c.l.b16 %v318
      %v2512 = vunpack.c.h.b16 %v318
      %v2513 = vunpack.c.l.b16 %v319
      %v2514 = vunpack.c.h.b16 %v319
      %v2515 = vunpack.c.l.b16 %v320
      %v2516 = vunpack.c.h.b16 %v320
      %v2517 = vunpack.c.l.b16 %v321
      %v2518 = vunpack.c.h.b16 %v321
      %v2519 = vunpack.c.l.b16 %v322
      %v2520 = vunpack.c.h.b16 %v322
      %v2521 = vunpack.c.l.b16 %v323
      %v2522 = vunpack.c.h.b16 %v323
      %v2523 = vunpack.c.l.b16 %v324
      %v2524 = vunpack.c.h.b16 %v324
      %v2525 = vunpack.c.l.b16 %v325
      %v2526 = vunpack.c.h.b16 %v325
      %v2527 = vunpack.c.l.b16 %v326
      %v2528 = vunpack.c.h.b16 %v326
      %v2529 = vunpack.c.l.b16 %v327
      %v2530 = vunpack.c.h.b16 %v327
      %v2531 = vunpack.c.l.b16 %v328
      %v2532 = vunpack.c.h.b16 %v328
      %v2533 = vunpack.c.l.b16 %v329
      %v2534 = vunpack.c.h.b16 %v329
      %v2535 = vunpack.c.l.b16 %v330
      %v2536 = vunpack.c.h.b16 %v330
      %v2537 = vunpack.c.l.b16 %v331
      %v2538 = vunpack.c.h.b16 %v331
      %v2539 = vunpack.c.l.b16 %v332
      %v2540 = vunpack.c.h.b16 %v332
      %v2541 = vunpack.c.l.b16 %v333
      %v2542 = vunpack.c.h.b16 %v333
      %v2543 = vunpack.c.l.b16 %v334
      %v2544 = vunpack.c.h.b16 %v334
      %v2545 = vunpack.c.l.b16 %v335
      %v2546 = vunpack.c.h.b16 %v335
      %v2547 = vunpack.c.l.b16 %v336
      %v2548 = vunpack.c.h.b16 %v336
      %v2549 = vunpack.c.l.b16 %v337
      %v2550 = vunpack.c.h.b16 %v337
      %v2551 = vunpack.c.l.b16 %v338
      %v2552 = vunpack.c.h.b16 %v338
      %v2553 = vunpack.c.l.b16 %v339
      %v2554 = vunpack.c.h.b16 %v339
      %v2555 = vunpack.c.l.b16 %v340
      %v2556 = vunpack.c.h.b16 %v340
      %v2557 = vunpack.c.l.b16 %v341
      %v2558 = vunpack.c.h.b16 %v341
      %v2559 = vunpack.c.l.b16 %v342
      %v2560 = vunpack.c.h.b16 %v342
      %v2561 = vunpack.c.l.b16 %v343
      %v2562 = vunpack.c.h.b16 %v343
      %v2563 = vunpack.c.l.b16 %v344
      %v2564 = vunpack.c.h.b16 %v344
      %v2565 = vunpack.c.l.b16 %v345
      %v2566 = vunpack.c.h.b16 %v345
      %v2567 = vunpack.c.l.b16 %v346
      %v2568 = vunpack.c.h.b16 %v346
      %v2569 = vunpack.c.l.b16 %v347
      %v2570 = vunpack.c.h.b16 %v347
      %v2571 = vunpack.c.l.b16 %v348
      %v2572 = vunpack.c.h.b16 %v348
      %v2573 = vunpack.c.l.b16 %v349
      %v2574 = vunpack.c.h.b16 %v349
      %v2575 = vunpack.c.l.b16 %v350
      %v2576 = vunpack.c.h.b16 %v350
      %v2577 = vunpack.c.l.b16 %v351
      %v2578 = vunpack.c.h.b16 %v351
      %v2579 = vunpack.c.l.b16 %v352
      %v2580 = vunpack.c.h.b16 %v352
      %v2581 = vunpack.c.l.b16 %v353
      %v2582 = vunpack.c.h.b16 %v353
      %v2583 = vunpack.c.l.b16 %v354
      %v2584 = vunpack.c.h.b16 %v354
      %v2585 = vunpack.c.l.b16 %v355
      %v2586 = vunpack.c.h.b16 %v355
      %v2587 = vunpack.c.l.b16 %v356
      %v2588 = vunpack.c.h.b16 %v356
      %v2589 = vunpack.c.l.b16 %v357
      %v2590 = vunpack.c.h.b16 %v357
      %v2591 = vunpack.c.l.b16 %v358
      %v2592 = vunpack.c.h.b16 %v358
      %v2593 = vunpack.c.l.b16 %v359
      %v2594 = vunpack.c.h.b16 %v359
      %v2595 = vunpack.c.l.b16 %v360
      %v2596 = vunpack.c.h.b16 %v360
      %v2597 = vunpack.c.l.b16 %v361
      %v2598 = vunpack.c.h.b16 %v361
      %v2599 = vunpack.c.l.b16 %v362
      %v2600 = vunpack.c.h.b16 %v362
      %v2601 = vunpack.c.l.b16 %v363
      %v2602 = vunpack.c.h.b16 %v363
      %v2603 = vunpack.c.l.b16 %v364
      %v2604 = vunpack.c.h.b16 %v364
      %v2605 = vunpack.c.l.b16 %v365
      %v2606 = vunpack.c.h.b16 %v365
      %v2607 = vunpack.c.l.b16 %v366
      %v2608 = vunpack.c.h.b16 %v366
      %v2609 = vunpack.c.l.b16 %v367
      %v2610 = vunpack.c.h.b16 %v367
      %v2611 = vunpack.c.l.b16 %v368
      %v2612 = vunpack.c.h.b16 %v368
      %v2613 = vunpack.c.l.b16 %v369
      %v2614 = vunpack.c.h.b16 %v369
      %v2615 = vunpack.c.l.b16 %v370
      %v2616 = vunpack.c.h.b16 %v370
      %v2617 = vunpack.c.l.b16 %v371
      %v2618 = vunpack.c.h.b16 %v371
      %v2619 = vunpack.c.l.b16 %v372
      %v2620 = vunpack.c.h.b16 %v372
      %v2621 = vunpack.c.l.b16 %v373
      %v2622 = vunpack.c.h.b16 %v373
      %v2623 = vunpack.c.l.b16 %v374
      %v2624 = vunpack.c.h.b16 %v374
      %v2625 = vunpack.c.l.b16 %v375
      %v2626 = vunpack.c.h.b16 %v375
      %v2627 = vunpack.c.l.b16 %v376
      %v2628 = vunpack.c.h.b16 %v376
      %v2629 = vunpack.c.l.b16 %v377
      %v2630 = vunpack.c.h.b16 %v377
      %v2631 = vunpack.c.l.b16 %v378
      %v2632 = vunpack.c.h.b16 %v378
      %v2633 = vunpack.c.l.b16 %v379
      %v2634 = vunpack.c.h.b16 %v379
      %v2635 = vunpack.c.l.b16 %v380
      %v2636 = vunpack.c.h.b16 %v380
      %v2637 = vunpack.c.l.b16 %v381
      %v2638 = vunpack.c.h.b16 %v381
      %v2639 = vunpack.c.l.b16 %v382
      %v2640 = vunpack.c.h.b16 %v382
      %v2641 = vunpack.c.l.b16 %v383
      %v2642 = vunpack.c.h.b16 %v383
      %v2643 = vunpack.c.l.b16 %v384
      %v2644 = vunpack.c.h.b16 %v384
      %v2645 = vunpack.c.l.b16 %v385
      %v2646 = vunpack.c.h.b16 %v385
      %v2647 = vunpack.c.l.b16 %v386
      %v2648 = vunpack.c.h.b16 %v386
      %v2649 = vunpack.c.l.b16 %v387
      %v2650 = vunpack.c.h.b16 %v387
      %v2651 = vunpack.c.l.b16 %v388
      %v2652 = vunpack.c.h.b16 %v388
      %v2653 = vunpack.c.l.b16 %v389
      %v2654 = vunpack.c.h.b16 %v389
      %v2655 = vunpack.c.l.b16 %v390
      %v2656 = vunpack.c.h.b16 %v390
      %v2657 = vunpack.c.l.b16 %v391
      %v2658 = vunpack.c.h.b16 %v391
      %v2659 = vunpack.c.l.b16 %v392
      %v2660 = vunpack.c.h.b16 %v392
      %v2661 = vunpack.c.l.b16 %v393
      %v2662 = vunpack.c.h.b16 %v393
      %v2663 = vunpack.c.l.b16 %v394
      %v2664 = vunpack.c.h.b16 %v394
      %v2665 = vunpack.c.l.b16 %v395
      %v2666 = vunpack.c.h.b16 %v395
      %v2667 = vunpack.c.l.b16 %v396
      %v2668 = vunpack.c.h.b16 %v396
      %v2669 = vunpack.c.l.b16 %v397
      %v2670 = vunpack.c.h.b16 %v397
      %v2671 = vunpack.c.l.b16 %v398
      %v2672 = vunpack.c.h.b16 %v398
      %v2673 = vunpack.c.l.b16 %v399
      %v2674 = vunpack.c.h.b16 %v399
      %v2675 = vunpack.c.l.b16 %v400
      %v2676 = vunpack.c.h.b16 %v400
      %v2677 = vunpack.c.l.b16 %v401
      %v2678 = vunpack.c.h.b16 %v401
      %v2679 = vunpack.c.l.b16 %v402
      %v2680 = vunpack.c.h.b16 %v402
      %v2681 = vunpack.c.l.b16 %v403
      %v2682 = vunpack.c.h.b16 %v403
      %v2683 = vunpack.c.l.b16 %v404
      %v2684 = vunpack.c.h.b16 %v404
      %v2685 = vunpack.c.l.b16 %v405
      %v2686 = vunpack.c.h.b16 %v405
      %v2687 = vunpack.c.l.b16 %v406
      %v2688 = vunpack.c.h.b16 %v406
      %v2689 = vunpack.c.l.b16 %v407
      %v2690 = vunpack.c.h.b16 %v407
      %v2691 = vunpack.c.l.b16 %v408
      %v2692 = vunpack.c.h.b16 %v408
      %v2693 = vunpack.c.l.b16 %v409
      %v2694 = vunpack.c.h.b16 %v409
      %v2695 = vunpack.c.l.b16 %v410
      %v2696 = vunpack.c.h.b16 %v410
      %v2697 = vunpack.c.l.b16 %v411
      %v2698 = vunpack.c.h.b16 %v411
      %v2699 = vunpack.c.l.b16 %v412
      %v2700 = vunpack.c.h.b16 %v412
      %v2701 = vunpack.c.l.b16 %v413
      %v2702 = vunpack.c.h.b16 %v413
      %v2703 = vunpack.c.l.b16 %v414
      %v2704 = vunpack.c.h.b16 %v414
      %v2705 = vunpack.c.l.b16 %v415
      %v2706 = vunpack.c.h.b16 %v415
      %v2707 = vunpack.c.l.b16 %v416
      %v2708 = vunpack.c.h.b16 %v416
      %v2709 = vunpack.c.l.b16 %v417
      %v2710 = vunpack.c.h.b16 %v417
      %v2711 = vunpack.c.l.b16 %v418
      %v2712 = vunpack.c.h.b16 %v418
      %v2713 = vunpack.c.l.b16 %v419
      %v2714 = vunpack.c.h.b16 %v419
      %v2715 = vunpack.c.l.b16 %v420
      %v2716 = vunpack.c.h.b16 %v420
      %v2717 = vunpack.c.l.b16 %v421
      %v2718 = vunpack.c.h.b16 %v421
      %v2719 = vunpack.c.l.b16 %v422
      %v2720 = vunpack.c.h.b16 %v422
      %v2721 = vunpack.c.l.b16 %v423
      %v2722 = vunpack.c.h.b16 %v423
      %v2723 = vunpack.c.l.b16 %v424
      %v2724 = vunpack.c.h.b16 %v424
      %v2725 = vunpack.c.l.b16 %v425
      %v2726 = vunpack.c.h.b16 %v425
      %v2727 = vunpack.c.l.b16 %v426
      %v2728 = vunpack.c.h.b16 %v426
      %v2729 = vunpack.c.l.b16 %v427
      %v2730 = vunpack.c.h.b16 %v427
      %v2731 = vunpack.c.l.b16 %v428
      %v2732 = vunpack.c.h.b16 %v428
      %v2733 = vunpack.c.l.b16 %v429
      %v2734 = vunpack.c.h.b16 %v429
      %v2735 = vunpack.c.l.b16 %v430
      %v2736 = vunpack.c.h.b16 %v430
      %v2737 = vunpack.c.l.b16 %v431
      %v2738 = vunpack.c.h.b16 %v431
      %v2739 = vunpack.c.l.b16 %v432
      %v2740 = vunpack.c.h.b16 %v432
      %v2741 = vunpack.c.l.b16 %v433
      %v2742 = vunpack.c.h.b16 %v433
      %v2743 = vunpack.c.l.b16 %v434
      %v2744 = vunpack.c.h.b16 %v434
      %v2745 = vunpack.c.l.b16 %v435
      %v2746 = vunpack.c.h.b16 %v435
      %v2747 = vunpack.c.l.b16 %v436
      %v2748 = vunpack.c.h.b16 %v436
      %v2749 = vunpack.c.l.b16 %v437
      %v2750 = vunpack.c.h.b16 %v437
      %v2751 = vunpack.c.l.b16 %v438
      %v2752 = vunpack.c.h.b16 %v438
      %v2753 = vunpack.c.l.b16 %v439
      %v2754 = vunpack.c.h.b16 %v439
      %v2755 = vunpack.c.l.b16 %v440
      %v2756 = vunpack.c.h.b16 %v440
      %v2757 = vunpack.c.l.b16 %v441
      %v2758 = vunpack.c.h.b16 %v441
      %v2759 = vunpack.c.l.b16 %v442
      %v2760 = vunpack.c.h.b16 %v442
      %v2761 = vunpack.c.l.b16 %v443
      %v2762 = vunpack.c.h.b16 %v443
      %v2763 = vunpack.c.l.b16 %v444
      %v2764 = vunpack.c.h.b16 %v444
      %v2765 = vunpack.c.l.b16 %v445
      %v2766 = vunpack.c.h.b16 %v445
      %v2767 = vunpack.c.l.b16 %v446
      %v2768 = vunpack.c.h.b16 %v446
      %v2769 = vunpack.c.l.b16 %v447
      %v2770 = vunpack.c.h.b16 %v447
      %v2771 = vunpack.c.l.b16 %v448
      %v2772 = vunpack.c.h.b16 %v448
      %v2773 = vunpack.c.l.b16 %v449
      %v2774 = vunpack.c.h.b16 %v449
      %v2775 = vunpack.c.l.b16 %v450
      %v2776 = vunpack.c.h.b16 %v450
      %v2777 = vunpack.c.l.b16 %v451
      %v2778 = vunpack.c.h.b16 %v451
      %v2779 = vunpack.c.l.b16 %v452
      %v2780 = vunpack.c.h.b16 %v452
      %v2781 = vunpack.c.l.b16 %v453
      %v2782 = vunpack.c.h.b16 %v453
      %v2783 = vunpack.c.l.b16 %v454
      %v2784 = vunpack.c.h.b16 %v454
      %v2785 = vunpack.c.l.b16 %v455
      %v2786 = vunpack.c.h.b16 %v455
      %v2787 = vunpack.c.l.b16 %v456
      %v2788 = vunpack.c.h.b16 %v456
      %v2789 = vunpack.c.l.b16 %v457
      %v2790 = vunpack.c.h.b16 %v457
      %v2791 = vunpack.c.l.b16 %v458
      %v2792 = vunpack.c.h.b16 %v458
      %v2793 = vunpack.c.l.b16 %v459
      %v2794 = vunpack.c.h.b16 %v459
      %v2795 = vunpack.c.l.b16 %v460
      %v2796 = vunpack.c.h.b16 %v460
      %v2797 = vunpack.c.l.b16 %v461
      %v2798 = vunpack.c.h.b16 %v461
      %v2799 = vunpack.c.l.b16 %v462
      %v2800 = vunpack.c.h.b16 %v462
      %v2801 = vunpack.c.l.b16 %v463
      %v2802 = vunpack.c.h.b16 %v463
      %v2803 = vunpack.c.l.b16 %v464
      %v2804 = vunpack.c.h.b16 %v464
      %v2805 = vunpack.c.l.b16 %v465
      %v2806 = vunpack.c.h.b16 %v465
      %v2807 = vunpack.c.l.b16 %v466
      %v2808 = vunpack.c.h.b16 %v466
      %v2809 = vunpack.c.l.b16 %v467
      %v2810 = vunpack.c.h.b16 %v467
      %v2811 = vunpack.c.l.b16 %v468
      %v2812 = vunpack.c.h.b16 %v468
      %v2813 = vunpack.c.l.b16 %v469
      %v2814 = vunpack.c.h.b16 %v469
      %v2815 = vunpack.c.l.b16 %v470
      %v2816 = vunpack.c.h.b16 %v470
      %v2817 = vunpack.c.l.b16 %v471
      %v2818 = vunpack.c.h.b16 %v471
      %v2819 = vunpack.c.l.b16 %v472
      %v2820 = vunpack.c.h.b16 %v472
      %v2821 = vunpack.c.l.b16 %v473
      %v2822 = vunpack.c.h.b16 %v473
      %v2823 = vunpack.c.l.b16 %v474
      %v2824 = vunpack.c.h.b16 %v474
      %v2825 = vunpack.c.l.b16 %v475
      %v2826 = vunpack.c.h.b16 %v475
      %v2827 = vunpack.c.l.b16 %v476
      %v2828 = vunpack.c.h.b16 %v476
      %v2829 = vunpack.c.l.b16 %v477
      %v2830 = vunpack.c.h.b16 %v477
      %v2831 = vunpack.c.l.b16 %v478
      %v2832 = vunpack.c.h.b16 %v478
      %v2833 = vunpack.c.l.b16 %v479
      %v2834 = vunpack.c.h.b16 %v479
      %v2835 = vunpack.c.l.b16 %v480
      %v2836 = vunpack.c.h.b16 %v480
      %v2837 = vunpack.c.l.b16 %v481
      %v2838 = vunpack.c.h.b16 %v481
      %v2839 = vunpack.c.l.b16 %v482
      %v2840 = vunpack.c.h.b16 %v482
      %v2841 = vunpack.c.l.b16 %v483
      %v2842 = vunpack.c.h.b16 %v483
      %v2843 = vunpack.c.l.b16 %v484
      %v2844 = vunpack.c.h.b16 %v484
      %v2845 = vunpack.c.l.b16 %v485
      %v2846 = vunpack.c.h.b16 %v485
      %v2847 = vunpack.c.l.b16 %v486
      %v2848 = vunpack.c.h.b16 %v486
      %v2849 = vunpack.c.l.b16 %v487
      %v2850 = vunpack.c.h.b16 %v487
      %v2851 = vunpack.c.l.b16 %v488
      %v2852 = vunpack.c.h.b16 %v488
      %v2853 = vunpack.c.l.b16 %v489
      %v2854 = vunpack.c.h.b16 %v489
      %v2855 = vunpack.c.l.b16 %v490
      %v2856 = vunpack.c.h.b16 %v490
      %v2857 = vunpack.c.l.b16 %v491
      %v2858 = vunpack.c.h.b16 %v491
      %v2859 = vunpack.c.l.b16 %v492
      %v2860 = vunpack.c.h.b16 %v492
      %v2861 = vunpack.c.l.b16 %v493
      %v2862 = vunpack.c.h.b16 %v493
      %v2863 = vunpack.c.l.b16 %v494
      %v2864 = vunpack.c.h.b16 %v494
      %v2865 = vunpack.c.l.b16 %v495
      %v2866 = vunpack.c.h.b16 %v495
      %v2867 = vunpack.c.l.b16 %v496
      %v2868 = vunpack.c.h.b16 %v496
      %v2869 = vunpack.c.l.b16 %v497
      %v2870 = vunpack.c.h.b16 %v497
      %v2871 = vunpack.c.l.b16 %v498
      %v2872 = vunpack.c.h.b16 %v498
      %v2873 = vunpack.c.l.b16 %v499
      %v2874 = vunpack.c.h.b16 %v499
      %v2875 = vunpack.c.l.b16 %v500
      %v2876 = vunpack.c.h.b16 %v500
      %v2877 = vunpack.c.l.b16 %v501
      %v2878 = vunpack.c.h.b16 %v501
      %v2879 = vunpack.c.l.b16 %v502
      %v2880 = vunpack.c.h.b16 %v502
      %v2881 = vunpack.c.l.b16 %v503
      %v2882 = vunpack.c.h.b16 %v503
      %v2883 = vunpack.c.l.b16 %v504
      %v2884 = vunpack.c.h.b16 %v504
      %v2885 = vunpack.c.l.b16 %v505
      %v2886 = vunpack.c.h.b16 %v505
      %v2887 = vunpack.c.l.b16 %v506
      %v2888 = vunpack.c.h.b16 %v506
      %v2889 = vunpack.c.l.b16 %v507
      %v2890 = vunpack.c.h.b16 %v507
      %v2891 = vunpack.c.l.b16 %v508
      %v2892 = vunpack.c.h.b16 %v508
      %v2893 = vunpack.c.l.b16 %v509
      %v2894 = vunpack.c.h.b16 %v509
      %v2895 = vunpack.c.l.b16 %v510
      %v2896 = vunpack.c.h.b16 %v510
      %v2897 = vunpack.c.l.b16 %v511
      %v2898 = vunpack.c.h.b16 %v511
      %v2899 = vunpack.c.l.b16 %v512
      %v2900 = vunpack.c.h.b16 %v512
      %v2901 = vunpack.c.l.b16 %v513
      %v2902 = vunpack.c.h.b16 %v513
      %v2903 = vunpack.c.l.b16 %v514
      %v2904 = vunpack.c.h.b16 %v514
      %v2905 = vunpack.c.l.b16 %v515
      %v2906 = vunpack.c.h.b16 %v515
      %v2907 = vunpack.c.l.b16 %v516
      %v2908 = vunpack.c.h.b16 %v516
      %v2909 = vunpack.c.l.b16 %v517
      %v2910 = vunpack.c.h.b16 %v517
      %v2911 = vunpack.c.l.b16 %v518
      %v2912 = vunpack.c.h.b16 %v518
      %v2913 = vunpack.c.l.b16 %v519
      %v2914 = vunpack.c.h.b16 %v519
      %v2915 = vunpack.c.l.b16 %v520
      %v2916 = vunpack.c.h.b16 %v520
      %v2917 = vunpack.c.l.b16 %v521
      %v2918 = vunpack.c.h.b16 %v521
      %v2919 = vunpack.c.l.b16 %v522
      %v2920 = vunpack.c.h.b16 %v522
      %v2921 = vunpack.c.l.b16 %v523
      %v2922 = vunpack.c.h.b16 %v523
      %v2923 = vunpack.c.l.b16 %v524
      %v2924 = vunpack.c.h.b16 %v524
      %v2925 = vunpack.c.l.b16 %v525
      %v2926 = vunpack.c.h.b16 %v525
      %v2927 = vunpack.c.l.b16 %v526
      %v2928 = vunpack.c.h.b16 %v526
      %v2929 = vunpack.c.l.b16 %v527
      %v2930 = vunpack.c.h.b16 %v527
      %v2931 = vunpack.c.l.b16 %v528
      %v2932 = vunpack.c.h.b16 %v528
      %v2933 = vunpack.c.l.b16 %v529
      %v2934 = vunpack.c.h.b16 %v529
      %v2935 = vunpack.c.l.b16 %v530
      %v2936 = vunpack.c.h.b16 %v530
      %v2937 = vunpack.c.l.b16 %v531
      %v2938 = vunpack.c.h.b16 %v531
      %v2939 = vunpack.c.l.b16 %v532
      %v2940 = vunpack.c.h.b16 %v532
      %v2941 = vunpack.c.l.b16 %v533
      %v2942 = vunpack.c.h.b16 %v533
      %v2943 = vunpack.c.l.b16 %v534
      %v2944 = vunpack.c.h.b16 %v534
      %v2945 = vunpack.c.l.b16 %v535
      %v2946 = vunpack.c.h.b16 %v535
      %v2947 = vunpack.c.l.b16 %v536
      %v2948 = vunpack.c.h.b16 %v536
      %v2949 = vunpack.c.l.b16 %v537
      %v2950 = vunpack.c.h.b16 %v537
      %v2951 = vunpack.c.l.b16 %v538
      %v2952 = vunpack.c.h.b16 %v538
      %v2953 = vunpack.c.l.b16 %v539
      %v2954 = vunpack.c.h.b16 %v539
      %v2955 = vunpack.c.l.b16 %v540
      %v2956 = vunpack.c.h.b16 %v540
      %v2957 = vunpack.c.l.b16 %v541
      %v2958 = vunpack.c.h.b16 %v541
      %v2959 = vunpack.c.l.b16 %v542
      %v2960 = vunpack.c.h.b16 %v542
      %v2961 = vunpack.c.l.b16 %v543
      %v2962 = vunpack.c.h.b16 %v543
      %v2963 = vunpack.c.l.b16 %v544
      %v2964 = vunpack.c.h.b16 %v544
      %v2965 = vunpack.c.l.b16 %v545
      %v2966 = vunpack.c.h.b16 %v545
      %v2967 = vunpack.c.l.b16 %v546
      %v2968 = vunpack.c.h.b16 %v546
      %v2969 = vunpack.c.l.b16 %v547
      %v2970 = vunpack.c.h.b16 %v547
      %v2971 = vunpack.c.l.b16 %v548
      %v2972 = vunpack.c.h.b16 %v548
      %v2973 = vunpack.c.l.b16 %v549
      %v2974 = vunpack.c.h.b16 %v549
      %v2975 = vunpack.c.l.b16 %v550
      %v2976 = vunpack.c.h.b16 %v550
      %v2977 = vunpack.c.l.b16 %v551
      %v2978 = vunpack.c.h.b16 %v551
      %v2979 = vunpack.c.l.b16 %v552
      %v2980 = vunpack.c.h.b16 %v552
      %v2981 = vunpack.c.l.b16 %v553
      %v2982 = vunpack.c.h.b16 %v553
      %v2983 = vunpack.c.l.b16 %v554
      %v2984 = vunpack.c.h.b16 %v554
      %v2985 = vunpack.c.l.b16 %v555
      %v2986 = vunpack.c.h.b16 %v555
      %v2987 = vunpack.c.l.b16 %v556
      %v2988 = vunpack.c.h.b16 %v556
      %v2989 = vunpack.c.l.b16 %v557
      %v2990 = vunpack.c.h.b16 %v557
      %v2991 = vunpack.c.l.b16 %v558
      %v2992 = vunpack.c.h.b16 %v558
      %v2993 = vunpack.c.l.b16 %v559
      %v2994 = vunpack.c.h.b16 %v559
      %v2995 = vunpack.c.l.b16 %v560
      %v2996 = vunpack.c.h.b16 %v560
      %v2997 = vunpack.c.l.b16 %v561
      %v2998 = vunpack.c.h.b16 %v561
      %v2999 = vunpack.c.l.b16 %v562
      %v3000 = vunpack.c.h.b16 %v562
      %v3001 = vunpack.c.l.b16 %v563
      %v3002 = vunpack.c.h.b16 %v563
      %v3003 = vunpack.c.l.b16 %v564
      %v3004 = vunpack.c.h.b16 %v564
      %v3005 = vunpack.c.l.b16 %v565
      %v3006 = vunpack.c.h.b16 %v565
      %v3007 = vunpack.c.l.b16 %v566
      %v3008 = vunpack.c.h.b16 %v566
      %v3009 = vunpack.c.l.b16 %v567
      %v3010 = vunpack.c.h.b16 %v567
      %v3011 = vunpack.c.l.b16 %v568
      %v3012 = vunpack.c.h.b16 %v568
      %v3013 = vunpack.c.l.b16 %v569
      %v3014 = vunpack.c.h.b16 %v569
      %v3015 = vunpack.c.l.b16 %v570
      %v3016 = vunpack.c.h.b16 %v570
      %v3017 = vunpack.c.l.b16 %v571
      %v3018 = vunpack.c.h.b16 %v571
      %v3019 = vunpack.c.l.b16 %v572
      %v3020 = vunpack.c.h.b16 %v572
      %v3021 = vunpack.c.l.b16 %v573
      %v3022 = vunpack.c.h.b16 %v573
      %v3023 = vunpack.c.l.b16 %v574
      %v3024 = vunpack.c.h.b16 %v574
      %v3025 = vunpack.c.l.b16 %v575
      %v3026 = vunpack.c.h.b16 %v575
      %v3027 = vunpack.c.l.b16 %v576
      %v3028 = vunpack.c.h.b16 %v576
      %v3029 = vunpack.c.l.b16 %v577
      %v3030 = vunpack.c.h.b16 %v577
      %v3031 = vunpack.c.l.b16 %v578
      %v3032 = vunpack.c.h.b16 %v578
      %v3033 = vunpack.c.l.b16 %v579
      %v3034 = vunpack.c.h.b16 %v579
      %v3035 = vunpack.c.l.b16 %v580
      %v3036 = vunpack.c.h.b16 %v580
      %v3037 = vunpack.c.l.b16 %v581
      %v3038 = vunpack.c.h.b16 %v581
      %v3039 = vunpack.c.l.b16 %v582
      %v3040 = vunpack.c.h.b16 %v582
      %v3041 = vunpack.c.l.b16 %v583
      %v3042 = vunpack.c.h.b16 %v583
      %v3043 = vunpack.c.l.b16 %v584
      %v3044 = vunpack.c.h.b16 %v584
      %v3045 = vunpack.c.l.b16 %v585
      %v3046 = vunpack.c.h.b16 %v585
      %v3047 = vunpack.c.l.b16 %v586
      %v3048 = vunpack.c.h.b16 %v586
      %v3049 = vunpack.c.l.b16 %v587
      %v3050 = vunpack.c.h.b16 %v587
      %v3051 = vunpack.c.l.b16 %v588
      %v3052 = vunpack.c.h.b16 %v588
      %v3053 = vunpack.c.l.b16 %v589
      %v3054 = vunpack.c.h.b16 %v589
      %v3055 = vunpack.c.l.b16 %v590
      %v3056 = vunpack.c.h.b16 %v590
      %v3057 = vunpack.c.l.b16 %v591
      %v3058 = vunpack.c.h.b16 %v591
      %v3059 = vunpack.c.l.b16 %v592
      %v3060 = vunpack.c.h.b16 %v592
      %v3061 = vunpack.c.l.b16 %v593
      %v3062 = vunpack.c.h.b16 %v593
      %v3063 = vunpack.c.l.b16 %v594
      %v3064 = vunpack.c.h.b16 %v594
      %v3065 = vunpack.c.l.b16 %v595
      %v3066 = vunpack.c.h.b16 %v595
      %v3067 = vunpack.c.l.b16 %v596
      %v3068 = vunpack.c.h.b16 %v596
      %v3069 = vunpack.c.l.b16 %v597
      %v3070 = vunpack.c.h.b16 %v597
      %v3071 = vunpack.c.l.b16 %v598
      %v3072 = vunpack.c.h.b16 %v598
      %v3073 = vunpack.c.l.b16 %v599
      %v3074 = vunpack.c.h.b16 %v599
      %v3075 = vunpack.c.l.b16 %v600
      %v3076 = vunpack.c.h.b16 %v600
      %v3077 = vunpack.c.l.b16 %v601
      %v3078 = vunpack.c.h.b16 %v601
      %v3079 = vunpack.c.l.b16 %v602
      %v3080 = vunpack.c.h.b16 %v602
      %v3081 = vunpack.c.l.b16 %v603
      %v3082 = vunpack.c.h.b16 %v603
      %v3083 = vunpack.c.l.b16 %v604
      %v3084 = vunpack.c.h.b16 %v604
      %v3085 = vunpack.c.l.b16 %v605
      %v3086 = vunpack.c.h.b16 %v605
      %v3087 = vunpack.c.l.b16 %v606
      %v3088 = vunpack.c.h.b16 %v606
      %v3089 = vunpack.c.l.b16 %v607
      %v3090 = vunpack.c.h.b16 %v607
      %v3091 = vunpack.c.l.b16 %v608
      %v3092 = vunpack.c.h.b16 %v608
      %v3093 = vunpack.c.l.b16 %v609
      %v3094 = vunpack.c.h.b16 %v609
      %v3095 = vunpack.c.l.b16 %v610
      %v3096 = vunpack.c.h.b16 %v610
      %v3097 = vunpack.c.l.b16 %v611
      %v3098 = vunpack.c.h.b16 %v611
      %v3099 = vunpack.c.l.b16 %v612
      %v3100 = vunpack.c.h.b16 %v612
      %v3101 = vunpack.c.l.b16 %v613
      %v3102 = vunpack.c.h.b16 %v613
      %v3103 = vunpack.c.l.b16 %v614
      %v3104 = vunpack.c.h.b16 %v614
      %v3105 = vunpack.c.l.b16 %v615
      %v3106 = vunpack.c.h.b16 %v615
      %v3107 = vunpack.c.l.b16 %v616
      %v3108 = vunpack.c.h.b16 %v616
      %v3109 = vunpack.c.l.b16 %v617
      %v3110 = vunpack.c.h.b16 %v617
      %v3111 = vunpack.c.l.b16 %v618
      %v3112 = vunpack.c.h.b16 %v618
      %v3113 = vunpack.c.l.b16 %v619
      %v3114 = vunpack.c.h.b16 %v619
      %v3115 = vunpack.c.l.b16 %v620
      %v3116 = vunpack.c.h.b16 %v620
      %v3117 = vunpack.c.l.b16 %v621
      %v3118 = vunpack.c.h.b16 %v621
      %v3119 = vunpack.c.l.b16 %v622
      %v3120 = vunpack.c.h.b16 %v622
      %v3121 = vunpack.c.l.b16 %v623
      %v3122 = vunpack.c.h.b16 %v623
      %v3123 = vunpack.c.l.b16 %v624
      %v3124 = vunpack.c.h.b16 %v624
      %v3125 = vunpack.c.l.b16 %v625
      %v3126 = vunpack.c.h.b16 %v625
      %v3127 = vunpack.c.l.b16 %v626
      %v3128 = vunpack.c.h.b16 %v626
      %v3129 = vunpack.c.l.b16 %v627
      %v3130 = vunpack.c.h.b16 %v627
      %v3131 = vunpack.c.l.b16 %v628
      %v3132 = vunpack.c.h.b16 %v628
      %v3133 = vunpack.c.l.b16 %v629
      %v3134 = vunpack.c.h.b16 %v629
      %v3135 = vunpack.c.l.b16 %v630
      %v3136 = vunpack.c.h.b16 %v630
      %v3137 = vunpack.c.l.b16 %v631
      %v3138 = vunpack.c.h.b16 %v631
      %v3139 = vunpack.c.l.b16 %v632
      %v3140 = vunpack.c.h.b16 %v632
      %v3141 = vunpack.c.l.b16 %v633
      %v3142 = vunpack.c.h.b16 %v633
      %v3143 = vunpack.c.l.b16 %v634
      %v3144 = vunpack.c.h.b16 %v634
      %v3145 = vunpack.c.l.b16 %v635
      %v3146 = vunpack.c.h.b16 %v635
      %v3147 = vunpack.c.l.b16 %v636
      %v3148 = vunpack.c.h.b16 %v636
      %v3149 = vunpack.c.l.b16 %v637
      %v3150 = vunpack.c.h.b16 %v637
      %v3151 = vunpack.c.l.b16 %v638
      %v3152 = vunpack.c.h.b16 %v638
      %v3153 = vunpack.c.l.b16 %v639
      %v3154 = vunpack.c.h.b16 %v639
      %v3155 = vunpack.c.l.b16 %v640
      %v3156 = vunpack.c.h.b16 %v640
      %v3157 = vunpack.c.l.b16 %v641
      %v3158 = vunpack.c.h.b16 %v641
      %v3159 = vunpack.c.l.b16 %v642
      %v3160 = vunpack.c.h.b16 %v642
      %v3161 = vunpack.c.l.b16 %v643
      %v3162 = vunpack.c.h.b16 %v643
      %v3163 = vunpack.c.l.b16 %v644
      %v3164 = vunpack.c.h.b16 %v644
      %v3165 = vunpack.c.l.b16 %v645
      %v3166 = vunpack.c.h.b16 %v645
      %v3167 = vunpack.c.l.b16 %v646
      %v3168 = vunpack.c.h.b16 %v646
      %v3169 = vunpack.c.l.b16 %v647
      %v3170 = vunpack.c.h.b16 %v647
      %v3171 = vunpack.c.l.b16 %v648
      %v3172 = vunpack.c.h.b16 %v648
      %v3173 = vunpack.c.l.b16 %v649
      %v3174 = vunpack.c.h.b16 %v649
      %v3175 = vunpack.c.l.b16 %v650
      %v3176 = vunpack.c.h.b16 %v650
      %v3177 = vunpack.c.l.b16 %v651
      %v3178 = vunpack.c.h.b16 %v651
      %v3179 = vunpack.c.l.b16 %v652
      %v3180 = vunpack.c.h.b16 %v652
      %v3181 = vunpack.c.l.b16 %v653
      %v3182 = vunpack.c.h.b16 %v653
      %v3183 = vunpack.c.l.b16 %v654
      %v3184 = vunpack.c.h.b16 %v654
      %v3185 = vunpack.c.l.b16 %v655
      %v3186 = vunpack.c.h.b16 %v655
      %v3187 = vunpack.c.l.b16 %v656
      %v3188 = vunpack.c.h.b16 %v656
      %v3189 = vunpack.c.l.b16 %v657
      %v3190 = vunpack.c.h.b16 %v657
      %v3191 = vunpack.c.l.b16 %v658
      %v3192 = vunpack.c.h.b16 %v658
      %v3193 = vunpack.c.l.b16 %v659
      %v3194 = vunpack.c.h.b16 %v659
      %v3195 = vunpack.c.l.b16 %v660
      %v3196 = vunpack.c.h.b16 %v660
      %v3197 = vunpack.c.l.b16 %v661
      %v3198 = vunpack.c.h.b16 %v661
      %v3199 = vunpack.c.l.b16 %v662
      %v3200 = vunpack.c.h.b16 %v662
      %v3201 = vunpack.c.l.b16 %v663
      %v3202 = vunpack.c.h.b16 %v663
      %v3203 = vunpack.c.l.b16 %v664
      %v3204 = vunpack.c.h.b16 %v664
      %v3205 = vunpack.c.l.b16 %v665
      %v3206 = vunpack.c.h.b16 %v665
      %v3207 = vunpack.c.l.b16 %v666
      %v3208 = vunpack.c.h.b16 %v666
      %v3209 = vunpack.c.l.b16 %v667
      %v3210 = vunpack.c.h.b16 %v667
      %v3211 = vunpack.c.l.b16 %v668
      %v3212 = vunpack.c.h.b16 %v668
      %v3213 = vunpack.c.l.b16 %v669
      %v3214 = vunpack.c.h.b16 %v669
      %v3215 = vunpack.c.l.b16 %v670
      %v3216 = vunpack.c.h.b16 %v670
      %v3217 = vunpack.c.l.b16 %v671
      %v3218 = vunpack.c.h.b16 %v671
      %v3219 = vunpack.c.l.b16 %v672
      %v3220 = vunpack.c.h.b16 %v672
      %v3221 = vunpack.c.l.b16 %v673
      %v3222 = vunpack.c.h.b16 %v673
      %v3223 = vunpack.c.l.b16 %v674
      %v3224 = vunpack.c.h.b16 %v674
      %v3225 = vunpack.c.l.b16 %v675
      %v3226 = vunpack.c.h.b16 %v675
      %v3227 = vunpack.c.l.b16 %v676
      %v3228 = vunpack.c.h.b16 %v676
      %v3229 = vunpack.c.l.b16 %v677
      %v3230 = vunpack.c.h.b16 %v677
      %v3231 = vunpack.c.l.b16 %v678
      %v3232 = vunpack.c.h.b16 %v678
      %v3233 = vunpack.c.l.b16 %v679
      %v3234 = vunpack.c.h.b16 %v679
      %v3235 = vunpack.c.l.b16 %v680
      %v3236 = vunpack.c.h.b16 %v680
      %v3237 = vunpack.c.l.b16 %v681
      %v3238 = vunpack.c.h.b16 %v681
      %v3239 = vunpack.c.l.b16 %v682
      %v3240 = vunpack.c.h.b16 %v682
      %v3241 = vunpack.c.l.b16 %v683
      %v3242 = vunpack.c.h.b16 %v683
      %v3243 = vunpack.c.l.b16 %v684
      %v3244 = vunpack.c.h.b16 %v684
      %v3245 = vunpack.c.l.b16 %v685
      %v3246 = vunpack.c.h.b16 %v685
      %v3247 = vunpack.c.l.b16 %v686
      %v3248 = vunpack.c.h.b16 %v686
      %v3249 = vunpack.c.l.b16 %v687
      %v3250 = vunpack.c.h.b16 %v687
      %v3251 = vunpack.c.l.b16 %v688
      %v3252 = vunpack.c.h.b16 %v688
      %v3253 = vunpack.c.l.b16 %v689
      %v3254 = vunpack.c.h.b16 %v689
      %v3255 = vunpack.c.l.b16 %v690
      %v3256 = vunpack.c.h.b16 %v690
      %v3257 = vunpack.c.l.b16 %v691
      %v3258 = vunpack.c.h.b16 %v691
      %v3259 = vunpack.c.l.b16 %v692
      %v3260 = vunpack.c.h.b16 %v692
      %v3261 = vunpack.c.l.b16 %v693
      %v3262 = vunpack.c.h.b16 %v693
      %v3263 = vunpack.c.l.b16 %v694
      %v3264 = vunpack.c.h.b16 %v694
      %v3265 = vunpack.c.l.b16 %v695
      %v3266 = vunpack.c.h.b16 %v695
      %v3267 = vunpack.c.l.b16 %v696
      %v3268 = vunpack.c.h.b16 %v696
      %v3269 = vunpack.c.l.b16 %v697
      %v3270 = vunpack.c.h.b16 %v697
      %v3271 = vunpack.c.l.b16 %v698
      %v3272 = vunpack.c.h.b16 %v698
      %v3273 = vunpack.c.l.b16 %v699
      %v3274 = vunpack.c.h.b16 %v699
      %v3275 = vunpack.c.l.b16 %v700
      %v3276 = vunpack.c.h.b16 %v700
      %v3277 = vunpack.c.l.b16 %v701
      %v3278 = vunpack.c.h.b16 %v701
      %v3279 = vunpack.c.l.b16 %v702
      %v3280 = vunpack.c.h.b16 %v702
      %v3281 = vunpack.c.l.b16 %v703
      %v3282 = vunpack.c.h.b16 %v703
      %v3283 = vunpack.c.l.b16 %v704
      %v3284 = vunpack.c.h.b16 %v704
      %v3285 = vunpack.c.l.b16 %v705
      %v3286 = vunpack.c.h.b16 %v705
      %v3287 = vunpack.c.l.b16 %v706
      %v3288 = vunpack.c.h.b16 %v706
      %v3289 = vunpack.c.l.b16 %v707
      %v3290 = vunpack.c.h.b16 %v707
      %v3291 = vunpack.c.l.b16 %v708
      %v3292 = vunpack.c.h.b16 %v708
      %v3293 = vunpack.c.l.b16 %v709
      %v3294 = vunpack.c.h.b16 %v709
      %v3295 = vunpack.c.l.b16 %v710
      %v3296 = vunpack.c.h.b16 %v710
      %v3297 = vunpack.c.l.b16 %v711
      %v3298 = vunpack.c.h.b16 %v711
      %v3299 = vunpack.c.l.b16 %v712
      %v3300 = vunpack.c.h.b16 %v712
      %v3301 = vunpack.c.l.b16 %v713
      %v3302 = vunpack.c.h.b16 %v713
      %v3303 = vunpack.c.l.b16 %v714
      %v3304 = vunpack.c.h.b16 %v714
      %v3305 = vunpack.c.l.b16 %v715
      %v3306 = vunpack.c.h.b16 %v715
      %v3307 = vunpack.c.l.b16 %v716
      %v3308 = vunpack.c.h.b16 %v716
      %v3309 = vunpack.c.l.b16 %v717
      %v3310 = vunpack.c.h.b16 %v717
      %v3311 = vunpack.c.l.b16 %v718
      %v3312 = vunpack.c.h.b16 %v718
      %v3313 = vunpack.c.l.b16 %v719
      %v3314 = vunpack.c.h.b16 %v719
      %v3315 = vunpack.c.l.b16 %v720
      %v3316 = vunpack.c.h.b16 %v720
      %v3317 = vunpack.c.l.b16 %v721
      %v3318 = vunpack.c.h.b16 %v721
      %v3319 = vunpack.c.l.b16 %v722
      %v3320 = vunpack.c.h.b16 %v722
      %v3321 = vunpack.c.l.b16 %v723
      %v3322 = vunpack.c.h.b16 %v723
      %v3323 = vunpack.c.l.b16 %v724
      %v3324 = vunpack.c.h.b16 %v724
      %v3325 = vunpack.c.l.b16 %v725
      %v3326 = vunpack.c.h.b16 %v725
      %v3327 = vunpack.c.l.b16 %v726
      %v3328 = vunpack.c.h.b16 %v726
      %v3329 = vunpack.c.l.b16 %v727
      %v3330 = vunpack.c.h.b16 %v727
      %v3331 = vunpack.c.l.b16 %v728
      %v3332 = vunpack.c.h.b16 %v728
      %v3333 = vunpack.c.l.b16 %v729
      %v3334 = vunpack.c.h.b16 %v729
      %v3335 = vunpack.c.l.b16 %v730
      %v3336 = vunpack.c.h.b16 %v730
      %v3337 = vunpack.c.l.b16 %v731
      %v3338 = vunpack.c.h.b16 %v731
      %v3339 = vunpack.c.l.b16 %v732
      %v3340 = vunpack.c.h.b16 %v732
      %v3341 = vunpack.c.l.b16 %v733
      %v3342 = vunpack.c.h.b16 %v733
      %v3343 = vunpack.c.l.b16 %v734
      %v3344 = vunpack.c.h.b16 %v734
      %v3345 = vunpack.c.l.b16 %v735
      %v3346 = vunpack.c.h.b16 %v735
      %v3347 = vunpack.c.l.b16 %v736
      %v3348 = vunpack.c.h.b16 %v736
      %v3349 = vunpack.c.l.b16 %v737
      %v3350 = vunpack.c.h.b16 %v737
      %v3351 = vunpack.c.l.b16 %v738
      %v3352 = vunpack.c.h.b16 %v738
      %v3353 = vunpack.c.l.b16 %v739
      %v3354 = vunpack.c.h.b16 %v739
      %v3355 = vunpack.c.l.b16 %v740
      %v3356 = vunpack.c.h.b16 %v740
      %v3357 = vunpack.c.l.b16 %v741
      %v3358 = vunpack.c.h.b16 %v741
      %v3359 = vunpack.c.l.b16 %v742
      %v3360 = vunpack.c.h.b16 %v742
      %v3361 = vunpack.c.l.b16 %v743
      %v3362 = vunpack.c.h.b16 %v743
      %v3363 = vunpack.c.l.b16 %v744
      %v3364 = vunpack.c.h.b16 %v744
      %v3365 = vunpack.c.l.b16 %v745
      %v3366 = vunpack.c.h.b16 %v745
      %v3367 = vunpack.c.l.b16 %v746
      %v3368 = vunpack.c.h.b16 %v746
      %v3369 = vunpack.c.l.b16 %v747
      %v3370 = vunpack.c.h.b16 %v747
      %v3371 = vunpack.c.l.b16 %v748
      %v3372 = vunpack.c.h.b16 %v748
      %v3373 = vunpack.c.l.b16 %v749
      %v3374 = vunpack.c.h.b16 %v749
      %v3375 = vunpack.c.l.b16 %v750
      %v3376 = vunpack.c.h.b16 %v750
      %v3377 = vunpack.c.l.b16 %v751
      %v3378 = vunpack.c.h.b16 %v751
      %v3379 = vunpack.c.l.b16 %v752
      %v3380 = vunpack.c.h.b16 %v752
      %v3381 = vunpack.c.l.b16 %v753
      %v3382 = vunpack.c.h.b16 %v753
      %v3383 = vunpack.c.l.b16 %v754
      %v3384 = vunpack.c.h.b16 %v754
      %v3385 = vunpack.c.l.b16 %v755
      %v3386 = vunpack.c.h.b16 %v755
      %v3387 = vunpack.c.l.b16 %v756
      %v3388 = vunpack.c.h.b16 %v756
      %v3389 = vunpack.c.l.b16 %v757
      %v3390 = vunpack.c.h.b16 %v757
      %v3391 = vunpack.c.l.b16 %v758
      %v3392 = vunpack.c.h.b16 %v758
      %v3393 = vunpack.c.l.b16 %v759
      %v3394 = vunpack.c.h.b16 %v759
      %v3395 = vunpack.c.l.b16 %v760
      %v3396 = vunpack.c.h.b16 %v760
      %v3397 = vunpack.c.l.b16 %v761
      %v3398 = vunpack.c.h.b16 %v761
      %v3399 = vunpack.c.l.b16 %v762
      %v3400 = vunpack.c.h.b16 %v762
      %v3401 = vunpack.c.l.b16 %v763
      %v3402 = vunpack.c.h.b16 %v763
      %v3403 = vunpack.c.l.b16 %v764
      %v3404 = vunpack.c.h.b16 %v764
      %v3405 = vunpack.c.l.b16 %v765
      %v3406 = vunpack.c.h.b16 %v765
      %v3407 = vunpack.c.l.b16 %v766
      %v3408 = vunpack.c.h.b16 %v766
      %v3409 = vunpack.c.l.b16 %v767
      %v3410 = vunpack.c.h.b16 %v767
      %v3411 = vunpack.c.l.b16 %v768
      %v3412 = vunpack.c.h.b16 %v768
      %v3413 = vunpack.c.l.b16 %v769
      %v3414 = vunpack.c.h.b16 %v769
      %v3415 = vunpack.c.l.b16 %v770
      %v3416 = vunpack.c.h.b16 %v770
      %v3417 = vunpack.c.l.b16 %v771
      %v3418 = vunpack.c.h.b16 %v771
      %v3419 = vunpack.c.l.b16 %v772
      %v3420 = vunpack.c.h.b16 %v772
      %v3421 = vunpack.c.l.b16 %v773
      %v3422 = vunpack.c.h.b16 %v773
      %v3423 = vunpack.c.l.b16 %v774
      %v3424 = vunpack.c.h.b16 %v774
      %v3425 = vunpack.c.l.b16 %v775
      %v3426 = vunpack.c.h.b16 %v775
      %v3427 = vunpack.c.l.b16 %v776
      %v3428 = vunpack.c.h.b16 %v776
      %v3429 = vunpack.c.l.b16 %v777
      %v3430 = vunpack.c.h.b16 %v777
      %v3431 = vunpack.c.l.b16 %v778
      %v3432 = vunpack.c.h.b16 %v778
      %v3433 = vunpack.c.l.b16 %v779
      %v3434 = vunpack.c.h.b16 %v779
      %v3435 = vunpack.c.l.b16 %v780
      %v3436 = vunpack.c.h.b16 %v780
      %v3437 = vunpack.c.l.b16 %v781
      %v3438 = vunpack.c.h.b16 %v781
      %v3439 = vunpack.c.l.b16 %v782
      %v3440 = vunpack.c.h.b16 %v782
      %v3441 = vunpack.c.l.b16 %v783
      %v3442 = vunpack.c.h.b16 %v783
      %v3443 = vunpack.c.l.b16 %v784
      %v3444 = vunpack.c.h.b16 %v784
      %v3445 = vunpack.c.l.b16 %v785
      %v3446 = vunpack.c.h.b16 %v785
      %v3447 = vunpack.c.l.b16 %v786
      %v3448 = vunpack.c.h.b16 %v786
      %v3449 = vunpack.c.l.b16 %v787
      %v3450 = vunpack.c.h.b16 %v787
      %v3451 = vunpack.c.l.b16 %v788
      %v3452 = vunpack.c.h.b16 %v788
      %v3453 = vunpack.c.l.b16 %v789
      %v3454 = vunpack.c.h.b16 %v789
      %v3455 = vunpack.c.l.b16 %v790
      %v3456 = vunpack.c.h.b16 %v790
      %v3457 = vunpack.c.l.b16 %v791
      %v3458 = vunpack.c.h.b16 %v791
      %v3459 = vunpack.c.l.b16 %v792
      %v3460 = vunpack.c.h.b16 %v792
      %v3461 = vunpack.c.l.b16 %v793
      %v3462 = vunpack.c.h.b16 %v793
      %v3463 = vunpack.c.l.b16 %v794
      %v3464 = vunpack.c.h.b16 %v794
      %v3465 = vunpack.c.l.b16 %v795
      %v3466 = vunpack.c.h.b16 %v795
      %v3467 = vunpack.c.l.b16 %v796
      %v3468 = vunpack.c.h.b16 %v796
      %v3469 = vunpack.c.l.b16 %v797
      %v3470 = vunpack.c.h.b16 %v797
      %v3471 = vunpack.c.l.b16 %v798
      %v3472 = vunpack.c.h.b16 %v798
      %v3473 = vunpack.c.l.b16 %v799
      %v3474 = vunpack.c.h.b16 %v799
      %v3475 = vunpack.c.l.b16 %v800
      %v3476 = vunpack.c.h.b16 %v800
      %v3477 = vunpack.c.l.b16 %v801
      %v3478 = vunpack.c.h.b16 %v801
      %v3479 = vunpack.c.l.b16 %v802
      %v3480 = vunpack.c.h.b16 %v802
      %v3481 = vunpack.c.l.b16 %v803
      %v3482 = vunpack.c.h.b16 %v803
      %v3483 = vunpack.c.l.b16 %v804
      %v3484 = vunpack.c.h.b16 %v804
      %v3485 = vunpack.c.l.b16 %v805
      %v3486 = vunpack.c.h.b16 %v805
      %v3487 = vunpack.c.l.b16 %v806
      %v3488 = vunpack.c.h.b16 %v806
      %v3489 = vunpack.c.l.b16 %v807
      %v3490 = vunpack.c.h.b16 %v807
      %v3491 = vunpack.c.l.b16 %v808
      %v3492 = vunpack.c.h.b16 %v808
      %v3493 = vunpack.c.l.b16 %v809
      %v3494 = vunpack.c.h.b16 %v809
      %v3495 = vunpack.c.l.b16 %v810
      %v3496 = vunpack.c.h.b16 %v810
      %v3497 = vunpack.c.l.b16 %v811
      %v3498 = vunpack.c.h.b16 %v811
      %v3499 = vunpack.c.l.b16 %v812
      %v3500 = vunpack.c.h.b16 %v812
      %v3501 = vunpack.c.l.b16 %v813
      %v3502 = vunpack.c.h.b16 %v813
      %v3503 = vunpack.c.l.b16 %v814
      %v3504 = vunpack.c.h.b16 %v814
      %v3505 = vunpack.c.l.b16 %v815
      %v3506 = vunpack.c.h.b16 %v815
      %v3507 = vunpack.c.l.b16 %v816
      %v3508 = vunpack.c.h.b16 %v816
      %v3509 = vunpack.c.l.b16 %v817
      %v3510 = vunpack.c.h.b16 %v817
      %v3511 = vunpack.c.l.b16 %v818
      %v3512 = vunpack.c.h.b16 %v818
      %v3513 = vunpack.c.l.b16 %v819
      %v3514 = vunpack.c.h.b16 %v819
      %v3515 = vunpack.c.l.b16 %v820
      %v3516 = vunpack.c.h.b16 %v820
      %v3517 = vunpack.c.l.b16 %v821
      %v3518 = vunpack.c.h.b16 %v821
      %v3519 = vunpack.c.l.b16 %v822
      %v3520 = vunpack.c.h.b16 %v822
      %v3521 = vunpack.c.l.b16 %v823
      %v3522 = vunpack.c.h.b16 %v823
      %v3523 = vunpack.c.l.b16 %v824
      %v3524 = vunpack.c.h.b16 %v824
      %v3525 = vunpack.c.l.b16 %v825
      %v3526 = vunpack.c.h.b16 %v825
      %v3527 = vunpack.c.l.b16 %v826
      %v3528 = vunpack.c.h.b16 %v826
      %v3529 = vunpack.c.l.b16 %v827
      %v3530 = vunpack.c.h.b16 %v827
      %v3531 = vunpack.c.l.b16 %v828
      %v3532 = vunpack.c.h.b16 %v828
      %v3533 = vunpack.c.l.b16 %v829
      %v3534 = vunpack.c.h.b16 %v829
      %v3535 = vunpack.c.l.b16 %v830
      %v3536 = vunpack.c.h.b16 %v830
      %v3537 = vunpack.c.l.b16 %v831
      %v3538 = vunpack.c.h.b16 %v831
      %v3539 = vunpack.c.l.b16 %v832
      %v3540 = vunpack.c.h.b16 %v832
      %v3541 = vunpack.c.l.b16 %v833
      %v3542 = vunpack.c.h.b16 %v833
      %v3543 = vunpack.c.l.b16 %v834
      %v3544 = vunpack.c.h.b16 %v834
      %v3545 = vunpack.c.l.b16 %v835
      %v3546 = vunpack.c.h.b16 %v835
      %v3547 = vunpack.c.l.b16 %v836
      %v3548 = vunpack.c.h.b16 %v836
      %v3549 = vunpack.c.l.b16 %v837
      %v3550 = vunpack.c.h.b16 %v837
      %v3551 = vunpack.c.l.b16 %v838
      %v3552 = vunpack.c.h.b16 %v838
      %v3553 = vunpack.c.l.b16 %v839
      %v3554 = vunpack.c.h.b16 %v839
      %v3555 = vunpack.c.l.b16 %v840
      %v3556 = vunpack.c.h.b16 %v840
      %v3557 = vunpack.c.l.b16 %v841
      %v3558 = vunpack.c.h.b16 %v841
      %v3559 = vunpack.c.l.b16 %v842
      %v3560 = vunpack.c.h.b16 %v842
      %v3561 = vunpack.c.l.b16 %v843
      %v3562 = vunpack.c.h.b16 %v843
      %v3563 = vunpack.c.l.b16 %v844
      %v3564 = vunpack.c.h.b16 %v844
      %v3565 = vunpack.c.l.b16 %v845
      %v3566 = vunpack.c.h.b16 %v845
      %v3567 = vunpack.c.l.b16 %v846
      %v3568 = vunpack.c.h.b16 %v846
      %v3569 = vunpack.c.l.b16 %v847
      %v3570 = vunpack.c.h.b16 %v847
      %v3571 = vunpack.c.l.b16 %v848
      %v3572 = vunpack.c.h.b16 %v848
      %v3573 = vunpack.c.l.b16 %v849
      %v3574 = vunpack.c.h.b16 %v849
      %v3575 = vunpack.c.l.b16 %v850
      %v3576 = vunpack.c.h.b16 %v850
      %v3577 = vunpack.c.l.b16 %v851
      %v3578 = vunpack.c.h.b16 %v851
      %v3579 = vunpack.c.l.b16 %v852
      %v3580 = vunpack.c.h.b16 %v852
      %v3581 = vunpack.c.l.b16 %v853
      %v3582 = vunpack.c.h.b16 %v853
      %v3583 = vunpack.c.l.b16 %v854
      %v3584 = vunpack.c.h.b16 %v854
      %v3585 = vunpack.c.l.b16 %v855
      %v3586 = vunpack.c.h.b16 %v855
      %v3587 = vunpack.c.l.b16 %v856
      %v3588 = vunpack.c.h.b16 %v856
      %v3589 = vunpack.c.l.b16 %v857
      %v3590 = vunpack.c.h.b16 %v857
      %v3591 = vunpack.c.l.b16 %v858
      %v3592 = vunpack.c.h.b16 %v858
      %v3593 = vunpack.c.l.b16 %v859
      %v3594 = vunpack.c.h.b16 %v859
      %v3595 = vunpack.c.l.b16 %v860
      %v3596 = vunpack.c.h.b16 %v860
      %v3597 = vunpack.c.l.b16 %v861
      %v3598 = vunpack.c.h.b16 %v861
      %v3599 = vunpack.c.l.b16 %v862
      %v3600 = vunpack.c.h.b16 %v862
      %v3601 = vunpack.c.l.b16 %v863
      %v3602 = vunpack.c.h.b16 %v863
      %v3603 = vunpack.c.l.b16 %v864
      %v3604 = vunpack.c.h.b16 %v864
      %v3605 = vunpack.c.l.b16 %v865
      %v3606 = vunpack.c.h.b16 %v865
      %v3607 = vunpack.c.l.b16 %v866
      %v3608 = vunpack.c.h.b16 %v866
      %v3609 = vunpack.c.l.b16 %v867
      %v3610 = vunpack.c.h.b16 %v867
      %v3611 = vunpack.c.l.b16 %v868
      %v3612 = vunpack.c.h.b16 %v868
      %v3613 = vunpack.c.l.b16 %v869
      %v3614 = vunpack.c.h.b16 %v869
      %v3615 = vunpack.c.l.b16 %v870
      %v3616 = vunpack.c.h.b16 %v870
      %v3617 = vunpack.c.l.b16 %v871
      %v3618 = vunpack.c.h.b16 %v871
      %v3619 = vunpack.c.l.b16 %v872
      %v3620 = vunpack.c.h.b16 %v872
      %v3621 = vunpack.c.l.b16 %v873
      %v3622 = vunpack.c.h.b16 %v873
      %v3623 = vunpack.c.l.b16 %v874
      %v3624 = vunpack.c.h.b16 %v874
      %v3625 = vunpack.c.l.b16 %v875
      %v3626 = vunpack.c.h.b16 %v875
      %v3627 = vunpack.c.l.b16 %v876
      %v3628 = vunpack.c.h.b16 %v876
      %v3629 = vunpack.c.l.b16 %v877
      %v3630 = vunpack.c.h.b16 %v877
      %v3631 = vunpack.c.l.b16 %v878
      %v3632 = vunpack.c.h.b16 %v878
      %v3633 = vunpack.c.l.b16 %v879
      %v3634 = vunpack.c.h.b16 %v879
      %v3635 = vunpack.c.l.b16 %v880
      %v3636 = vunpack.c.h.b16 %v880
      %v3637 = vunpack.c.l.b16 %v881
      %v3638 = vunpack.c.h.b16 %v881
      %v3639 = vunpack.c.l.b16 %v882
      %v3640 = vunpack.c.h.b16 %v882
      %v3641 = vunpack.c.l.b16 %v883
      %v3642 = vunpack.c.h.b16 %v883
      %v3643 = vunpack.c.l.b16 %v884
      %v3644 = vunpack.c.h.b16 %v884
      %v3645 = vunpack.c.l.b16 %v885
      %v3646 = vunpack.c.h.b16 %v885
      %v3647 = vunpack.c.l.b16 %v886
      %v3648 = vunpack.c.h.b16 %v886
      %v3649 = vunpack.c.l.b16 %v887
      %v3650 = vunpack.c.h.b16 %v887
      %v3651 = vunpack.c.l.b16 %v888
      %v3652 = vunpack.c.h.b16 %v888
      %v3653 = vunpack.c.l.b16 %v889
      %v3654 = vunpack.c.h.b16 %v889
      %v3655 = vunpack.c.l.b16 %v890
      %v3656 = vunpack.c.h.b16 %v890
      %v3657 = vunpack.c.l.b16 %v891
      %v3658 = vunpack.c.h.b16 %v891
      %v3659 = vunpack.c.l.b16 %v892
      %v3660 = vunpack.c.h.b16 %v892
      %v3661 = vunpack.c.l.b16 %v893
      %v3662 = vunpack.c.h.b16 %v893
      %v3663 = vunpack.c.l.b16 %v894
      %v3664 = vunpack.c.h.b16 %v894
      %v3665 = vunpack.c.l.b16 %v895
      %v3666 = vunpack.c.h.b16 %v895
      %v3667 = vunpack.c.l.b16 %v896
      %v3668 = vunpack.c.h.b16 %v896
      %v3669 = vunpack.c.l.b16 %v897
      %v3670 = vunpack.c.h.b16 %v897
      %v3671 = vunpack.c.l.b16 %v898
      %v3672 = vunpack.c.h.b16 %v898
      %v3673 = vunpack.c.l.b16 %v899
      %v3674 = vunpack.c.h.b16 %v899
      %v3675 = vunpack.c.l.b16 %v900
      %v3676 = vunpack.c.h.b16 %v900
      %v3677 = vunpack.c.l.b16 %v901
      %v3678 = vunpack.c.h.b16 %v901
      %v3679 = vunpack.c.l.b16 %v902
      %v3680 = vunpack.c.h.b16 %v902
      %v3681 = vunpack.c.l.b16 %v903
      %v3682 = vunpack.c.h.b16 %v903
      %v3683 = vunpack.c.l.b16 %v904
      %v3684 = vunpack.c.h.b16 %v904
      %v3685 = vunpack.c.l.b16 %v905
      %v3686 = vunpack.c.h.b16 %v905
      %v3687 = vunpack.c.l.b16 %v906
      %v3688 = vunpack.c.h.b16 %v906
      %v3689 = vunpack.c.l.b16 %v907
      %v3690 = vunpack.c.h.b16 %v907
      %v3691 = vunpack.c.l.b16 %v908
      %v3692 = vunpack.c.h.b16 %v908
      %v3693 = vunpack.c.l.b16 %v909
      %v3694 = vunpack.c.h.b16 %v909
      %v3695 = vunpack.c.l.b16 %v910
      %v3696 = vunpack.c.h.b16 %v910
      %v3697 = vunpack.c.l.b16 %v911
      %v3698 = vunpack.c.h.b16 %v911
      %v3699 = vunpack.c.l.b16 %v912
      %v3700 = vunpack.c.h.b16 %v912
      %v3701 = vunpack.c.l.b16 %v913
      %v3702 = vunpack.c.h.b16 %v913
      %v3703 = vunpack.c.l.b16 %v914
      %v3704 = vunpack.c.h.b16 %v914
      %v3705 = vunpack.c.l.b16 %v915
      %v3706 = vunpack.c.h.b16 %v915
      %v3707 = vunpack.c.l.b16 %v916
      %v3708 = vunpack.c.h.b16 %v916
      %v3709 = vunpack.c.l.b16 %v917
      %v3710 = vunpack.c.h.b16 %v917
      %v3711 = vunpack.c.l.b16 %v918
      %v3712 = vunpack.c.h.b16 %v918
      %v3713 = vunpack.c.l.b16 %v919
      %v3714 = vunpack.c.h.b16 %v919
      %v3715 = vunpack.c.l.b16 %v920
      %v3716 = vunpack.c.h.b16 %v920
      %v3717 = vunpack.c.l.b16 %v921
      %v3718 = vunpack.c.h.b16 %v921
      %v3719 = vunpack.c.l.b16 %v922
      %v3720 = vunpack.c.h.b16 %v922
      %v3721 = vunpack.c.l.b16 %v923
      %v3722 = vunpack.c.h.b16 %v923
      %v3723 = vunpack.c.l.b16 %v924
      %v3724 = vunpack.c.h.b16 %v924
      %v3725 = vunpack.c.l.b16 %v925
      %v3726 = vunpack.c.h.b16 %v925
      %v3727 = vunpack.c.l.b16 %v926
      %v3728 = vunpack.c.h.b16 %v926
      %v3729 = vunpack.c.l.b16 %v927
      %v3730 = vunpack.c.h.b16 %v927
      %v3731 = vunpack.c.l.b16 %v928
      %v3732 = vunpack.c.h.b16 %v928
      %v3733 = vunpack.c.l.b16 %v929
      %v3734 = vunpack.c.h.b16 %v929
      %v3735 = vunpack.c.l.b16 %v930
      %v3736 = vunpack.c.h.b16 %v930
      %v3737 = vunpack.c.l.b16 %v931
      %v3738 = vunpack.c.h.b16 %v931
      %v3739 = vunpack.c.l.b16 %v932
      %v3740 = vunpack.c.h.b16 %v932
      %v3741 = vunpack.c.l.b16 %v933
      %v3742 = vunpack.c.h.b16 %v933
      %v3743 = vunpack.c.l.b16 %v934
      %v3744 = vunpack.c.h.b16 %v934
      %v3745 = vunpack.c.l.b16 %v935
      %v3746 = vunpack.c.h.b16 %v935
      %v3747 = vunpack.c.l.b16 %v936
      %v3748 = vunpack.c.h.b16 %v936
      %v3749 = vunpack.c.l.b16 %v937
      %v3750 = vunpack.c.h.b16 %v937
      %v3751 = vunpack.c.l.b16 %v938
      %v3752 = vunpack.c.h.b16 %v938
      %v3753 = vunpack.c.l.b16 %v939
      %v3754 = vunpack.c.h.b16 %v939
      %v3755 = vunpack.c.l.b16 %v940
      %v3756 = vunpack.c.h.b16 %v940
      %v3757 = vunpack.c.l.b16 %v941
      %v3758 = vunpack.c.h.b16 %v941
      %v3759 = vunpack.c.l.b16 %v942
      %v3760 = vunpack.c.h.b16 %v942
      %v3761 = vunpack.c.l.b16 %v943
      %v3762 = vunpack.c.h.b16 %v943
      %v3763 = vunpack.c.l.b16 %v944
      %v3764 = vunpack.c.h.b16 %v944
      %v3765 = vunpack.c.l.b16 %v945
      %v3766 = vunpack.c.h.b16 %v945
      %v3767 = vunpack.c.l.b16 %v946
      %v3768 = vunpack.c.h.b16 %v946
      %v3769 = vunpack.c.l.b16 %v947
      %v3770 = vunpack.c.h.b16 %v947
      %v3771 = vunpack.c.l.b16 %v948
      %v3772 = vunpack.c.h.b16 %v948
      %v3773 = vunpack.c.l.b16 %v949
      %v3774 = vunpack.c.h.b16 %v949
      %v3775 = vunpack.c.l.b16 %v950
      %v3776 = vunpack.c.h.b16 %v950
      %v3777 = vunpack.c.l.b16 %v951
      %v3778 = vunpack.c.h.b16 %v951
      %v3779 = vunpack.c.l.b16 %v952
      %v3780 = vunpack.c.h.b16 %v952
      %v3781 = vunpack.c.l.b16 %v953
      %v3782 = vunpack.c.h.b16 %v953
      %v3783 = vunpack.c.l.b16 %v954
      %v3784 = vunpack.c.h.b16 %v954
      %v3785 = vunpack.c.l.b16 %v955
      %v3786 = vunpack.c.h.b16 %v955
      %v3787 = vunpack.c.l.b16 %v956
      %v3788 = vunpack.c.h.b16 %v956
      %v3789 = vunpack.c.l.b16 %v957
      %v3790 = vunpack.c.h.b16 %v957
      %v3791 = vunpack.c.l.b16 %v958
      %v3792 = vunpack.c.h.b16 %v958
      %v3793 = vunpack.c.l.b16 %v959
      %v3794 = vunpack.c.h.b16 %v959
      %v3795 = vunpack.c.l.b16 %v960
      %v3796 = vunpack.c.h.b16 %v960
      %v3797 = vunpack.c.l.b16 %v961
      %v3798 = vunpack.c.h.b16 %v961
      %v3799 = vunpack.c.l.b16 %v962
      %v3800 = vunpack.c.h.b16 %v962
      %v3801 = vunpack.c.l.b16 %v963
      %v3802 = vunpack.c.h.b16 %v963
      %v3803 = vunpack.c.l.b16 %v964
      %v3804 = vunpack.c.h.b16 %v964
      %v3805 = vunpack.c.l.b16 %v965
      %v3806 = vunpack.c.h.b16 %v965
      %v3807 = vunpack.c.l.b16 %v966
      %v3808 = vunpack.c.h.b16 %v966
      %v3809 = vunpack.c.l.b16 %v967
      %v3810 = vunpack.c.h.b16 %v967
      %v3811 = vunpack.c.l.b16 %v968
      %v3812 = vunpack.c.h.b16 %v968
      %v3813 = vunpack.c.l.b16 %v969
      %v3814 = vunpack.c.h.b16 %v969
      %v3815 = vunpack.c.l.b16 %v970
      %v3816 = vunpack.c.h.b16 %v970
      %v3817 = vunpack.c.l.b16 %v971
      %v3818 = vunpack.c.h.b16 %v971
      %v3819 = vunpack.c.l.b16 %v972
      %v3820 = vunpack.c.h.b16 %v972
      %v3821 = vunpack.c.l.b16 %v973
      %v3822 = vunpack.c.h.b16 %v973
      %v3823 = vunpack.c.l.b16 %v974
      %v3824 = vunpack.c.h.b16 %v974
      %v3825 = vunpack.c.l.b16 %v975
      %v3826 = vunpack.c.h.b16 %v975
      %v3827 = vunpack.c.l.b16 %v976
      %v3828 = vunpack.c.h.b16 %v976
      %v3829 = vunpack.c.l.b16 %v977
      %v3830 = vunpack.c.h.b16 %v977
      %v3831 = vunpack.c.l.b16 %v978
      %v3832 = vunpack.c.h.b16 %v978
      %v3833 = vunpack.c.l.b16 %v979
      %v3834 = vunpack.c.h.b16 %v979
      %v3835 = vunpack.c.l.b16 %v980
      %v3836 = vunpack.c.h.b16 %v980
      %v3837 = vunpack.c.l.b16 %v981
      %v3838 = vunpack.c.h.b16 %v981
      %v3839 = vunpack.c.l.b16 %v982
      %v3840 = vunpack.c.h.b16 %v982
      %v3841 = vunpack.c.l.b16 %v983
      %v3842 = vunpack.c.h.b16 %v983
      %v3843 = vunpack.c.l.b16 %v984
      %v3844 = vunpack.c.h.b16 %v984
      %v3845 = vunpack.c.l.b16 %v985
      %v3846 = vunpack.c.h.b16 %v985
      %v3847 = vunpack.c.l.b16 %v986
      %v3848 = vunpack.c.h.b16 %v986
      %v3849 = vunpack.c.l.b16 %v987
      %v3850 = vunpack.c.h.b16 %v987
      %v3851 = vunpack.c.l.b16 %v988
      %v3852 = vunpack.c.h.b16 %v988
      %v3853 = vunpack.c.l.b16 %v989
      %v3854 = vunpack.c.h.b16 %v989
      %v3855 = vunpack.c.l.b16 %v990
      %v3856 = vunpack.c.h.b16 %v990
      %v3857 = vunpack.c.l.b16 %v991
      %v3858 = vunpack.c.h.b16 %v991
      %v3859 = vunpack.c.l.b16 %v992
      %v3860 = vunpack.c.h.b16 %v992
      %v3861 = vunpack.c.l.b16 %v993
      %v3862 = vunpack.c.h.b16 %v993
      %v3863 = vunpack.c.l.b16 %v994
      %v3864 = vunpack.c.h.b16 %v994
      %v3865 = vunpack.c.l.b16 %v995
      %v3866 = vunpack.c.h.b16 %v995
      %v3867 = vunpack.c.l.b16 %v996
      %v3868 = vunpack.c.h.b16 %v996
      %v3869 = vunpack.c.l.b16 %v997
      %v3870 = vunpack.c.h.b16 %v997
      %v3871 = vunpack.c.l.b16 %v998
      %v3872 = vunpack.c.h.b16 %v998
      %v3873 = vunpack.c.l.b16 %v999
      %v3874 = vunpack.c.h.b16 %v999
      %v3875 = vunpack.c.l.b16 %v1000
      %v3876 = vunpack.c.h.b16 %v1000
      %v3877 = vunpack.c.l.b16 %v1001
      %v3878 = vunpack.c.h.b16 %v1001
      %v3879 = vunpack.c.l.b16 %v1002
      %v3880 = vunpack.c.h.b16 %v1002
      %v3881 = vunpack.c.l.b16 %v1003
      %v3882 = vunpack.c.h.b16 %v1003
      %v3883 = vunpack.c.l.b16 %v1004
      %v3884 = vunpack.c.h.b16 %v1004
      %v3885 = vunpack.c.l.b16 %v1005
      %v3886 = vunpack.c.h.b16 %v1005
      %v3887 = vunpack.c.l.b16 %v1006
      %v3888 = vunpack.c.h.b16 %v1006
      %v3889 = vunpack.c.l.b16 %v1007
      %v3890 = vunpack.c.h.b16 %v1007
      %v3891 = vunpack.c.l.b16 %v1008
      %v3892 = vunpack.c.h.b16 %v1008
      %v3893 = vunpack.c.l.b16 %v1009
      %v3894 = vunpack.c.h.b16 %v1009
      %v3895 = vunpack.c.l.b16 %v1010
      %v3896 = vunpack.c.h.b16 %v1010
      %v3897 = vunpack.c.l.b16 %v1011
      %v3898 = vunpack.c.h.b16 %v1011
      %v3899 = vunpack.c.l.b16 %v1012
      %v3900 = vunpack.c.h.b16 %v1012
      %v3901 = vunpack.c.l.b16 %v1013
      %v3902 = vunpack.c.h.b16 %v1013
      %v3903 = vunpack.c.l.b16 %v1014
      %v3904 = vunpack.c.h.b16 %v1014
      %v3905 = vunpack.c.l.b16 %v1015
      %v3906 = vunpack.c.h.b16 %v1015
      %v3907 = vunpack.c.l.b16 %v1016
      %v3908 = vunpack.c.h.b16 %v1016
      %v3909 = vunpack.c.l.b16 %v1017
      %v3910 = vunpack.c.h.b16 %v1017
      %v3911 = vunpack.c.l.b16 %v1018
      %v3912 = vunpack.c.h.b16 %v1018
      %v3913 = vunpack.c.l.b16 %v1019
      %v3914 = vunpack.c.h.b16 %v1019
      %v3915 = vunpack.c.l.b16 %v1020
      %v3916 = vunpack.c.h.b16 %v1020
      %v3917 = vunpack.c.l.b16 %v1021
      %v3918 = vunpack.c.h.b16 %v1021
      %v3919 = vunpack.c.l.b16 %v1022
      %v3920 = vunpack.c.h.b16 %v1022
      %v3921 = vunpack.c.l.b16 %v1023
      %v3922 = vunpack.c.h.b16 %v1023
      %v3923 = vunpack.c.l.b16 %v1024
      %v3924 = vunpack.c.h.b16 %v1024
      %v3925 = vunpack.c.l.b16 %v1025
      %v3926 = vunpack.c.h.b16 %v1025
      %v3927 = vunpack.c.l.b16 %v1026
      %v3928 = vunpack.c.h.b16 %v1026
      %v3929 = vunpack.c.l.b16 %v1027
      %v3930 = vunpack.c.h.b16 %v1027
      %v3931 = vunpack.c.l.b16 %v1028
      %v3932 = vunpack.c.h.b16 %v1028
      %v3933 = vunpack.c.l.b16 %v1029
      %v3934 = vunpack.c.h.b16 %v1029
      %v3935 = vunpack.c.l.b16 %v1030
      %v3936 = vunpack.c.h.b16 %v1030
      %v3937 = vunpack.c.l.b16 %v1031
      %v3938 = vunpack.c.h.b16 %v1031
      %v3939 = vunpack.c.l.b16 %v1032
      %v3940 = vunpack.c.h.b16 %v1032
      %v3941 = vunpack.c.l.b16 %v1033
      %v3942 = vunpack.c.h.b16 %v1033
      %v3943 = vunpack.c.l.b16 %v1034
      %v3944 = vunpack.c.h.b16 %v1034
      %v3945 = vunpack.c.l.b16 %v1035
      %v3946 = vunpack.c.h.b16 %v1035
      %v3947 = vunpack.c.l.b16 %v1036
      %v3948 = vunpack.c.h.b16 %v1036
      %v3949 = vunpack.c.l.b16 %v1037
      %v3950 = vunpack.c.h.b16 %v1037
      %v3951 = vunpack.c.l.b16 %v1038
      %v3952 = vunpack.c.h.b16 %v1038
      %v3953 = vunpack.c.l.b16 %v1039
      %v3954 = vunpack.c.h.b16 %v1039
      %v3955 = vunpack.c.l.b16 %v1040
      %v3956 = vunpack.c.h.b16 %v1040
      %v3957 = vunpack.c.l.b16 %v1041
      %v3958 = vunpack.c.h.b16 %v1041
      %v3959 = vunpack.c.l.b16 %v1042
      %v3960 = vunpack.c.h.b16 %v1042
      %v3961 = vunpack.c.l.b16 %v1043
      %v3962 = vunpack.c.h.b16 %v1043
      %v3963 = vunpack.c.l.b16 %v1044
      %v3964 = vunpack.c.h.b16 %v1044
      %v3965 = vunpack.c.l.b16 %v1045
      %v3966 = vunpack.c.h.b16 %v1045
      %v3967 = vunpack.c.l.b16 %v1046
      %v3968 = vunpack.c.h.b16 %v1046
      %v3969 = vunpack.c.l.b16 %v1047
      %v3970 = vunpack.c.h.b16 %v1047
      %v3971 = vunpack.c.l.b16 %v1048
      %v3972 = vunpack.c.h.b16 %v1048
      %v3973 = vunpack.c.l.b16 %v1049
      %v3974 = vunpack.c.h.b16 %v1049
      %v3975 = vunpack.c.l.b16 %v1050
      %v3976 = vunpack.c.h.b16 %v1050
      %v3977 = vunpack.c.l.b16 %v1051
      %v3978 = vunpack.c.h.b16 %v1051
      %v3979 = vunpack.c.l.b16 %v1052
      %v3980 = vunpack.c.h.b16 %v1052
      %v3981 = vunpack.c.l.b16 %v1053
      %v3982 = vunpack.c.h.b16 %v1053
      %v3983 = vunpack.c.l.b16 %v1054
      %v3984 = vunpack.c.h.b16 %v1054
      %v3985 = vunpack.c.l.b16 %v1055
      %v3986 = vunpack.c.h.b16 %v1055
      %v3987 = vunpack.c.l.b16 %v1056
      %v3988 = vunpack.c.h.b16 %v1056
      %v3989 = vunpack.c.l.b16 %v1057
      %v3990 = vunpack.c.h.b16 %v1057
      %v3991 = vunpack.c.l.b16 %v1058
      %v3992 = vunpack.c.h.b16 %v1058
      %v3993 = vunpack.c.l.b16 %v1059
      %v3994 = vunpack.c.h.b16 %v1059
      %v3995 = vunpack.c.l.b16 %v1060
      %v3996 = vunpack.c.h.b16 %v1060
      %v3997 = vunpack.c.l.b16 %v1061
      %v3998 = vunpack.c.h.b16 %v1061
      %v3999 = vunpack.c.l.b16 %v1062
      %v4000 = vunpack.c.h.b16 %v1062
      %v4001 = vunpack.c.l.b16 %v1063
      %v4002 = vunpack.c.h.b16 %v1063
      %v4003 = vunpack.c.l.b16 %v1064
      %v4004 = vunpack.c.h.b16 %v1064
      %v4005 = vunpack.c.l.b16 %v1065
      %v4006 = vunpack.c.h.b16 %v1065
      %v4007 = vunpack.c.l.b16 %v1066
      %v4008 = vunpack.c.h.b16 %v1066
      %v4009 = vunpack.c.l.b16 %v1067
      %v4010 = vunpack.c.h.b16 %v1067
      %v4011 = vunpack.c.l.b16 %v1068
      %v4012 = vunpack.c.h.b16 %v1068
      %v4013 = vunpack.c.l.b16 %v1069
      %v4014 = vunpack.c.h.b16 %v1069
      %v4015 = vunpack.c.l.b16 %v1070
      %v4016 = vunpack.c.h.b16 %v1070
      %v4017 = vunpack.c.l.b16 %v1071
      %v4018 = vunpack.c.h.b16 %v1071
      %v4019 = vunpack.c.l.b16 %v1072
      %v4020 = vunpack.c.h.b16 %v1072
      %v4021 = vunpack.c.l.b16 %v1073
      %v4022 = vunpack.c.h.b16 %v1073
      %v4023 = vunpack.c.l.b16 %v1074
      %v4024 = vunpack.c.h.b16 %v1074
      %v4025 = vunpack.c.l.b16 %v1075
      %v4026 = vunpack.c.h.b16 %v1075
      %v4027 = vunpack.c.l.b16 %v1076
      %v4028 = vunpack.c.h.b16 %v1076
      %v4029 = vunpack.c.l.b16 %v1077
      %v4030 = vunpack.c.h.b16 %v1077
      %v4031 = vunpack.c.l.b16 %v1078
      %v4032 = vunpack.c.h.b16 %v1078
      %v4033 = vunpack.c.l.b16 %v1079
      %v4034 = vunpack.c.h.b16 %v1079
      %v4035 = vunpack.c.l.b16 %v1080
      %v4036 = vunpack.c.h.b16 %v1080
      %v4037 = vunpack.c.l.b16 %v1081
      %v4038 = vunpack.c.h.b16 %v1081
      %v4039 = vunpack.c.l.b16 %v1082
      %v4040 = vunpack.c.h.b16 %v1082
      %v4041 = vunpack.c.l.b16 %v1083
      %v4042 = vunpack.c.h.b16 %v1083
      %v4043 = vunpack.c.l.b16 %v1084
      %v4044 = vunpack.c.h.b16 %v1084
      %v4045 = vunpack.c.l.b16 %v1085
      %v4046 = vunpack.c.h.b16 %v1085
      %v4047 = vunpack.c.l.b16 %v1086
      %v4048 = vunpack.c.h.b16 %v1086
      %v4049 = vunpack.c.l.b16 %v1087
      %v4050 = vunpack.c.h.b16 %v1087
      %v4051 = vunpack.c.l.b16 %v1088
      %v4052 = vunpack.c.h.b16 %v1088
      %v4053 = vunpack.c.l.b16 %v1089
      %v4054 = vunpack.c.h.b16 %v1089
      %v4055 = vunpack.c.l.b16 %v1090
      %v4056 = vunpack.c.h.b16 %v1090
      %v4057 = vunpack.c.l.b16 %v1091
      %v4058 = vunpack.c.h.b16 %v1091
      %v4059 = vunpack.c.l.b16 %v1092
      %v4060 = vunpack.c.h.b16 %v1092
      %v4061 = vunpack.c.l.b16 %v1093
      %v4062 = vunpack.c.h.b16 %v1093
      %v4063 = vunpack.c.l.b16 %v1094
      %v4064 = vunpack.c.h.b16 %v1094
      %v4065 = vunpack.c.l.b16 %v1095
      %v4066 = vunpack.c.h.b16 %v1095
      %v4067 = vunpack.c.l.b16 %v1096
      %v4068 = vunpack.c.h.b16 %v1096
      %v4069 = vunpack.c.l.b16 %v1097
      %v4070 = vunpack.c.h.b16 %v1097
      %v4071 = vunpack.c.l.b16 %v1098
      %v4072 = vunpack.c.h.b16 %v1098
      %v4073 = vunpack.c.l.b16 %v1099
      %v4074 = vunpack.c.h.b16 %v1099
      %v4075 = vunpack.c.l.b16 %v1100
      %v4076 = vunpack.c.h.b16 %v1100
      %v4077 = vunpack.c.l.b16 %v1101
      %v4078 = vunpack.c.h.b16 %v1101
      %v4079 = vunpack.c.l.b16 %v1102
      %v4080 = vunpack.c.h.b16 %v1102
      %v4081 = vunpack.c.l.b16 %v1103
      %v4082 = vunpack.c.h.b16 %v1103
      %v4083 = vunpack.c.l.b16 %v1104
      %v4084 = vunpack.c.h.b16 %v1104
      %v4085 = vunpack.c.l.b16 %v1105
      %v4086 = vunpack.c.h.b16 %v1105
      %v4087 = vunpack.c.l.b16 %v1106
      %v4088 = vunpack.c.h.b16 %v1106
      %v4089 = vunpack.c.l.b16 %v1107
      %v4090 = vunpack.c.h.b16 %v1107
      %v4091 = vunpack.c.l.b16 %v1108
      %v4092 = vunpack.c.h.b16 %v1108
      %v4093 = vunpack.c.l.b16 %v1109
      %v4094 = vunpack.c.h.b16 %v1109
      %v4095 = vunpack.c.l.b16 %v1110
      %v4096 = vunpack.c.h.b16 %v1110
      %v4097 = vunpack.c.l.b16 %v1111
      %v4098 = vunpack.c.h.b16 %v1111
      %v4099 = vunpack.c.l.b16 %v1112
      %v4100 = vunpack.c.h.b16 %v1112
      %v4101 = vunpack.c.l.b16 %v1113
      %v4102 = vunpack.c.h.b16 %v1113
      %v4103 = vunpack.c.l.b16 %v1114
      %v4104 = vunpack.c.h.b16 %v1114
      %v4105 = vunpack.c.l.b16 %v1115
      %v4106 = vunpack.c.h.b16 %v1115
      %v4107 = vunpack.c.l.b16 %v1116
      %v4108 = vunpack.c.h.b16 %v1116
      %v4109 = vunpack.c.l.b16 %v1117
      %v4110 = vunpack.c.h.b16 %v1117
      %v4111 = vunpack.c.l.b16 %v1118
      %v4112 = vunpack.c.h.b16 %v1118
      %v4113 = vunpack.c.l.b16 %v1119
      %v4114 = vunpack.c.h.b16 %v1119
      %v4115 = vunpack.c.l.b16 %v1120
      %v4116 = vunpack.c.h.b16 %v1120
      %v4117 = vunpack.c.l.b16 %v1121
      %v4118 = vunpack.c.h.b16 %v1121
      %v4119 = vunpack.c.l.b16 %v1122
      %v4120 = vunpack.c.h.b16 %v1122
      %v4121 = vunpack.c.l.b16 %v1123
      %v4122 = vunpack.c.h.b16 %v1123
      %v4123 = vunpack.c.l.b16 %v1124
      %v4124 = vunpack.c.h.b16 %v1124
      %v4125 = vunpack.c.l.b16 %v1125
      %v4126 = vunpack.c.h.b16 %v1125
      %v4127 = vunpack.c.l.b16 %v1126
      %v4128 = vunpack.c.h.b16 %v1126
      %v4129 = vunpack.c.l.b16 %v1127
      %v4130 = vunpack.c.h.b16 %v1127
      %v4131 = vunpack.c.l.b16 %v1128
      %v4132 = vunpack.c.h.b16 %v1128
      %v4133 = vunpack.c.l.b16 %v1129
      %v4134 = vunpack.c.h.b16 %v1129
      %v4135 = vunpack.c.l.b16 %v1130
      %v4136 = vunpack.c.h.b16 %v1130
      %v4137 = vunpack.c.l.b16 %v1131
      %v4138 = vunpack.c.h.b16 %v1131
      %v4139 = vunpack.c.l.b16 %v1132
      %v4140 = vunpack.c.h.b16 %v1132
      %v4141 = vunpack.c.l.b16 %v1133
      %v4142 = vunpack.c.h.b16 %v1133
      %v4143 = vunpack.c.l.b16 %v1134
      %v4144 = vunpack.c.h.b16 %v1134
      %v4145 = vunpack.c.l.b16 %v1135
      %v4146 = vunpack.c.h.b16 %v1135
      %v4147 = vunpack.c.l.b16 %v1136
      %v4148 = vunpack.c.h.b16 %v1136
      %v4149 = vunpack.c.l.b16 %v1137
      %v4150 = vunpack.c.h.b16 %v1137
      %v4151 = vunpack.c.l.b16 %v1138
      %v4152 = vunpack.c.h.b16 %v1138
      %v4153 = vunpack.c.l.b16 %v1139
      %v4154 = vunpack.c.h.b16 %v1139
      %v4155 = vunpack.c.l.b16 %v1140
      %v4156 = vunpack.c.h.b16 %v1140
      %v4157 = vunpack.c.l.b16 %v1141
      %v4158 = vunpack.c.h.b16 %v1141
      %v4159 = vunpack.c.l.b16 %v1142
      %v4160 = vunpack.c.h.b16 %v1142
      %v4161 = vunpack.c.l.b16 %v1143
      %v4162 = vunpack.c.h.b16 %v1143
      %v4163 = vunpack.c.l.b16 %v1144
      %v4164 = vunpack.c.h.b16 %v1144
      %v4165 = vunpack.c.l.b16 %v1145
      %v4166 = vunpack.c.h.b16 %v1145
      %v4167 = vunpack.c.l.b16 %v1146
      %v4168 = vunpack.c.h.b16 %v1146
      %v4169 = vunpack.c.l.b16 %v1147
      %v4170 = vunpack.c.h.b16 %v1147
      %v4171 = vunpack.c.l.b16 %v1148
      %v4172 = vunpack.c.h.b16 %v1148
      %v4173 = vunpack.c.l.b16 %v1149
      %v4174 = vunpack.c.h.b16 %v1149
      %v4175 = vunpack.c.l.b16 %v1150
      %v4176 = vunpack.c.h.b16 %v1150
      %v4177 = vunpack.c.l.b16 %v1151
      %v4178 = vunpack.c.h.b16 %v1151
      %v4179 = vunpack.c.l.b16 %v1152
      %v4180 = vunpack.c.h.b16 %v1152
      %v4181 = vunpack.c.l.b16 %v1153
      %v4182 = vunpack.c.h.b16 %v1153
      %v4183 = vunpack.c.l.b16 %v1154
      %v4184 = vunpack.c.h.b16 %v1154
      %v4185 = vunpack.c.l.b16 %v1155
      %v4186 = vunpack.c.h.b16 %v1155
      %v4187 = vunpack.c.l.b16 %v1156
      %v4188 = vunpack.c.h.b16 %v1156
      %v4189 = vunpack.c.l.b16 %v1157
      %v4190 = vunpack.c.h.b16 %v1157
      %v4191 = vunpack.c.l.b16 %v1158
      %v4192 = vunpack.c.h.b16 %v1158
      %v4193 = vunpack.c.l.b16 %v1159
      %v4194 = vunpack.c.h.b16 %v1159
      %v4195 = vunpack.c.l.b16 %v1160
      %v4196 = vunpack.c.h.b16 %v1160
      %v4197 = vunpack.c.l.b16 %v1161
      %v4198 = vunpack.c.h.b16 %v1161
      %v4199 = vunpack.c.l.b16 %v1162
      %v4200 = vunpack.c.h.b16 %v1162
      %v4201 = vunpack.c.l.b16 %v1163
      %v4202 = vunpack.c.h.b16 %v1163
      %v4203 = vunpack.c.l.b16 %v1164
      %v4204 = vunpack.c.h.b16 %v1164
      %v4205 = vunpack.c.l.b16 %v1165
      %v4206 = vunpack.c.h.b16 %v1165
      %v4207 = vunpack.c.l.b16 %v1166
      %v4208 = vunpack.c.h.b16 %v1166
      %v4209 = vunpack.c.l.b16 %v1167
      %v4210 = vunpack.c.h.b16 %v1167
      %v4211 = vunpack.c.l.b16 %v1168
      %v4212 = vunpack.c.h.b16 %v1168
      %v4213 = vunpack.c.l.b16 %v1169
      %v4214 = vunpack.c.h.b16 %v1169
      %v4215 = vunpack.c.l.b16 %v1170
      %v4216 = vunpack.c.h.b16 %v1170
      %v4217 = vunpack.c.l.b16 %v1171
      %v4218 = vunpack.c.h.b16 %v1171
      %v4219 = vunpack.c.l.b16 %v1172
      %v4220 = vunpack.c.h.b16 %v1172
      %v4221 = vunpack.c.l.b16 %v1173
      %v4222 = vunpack.c.h.b16 %v1173
      %v4223 = vunpack.c.l.b16 %v1174
      %v4224 = vunpack.c.h.b16 %v1174
      %v4225 = vunpack.c.l.b16 %v1175
      %v4226 = vunpack.c.h.b16 %v1175
      %v4227 = vunpack.c.l.b16 %v1176
      %v4228 = vunpack.c.h.b16 %v1176
      %v4229 = vunpack.c.l.b16 %v1177
      %v4230 = vunpack.c.h.b16 %v1177
      %v4231 = vunpack.c.l.b16 %v1178
      %v4232 = vunpack.c.h.b16 %v1178
      %v4233 = vunpack.c.l.b16 %v1179
      %v4234 = vunpack.c.h.b16 %v1179
      %v4235 = vunpack.c.l.b16 %v1180
      %v4236 = vunpack.c.h.b16 %v1180
      %v4237 = vunpack.c.l.b16 %v1181
      %v4238 = vunpack.c.h.b16 %v1181
      %v4239 = vunpack.c.l.b16 %v1182
      %v4240 = vunpack.c.h.b16 %v1182
      %v4241 = vunpack.c.l.b16 %v1183
      %v4242 = vunpack.c.h.b16 %v1183
      %v4243 = vunpack.c.l.b16 %v1184
      %v4244 = vunpack.c.h.b16 %v1184
      %v4245 = vunpack.c.l.b16 %v1185
      %v4246 = vunpack.c.h.b16 %v1185
      %v4247 = vpack.c.b16 %v2259, %v2231
      %v4248 = vpack.c.b16 %v2260, %v2232
      %v4249 = vpack.c.b16 %v2261, %v2233
      %v4250 = vpack.c.b16 %v2262, %v2234
      %v4251 = vpack.c.b16 %v2263, %v2235
      %v4252 = vpack.c.b16 %v2264, %v2236
      %v4253 = vpack.c.b16 %v2265, %v2237
      %v4254 = vpack.c.b16 %v2266, %v2238
      %v4255 = vpack.c.b16 %v2267, %v2239
      %v4256 = vpack.c.b16 %v2268, %v2240
      %v4257 = vpack.c.b16 %v2269, %v2241
      %v4258 = vpack.c.b16 %v2270, %v2242
      %v4259 = vpack.c.b16 %v2271, %v2243
      %v4260 = vpack.c.b16 %v2272, %v2244
      %v4261 = vpack.c.b16 %v2273, %v2245
      %v4262 = vpack.c.b16 %v2274, %v2246
      %v4263 = vpack.c.b16 %v2275, %v2247
      %v4264 = vpack.c.b16 %v2276, %v2248
      %v4265 = vpack.c.b16 %v2277, %v2249
      %v4266 = vpack.c.b16 %v2278, %v2250
      %v4267 = vpack.c.b16 %v2279, %v2251
      %v4268 = vpack.c.b16 %v2280, %v2252
      %v4269 = vpack.c.b16 %v2281, %v2253
      %v4270 = vpack.c.b16 %v2282, %v2254
      %v4271 = vpack.c.b16 %v2283, %v2255
      %v4272 = vpack.c.b16 %v2284, %v2256
      %v4273 = vpack.c.b16 %v2285, %v2257
      %v4274 = vpack.c.b16 %v2286, %v2258
      %v4275 = vpack.c.b16 %v2315, %v2287
      %v4276 = vpack.c.b16 %v2316, %v2288
      %v4277 = vpack.c.b16 %v2317, %v2289
      %v4278 = vpack.c.b16 %v2318, %v2290
      %v4279 = vpack.c.b16 %v2319, %v2291
      %v4280 = vpack.c.b16 %v2320, %v2292
      %v4281 = vpack.c.b16 %v2321, %v2293
      %v4282 = vpack.c.b16 %v2322, %v2294
      %v4283 = vpack.c.b16 %v2323, %v2295
      %v4284 = vpack.c.b16 %v2324, %v2296
      %v4285 = vpack.c.b16 %v2325, %v2297
      %v4286 = vpack.c.b16 %v2326, %v2298
      %v4287 = vpack.c.b16 %v2327, %v2299
      %v4288 = vpack.c.b16 %v2328, %v2300
      %v4289 = vpack.c.b16 %v2329, %v2301
      %v4290 = vpack.c.b16 %v2330, %v2302
      %v4291 = vpack.c.b16 %v2331, %v2303
      %v4292 = vpack.c.b16 %v2332, %v2304
      %v4293 = vpack.c.b16 %v2333, %v2305
      %v4294 = vpack.c.b16 %v2334, %v2306
      %v4295 = vpack.c.b16 %v2335, %v2307
      %v4296 = vpack.c.b16 %v2336, %v2308
      %v4297 = vpack.c.b16 %v2337, %v2309
      %v4298 = vpack.c.b16 %v2338, %v2310
      %v4299 = vpack.c.b16 %v2339, %v2311
      %v4300 = vpack.c.b16 %v2340, %v2312
      %v4301 = vpack.c.b16 %v2341, %v2313
      %v4302 = vpack.c.b16 %v2342, %v2314
      %v4303 = vpack.c.b16 %v2371, %v2343
      %v4304 = vpack.c.b16 %v2372, %v2344
      %v4305 = vpack.c.b16 %v2373, %v2345
      %v4306 = vpack.c.b16 %v2374, %v2346
      %v4307 = vpack.c.b16 %v2375, %v2347
      %v4308 = vpack.c.b16 %v2376, %v2348
      %v4309 = vpack.c.b16 %v2377, %v2349
      %v4310 = vpack.c.b16 %v2378, %v2350
      %v4311 = vpack.c.b16 %v2379, %v2351
      %v4312 = vpack.c.b16 %v2380, %v2352
      %v4313 = vpack.c.b16 %v2381, %v2353
      %v4314 = vpack.c.b16 %v2382, %v2354
      %v4315 = vpack.c.b16 %v2383, %v2355
      %v4316 = vpack.c.b16 %v2384, %v2356
      %v4317 = vpack.c.b16 %v2385, %v2357
      %v4318 = vpack.c.b16 %v2386, %v2358
      %v4319 = vpack.c.b16 %v2387, %v2359
      %v4320 = vpack.c.b16 %v2388, %v2360
      %v4321 = vpack.c.b16 %v2389, %v2361
      %v4322 = vpack.c.b16 %v2390, %v2362
      %v4323 = vpack.c.b16 %v2391, %v2363
      %v4324 = vpack.c.b16 %v2392, %v2364
      %v4325 = vpack.c.b16 %v2393, %v2365
      %v4326 = vpack.c.b16 %v2394, %v2366
      %v4327 = vpack.c.b16 %v2395, %v2367
      %v4328 = vpack.c.b16 %v2396, %v2368
      %v4329 = vpack.c.b16 %v2397, %v2369
      %v4330 = vpack.c.b16 %v2398, %v2370
      %v4331 = vpack.c.b16 %v2427, %v2399
      %v4332 = vpack.c.b16 %v2428, %v2400
      %v4333 = vpack.c.b16 %v2429, %v2401
      %v4334 = vpack.c.b16 %v2430, %v2402
      %v4335 = vpack.c.b16 %v2431, %v2403
      %v4336 = vpack.c.b16 %v2432, %v2404
      %v4337 = vpack.c.b16 %v2433, %v2405
      %v4338 = vpack.c.b16 %v2434, %v2406
      %v4339 = vpack.c.b16 %v2435, %v2407
      %v4340 = vpack.c.b16 %v2436, %v2408
      %v4341 = vpack.c.b16 %v2437, %v2409
      %v4342 = vpack.c.b16 %v2438, %v2410
      %v4343 = vpack.c.b16 %v2439, %v2411
      %v4344 = vpack.c.b16 %v2440, %v2412
      %v4345 = vpack.c.b16 %v2441, %v2413
      %v4346 = vpack.c.b16 %v2442, %v2414
      %v4347 = vpack.c.b16 %v2443, %v2415
      %v4348 = vpack.c.b16 %v2444, %v2416
      %v4349 = vpack.c.b16 %v2445, %v2417
      %v4350 = vpack.c.b16 %v2446, %v2418
      %v4351 = vpack.c.b16 %v2447, %v2419
      %v4352 = vpack.c.b16 %v2448, %v2420
      %v4353 = vpack.c.b16 %v2449, %v2421
      %v4354 = vpack.c.b16 %v2450, %v2422
      %v4355 = vpack.c.b16 %v2451, %v2423
      %v4356 = vpack.c.b16 %v2452, %v2424
      %v4357 = vpack.c.b16 %v2453, %v2425
      %v4358 = vpack.c.b16 %v2454, %v2426
      %v4359 = vpack.c.b16 %v2483, %v2455
      %v4360 = vpack.c.b16 %v2484, %v2456
      %v4361 = vpack.c.b16 %v2485, %v2457
      %v4362 = vpack.c.b16 %v2486, %v2458
      %v4363 = vpack.c.b16 %v2487, %v2459
      %v4364 = vpack.c.b16 %v2488, %v2460
      %v4365 = vpack.c.b16 %v2489, %v2461
      %v4366 = vpack.c.b16 %v2490, %v2462
      %v4367 = vpack.c.b16 %v2491, %v2463
      %v4368 = vpack.c.b16 %v2492, %v2464
      %v4369 = vpack.c.b16 %v2493, %v2465
      %v4370 = vpack.c.b16 %v2494, %v2466
      %v4371 = vpack.c.b16 %v2495, %v2467
      %v4372 = vpack.c.b16 %v2496, %v2468
      %v4373 = vpack.c.b16 %v2497, %v2469
      %v4374 = vpack.c.b16 %v2498, %v2470
      %v4375 = vpack.c.b16 %v2499, %v2471
      %v4376 = vpack.c.b16 %v2500, %v2472
      %v4377 = vpack.c.b16 %v2501, %v2473
      %v4378 = vpack.c.b16 %v2502, %v2474
      %v4379 = vpack.c.b16 %v2503, %v2475
      %v4380 = vpack.c.b16 %v2504, %v2476
      %v4381 = vpack.c.b16 %v2505, %v2477
      %v4382 = vpack.c.b16 %v2506, %v2478
      %v4383 = vpack.c.b16 %v2507, %v2479
      %v4384 = vpack.c.b16 %v2508, %v2480
      %v4385 = vpack.c.b16 %v2509, %v2481
      %v4386 = vpack.c.b16 %v2510, %v2482
      %v4387 = vpack.c.b16 %v2539, %v2511
      %v4388 = vpack.c.b16 %v2540, %v2512
      %v4389 = vpack.c.b16 %v2541, %v2513
      %v4390 = vpack.c.b16 %v2542, %v2514
      %v4391 = vpack.c.b16 %v2543, %v2515
      %v4392 = vpack.c.b16 %v2544, %v2516
      %v4393 = vpack.c.b16 %v2545, %v2517
      %v4394 = vpack.c.b16 %v2546, %v2518
      %v4395 = vpack.c.b16 %v2547, %v2519
      %v4396 = vpack.c.b16 %v2548, %v2520
      %v4397 = vpack.c.b16 %v2549, %v2521
      %v4398 = vpack.c.b16 %v2550, %v2522
      %v4399 = vpack.c.b16 %v2551, %v2523
      %v4400 = vpack.c.b16 %v2552, %v2524
      %v4401 = vpack.c.b16 %v2553, %v2525
      %v4402 = vpack.c.b16 %v2554, %v2526
      %v4403 = vpack.c.b16 %v2555, %v2527
      %v4404 = vpack.c.b16 %v2556, %v2528
      %v4405 = vpack.c.b16 %v2557, %v2529
      %v4406 = vpack.c.b16 %v2558, %v2530
      %v4407 = vpack.c.b16 %v2559, %v2531
      %v4408 = vpack.c.b16 %v2560, %v2532
      %v4409 = vpack.c.b16 %v2561, %v2533
      %v4410 = vpack.c.b16 %v2562, %v2534
      %v4411 = vpack.c.b16 %v2563, %v2535
      %v4412 = vpack.c.b16 %v2564, %v2536
      %v4413 = vpack.c.b16 %v2565, %v2537
      %v4414 = vpack.c.b16 %v2566, %v2538
      %v4415 = vpack.c.b16 %v2595, %v2567
      %v4416 = vpack.c.b16 %v2596, %v2568
      %v4417 = vpack.c.b16 %v2597, %v2569
      %v4418 = vpack.c.b16 %v2598, %v2570
      %v4419 = vpack.c.b16 %v2599, %v2571
      %v4420 = vpack.c.b16 %v2600, %v2572
      %v4421 = vpack.c.b16 %v2601, %v2573
      %v4422 = vpack.c.b16 %v2602, %v2574
      %v4423 = vpack.c.b16 %v2603, %v2575
      %v4424 = vpack.c.b16 %v2604, %v2576
      %v4425 = vpack.c.b16 %v2605, %v2577
      %v4426 = vpack.c.b16 %v2606, %v2578
      %v4427 = vpack.c.b16 %v2607, %v2579
      %v4428 = vpack.c.b16 %v2608, %v2580
      %v4429 = vpack.c.b16 %v2609, %v2581
      %v4430 = vpack.c.b16 %v2610, %v2582
      %v4431 = vpack.c.b16 %v2611, %v2583
      %v4432 = vpack.c.b16 %v2612, %v2584
      %v4433 = vpack.c.b16 %v2613, %v2585
      %v4434 = vpack.c.b16 %v2614, %v2586
      %v4435 = vpack.c.b16 %v2615, %v2587
      %v4436 = vpack.c.b16 %v2616, %v2588
      %v4437 = vpack.c.b16 %v2617, %v2589
      %v4438 = vpack.c.b16 %v2618, %v2590
      %v4439 = vpack.c.b16 %v2619, %v2591
      %v4440 = vpack.c.b16 %v2620, %v2592
      %v4441 = vpack.c.b16 %v2621, %v2593
      %v4442 = vpack.c.b16 %v2622, %v2594
      %v4443 = vpack.c.b16 %v2651, %v2623
      %v4444 = vpack.c.b16 %v2652, %v2624
      %v4445 = vpack.c.b16 %v2653, %v2625
      %v4446 = vpack.c.b16 %v2654, %v2626
      %v4447 = vpack.c.b16 %v2655, %v2627
      %v4448 = vpack.c.b16 %v2656, %v2628
      %v4449 = vpack.c.b16 %v2657, %v2629
      %v4450 = vpack.c.b16 %v2658, %v2630
      %v4451 = vpack.c.b16 %v2659, %v2631
      %v4452 = vpack.c.b16 %v2660, %v2632
      %v4453 = vpack.c.b16 %v2661, %v2633
      %v4454 = vpack.c.b16 %v2662, %v2634
      %v4455 = vpack.c.b16 %v2663, %v2635
      %v4456 = vpack.c.b16 %v2664, %v2636
      %v4457 = vpack.c.b16 %v2665, %v2637
      %v4458 = vpack.c.b16 %v2666, %v2638
      %v4459 = vpack.c.b16 %v2667, %v2639
      %v4460 = vpack.c.b16 %v2668, %v2640
      %v4461 = vpack.c.b16 %v2669, %v2641
      %v4462 = vpack.c.b16 %v2670, %v2642
      %v4463 = vpack.c.b16 %v2671, %v2643
      %v4464 = vpack.c.b16 %v2672, %v2644
      %v4465 = vpack.c.b16 %v2673, %v2645
      %v4466 = vpack.c.b16 %v2674, %v2646
      %v4467 = vpack.c.b16 %v2675, %v2647
      %v4468 = vpack.c.b16 %v2676, %v2648
      %v4469 = vpack.c.b16 %v2677, %v2649
      %v4470 = vpack.c.b16 %v2678, %v2650
      %v4471 = vpack.c.b16 %v2707, %v2679
      %v4472 = vpack.c.b16 %v2708, %v2680
      %v4473 = vpack.c.b16 %v2709, %v2681
      %v4474 = vpack.c.b16 %v2710, %v2682
      %v4475 = vpack.c.b16 %v2711, %v2683
      %v4476 = vpack.c.b16 %v2712, %v2684
      %v4477 = vpack.c.b16 %v2713, %v2685
      %v4478 = vpack.c.b16 %v2714, %v2686
      %v4479 = vpack.c.b16 %v2715, %v2687
      %v4480 = vpack.c.b16 %v2716, %v2688
      %v4481 = vpack.c.b16 %v2717, %v2689
      %v4482 = vpack.c.b16 %v2718, %v2690
      %v4483 = vpack.c.b16 %v2719, %v2691
      %v4484 = vpack.c.b16 %v2720, %v2692
      %v4485 = vpack.c.b16 %v2721, %v2693
      %v4486 = vpack.c.b16 %v2722, %v2694
      %v4487 = vpack.c.b16 %v2723, %v2695
      %v4488 = vpack.c.b16 %v2724, %v2696
      %v4489 = vpack.c.b16 %v2725, %v2697
      %v4490 = vpack.c.b16 %v2726, %v2698
      %v4491 = vpack.c.b16 %v2727, %v2699
      %v4492 = vpack.c.b16 %v2728, %v2700
      %v4493 = vpack.c.b16 %v2729, %v2701
      %v4494 = vpack.c.b16 %v2730, %v2702
      %v4495 = vpack.c.b16 %v2731, %v2703
      %v4496 = vpack.c.b16 %v2732, %v2704
      %v4497 = vpack.c.b16 %v2733, %v2705
      %v4498 = vpack.c.b16 %v2734, %v2706
      %v4499 = vpack.c.b16 %v2763, %v2735
      %v4500 = vpack.c.b16 %v2764, %v2736
      %v4501 = vpack.c.b16 %v2765, %v2737
      %v4502 = vpack.c.b16 %v2766, %v2738
      %v4503 = vpack.c.b16 %v2767, %v2739
      %v4504 = vpack.c.b16 %v2768, %v2740
      %v4505 = vpack.c.b16 %v2769, %v2741
      %v4506 = vpack.c.b16 %v2770, %v2742
      %v4507 = vpack.c.b16 %v2771, %v2743
      %v4508 = vpack.c.b16 %v2772, %v2744
      %v4509 = vpack.c.b16 %v2773, %v2745
      %v4510 = vpack.c.b16 %v2774, %v2746
      %v4511 = vpack.c.b16 %v2775, %v2747
      %v4512 = vpack.c.b16 %v2776, %v2748
      %v4513 = vpack.c.b16 %v2777, %v2749
      %v4514 = vpack.c.b16 %v2778, %v2750
      %v4515 = vpack.c.b16 %v2779, %v2751
      %v4516 = vpack.c.b16 %v2780, %v2752
      %v4517 = vpack.c.b16 %v2781, %v2753
      %v4518 = vpack.c.b16 %v2782, %v2754
      %v4519 = vpack.c.b16 %v2783, %v2755
      %v4520 = vpack.c.b16 %v2784, %v2756
      %v4521 = vpack.c.b16 %v2785, %v2757
      %v4522 = vpack.c.b16 %v2786, %v2758
      %v4523 = vpack.c.b16 %v2787, %v2759
      %v4524 = vpack.c.b16 %v2788, %v2760
      %v4525 = vpack.c.b16 %v2789, %v2761
      %v4526 = vpack.c.b16 %v2790, %v2762
      %v4527 = vpack.c.b16 %v2819, %v2791
      %v4528 = vpack.c.b16 %v2820, %v2792
      %v4529 = vpack.c.b16 %v2821, %v2793
      %v4530 = vpack.c.b16 %v2822, %v2794
      %v4531 = vpack.c.b16 %v2823, %v2795
      %v4532 = vpack.c.b16 %v2824, %v2796
      %v4533 = vpack.c.b16 %v2825, %v2797
      %v4534 = vpack.c.b16 %v2826, %v2798
      %v4535 = vpack.c.b16 %v2827, %v2799
      %v4536 = vpack.c.b16 %v2828, %v2800
      %v4537 = vpack.c.b16 %v2829, %v2801
      %v4538 = vpack.c.b16 %v2830, %v2802
      %v4539 = vpack.c.b16 %v2831, %v2803
      %v4540 = vpack.c.b16 %v2832, %v2804
      %v4541 = vpack.c.b16 %v2833, %v2805
      %v4542 = vpack.c.b16 %v2834, %v2806
      %v4543 = vpack.c.b16 %v2835, %v2807
      %v4544 = vpack.c.b16 %v2836, %v2808
      %v4545 = vpack.c.b16 %v2837, %v2809
      %v4546 = vpack.c.b16 %v2838, %v2810
      %v4547 = vpack.c.b16 %v2839, %v2811
      %v4548 = vpack.c.b16 %v2840, %v2812
      %v4549 = vpack.c.b16 %v2841, %v2813
      %v4550 = vpack.c.b16 %v2842, %v2814
      %v4551 = vpack.c.b16 %v2843, %v2815
      %v4552 = vpack.c.b16 %v2844, %v2816
      %v4553 = vpack.c.b16 %v2845, %v2817
      %v4554 = vpack.c.b16 %v2846, %v2818
      %v4555 = vpack.c.b16 %v2875, %v2847
      %v4556 = vpack.c.b16 %v2876, %v2848
      %v4557 = vpack.c.b16 %v2877, %v2849
      %v4558 = vpack.c.b16 %v2878, %v2850
      %v4559 = vpack.c.b16 %v2879, %v2851
      %v4560 = vpack.c.b16 %v2880, %v2852
      %v4561 = vpack.c.b16 %v2881, %v2853
      %v4562 = vpack.c.b16 %v2882, %v2854
      %v4563 = vpack.c.b16 %v2883, %v2855
      %v4564 = vpack.c.b16 %v2884, %v2856
      %v4565 = vpack.c.b16 %v2885, %v2857
      %v4566 = vpack.c.b16 %v2886, %v2858
      %v4567 = vpack.c.b16 %v2887, %v2859
      %v4568 = vpack.c.b16 %v2888, %v2860
      %v4569 = vpack.c.b16 %v2889, %v2861
      %v4570 = vpack.c.b16 %v2890, %v2862
      %v4571 = vpack.c.b16 %v2891, %v2863
      %v4572 = vpack.c.b16 %v2892, %v2864
      %v4573 = vpack.c.b16 %v2893, %v2865
      %v4574 = vpack.c.b16 %v2894, %v2866
      %v4575 = vpack.c.b16 %v2895, %v2867
      %v4576 = vpack.c.b16 %v2896, %v2868
      %v4577 = vpack.c.b16 %v2897, %v2869
      %v4578 = vpack.c.b16 %v2898, %v2870
      %v4579 = vpack.c.b16 %v2899, %v2871
      %v4580 = vpack.c.b16 %v2900, %v2872
      %v4581 = vpack.c.b16 %v2901, %v2873
      %v4582 = vpack.c.b16 %v2902, %v2874
      %v4583 = vpack.c.b16 %v2931, %v2903
      %v4584 = vpack.c.b16 %v2932, %v2904
      %v4585 = vpack.c.b16 %v2933, %v2905
      %v4586 = vpack.c.b16 %v2934, %v2906
      %v4587 = vpack.c.b16 %v2935, %v2907
      %v4588 = vpack.c.b16 %v2936, %v2908
      %v4589 = vpack.c.b16 %v2937, %v2909
      %v4590 = vpack.c.b16 %v2938, %v2910
      %v4591 = vpack.c.b16 %v2939, %v2911
      %v4592 = vpack.c.b16 %v2940, %v2912
      %v4593 = vpack.c.b16 %v2941, %v2913
      %v4594 = vpack.c.b16 %v2942, %v2914
      %v4595 = vpack.c.b16 %v2943, %v2915
      %v4596 = vpack.c.b16 %v2944, %v2916
      %v4597 = vpack.c.b16 %v2945, %v2917
      %v4598 = vpack.c.b16 %v2946, %v2918
      %v4599 = vpack.c.b16 %v2947, %v2919
      %v4600 = vpack.c.b16 %v2948, %v2920
      %v4601 = vpack.c.b16 %v2949, %v2921
      %v4602 = vpack.c.b16 %v2950, %v2922
      %v4603 = vpack.c.b16 %v2951, %v2923
      %v4604 = vpack.c.b16 %v2952, %v2924
      %v4605 = vpack.c.b16 %v2953, %v2925
      %v4606 = vpack.c.b16 %v2954, %v2926
      %v4607 = vpack.c.b16 %v2955, %v2927
      %v4608 = vpack.c.b16 %v2956, %v2928
      %v4609 = vpack.c.b16 %v2957, %v2929
      %v4610 = vpack.c.b16 %v2958, %v2930
      %v4611 = vpack.c.b16 %v2987, %v2959
      %v4612 = vpack.c.b16 %v2988, %v2960
      %v4613 = vpack.c.b16 %v2989, %v2961
      %v4614 = vpack.c.b16 %v2990, %v2962
      %v4615 = vpack.c.b16 %v2991, %v2963
      %v4616 = vpack.c.b16 %v2992, %v2964
      %v4617 = vpack.c.b16 %v2993, %v2965
      %v4618 = vpack.c.b16 %v2994, %v2966
      %v4619 = vpack.c.b16 %v2995, %v2967
      %v4620 = vpack.c.b16 %v2996, %v2968
      %v4621 = vpack.c.b16 %v2997, %v2969
      %v4622 = vpack.c.b16 %v2998, %v2970
      %v4623 = vpack.c.b16 %v2999, %v2971
      %v4624 = vpack.c.b16 %v3000, %v2972
      %v4625 = vpack.c.b16 %v3001, %v2973
      %v4626 = vpack.c.b16 %v3002, %v2974
      %v4627 = vpack.c.b16 %v3003, %v2975
      %v4628 = vpack.c.b16 %v3004, %v2976
      %v4629 = vpack.c.b16 %v3005, %v2977
      %v4630 = vpack.c.b16 %v3006, %v2978
      %v4631 = vpack.c.b16 %v3007, %v2979
      %v4632 = vpack.c.b16 %v3008, %v2980
      %v4633 = vpack.c.b16 %v3009, %v2981
      %v4634 = vpack.c.b16 %v3010, %v2982
      %v4635 = vpack.c.b16 %v3011, %v2983
      %v4636 = vpack.c.b16 %v3012, %v2984
      %v4637 = vpack.c.b16 %v3013, %v2985
      %v4638 = vpack.c.b16 %v3014, %v2986
      %v4639 = vpack.c.b16 %v3043, %v3015
      %v4640 = vpack.c.b16 %v3044, %v3016
      %v4641 = vpack.c.b16 %v3045, %v3017
      %v4642 = vpack.c.b16 %v3046, %v3018
      %v4643 = vpack.c.b16 %v3047, %v3019
      %v4644 = vpack.c.b16 %v3048, %v3020
      %v4645 = vpack.c.b16 %v3049, %v3021
      %v4646 = vpack.c.b16 %v3050, %v3022
      %v4647 = vpack.c.b16 %v3051, %v3023
      %v4648 = vpack.c.b16 %v3052, %v3024
      %v4649 = vpack.c.b16 %v3053, %v3025
      %v4650 = vpack.c.b16 %v3054, %v3026
      %v4651 = vpack.c.b16 %v3055, %v3027
      %v4652 = vpack.c.b16 %v3056, %v3028
      %v4653 = vpack.c.b16 %v3057, %v3029
      %v4654 = vpack.c.b16 %v3058, %v3030
      %v4655 = vpack.c.b16 %v3059, %v3031
      %v4656 = vpack.c.b16 %v3060, %v3032
      %v4657 = vpack.c.b16 %v3061, %v3033
      %v4658 = vpack.c.b16 %v3062, %v3034
      %v4659 = vpack.c.b16 %v3063, %v3035
      %v4660 = vpack.c.b16 %v3064, %v3036
      %v4661 = vpack.c.b16 %v3065, %v3037
      %v4662 = vpack.c.b16 %v3066, %v3038
      %v4663 = vpack.c.b16 %v3067, %v3039
      %v4664 = vpack.c.b16 %v3068, %v3040
      %v4665 = vpack.c.b16 %v3069, %v3041
      %v4666 = vpack.c.b16 %v3070, %v3042
      %v4667 = vpack.c.b16 %v3099, %v3071
      %v4668 = vpack.c.b16 %v3100, %v3072
      %v4669 = vpack.c.b16 %v3101, %v3073
      %v4670 = vpack.c.b16 %v3102, %v3074
      %v4671 = vpack.c.b16 %v3103, %v3075
      %v4672 = vpack.c.b16 %v3104, %v3076
      %v4673 = vpack.c.b16 %v3105, %v3077
      %v4674 = vpack.c.b16 %v3106, %v3078
      %v4675 = vpack.c.b16 %v3107, %v3079
      %v4676 = vpack.c.b16 %v3108, %v3080
      %v4677 = vpack.c.b16 %v3109, %v3081
      %v4678 = vpack.c.b16 %v3110, %v3082
      %v4679 = vpack.c.b16 %v3111, %v3083
      %v4680 = vpack.c.b16 %v3112, %v3084
      %v4681 = vpack.c.b16 %v3113, %v3085
      %v4682 = vpack.c.b16 %v3114, %v3086
      %v4683 = vpack.c.b16 %v3115, %v3087
      %v4684 = vpack.c.b16 %v3116, %v3088
      %v4685 = vpack.c.b16 %v3117, %v3089
      %v4686 = vpack.c.b16 %v3118, %v3090
      %v4687 = vpack.c.b16 %v3119, %v3091
      %v4688 = vpack.c.b16 %v3120, %v3092
      %v4689 = vpack.c.b16 %v3121, %v3093
      %v4690 = vpack.c.b16 %v3122, %v3094
      %v4691 = vpack.c.b16 %v3123, %v3095
      %v4692 = vpack.c.b16 %v3124, %v3096
      %v4693 = vpack.c.b16 %v3125, %v3097
      %v4694 = vpack.c.b16 %v3126, %v3098
      %v4695 = vpack.c.b16 %v3155, %v3127
      %v4696 = vpack.c.b16 %v3156, %v3128
      %v4697 = vpack.c.b16 %v3157, %v3129
      %v4698 = vpack.c.b16 %v3158, %v3130
      %v4699 = vpack.c.b16 %v3159, %v3131
      %v4700 = vpack.c.b16 %v3160, %v3132
      %v4701 = vpack.c.b16 %v3161, %v3133
      %v4702 = vpack.c.b16 %v3162, %v3134
      %v4703 = vpack.c.b16 %v3163, %v3135
      %v4704 = vpack.c.b16 %v3164, %v3136
      %v4705 = vpack.c.b16 %v3165, %v3137
      %v4706 = vpack.c.b16 %v3166, %v3138
      %v4707 = vpack.c.b16 %v3167, %v3139
      %v4708 = vpack.c.b16 %v3168, %v3140
      %v4709 = vpack.c.b16 %v3169, %v3141
      %v4710 = vpack.c.b16 %v3170, %v3142
      %v4711 = vpack.c.b16 %v3171, %v3143
      %v4712 = vpack.c.b16 %v3172, %v3144
      %v4713 = vpack.c.b16 %v3173, %v3145
      %v4714 = vpack.c.b16 %v3174, %v3146
      %v4715 = vpack.c.b16 %v3175, %v3147
      %v4716 = vpack.c.b16 %v3176, %v3148
      %v4717 = vpack.c.b16 %v3177, %v3149
      %v4718 = vpack.c.b16 %v3178, %v3150
      %v4719 = vpack.c.b16 %v3179, %v3151
      %v4720 = vpack.c.b16 %v3180, %v3152
      %v4721 = vpack.c.b16 %v3181, %v3153
      %v4722 = vpack.c.b16 %v3182, %v3154
      %v4723 = vpack.c.b16 %v3211, %v3183
      %v4724 = vpack.c.b16 %v3212, %v3184
      %v4725 = vpack.c.b16 %v3213, %v3185
      %v4726 = vpack.c.b16 %v3214, %v3186
      %v4727 = vpack.c.b16 %v3215, %v3187
      %v4728 = vpack.c.b16 %v3216, %v3188
      %v4729 = vpack.c.b16 %v3217, %v3189
      %v4730 = vpack.c.b16 %v3218, %v3190
      %v4731 = vpack.c.b16 %v3219, %v3191
      %v4732 = vpack.c.b16 %v3220, %v3192
      %v4733 = vpack.c.b16 %v3221, %v3193
      %v4734 = vpack.c.b16 %v3222, %v3194
      %v4735 = vpack.c.b16 %v3223, %v3195
      %v4736 = vpack.c.b16 %v3224, %v3196
      %v4737 = vpack.c.b16 %v3225, %v3197
      %v4738 = vpack.c.b16 %v3226, %v3198
      %v4739 = vpack.c.b16 %v3227, %v3199
      %v4740 = vpack.c.b16 %v3228, %v3200
      %v4741 = vpack.c.b16 %v3229, %v3201
      %v4742 = vpack.c.b16 %v3230, %v3202
      %v4743 = vpack.c.b16 %v3231, %v3203
      %v4744 = vpack.c.b16 %v3232, %v3204
      %v4745 = vpack.c.b16 %v3233, %v3205
      %v4746 = vpack.c.b16 %v3234, %v3206
      %v4747 = vpack.c.b16 %v3235, %v3207
      %v4748 = vpack.c.b16 %v3236, %v3208
      %v4749 = vpack.c.b16 %v3237, %v3209
      %v4750 = vpack.c.b16 %v3238, %v3210
      %v4751 = vpack.c.b16 %v3267, %v3239
      %v4752 = vpack.c.b16 %v3268, %v3240
      %v4753 = vpack.c.b16 %v3269, %v3241
      %v4754 = vpack.c.b16 %v3270, %v3242
      %v4755 = vpack.c.b16 %v3271, %v3243
      %v4756 = vpack.c.b16 %v3272, %v3244
      %v4757 = vpack.c.b16 %v3273, %v3245
      %v4758 = vpack.c.b16 %v3274, %v3246
      %v4759 = vpack.c.b16 %v3275, %v3247
      %v4760 = vpack.c.b16 %v3276, %v3248
      %v4761 = vpack.c.b16 %v3277, %v3249
      %v4762 = vpack.c.b16 %v3278, %v3250
      %v4763 = vpack.c.b16 %v3279, %v3251
      %v4764 = vpack.c.b16 %v3280, %v3252
      %v4765 = vpack.c.b16 %v3281, %v3253
      %v4766 = vpack.c.b16 %v3282, %v3254
      %v4767 = vpack.c.b16 %v3283, %v3255
      %v4768 = vpack.c.b16 %v3284, %v3256
      %v4769 = vpack.c.b16 %v3285, %v3257
      %v4770 = vpack.c.b16 %v3286, %v3258
      %v4771 = vpack.c.b16 %v3287, %v3259
      %v4772 = vpack.c.b16 %v3288, %v3260
      %v4773 = vpack.c.b16 %v3289, %v3261
      %v4774 = vpack.c.b16 %v3290, %v3262
      %v4775 = vpack.c.b16 %v3291, %v3263
      %v4776 = vpack.c.b16 %v3292, %v3264
      %v4777 = vpack.c.b16 %v3293, %v3265
      %v4778 = vpack.c.b16 %v3294, %v3266
      %v4779 = vpack.c.b16 %v3323, %v3295
      %v4780 = vpack.c.b16 %v3324, %v3296
      %v4781 = vpack.c.b16 %v3325, %v3297
      %v4782 = vpack.c.b16 %v3326, %v3298
      %v4783 = vpack.c.b16 %v3327, %v3299
      %v4784 = vpack.c.b16 %v3328, %v3300
      %v4785 = vpack.c.b16 %v3329, %v3301
      %v4786 = vpack.c.b16 %v3330, %v3302
      %v4787 = vpack.c.b16 %v3331, %v3303
      %v4788 = vpack.c.b16 %v3332, %v3304
      %v4789 = vpack.c.b16 %v3333, %v3305
      %v4790 = vpack.c.b16 %v3334, %v3306
      %v4791 = vpack.c.b16 %v3335, %v3307
      %v4792 = vpack.c.b16 %v3336, %v3308
      %v4793 = vpack.c.b16 %v3337, %v3309
      %v4794 = vpack.c.b16 %v3338, %v3310
      %v4795 = vpack.c.b16 %v3339, %v3311
      %v4796 = vpack.c.b16 %v3340, %v3312
      %v4797 = vpack.c.b16 %v3341, %v3313
      %v4798 = vpack.c.b16 %v3342, %v3314
      %v4799 = vpack.c.b16 %v3343, %v3315
      %v4800 = vpack.c.b16 %v3344, %v3316
      %v4801 = vpack.c.b16 %v3345, %v3317
      %v4802 = vpack.c.b16 %v3346, %v3318
      %v4803 = vpack.c.b16 %v3347, %v3319
      %v4804 = vpack.c.b16 %v3348, %v3320
      %v4805 = vpack.c.b16 %v3349, %v3321
      %v4806 = vpack.c.b16 %v3350, %v3322
      %v4807 = vpack.c.b16 %v3379, %v3351
      %v4808 = vpack.c.b16 %v3380, %v3352
      %v4809 = vpack.c.b16 %v3381, %v3353
      %v4810 = vpack.c.b16 %v3382, %v3354
      %v4811 = vpack.c.b16 %v3383, %v3355
      %v4812 = vpack.c.b16 %v3384, %v3356
      %v4813 = vpack.c.b16 %v3385, %v3357
      %v4814 = vpack.c.b16 %v3386, %v3358
      %v4815 = vpack.c.b16 %v3387, %v3359
      %v4816 = vpack.c.b16 %v3388, %v3360
      %v4817 = vpack.c.b16 %v3389, %v3361
      %v4818 = vpack.c.b16 %v3390, %v3362
      %v4819 = vpack.c.b16 %v3391, %v3363
      %v4820 = vpack.c.b16 %v3392, %v3364
      %v4821 = vpack.c.b16 %v3393, %v3365
      %v4822 = vpack.c.b16 %v3394, %v3366
      %v4823 = vpack.c.b16 %v3395, %v3367
      %v4824 = vpack.c.b16 %v3396, %v3368
      %v4825 = vpack.c.b16 %v3397, %v3369
      %v4826 = vpack.c.b16 %v3398, %v3370
      %v4827 = vpack.c.b16 %v3399, %v3371
      %v4828 = vpack.c.b16 %v3400, %v3372
      %v4829 = vpack.c.b16 %v3401, %v3373
      %v4830 = vpack.c.b16 %v3402, %v3374
      %v4831 = vpack.c.b16 %v3403, %v3375
      %v4832 = vpack.c.b16 %v3404, %v3376
      %v4833 = vpack.c.b16 %v3405, %v3377
      %v4834 = vpack.c.b16 %v3406, %v3378
      %v4835 = vpack.c.b16 %v3435, %v3407
      %v4836 = vpack.c.b16 %v3436, %v3408
      %v4837 = vpack.c.b16 %v3437, %v3409
      %v4838 = vpack.c.b16 %v3438, %v3410
      %v4839 = vpack.c.b16 %v3439, %v3411
      %v4840 = vpack.c.b16 %v3440, %v3412
      %v4841 = vpack.c.b16 %v3441, %v3413
      %v4842 = vpack.c.b16 %v3442, %v3414
      %v4843 = vpack.c.b16 %v3443, %v3415
      %v4844 = vpack.c.b16 %v3444, %v3416
      %v4845 = vpack.c.b16 %v3445, %v3417
      %v4846 = vpack.c.b16 %v3446, %v3418
      %v4847 = vpack.c.b16 %v3447, %v3419
      %v4848 = vpack.c.b16 %v3448, %v3420
      %v4849 = vpack.c.b16 %v3449, %v3421
      %v4850 = vpack.c.b16 %v3450, %v3422
      %v4851 = vpack.c.b16 %v3451, %v3423
      %v4852 = vpack.c.b16 %v3452, %v3424
      %v4853 = vpack.c.b16 %v3453, %v3425
      %v4854 = vpack.c.b16 %v3454, %v3426
      %v4855 = vpack.c.b16 %v3455, %v3427
      %v4856 = vpack.c.b16 %v3456, %v3428
      %v4857 = vpack.c.b16 %v3457, %v3429
      %v4858 = vpack.c.b16 %v3458, %v3430
      %v4859 = vpack.c.b16 %v3459, %v3431
      %v4860 = vpack.c.b16 %v3460, %v3432
      %v4861 = vpack.c.b16 %v3461, %v3433
      %v4862 = vpack.c.b16 %v3462, %v3434
      %v4863 = vpack.c.b16 %v3491, %v3463
      %v4864 = vpack.c.b16 %v3492, %v3464
      %v4865 = vpack.c.b16 %v3493, %v3465
      %v4866 = vpack.c.b16 %v3494, %v3466
      %v4867 = vpack.c.b16 %v3495, %v3467
      %v4868 = vpack.c.b16 %v3496, %v3468
      %v4869 = vpack.c.b16 %v3497, %v3469
      %v4870 = vpack.c.b16 %v3498, %v3470
      %v4871 = vpack.c.b16 %v3499, %v3471
      %v4872 = vpack.c.b16 %v3500, %v3472
      %v4873 = vpack.c.b16 %v3501, %v3473
      %v4874 = vpack.c.b16 %v3502, %v3474
      %v4875 = vpack.c.b16 %v3503, %v3475
      %v4876 = vpack.c.b16 %v3504, %v3476
      %v4877 = vpack.c.b16 %v3505, %v3477
      %v4878 = vpack.c.b16 %v3506, %v3478
      %v4879 = vpack.c.b16 %v3507, %v3479
      %v4880 = vpack.c.b16 %v3508, %v3480
      %v4881 = vpack.c.b16 %v3509, %v3481
      %v4882 = vpack.c.b16 %v3510, %v3482
      %v4883 = vpack.c.b16 %v3511, %v3483
      %v4884 = vpack.c.b16 %v3512, %v3484
      %v4885 = vpack.c.b16 %v3513, %v3485
      %v4886 = vpack.c.b16 %v3514, %v3486
      %v4887 = vpack.c.b16 %v3515, %v3487
      %v4888 = vpack.c.b16 %v3516, %v3488
      %v4889 = vpack.c.b16 %v3517, %v3489
      %v4890 = vpack.c.b16 %v3518, %v3490
      %v4891 = vpack.c.b16 %v3547, %v3519
      %v4892 = vpack.c.b16 %v3548, %v3520
      %v4893 = vpack.c.b16 %v3549, %v3521
      %v4894 = vpack.c.b16 %v3550, %v3522
      %v4895 = vpack.c.b16 %v3551, %v3523
      %v4896 = vpack.c.b16 %v3552, %v3524
      %v4897 = vpack.c.b16 %v3553, %v3525
      %v4898 = vpack.c.b16 %v3554, %v3526
      %v4899 = vpack.c.b16 %v3555, %v3527
      %v4900 = vpack.c.b16 %v3556, %v3528
      %v4901 = vpack.c.b16 %v3557, %v3529
      %v4902 = vpack.c.b16 %v3558, %v3530
      %v4903 = vpack.c.b16 %v3559, %v3531
      %v4904 = vpack.c.b16 %v3560, %v3532
      %v4905 = vpack.c.b16 %v3561, %v3533
      %v4906 = vpack.c.b16 %v3562, %v3534
      %v4907 = vpack.c.b16 %v3563, %v3535
      %v4908 = vpack.c.b16 %v3564, %v3536
      %v4909 = vpack.c.b16 %v3565, %v3537
      %v4910 = vpack.c.b16 %v3566, %v3538
      %v4911 = vpack.c.b16 %v3567, %v3539
      %v4912 = vpack.c.b16 %v3568, %v3540
      %v4913 = vpack.c.b16 %v3569, %v3541
      %v4914 = vpack.c.b16 %v3570, %v3542
      %v4915 = vpack.c.b16 %v3571, %v3543
      %v4916 = vpack.c.b16 %v3572, %v3544
      %v4917 = vpack.c.b16 %v3573, %v3545
      %v4918 = vpack.c.b16 %v3574, %v3546
      %v4919 = vpack.c.b16 %v3603, %v3575
      %v4920 = vpack.c.b16 %v3604, %v3576
      %v4921 = vpack.c.b16 %v3605, %v3577
      %v4922 = vpack.c.b16 %v3606, %v3578
      %v4923 = vpack.c.b16 %v3607, %v3579
      %v4924 = vpack.c.b16 %v3608, %v3580
      %v4925 = vpack.c.b16 %v3609, %v3581
      %v4926 = vpack.c.b16 %v3610, %v3582
      %v4927 = vpack.c.b16 %v3611, %v3583
      %v4928 = vpack.c.b16 %v3612, %v3584
      %v4929 = vpack.c.b16 %v3613, %v3585
      %v4930 = vpack.c.b16 %v3614, %v3586
      %v4931 = vpack.c.b16 %v3615, %v3587
      %v4932 = vpack.c.b16 %v3616, %v3588
      %v4933 = vpack.c.b16 %v3617, %v3589
      %v4934 = vpack.c.b16 %v3618, %v3590
      %v4935 = vpack.c.b16 %v3619, %v3591
      %v4936 = vpack.c.b16 %v3620, %v3592
      %v4937 = vpack.c.b16 %v3621, %v3593
      %v4938 = vpack.c.b16 %v3622, %v3594
      %v4939 = vpack.c.b16 %v3623, %v3595
      %v4940 = vpack.c.b16 %v3624, %v3596
      %v4941 = vpack.c.b16 %v3625, %v3597
      %v4942 = vpack.c.b16 %v3626, %v3598
      %v4943 = vpack.c.b16 %v3627, %v3599
      %v4944 = vpack.c.b16 %v3628, %v3600
      %v4945 = vpack.c.b16 %v3629, %v3601
      %v4946 = vpack.c.b16 %v3630, %v3602
      %v4947 = vpack.c.b16 %v3659, %v3631
      %v4948 = vpack.c.b16 %v3660, %v3632
      %v4949 = vpack.c.b16 %v3661, %v3633
      %v4950 = vpack.c.b16 %v3662, %v3634
      %v4951 = vpack.c.b16 %v3663, %v3635
      %v4952 = vpack.c.b16 %v3664, %v3636
      %v4953 = vpack.c.b16 %v3665, %v3637
      %v4954 = vpack.c.b16 %v3666, %v3638
      %v4955 = vpack.c.b16 %v3667, %v3639
      %v4956 = vpack.c.b16 %v3668, %v3640
      %v4957 = vpack.c.b16 %v3669, %v3641
      %v4958 = vpack.c.b16 %v3670, %v3642
      %v4959 = vpack.c.b16 %v3671, %v3643
      %v4960 = vpack.c.b16 %v3672, %v3644
      %v4961 = vpack.c.b16 %v3673, %v3645
      %v4962 = vpack.c.b16 %v3674, %v3646
      %v4963 = vpack.c.b16 %v3675, %v3647
      %v4964 = vpack.c.b16 %v3676, %v3648
      %v4965 = vpack.c.b16 %v3677, %v3649
      %v4966 = vpack.c.b16 %v3678, %v3650
      %v4967 = vpack.c.b16 %v3679, %v3651
      %v4968 = vpack.c.b16 %v3680, %v3652
      %v4969 = vpack.c.b16 %v3681, %v3653
      %v4970 = vpack.c.b16 %v3682, %v3654
      %v4971 = vpack.c.b16 %v3683, %v3655
      %v4972 = vpack.c.b16 %v3684, %v3656
      %v4973 = vpack.c.b16 %v3685, %v3657
      %v4974 = vpack.c.b16 %v3686, %v3658
      %v4975 = vpack.c.b16 %v3715, %v3687
      %v4976 = vpack.c.b16 %v3716, %v3688
      %v4977 = vpack.c.b16 %v3717, %v3689
      %v4978 = vpack.c.b16 %v3718, %v3690
      %v4979 = vpack.c.b16 %v3719, %v3691
      %v4980 = vpack.c.b16 %v3720, %v3692
      %v4981 = vpack.c.b16 %v3721, %v3693
      %v4982 = vpack.c.b16 %v3722, %v3694
      %v4983 = vpack.c.b16 %v3723, %v3695
      %v4984 = vpack.c.b16 %v3724, %v3696
      %v4985 = vpack.c.b16 %v3725, %v3697
      %v4986 = vpack.c.b16 %v3726, %v3698
      %v4987 = vpack.c.b16 %v3727, %v3699
      %v4988 = vpack.c.b16 %v3728, %v3700
      %v4989 = vpack.c.b16 %v3729, %v3701
      %v4990 = vpack.c.b16 %v3730, %v3702
      %v4991 = vpack.c.b16 %v3731, %v3703
      %v4992 = vpack.c.b16 %v3732, %v3704
      %v4993 = vpack.c.b16 %v3733, %v3705
      %v4994 = vpack.c.b16 %v3734, %v3706
      %v4995 = vpack.c.b16 %v3735, %v3707
      %v4996 = vpack.c.b16 %v3736, %v3708
      %v4997 = vpack.c.b16 %v3737, %v3709
      %v4998 = vpack.c.b16 %v3738, %v3710
      %v4999 = vpack.c.b16 %v3739, %v3711
      %v5000 = vpack.c.b16 %v3740, %v3712
      %v5001 = vpack.c.b16 %v3741, %v3713
      %v5002 = vpack.c.b16 %v3742, %v3714
      %v5003 = vpack.c.b16 %v3771, %v3743
      %v5004 = vpack.c.b16 %v3772, %v3744
      %v5005 = vpack.c.b16 %v3773, %v3745
      %v5006 = vpack.c.b16 %v3774, %v3746
      %v5007 = vpack.c.b16 %v3775, %v3747
      %v5008 = vpack.c.b16 %v3776, %v3748
      %v5009 = vpack.c.b16 %v3777, %v3749
      %v5010 = vpack.c.b16 %v3778, %v3750
      %v5011 = vpack.c.b16 %v3779, %v3751
      %v5012 = vpack.c.b16 %v3780, %v3752
      %v5013 = vpack.c.b16 %v3781, %v3753
      %v5014 = vpack.c.b16 %v3782, %v3754
      %v5015 = vpack.c.b16 %v3783, %v3755
      %v5016 = vpack.c.b16 %v3784, %v3756
      %v5017 = vpack.c.b16 %v3785, %v3757
      %v5018 = vpack.c.b16 %v3786, %v3758
      %v5019 = vpack.c.b16 %v3787, %v3759
      %v5020 = vpack.c.b16 %v3788, %v3760
      %v5021 = vpack.c.b16 %v3789, %v3761
      %v5022 = vpack.c.b16 %v3790, %v3762
      %v5023 = vpack.c.b16 %v3791, %v3763
      %v5024 = vpack.c.b16 %v3792, %v3764
      %v5025 = vpack.c.b16 %v3793, %v3765
      %v5026 = vpack.c.b16 %v3794, %v3766
      %v5027 = vpack.c.b16 %v3795, %v3767
      %v5028 = vpack.c.b16 %v3796, %v3768
      %v5029 = vpack.c.b16 %v3797, %v3769
      %v5030 = vpack.c.b16 %v3798, %v3770
      %v5031 = vpack.c.b16 %v3827, %v3799
      %v5032 = vpack.c.b16 %v3828, %v3800
      %v5033 = vpack.c.b16 %v3829, %v3801
      %v5034 = vpack.c.b16 %v3830, %v3802
      %v5035 = vpack.c.b16 %v3831, %v3803
      %v5036 = vpack.c.b16 %v3832, %v3804
      %v5037 = vpack.c.b16 %v3833, %v3805
      %v5038 = vpack.c.b16 %v3834, %v3806
      %v5039 = vpack.c.b16 %v3835, %v3807
      %v5040 = vpack.c.b16 %v3836, %v3808
      %v5041 = vpack.c.b16 %v3837, %v3809
      %v5042 = vpack.c.b16 %v3838, %v3810
      %v5043 = vpack.c.b16 %v3839, %v3811
      %v5044 = vpack.c.b16 %v3840, %v3812
      %v5045 = vpack.c.b16 %v3841, %v3813
      %v5046 = vpack.c.b16 %v3842, %v3814
      %v5047 = vpack.c.b16 %v3843, %v3815
      %v5048 = vpack.c.b16 %v3844, %v3816
      %v5049 = vpack.c.b16 %v3845, %v3817
      %v5050 = vpack.c.b16 %v3846, %v3818
      %v5051 = vpack.c.b16 %v3847, %v3819
      %v5052 = vpack.c.b16 %v3848, %v3820
      %v5053 = vpack.c.b16 %v3849, %v3821
      %v5054 = vpack.c.b16 %v3850, %v3822
      %v5055 = vpack.c.b16 %v3851, %v3823
      %v5056 = vpack.c.b16 %v3852, %v3824
      %v5057 = vpack.c.b16 %v3853, %v3825
      %v5058 = vpack.c.b16 %v3854, %v3826
      %v5059 = vpack.c.b16 %v3883, %v3855
      %v5060 = vpack.c.b16 %v3884, %v3856
      %v5061 = vpack.c.b16 %v3885, %v3857
      %v5062 = vpack.c.b16 %v3886, %v3858
      %v5063 = vpack.c.b16 %v3887, %v3859
      %v5064 = vpack.c.b16 %v3888, %v3860
      %v5065 = vpack.c.b16 %v3889, %v3861
      %v5066 = vpack.c.b16 %v3890, %v3862
      %v5067 = vpack.c.b16 %v3891, %v3863
      %v5068 = vpack.c.b16 %v3892, %v3864
      %v5069 = vpack.c.b16 %v3893, %v3865
      %v5070 = vpack.c.b16 %v3894, %v3866
      %v5071 = vpack.c.b16 %v3895, %v3867
      %v5072 = vpack.c.b16 %v3896, %v3868
      %v5073 = vpack.c.b16 %v3897, %v3869
      %v5074 = vpack.c.b16 %v3898, %v3870
      %v5075 = vpack.c.b16 %v3899, %v3871
      %v5076 = vpack.c.b16 %v3900, %v3872
      %v5077 = vpack.c.b16 %v3901, %v3873
      %v5078 = vpack.c.b16 %v3902, %v3874
      %v5079 = vpack.c.b16 %v3903, %v3875
      %v5080 = vpack.c.b16 %v3904, %v3876
      %v5081 = vpack.c.b16 %v3905, %v3877
      %v5082 = vpack.c.b16 %v3906, %v3878
      %v5083 = vpack.c.b16 %v3907, %v3879
      %v5084 = vpack.c.b16 %v3908, %v3880
      %v5085 = vpack.c.b16 %v3909, %v3881
      %v5086 = vpack.c.b16 %v3910, %v3882
      %v5087 = vpack.c.b16 %v3939, %v3911
      %v5088 = vpack.c.b16 %v3940, %v3912
      %v5089 = vpack.c.b16 %v3941, %v3913
      %v5090 = vpack.c.b16 %v3942, %v3914
      %v5091 = vpack.c.b16 %v3943, %v3915
      %v5092 = vpack.c.b16 %v3944, %v3916
      %v5093 = vpack.c.b16 %v3945, %v3917
      %v5094 = vpack.c.b16 %v3946, %v3918
      %v5095 = vpack.c.b16 %v3947, %v3919
      %v5096 = vpack.c.b16 %v3948, %v3920
      %v5097 = vpack.c.b16 %v3949, %v3921
      %v5098 = vpack.c.b16 %v3950, %v3922
      %v5099 = vpack.c.b16 %v3951, %v3923
      %v5100 = vpack.c.b16 %v3952, %v3924
      %v5101 = vpack.c.b16 %v3953, %v3925
      %v5102 = vpack.c.b16 %v3954, %v3926
      %v5103 = vpack.c.b16 %v3955, %v3927
      %v5104 = vpack.c.b16 %v3956, %v3928
      %v5105 = vpack.c.b16 %v3957, %v3929
      %v5106 = vpack.c.b16 %v3958, %v3930
      %v5107 = vpack.c.b16 %v3959, %v3931
      %v5108 = vpack.c.b16 %v3960, %v3932
      %v5109 = vpack.c.b16 %v3961, %v3933
      %v5110 = vpack.c.b16 %v3962, %v3934
      %v5111 = vpack.c.b16 %v3963, %v3935
      %v5112 = vpack.c.b16 %v3964, %v3936
      %v5113 = vpack.c.b16 %v3965, %v3937
      %v5114 = vpack.c.b16 %v3966, %v3938
      %v5115 = vpack.c.b16 %v3995, %v3967
      %v5116 = vpack.c.b16 %v3996, %v3968
      %v5117 = vpack.c.b16 %v3997, %v3969
      %v5118 = vpack.c.b16 %v3998, %v3970
      %v5119 = vpack.c.b16 %v3999, %v3971
      %v5120 = vpack.c.b16 %v4000, %v3972
      %v5121 = vpack.c.b16 %v4001, %v3973
      %v5122 = vpack.c.b16 %v4002, %v3974
      %v5123 = vpack.c.b16 %v4003, %v3975
      %v5124 = vpack.c.b16 %v4004, %v3976
      %v5125 = vpack.c.b16 %v4005, %v3977
      %v5126 = vpack.c.b16 %v4006, %v3978
      %v5127 = vpack.c.b16 %v4007, %v3979
      %v5128 = vpack.c.b16 %v4008, %v3980
      %v5129 = vpack.c.b16 %v4009, %v3981
      %v5130 = vpack.c.b16 %v4010, %v3982
      %v5131 = vpack.c.b16 %v4011, %v3983
      %v5132 = vpack.c.b16 %v4012, %v3984
      %v5133 = vpack.c.b16 %v4013, %v3985
      %v5134 = vpack.c.b16 %v4014, %v3986
      %v5135 = vpack.c.b16 %v4015, %v3987
      %v5136 = vpack.c.b16 %v4016, %v3988
      %v5137 = vpack.c.b16 %v4017, %v3989
      %v5138 = vpack.c.b16 %v4018, %v3990
      %v5139 = vpack.c.b16 %v4019, %v3991
      %v5140 = vpack.c.b16 %v4020, %v3992
      %v5141 = vpack.c.b16 %v4021, %v3993
      %v5142 = vpack.c.b16 %v4022, %v3994
      %v5143 = vpack.c.b16 %v4051, %v4023
      %v5144 = vpack.c.b16 %v4052, %v4024
      %v5145 = vpack.c.b16 %v4053, %v4025
      %v5146 = vpack.c.b16 %v4054, %v4026
      %v5147 = vpack.c.b16 %v4055, %v4027
      %v5148 = vpack.c.b16 %v4056, %v4028
      %v5149 = vpack.c.b16 %v4057, %v4029
      %v5150 = vpack.c.b16 %v4058, %v4030
      %v5151 = vpack.c.b16 %v4059, %v4031
      %v5152 = vpack.c.b16 %v4060, %v4032
      %v5153 = vpack.c.b16 %v4061, %v4033
      %v5154 = vpack.c.b16 %v4062, %v4034
      %v5155 = vpack.c.b16 %v4063, %v4035
      %v5156 = vpack.c.b16 %v4064, %v4036
      %v5157 = vpack.c.b16 %v4065, %v4037
      %v5158 = vpack.c.b16 %v4066, %v4038
      %v5159 = vpack.c.b16 %v4067, %v4039
      %v5160 = vpack.c.b16 %v4068, %v4040
      %v5161 = vpack.c.b16 %v4069, %v4041
      %v5162 = vpack.c.b16 %v4070, %v4042
      %v5163 = vpack.c.b16 %v4071, %v4043
      %v5164 = vpack.c.b16 %v4072, %v4044
      %v5165 = vpack.c.b16 %v4073, %v4045
      %v5166 = vpack.c.b16 %v4074, %v4046
      %v5167 = vpack.c.b16 %v4075, %v4047
      %v5168 = vpack.c.b16 %v4076, %v4048
      %v5169 = vpack.c.b16 %v4077, %v4049
      %v5170 = vpack.c.b16 %v4078, %v4050
      %v5171 = vpack.c.b16 %v4107, %v4079
      %v5172 = vpack.c.b16 %v4108, %v4080
      %v5173 = vpack.c.b16 %v4109, %v4081
      %v5174 = vpack.c.b16 %v4110, %v4082
      %v5175 = vpack.c.b16 %v4111, %v4083
      %v5176 = vpack.c.b16 %v4112, %v4084
      %v5177 = vpack.c.b16 %v4113, %v4085
      %v5178 = vpack.c.b16 %v4114, %v4086
      %v5179 = vpack.c.b16 %v4115, %v4087
      %v5180 = vpack.c.b16 %v4116, %v4088
      %v5181 = vpack.c.b16 %v4117, %v4089
      %v5182 = vpack.c.b16 %v4118, %v4090
      %v5183 = vpack.c.b16 %v4119, %v4091
      %v5184 = vpack.c.b16 %v4120, %v4092
      %v5185 = vpack.c.b16 %v4121, %v4093
      %v5186 = vpack.c.b16 %v4122, %v4094
      %v5187 = vpack.c.b16 %v4123, %v4095
      %v5188 = vpack.c.b16 %v4124, %v4096
      %v5189 = vpack.c.b16 %v4125, %v4097
      %v5190 = vpack.c.b16 %v4126, %v4098
      %v5191 = vpack.c.b16 %v4127, %v4099
      %v5192 = vpack.c.b16 %v4128, %v4100
      %v5193 = vpack.c.b16 %v4129, %v4101
      %v5194 = vpack.c.b16 %v4130, %v4102
      %v5195 = vpack.c.b16 %v4131, %v4103
      %v5196 = vpack.c.b16 %v4132, %v4104
      %v5197 = vpack.c.b16 %v4133, %v4105
      %v5198 = vpack.c.b16 %v4134, %v4106
      %v5199 = vpack.c.b16 %v4163, %v4135
      %v5200 = vpack.c.b16 %v4164, %v4136
      %v5201 = vpack.c.b16 %v4165, %v4137
      %v5202 = vpack.c.b16 %v4166, %v4138
      %v5203 = vpack.c.b16 %v4167, %v4139
      %v5204 = vpack.c.b16 %v4168, %v4140
      %v5205 = vpack.c.b16 %v4169, %v4141
      %v5206 = vpack.c.b16 %v4170, %v4142
      %v5207 = vpack.c.b16 %v4171, %v4143
      %v5208 = vpack.c.b16 %v4172, %v4144
      %v5209 = vpack.c.b16 %v4173, %v4145
      %v5210 = vpack.c.b16 %v4174, %v4146
      %v5211 = vpack.c.b16 %v4175, %v4147
      %v5212 = vpack.c.b16 %v4176, %v4148
      %v5213 = vpack.c.b16 %v4177, %v4149
      %v5214 = vpack.c.b16 %v4178, %v4150
      %v5215 = vpack.c.b16 %v4179, %v4151
      %v5216 = vpack.c.b16 %v4180, %v4152
      %v5217 = vpack.c.b16 %v4181, %v4153
      %v5218 = vpack.c.b16 %v4182, %v4154
      %v5219 = vpack.c.b16 %v4183, %v4155
      %v5220 = vpack.c.b16 %v4184, %v4156
      %v5221 = vpack.c.b16 %v4185, %v4157
      %v5222 = vpack.c.b16 %v4186, %v4158
      %v5223 = vpack.c.b16 %v4187, %v4159
      %v5224 = vpack.c.b16 %v4188, %v4160
      %v5225 = vpack.c.b16 %v4189, %v4161
      %v5226 = vpack.c.b16 %v4190, %v4162
      %v5227 = vpack.c.b16 %v4219, %v4191
      %v5228 = vpack.c.b16 %v4220, %v4192
      %v5229 = vpack.c.b16 %v4221, %v4193
      %v5230 = vpack.c.b16 %v4222, %v4194
      %v5231 = vpack.c.b16 %v4223, %v4195
      %v5232 = vpack.c.b16 %v4224, %v4196
      %v5233 = vpack.c.b16 %v4225, %v4197
      %v5234 = vpack.c.b16 %v4226, %v4198
      %v5235 = vpack.c.b16 %v4227, %v4199
      %v5236 = vpack.c.b16 %v4228, %v4200
      %v5237 = vpack.c.b16 %v4229, %v4201
      %v5238 = vpack.c.b16 %v4230, %v4202
      %v5239 = vpack.c.b16 %v4231, %v4203
      %v5240 = vpack.c.b16 %v4232, %v4204
      %v5241 = vpack.c.b16 %v4233, %v4205
      %v5242 = vpack.c.b16 %v4234, %v4206
      %v5243 = vpack.c.b16 %v4235, %v4207
      %v5244 = vpack.c.b16 %v4236, %v4208
      %v5245 = vpack.c.b16 %v4237, %v4209
      %v5246 = vpack.c.b16 %v4238, %v4210
      %v5247 = vpack.c.b16 %v4239, %v4211
      %v5248 = vpack.c.b16 %v4240, %v4212
      %v5249 = vpack.c.b16 %v4241, %v4213
      %v5250 = vpack.c.b16 %v4242, %v4214
      %v5251 = vpack.c.b16 %v4243, %v4215
      %v5252 = vpack.c.b16 %v4244, %v4216
      %v5253 = vpack.c.b16 %v4245, %v4217
      %v5254 = vpack.c.b16 %v4246, %v4218
      %vm6263 = vcmask 523264
      %v6265 = vsel %vm6263, %v1218, 0
      %6267 = vmatprep.subr.bf16.mxu0 %v4444
      %6268 = vmatpush1.bf16.msra.mxu0 %v4443
      %6269 = vmatprep.subr.bf16.mxu0 %v4416
      %6270 = vmatpush1.bf16.msra.mxu0 %v4415
      %6271 = vmatprep.subr.bf16.mxu0 %v4388
      %6272 = vmatpush1.bf16.msra.mxu0 %v4387
      %6273 = vmatprep.subr.bf16.mxu0 %v4360
      %6274 = vmatpush1.bf16.msra.mxu0 %v4359
      %6275 = vmatprep.subr.bf16.mxu0 %v4332
      %6276 = vmatpush1.bf16.msra.mxu0 %v4331
      %6277 = vmatprep.subr.bf16.mxu0 %v4304
      %6278 = vmatpush1.bf16.msra.mxu0 %v4303
      %6279 = vmatprep.subr.bf16.mxu0 %v4276
      %6280 = vmatpush1.bf16.msra.mxu0 %v4275
      %6281 = vmatprep.subr.bf16.mxu0 %v4248
      %6282 = vmatpush1.bf16.msra.mxu0 %v4247
      %6283 = vmatprep.subr.bf16.mxu0 %v4668
      %6284 = vmatpush2.bf16.msra.mxu0 %v4667
      %6285 = vmatprep.subr.bf16.mxu0 %v4640
      %6286 = vmatpush2.bf16.msra.mxu0 %v4639
      %6287 = vmatprep.subr.bf16.mxu0 %v4612
      %6288 = vmatpush2.bf16.msra.mxu0 %v4611
      %6289 = vmatprep.subr.bf16.mxu0 %v4584
      %6290 = vmatpush2.bf16.msra.mxu0 %v4583
      %6291 = vmatprep.subr.bf16.mxu0 %v4556
      %6292 = vmatpush2.bf16.msra.mxu0 %v4555
      %6293 = vmatprep.subr.bf16.mxu0 %v4528
      %6294 = vmatpush2.bf16.msra.mxu0 %v4527
      %6295 = vmatprep.subr.bf16.mxu0 %v4500
      %6296 = vmatpush2.bf16.msra.mxu0 %v4499
      %6297 = vmatprep.subr.bf16.mxu0 %v4472
      %6298 = vmatpush2.bf16.msra.mxu0 %v4471
      %6299 = vmatprep.mubr.bf16.mxu0 %v1215
      %6300 = vmatmul.mubr.bf16.gmra.mxu0 %v1214
      %v6301 = vpop.f32.mrf.mxu0
      %v6302 = vadd.f32 %v1191, %v6301
      %v6303 = vpop.f32.mrf.mxu0
      %v6304 = vadd.f32 %v1191, %v6303
      %v6305 = vpop.f32.mrf.mxu0
      %v6306 = vadd.f32 %v1196, %v6305
      %v6307 = vpop.f32.mrf.mxu0
      %v6308 = vadd.f32 %v1196, %v6307
      %6309 = vdwg.mxu0
      %6310 = vmatprep.subr.bf16.mxu0 %v4892
      %6311 = vmatpush1.bf16.msra.mxu0 %v4891
      %6312 = vmatprep.subr.bf16.mxu0 %v4864
      %6313 = vmatpush1.bf16.msra.mxu0 %v4863
      %6314 = vmatprep.subr.bf16.mxu0 %v4836
      %6315 = vmatpush1.bf16.msra.mxu0 %v4835
      %6316 = vmatprep.subr.bf16.mxu0 %v4808
      %6317 = vmatpush1.bf16.msra.mxu0 %v4807
      %6318 = vmatprep.subr.bf16.mxu0 %v4780
      %6319 = vmatpush1.bf16.msra.mxu0 %v4779
      %6320 = vmatprep.subr.bf16.mxu0 %v4752
      %6321 = vmatpush1.bf16.msra.mxu0 %v4751
      %6322 = vmatprep.subr.bf16.mxu0 %v4724
      %6323 = vmatpush1.bf16.msra.mxu0 %v4723
      %6324 = vmatprep.subr.bf16.mxu0 %v4696
      %6325 = vmatpush1.bf16.msra.mxu0 %v4695
      %6326 = vmatprep.subr.bf16.mxu0 %v5116
      %6327 = vmatpush2.bf16.msra.mxu0 %v5115
      %6328 = vmatprep.subr.bf16.mxu0 %v5088
      %6329 = vmatpush2.bf16.msra.mxu0 %v5087
      %6330 = vmatprep.subr.bf16.mxu0 %v5060
      %6331 = vmatpush2.bf16.msra.mxu0 %v5059
      %6332 = vmatprep.subr.bf16.mxu0 %v5032
      %6333 = vmatpush2.bf16.msra.mxu0 %v5031
      %6334 = vmatprep.subr.bf16.mxu0 %v5004
      %6335 = vmatpush2.bf16.msra.mxu0 %v5003
      %6336 = vmatprep.subr.bf16.mxu0 %v4976
      %6337 = vmatpush2.bf16.msra.mxu0 %v4975
      %6338 = vmatprep.subr.bf16.mxu0 %v4948
      %6339 = vmatpush2.bf16.msra.mxu0 %v4947
      %6340 = vmatprep.subr.bf16.mxu0 %v4920
      %6341 = vmatpush2.bf16.msra.mxu0 %v4919
      %6342 = vmatprep.mubr.bf16.mxu0 %v1217
      %6343 = vmatmul.mubr.bf16.gmra.mxu0 %v1216
      %v6344 = vpop.f32.mrf.mxu0
      %v6345 = vadd.f32 %v6302, %v6344
      %v6346 = vpop.f32.mrf.mxu0
      %v6347 = vadd.f32 %v6304, %v6346
      %v6348 = vpop.f32.mrf.mxu0
      %v6349 = vadd.f32 %v6306, %v6348
      %v6350 = vpop.f32.mrf.mxu0
      %v6351 = vadd.f32 %v6308, %v6350
      %6352 = vdwg.mxu0
      %6353 = vmatprep.subr.bf16.mxu0 0
      %6354 = vmatpush1.bf16.msra.mxu0 0
      %6355 = vmatprep.subr.bf16.mxu0 0
      %6356 = vmatpush1.bf16.msra.mxu0 0
      %6357 = vmatprep.subr.bf16.mxu0 0
      %6358 = vmatpush1.bf16.msra.mxu0 0
      %6359 = vmatprep.subr.bf16.mxu0 0
      %6360 = vmatpush1.bf16.msra.mxu0 0
      %6361 = vmatprep.subr.bf16.mxu0 %v5228
      %6362 = vmatpush1.bf16.msra.mxu0 %v5227
      %6363 = vmatprep.subr.bf16.mxu0 %v5200
      %6364 = vmatpush1.bf16.msra.mxu0 %v5199
      %6365 = vmatprep.subr.bf16.mxu0 %v5172
      %6366 = vmatpush1.bf16.msra.mxu0 %v5171
      %6367 = vmatprep.subr.bf16.mxu0 %v5144
      %6368 = vmatpush1.bf16.msra.mxu0 %v5143
      %6369 = vmatprep.subr.bf16.mxu0 0
      %6370 = vmatpush2.bf16.msra.mxu0 0
      %6371 = vmatprep.subr.bf16.mxu0 0
      %6372 = vmatpush2.bf16.msra.mxu0 0
      %6373 = vmatprep.subr.bf16.mxu0 0
      %6374 = vmatpush2.bf16.msra.mxu0 0
      %6375 = vmatprep.subr.bf16.mxu0 0
      %6376 = vmatpush2.bf16.msra.mxu0 0
      %6377 = vmatprep.subr.bf16.mxu0 0
      %6378 = vmatpush2.bf16.msra.mxu0 0
      %6379 = vmatprep.subr.bf16.mxu0 0
      %6380 = vmatpush2.bf16.msra.mxu0 0
      %6381 = vmatprep.subr.bf16.mxu0 0
      %6382 = vmatpush2.bf16.msra.mxu0 0
      %6383 = vmatprep.subr.bf16.mxu0 0
      %6384 = vmatpush2.bf16.msra.mxu0 0
      %6385 = vmatprep.mubr.bf16.mxu0 0
      %6386 = vmatmul.mubr.bf16.gmra.mxu0 %v6265
      %v6387 = vpop.f32.mrf.mxu0
      %v6388 = vadd.f32 %v6345, %v6387
      %v6389 = vpop.f32.mrf.mxu0
      %v6390 = vadd.f32 %v6347, %v6389
      %v6391 = vpop.f32.mrf.mxu0
      %v6392 = vadd.f32 %v6349, %v6391
      %v6393 = vpop.f32.mrf.mxu0
      %v6394 = vadd.f32 %v6351, %v6393
      %6395 = vdwg.mxu0
      %6396 = vmatprep.subr.bf16.mxu0 %v4446
      %6397 = vmatpush1.bf16.msra.mxu0 %v4445
      %6398 = vmatprep.subr.bf16.mxu0 %v4418
      %6399 = vmatpush1.bf16.msra.mxu0 %v4417
      %6400 = vmatprep.subr.bf16.mxu0 %v4390
      %6401 = vmatpush1.bf16.msra.mxu0 %v4389
      %6402 = vmatprep.subr.bf16.mxu0 %v4362
      %6403 = vmatpush1.bf16.msra.mxu0 %v4361
      %6404 = vmatprep.subr.bf16.mxu0 %v4334
      %6405 = vmatpush1.bf16.msra.mxu0 %v4333
      %6406 = vmatprep.subr.bf16.mxu0 %v4306
      %6407 = vmatpush1.bf16.msra.mxu0 %v4305
      %6408 = vmatprep.subr.bf16.mxu0 %v4278
      %6409 = vmatpush1.bf16.msra.mxu0 %v4277
      %6410 = vmatprep.subr.bf16.mxu0 %v4250
      %6411 = vmatpush1.bf16.msra.mxu0 %v4249
      %6412 = vmatprep.subr.bf16.mxu0 %v4670
      %6413 = vmatpush2.bf16.msra.mxu0 %v4669
      %6414 = vmatprep.subr.bf16.mxu0 %v4642
      %6415 = vmatpush2.bf16.msra.mxu0 %v4641
      %6416 = vmatprep.subr.bf16.mxu0 %v4614
      %6417 = vmatpush2.bf16.msra.mxu0 %v4613
      %6418 = vmatprep.subr.bf16.mxu0 %v4586
      %6419 = vmatpush2.bf16.msra.mxu0 %v4585
      %6420 = vmatprep.subr.bf16.mxu0 %v4558
      %6421 = vmatpush2.bf16.msra.mxu0 %v4557
      %6422 = vmatprep.subr.bf16.mxu0 %v4530
      %6423 = vmatpush2.bf16.msra.mxu0 %v4529
      %6424 = vmatprep.subr.bf16.mxu0 %v4502
      %6425 = vmatpush2.bf16.msra.mxu0 %v4501
      %6426 = vmatprep.subr.bf16.mxu0 %v4474
      %6427 = vmatpush2.bf16.msra.mxu0 %v4473
      %6428 = vmatprep.mubr.bf16.mxu0 %v1215
      %6429 = vmatmul.mubr.bf16.gmra.mxu0 %v1214
      %v6430 = vpop.f32.mrf.mxu0
      %v6431 = vadd.f32 %v1191, %v6430
      %v6432 = vpop.f32.mrf.mxu0
      %v6433 = vadd.f32 %v1191, %v6432
      %v6434 = vpop.f32.mrf.mxu0
      %v6435 = vadd.f32 %v1196, %v6434
      %v6436 = vpop.f32.mrf.mxu0
      %v6437 = vadd.f32 %v1196, %v6436
      %6438 = vdwg.mxu0
      %6439 = vmatprep.subr.bf16.mxu0 %v4894
      %6440 = vmatpush1.bf16.msra.mxu0 %v4893
      %6441 = vmatprep.subr.bf16.mxu0 %v4866
      %6442 = vmatpush1.bf16.msra.mxu0 %v4865
      %6443 = vmatprep.subr.bf16.mxu0 %v4838
      %6444 = vmatpush1.bf16.msra.mxu0 %v4837
      %6445 = vmatprep.subr.bf16.mxu0 %v4810
      %6446 = vmatpush1.bf16.msra.mxu0 %v4809
      %6447 = vmatprep.subr.bf16.mxu0 %v4782
      %6448 = vmatpush1.bf16.msra.mxu0 %v4781
      %6449 = vmatprep.subr.bf16.mxu0 %v4754
      %6450 = vmatpush1.bf16.msra.mxu0 %v4753
      %6451 = vmatprep.subr.bf16.mxu0 %v4726
      %6452 = vmatpush1.bf16.msra.mxu0 %v4725
      %6453 = vmatprep.subr.bf16.mxu0 %v4698
      %6454 = vmatpush1.bf16.msra.mxu0 %v4697
      %6455 = vmatprep.subr.bf16.mxu0 %v5118
      %6456 = vmatpush2.bf16.msra.mxu0 %v5117
      %6457 = vmatprep.subr.bf16.mxu0 %v5090
      %6458 = vmatpush2.bf16.msra.mxu0 %v5089
      %6459 = vmatprep.subr.bf16.mxu0 %v5062
      %6460 = vmatpush2.bf16.msra.mxu0 %v5061
      %6461 = vmatprep.subr.bf16.mxu0 %v5034
      %6462 = vmatpush2.bf16.msra.mxu0 %v5033
      %6463 = vmatprep.subr.bf16.mxu0 %v5006
      %6464 = vmatpush2.bf16.msra.mxu0 %v5005
      %6465 = vmatprep.subr.bf16.mxu0 %v4978
      %6466 = vmatpush2.bf16.msra.mxu0 %v4977
      %6467 = vmatprep.subr.bf16.mxu0 %v4950
      %6468 = vmatpush2.bf16.msra.mxu0 %v4949
      %6469 = vmatprep.subr.bf16.mxu0 %v4922
      %6470 = vmatpush2.bf16.msra.mxu0 %v4921
      %6471 = vmatprep.mubr.bf16.mxu0 %v1217
      %6472 = vmatmul.mubr.bf16.gmra.mxu0 %v1216
      %v6473 = vpop.f32.mrf.mxu0
      %v6474 = vadd.f32 %v6431, %v6473
      %v6475 = vpop.f32.mrf.mxu0
      %v6476 = vadd.f32 %v6433, %v6475
      %v6477 = vpop.f32.mrf.mxu0
      %v6478 = vadd.f32 %v6435, %v6477
      %v6479 = vpop.f32.mrf.mxu0
      %v6480 = vadd.f32 %v6437, %v6479
      %6481 = vdwg.mxu0
      %6482 = vmatprep.subr.bf16.mxu0 0
      %6483 = vmatpush1.bf16.msra.mxu0 0
      %6484 = vmatprep.subr.bf16.mxu0 0
      %6485 = vmatpush1.bf16.msra.mxu0 0
      %6486 = vmatprep.subr.bf16.mxu0 0
      %6487 = vmatpush1.bf16.msra.mxu0 0
      %6488 = vmatprep.subr.bf16.mxu0 0
      %6489 = vmatpush1.bf16.msra.mxu0 0
      %6490 = vmatprep.subr.bf16.mxu0 %v5230
      %6491 = vmatpush1.bf16.msra.mxu0 %v5229
      %6492 = vmatprep.subr.bf16.mxu0 %v5202
      %6493 = vmatpush1.bf16.msra.mxu0 %v5201
      %6494 = vmatprep.subr.bf16.mxu0 %v5174
      %6495 = vmatpush1.bf16.msra.mxu0 %v5173
      %6496 = vmatprep.subr.bf16.mxu0 %v5146
      %6497 = vmatpush1.bf16.msra.mxu0 %v5145
      %6498 = vmatprep.subr.bf16.mxu0 0
      %6499 = vmatpush2.bf16.msra.mxu0 0
      %6500 = vmatprep.subr.bf16.mxu0 0
      %6501 = vmatpush2.bf16.msra.mxu0 0
      %6502 = vmatprep.subr.bf16.mxu0 0
      %6503 = vmatpush2.bf16.msra.mxu0 0
      %6504 = vmatprep.subr.bf16.mxu0 0
      %6505 = vmatpush2.bf16.msra.mxu0 0
      %6506 = vmatprep.subr.bf16.mxu0 0
      %6507 = vmatpush2.bf16.msra.mxu0 0
      %6508 = vmatprep.subr.bf16.mxu0 0
      %6509 = vmatpush2.bf16.msra.mxu0 0
      %6510 = vmatprep.subr.bf16.mxu0 0
      %6511 = vmatpush2.bf16.msra.mxu0 0
      %6512 = vmatprep.subr.bf16.mxu0 0
      %6513 = vmatpush2.bf16.msra.mxu0 0
      %6514 = vmatprep.mubr.bf16.mxu0 0
      %6515 = vmatmul.mubr.bf16.gmra.mxu0 %v6265
      %v6516 = vpop.f32.mrf.mxu0
      %v6517 = vadd.f32 %v6474, %v6516
      %v6518 = vpop.f32.mrf.mxu0
      %v6519 = vadd.f32 %v6476, %v6518
      %v6520 = vpop.f32.mrf.mxu0
      %v6521 = vadd.f32 %v6478, %v6520
      %v6522 = vpop.f32.mrf.mxu0
      %v6523 = vadd.f32 %v6480, %v6522
      %6524 = vdwg.mxu0
      %6525 = vmatprep.subr.bf16.mxu0 %v4448
      %6526 = vmatpush1.bf16.msra.mxu0 %v4447
      %6527 = vmatprep.subr.bf16.mxu0 %v4420
      %6528 = vmatpush1.bf16.msra.mxu0 %v4419
      %6529 = vmatprep.subr.bf16.mxu0 %v4392
      %6530 = vmatpush1.bf16.msra.mxu0 %v4391
      %6531 = vmatprep.subr.bf16.mxu0 %v4364
      %6532 = vmatpush1.bf16.msra.mxu0 %v4363
      %6533 = vmatprep.subr.bf16.mxu0 %v4336
      %6534 = vmatpush1.bf16.msra.mxu0 %v4335
      %6535 = vmatprep.subr.bf16.mxu0 %v4308
      %6536 = vmatpush1.bf16.msra.mxu0 %v4307
      %6537 = vmatprep.subr.bf16.mxu0 %v4280
      %6538 = vmatpush1.bf16.msra.mxu0 %v4279
      %6539 = vmatprep.subr.bf16.mxu0 %v4252
      %6540 = vmatpush1.bf16.msra.mxu0 %v4251
      %6541 = vmatprep.subr.bf16.mxu0 %v4672
      %6542 = vmatpush2.bf16.msra.mxu0 %v4671
      %6543 = vmatprep.subr.bf16.mxu0 %v4644
      %6544 = vmatpush2.bf16.msra.mxu0 %v4643
      %6545 = vmatprep.subr.bf16.mxu0 %v4616
      %6546 = vmatpush2.bf16.msra.mxu0 %v4615
      %6547 = vmatprep.subr.bf16.mxu0 %v4588
      %6548 = vmatpush2.bf16.msra.mxu0 %v4587
      %6549 = vmatprep.subr.bf16.mxu0 %v4560
      %6550 = vmatpush2.bf16.msra.mxu0 %v4559
      %6551 = vmatprep.subr.bf16.mxu0 %v4532
      %6552 = vmatpush2.bf16.msra.mxu0 %v4531
      %6553 = vmatprep.subr.bf16.mxu0 %v4504
      %6554 = vmatpush2.bf16.msra.mxu0 %v4503
      %6555 = vmatprep.subr.bf16.mxu0 %v4476
      %6556 = vmatpush2.bf16.msra.mxu0 %v4475
      %6557 = vmatprep.mubr.bf16.mxu0 %v1215
      %6558 = vmatmul.mubr.bf16.gmra.mxu0 %v1214
      %v6559 = vpop.f32.mrf.mxu0
      %v6560 = vadd.f32 %v1191, %v6559
      %v6561 = vpop.f32.mrf.mxu0
      %v6562 = vadd.f32 %v1191, %v6561
      %v6563 = vpop.f32.mrf.mxu0
      %v6564 = vadd.f32 %v1196, %v6563
      %v6565 = vpop.f32.mrf.mxu0
      %v6566 = vadd.f32 %v1196, %v6565
      %6567 = vdwg.mxu0
      %6568 = vmatprep.subr.bf16.mxu0 %v4896
      %6569 = vmatpush1.bf16.msra.mxu0 %v4895
      %6570 = vmatprep.subr.bf16.mxu0 %v4868
      %6571 = vmatpush1.bf16.msra.mxu0 %v4867
      %6572 = vmatprep.subr.bf16.mxu0 %v4840
      %6573 = vmatpush1.bf16.msra.mxu0 %v4839
      %6574 = vmatprep.subr.bf16.mxu0 %v4812
      %6575 = vmatpush1.bf16.msra.mxu0 %v4811
      %6576 = vmatprep.subr.bf16.mxu0 %v4784
      %6577 = vmatpush1.bf16.msra.mxu0 %v4783
      %6578 = vmatprep.subr.bf16.mxu0 %v4756
      %6579 = vmatpush1.bf16.msra.mxu0 %v4755
      %6580 = vmatprep.subr.bf16.mxu0 %v4728
      %6581 = vmatpush1.bf16.msra.mxu0 %v4727
      %6582 = vmatprep.subr.bf16.mxu0 %v4700
      %6583 = vmatpush1.bf16.msra.mxu0 %v4699
      %6584 = vmatprep.subr.bf16.mxu0 %v5120
      %6585 = vmatpush2.bf16.msra.mxu0 %v5119
      %6586 = vmatprep.subr.bf16.mxu0 %v5092
      %6587 = vmatpush2.bf16.msra.mxu0 %v5091
      %6588 = vmatprep.subr.bf16.mxu0 %v5064
      %6589 = vmatpush2.bf16.msra.mxu0 %v5063
      %6590 = vmatprep.subr.bf16.mxu0 %v5036
      %6591 = vmatpush2.bf16.msra.mxu0 %v5035
      %6592 = vmatprep.subr.bf16.mxu0 %v5008
      %6593 = vmatpush2.bf16.msra.mxu0 %v5007
      %6594 = vmatprep.subr.bf16.mxu0 %v4980
      %6595 = vmatpush2.bf16.msra.mxu0 %v4979
      %6596 = vmatprep.subr.bf16.mxu0 %v4952
      %6597 = vmatpush2.bf16.msra.mxu0 %v4951
      %6598 = vmatprep.subr.bf16.mxu0 %v4924
      %6599 = vmatpush2.bf16.msra.mxu0 %v4923
      %6600 = vmatprep.mubr.bf16.mxu0 %v1217
      %6601 = vmatmul.mubr.bf16.gmra.mxu0 %v1216
      %v6602 = vpop.f32.mrf.mxu0
      %v6603 = vadd.f32 %v6560, %v6602
      %v6604 = vpop.f32.mrf.mxu0
      %v6605 = vadd.f32 %v6562, %v6604
      %v6606 = vpop.f32.mrf.mxu0
      %v6607 = vadd.f32 %v6564, %v6606
      %v6608 = vpop.f32.mrf.mxu0
      %v6609 = vadd.f32 %v6566, %v6608
      %6610 = vdwg.mxu0
      %6611 = vmatprep.subr.bf16.mxu0 0
      %6612 = vmatpush1.bf16.msra.mxu0 0
      %6613 = vmatprep.subr.bf16.mxu0 0
      %6614 = vmatpush1.bf16.msra.mxu0 0
      %6615 = vmatprep.subr.bf16.mxu0 0
      %6616 = vmatpush1.bf16.msra.mxu0 0
      %6617 = vmatprep.subr.bf16.mxu0 0
      %6618 = vmatpush1.bf16.msra.mxu0 0
      %6619 = vmatprep.subr.bf16.mxu0 %v5232
      %6620 = vmatpush1.bf16.msra.mxu0 %v5231
      %6621 = vmatprep.subr.bf16.mxu0 %v5204
      %6622 = vmatpush1.bf16.msra.mxu0 %v5203
      %6623 = vmatprep.subr.bf16.mxu0 %v5176
      %6624 = vmatpush1.bf16.msra.mxu0 %v5175
      %6625 = vmatprep.subr.bf16.mxu0 %v5148
      %6626 = vmatpush1.bf16.msra.mxu0 %v5147
      %6627 = vmatprep.subr.bf16.mxu0 0
      %6628 = vmatpush2.bf16.msra.mxu0 0
      %6629 = vmatprep.subr.bf16.mxu0 0
      %6630 = vmatpush2.bf16.msra.mxu0 0
      %6631 = vmatprep.subr.bf16.mxu0 0
      %6632 = vmatpush2.bf16.msra.mxu0 0
      %6633 = vmatprep.subr.bf16.mxu0 0
      %6634 = vmatpush2.bf16.msra.mxu0 0
      %6635 = vmatprep.subr.bf16.mxu0 0
      %6636 = vmatpush2.bf16.msra.mxu0 0
      %6637 = vmatprep.subr.bf16.mxu0 0
      %6638 = vmatpush2.bf16.msra.mxu0 0
      %6639 = vmatprep.subr.bf16.mxu0 0
      %6640 = vmatpush2.bf16.msra.mxu0 0
      %6641 = vmatprep.subr.bf16.mxu0 0
      %6642 = vmatpush2.bf16.msra.mxu0 0
      %6643 = vmatprep.mubr.bf16.mxu0 0
      %6644 = vmatmul.mubr.bf16.gmra.mxu0 %v6265
      %v6645 = vpop.f32.mrf.mxu0
      %v6646 = vadd.f32 %v6603, %v6645
      %v6647 = vpop.f32.mrf.mxu0
      %v6648 = vadd.f32 %v6605, %v6647
      %v6649 = vpop.f32.mrf.mxu0
      %v6650 = vadd.f32 %v6607, %v6649
      %v6651 = vpop.f32.mrf.mxu0
      %v6652 = vadd.f32 %v6609, %v6651
      %6653 = vdwg.mxu0
      %6654 = vmatprep.subr.bf16.mxu0 %v4450
      %6655 = vmatpush1.bf16.msra.mxu0 %v4449
      %6656 = vmatprep.subr.bf16.mxu0 %v4422
      %6657 = vmatpush1.bf16.msra.mxu0 %v4421
      %6658 = vmatprep.subr.bf16.mxu0 %v4394
      %6659 = vmatpush1.bf16.msra.mxu0 %v4393
      %6660 = vmatprep.subr.bf16.mxu0 %v4366
      %6661 = vmatpush1.bf16.msra.mxu0 %v4365
      %6662 = vmatprep.subr.bf16.mxu0 %v4338
      %6663 = vmatpush1.bf16.msra.mxu0 %v4337
      %6664 = vmatprep.subr.bf16.mxu0 %v4310
      %6665 = vmatpush1.bf16.msra.mxu0 %v4309
      %6666 = vmatprep.subr.bf16.mxu0 %v4282
      %6667 = vmatpush1.bf16.msra.mxu0 %v4281
      %6668 = vmatprep.subr.bf16.mxu0 %v4254
      %6669 = vmatpush1.bf16.msra.mxu0 %v4253
      %6670 = vmatprep.subr.bf16.mxu0 %v4674
      %6671 = vmatpush2.bf16.msra.mxu0 %v4673
      %6672 = vmatprep.subr.bf16.mxu0 %v4646
      %6673 = vmatpush2.bf16.msra.mxu0 %v4645
      %6674 = vmatprep.subr.bf16.mxu0 %v4618
      %6675 = vmatpush2.bf16.msra.mxu0 %v4617
      %6676 = vmatprep.subr.bf16.mxu0 %v4590
      %6677 = vmatpush2.bf16.msra.mxu0 %v4589
      %6678 = vmatprep.subr.bf16.mxu0 %v4562
      %6679 = vmatpush2.bf16.msra.mxu0 %v4561
      %6680 = vmatprep.subr.bf16.mxu0 %v4534
      %6681 = vmatpush2.bf16.msra.mxu0 %v4533
      %6682 = vmatprep.subr.bf16.mxu0 %v4506
      %6683 = vmatpush2.bf16.msra.mxu0 %v4505
      %6684 = vmatprep.subr.bf16.mxu0 %v4478
      %6685 = vmatpush2.bf16.msra.mxu0 %v4477
      %6686 = vmatprep.mubr.bf16.mxu0 %v1215
      %6687 = vmatmul.mubr.bf16.gmra.mxu0 %v1214
      %v6688 = vpop.f32.mrf.mxu0
      %v6689 = vadd.f32 %v1191, %v6688
      %v6690 = vpop.f32.mrf.mxu0
      %v6691 = vadd.f32 %v1191, %v6690
      %v6692 = vpop.f32.mrf.mxu0
      %v6693 = vadd.f32 %v1196, %v6692
      %v6694 = vpop.f32.mrf.mxu0
      %v6695 = vadd.f32 %v1196, %v6694
      %6696 = vdwg.mxu0
      %6697 = vmatprep.subr.bf16.mxu0 %v4898
      %6698 = vmatpush1.bf16.msra.mxu0 %v4897
      %6699 = vmatprep.subr.bf16.mxu0 %v4870
      %6700 = vmatpush1.bf16.msra.mxu0 %v4869
      %6701 = vmatprep.subr.bf16.mxu0 %v4842
      %6702 = vmatpush1.bf16.msra.mxu0 %v4841
      %6703 = vmatprep.subr.bf16.mxu0 %v4814
      %6704 = vmatpush1.bf16.msra.mxu0 %v4813
      %6705 = vmatprep.subr.bf16.mxu0 %v4786
      %6706 = vmatpush1.bf16.msra.mxu0 %v4785
      %6707 = vmatprep.subr.bf16.mxu0 %v4758
      %6708 = vmatpush1.bf16.msra.mxu0 %v4757
      %6709 = vmatprep.subr.bf16.mxu0 %v4730
      %6710 = vmatpush1.bf16.msra.mxu0 %v4729
      %6711 = vmatprep.subr.bf16.mxu0 %v4702
      %6712 = vmatpush1.bf16.msra.mxu0 %v4701
      %6713 = vmatprep.subr.bf16.mxu0 %v5122
      %6714 = vmatpush2.bf16.msra.mxu0 %v5121
      %6715 = vmatprep.subr.bf16.mxu0 %v5094
      %6716 = vmatpush2.bf16.msra.mxu0 %v5093
      %6717 = vmatprep.subr.bf16.mxu0 %v5066
      %6718 = vmatpush2.bf16.msra.mxu0 %v5065
      %6719 = vmatprep.subr.bf16.mxu0 %v5038
      %6720 = vmatpush2.bf16.msra.mxu0 %v5037
      %6721 = vmatprep.subr.bf16.mxu0 %v5010
      %6722 = vmatpush2.bf16.msra.mxu0 %v5009
      %6723 = vmatprep.subr.bf16.mxu0 %v4982
      %6724 = vmatpush2.bf16.msra.mxu0 %v4981
      %6725 = vmatprep.subr.bf16.mxu0 %v4954
      %6726 = vmatpush2.bf16.msra.mxu0 %v4953
      %6727 = vmatprep.subr.bf16.mxu0 %v4926
      %6728 = vmatpush2.bf16.msra.mxu0 %v4925
      %6729 = vmatprep.mubr.bf16.mxu0 %v1217
      %6730 = vmatmul.mubr.bf16.gmra.mxu0 %v1216
      %v6731 = vpop.f32.mrf.mxu0
      %v6732 = vadd.f32 %v6689, %v6731
      %v6733 = vpop.f32.mrf.mxu0
      %v6734 = vadd.f32 %v6691, %v6733
      %v6735 = vpop.f32.mrf.mxu0
      %v6736 = vadd.f32 %v6693, %v6735
      %v6737 = vpop.f32.mrf.mxu0
      %v6738 = vadd.f32 %v6695, %v6737
      %6739 = vdwg.mxu0
      %6740 = vmatprep.subr.bf16.mxu0 0
      %6741 = vmatpush1.bf16.msra.mxu0 0
      %6742 = vmatprep.subr.bf16.mxu0 0
      %6743 = vmatpush1.bf16.msra.mxu0 0
      %6744 = vmatprep.subr.bf16.mxu0 0
      %6745 = vmatpush1.bf16.msra.mxu0 0
      %6746 = vmatprep.subr.bf16.mxu0 0
      %6747 = vmatpush1.bf16.msra.mxu0 0
      %6748 = vmatprep.subr.bf16.mxu0 %v5234
      %6749 = vmatpush1.bf16.msra.mxu0 %v5233
      %6750 = vmatprep.subr.bf16.mxu0 %v5206
      %6751 = vmatpush1.bf16.msra.mxu0 %v5205
      %6752 = vmatprep.subr.bf16.mxu0 %v5178
      %6753 = vmatpush1.bf16.msra.mxu0 %v5177
      %6754 = vmatprep.subr.bf16.mxu0 %v5150
      %6755 = vmatpush1.bf16.msra.mxu0 %v5149
      %6756 = vmatprep.subr.bf16.mxu0 0
      %6757 = vmatpush2.bf16.msra.mxu0 0
      %6758 = vmatprep.subr.bf16.mxu0 0
      %6759 = vmatpush2.bf16.msra.mxu0 0
      %6760 = vmatprep.subr.bf16.mxu0 0
      %6761 = vmatpush2.bf16.msra.mxu0 0
      %6762 = vmatprep.subr.bf16.mxu0 0
      %6763 = vmatpush2.bf16.msra.mxu0 0
      %6764 = vmatprep.subr.bf16.mxu0 0
      %6765 = vmatpush2.bf16.msra.mxu0 0
      %6766 = vmatprep.subr.bf16.mxu0 0
      %6767 = vmatpush2.bf16.msra.mxu0 0
      %6768 = vmatprep.subr.bf16.mxu0 0
      %6769 = vmatpush2.bf16.msra.mxu0 0
      %6770 = vmatprep.subr.bf16.mxu0 0
      %6771 = vmatpush2.bf16.msra.mxu0 0
      %6772 = vmatprep.mubr.bf16.mxu0 0
      %6773 = vmatmul.mubr.bf16.gmra.mxu0 %v6265
      %v6774 = vpop.f32.mrf.mxu0
      %v6775 = vadd.f32 %v6732, %v6774
      %v6776 = vpop.f32.mrf.mxu0
      %v6777 = vadd.f32 %v6734, %v6776
      %v6778 = vpop.f32.mrf.mxu0
      %v6779 = vadd.f32 %v6736, %v6778
      %v6780 = vpop.f32.mrf.mxu0
      %v6781 = vadd.f32 %v6738, %v6780
      %6782 = vdwg.mxu0
      %6783 = vmatprep.subr.bf16.mxu0 %v4452
      %6784 = vmatpush1.bf16.msra.mxu0 %v4451
      %6785 = vmatprep.subr.bf16.mxu0 %v4424
      %6786 = vmatpush1.bf16.msra.mxu0 %v4423
      %6787 = vmatprep.subr.bf16.mxu0 %v4396
      %6788 = vmatpush1.bf16.msra.mxu0 %v4395
      %6789 = vmatprep.subr.bf16.mxu0 %v4368
      %6790 = vmatpush1.bf16.msra.mxu0 %v4367
      %6791 = vmatprep.subr.bf16.mxu0 %v4340
      %6792 = vmatpush1.bf16.msra.mxu0 %v4339
      %6793 = vmatprep.subr.bf16.mxu0 %v4312
      %6794 = vmatpush1.bf16.msra.mxu0 %v4311
      %6795 = vmatprep.subr.bf16.mxu0 %v4284
      %6796 = vmatpush1.bf16.msra.mxu0 %v4283
      %6797 = vmatprep.subr.bf16.mxu0 %v4256
      %6798 = vmatpush1.bf16.msra.mxu0 %v4255
      %6799 = vmatprep.subr.bf16.mxu0 %v4676
      %6800 = vmatpush2.bf16.msra.mxu0 %v4675
      %6801 = vmatprep.subr.bf16.mxu0 %v4648
      %6802 = vmatpush2.bf16.msra.mxu0 %v4647
      %6803 = vmatprep.subr.bf16.mxu0 %v4620
      %6804 = vmatpush2.bf16.msra.mxu0 %v4619
      %6805 = vmatprep.subr.bf16.mxu0 %v4592
      %6806 = vmatpush2.bf16.msra.mxu0 %v4591
      %6807 = vmatprep.subr.bf16.mxu0 %v4564
      %6808 = vmatpush2.bf16.msra.mxu0 %v4563
      %6809 = vmatprep.subr.bf16.mxu0 %v4536
      %6810 = vmatpush2.bf16.msra.mxu0 %v4535
      %6811 = vmatprep.subr.bf16.mxu0 %v4508
      %6812 = vmatpush2.bf16.msra.mxu0 %v4507
      %6813 = vmatprep.subr.bf16.mxu0 %v4480
      %6814 = vmatpush2.bf16.msra.mxu0 %v4479
      %6815 = vmatprep.mubr.bf16.mxu0 %v1215
      %6816 = vmatmul.mubr.bf16.gmra.mxu0 %v1214
      %v6817 = vpop.f32.mrf.mxu0
      %v6818 = vadd.f32 %v1191, %v6817
      %v6819 = vpop.f32.mrf.mxu0
      %v6820 = vadd.f32 %v1191, %v6819
      %v6821 = vpop.f32.mrf.mxu0
      %v6822 = vadd.f32 %v1196, %v6821
      %v6823 = vpop.f32.mrf.mxu0
      %v6824 = vadd.f32 %v1196, %v6823
      %6825 = vdwg.mxu0
      %6826 = vmatprep.subr.bf16.mxu0 %v4900
      %6827 = vmatpush1.bf16.msra.mxu0 %v4899
      %6828 = vmatprep.subr.bf16.mxu0 %v4872
      %6829 = vmatpush1.bf16.msra.mxu0 %v4871
      %6830 = vmatprep.subr.bf16.mxu0 %v4844
      %6831 = vmatpush1.bf16.msra.mxu0 %v4843
      %6832 = vmatprep.subr.bf16.mxu0 %v4816
      %6833 = vmatpush1.bf16.msra.mxu0 %v4815
      %6834 = vmatprep.subr.bf16.mxu0 %v4788
      %6835 = vmatpush1.bf16.msra.mxu0 %v4787
      %6836 = vmatprep.subr.bf16.mxu0 %v4760
      %6837 = vmatpush1.bf16.msra.mxu0 %v4759
      %6838 = vmatprep.subr.bf16.mxu0 %v4732
      %6839 = vmatpush1.bf16.msra.mxu0 %v4731
      %6840 = vmatprep.subr.bf16.mxu0 %v4704
      %6841 = vmatpush1.bf16.msra.mxu0 %v4703
      %6842 = vmatprep.subr.bf16.mxu0 %v5124
      %6843 = vmatpush2.bf16.msra.mxu0 %v5123
      %6844 = vmatprep.subr.bf16.mxu0 %v5096
      %6845 = vmatpush2.bf16.msra.mxu0 %v5095
      %6846 = vmatprep.subr.bf16.mxu0 %v5068
      %6847 = vmatpush2.bf16.msra.mxu0 %v5067
      %6848 = vmatprep.subr.bf16.mxu0 %v5040
      %6849 = vmatpush2.bf16.msra.mxu0 %v5039
      %6850 = vmatprep.subr.bf16.mxu0 %v5012
      %6851 = vmatpush2.bf16.msra.mxu0 %v5011
      %6852 = vmatprep.subr.bf16.mxu0 %v4984
      %6853 = vmatpush2.bf16.msra.mxu0 %v4983
      %6854 = vmatprep.subr.bf16.mxu0 %v4956
      %6855 = vmatpush2.bf16.msra.mxu0 %v4955
      %6856 = vmatprep.subr.bf16.mxu0 %v4928
      %6857 = vmatpush2.bf16.msra.mxu0 %v4927
      %6858 = vmatprep.mubr.bf16.mxu0 %v1217
      %6859 = vmatmul.mubr.bf16.gmra.mxu0 %v1216
      %v6860 = vpop.f32.mrf.mxu0
      %v6861 = vadd.f32 %v6818, %v6860
      %v6862 = vpop.f32.mrf.mxu0
      %v6863 = vadd.f32 %v6820, %v6862
      %v6864 = vpop.f32.mrf.mxu0
      %v6865 = vadd.f32 %v6822, %v6864
      %v6866 = vpop.f32.mrf.mxu0
      %v6867 = vadd.f32 %v6824, %v6866
      %6868 = vdwg.mxu0
      %6869 = vmatprep.subr.bf16.mxu0 0
      %6870 = vmatpush1.bf16.msra.mxu0 0
      %6871 = vmatprep.subr.bf16.mxu0 0
      %6872 = vmatpush1.bf16.msra.mxu0 0
      %6873 = vmatprep.subr.bf16.mxu0 0
      %6874 = vmatpush1.bf16.msra.mxu0 0
      %6875 = vmatprep.subr.bf16.mxu0 0
      %6876 = vmatpush1.bf16.msra.mxu0 0
      %6877 = vmatprep.subr.bf16.mxu0 %v5236
      %6878 = vmatpush1.bf16.msra.mxu0 %v5235
      %6879 = vmatprep.subr.bf16.mxu0 %v5208
      %6880 = vmatpush1.bf16.msra.mxu0 %v5207
      %6881 = vmatprep.subr.bf16.mxu0 %v5180
      %6882 = vmatpush1.bf16.msra.mxu0 %v5179
      %6883 = vmatprep.subr.bf16.mxu0 %v5152
      %6884 = vmatpush1.bf16.msra.mxu0 %v5151
      %6885 = vmatprep.subr.bf16.mxu0 0
      %6886 = vmatpush2.bf16.msra.mxu0 0
      %6887 = vmatprep.subr.bf16.mxu0 0
      %6888 = vmatpush2.bf16.msra.mxu0 0
      %6889 = vmatprep.subr.bf16.mxu0 0
      %6890 = vmatpush2.bf16.msra.mxu0 0
      %6891 = vmatprep.subr.bf16.mxu0 0
      %6892 = vmatpush2.bf16.msra.mxu0 0
      %6893 = vmatprep.subr.bf16.mxu0 0
      %6894 = vmatpush2.bf16.msra.mxu0 0
      %6895 = vmatprep.subr.bf16.mxu0 0
      %6896 = vmatpush2.bf16.msra.mxu0 0
      %6897 = vmatprep.subr.bf16.mxu0 0
      %6898 = vmatpush2.bf16.msra.mxu0 0
      %6899 = vmatprep.subr.bf16.mxu0 0
      %6900 = vmatpush2.bf16.msra.mxu0 0
      %6901 = vmatprep.mubr.bf16.mxu0 0
      %6902 = vmatmul.mubr.bf16.gmra.mxu0 %v6265
      %v6903 = vpop.f32.mrf.mxu0
      %v6904 = vadd.f32 %v6861, %v6903
      %v6905 = vpop.f32.mrf.mxu0
      %v6906 = vadd.f32 %v6863, %v6905
      %v6907 = vpop.f32.mrf.mxu0
      %v6908 = vadd.f32 %v6865, %v6907
      %v6909 = vpop.f32.mrf.mxu0
      %v6910 = vadd.f32 %v6867, %v6909
      %6911 = vdwg.mxu0
      %6912 = vmatprep.subr.bf16.mxu0 %v4454
      %6913 = vmatpush1.bf16.msra.mxu0 %v4453
      %6914 = vmatprep.subr.bf16.mxu0 %v4426
      %6915 = vmatpush1.bf16.msra.mxu0 %v4425
      %6916 = vmatprep.subr.bf16.mxu0 %v4398
      %6917 = vmatpush1.bf16.msra.mxu0 %v4397
      %6918 = vmatprep.subr.bf16.mxu0 %v4370
      %6919 = vmatpush1.bf16.msra.mxu0 %v4369
      %6920 = vmatprep.subr.bf16.mxu0 %v4342
      %6921 = vmatpush1.bf16.msra.mxu0 %v4341
      %6922 = vmatprep.subr.bf16.mxu0 %v4314
      %6923 = vmatpush1.bf16.msra.mxu0 %v4313
      %6924 = vmatprep.subr.bf16.mxu0 %v4286
      %6925 = vmatpush1.bf16.msra.mxu0 %v4285
      %6926 = vmatprep.subr.bf16.mxu0 %v4258
      %6927 = vmatpush1.bf16.msra.mxu0 %v4257
      %6928 = vmatprep.subr.bf16.mxu0 %v4678
      %6929 = vmatpush2.bf16.msra.mxu0 %v4677
      %6930 = vmatprep.subr.bf16.mxu0 %v4650
      %6931 = vmatpush2.bf16.msra.mxu0 %v4649
      %6932 = vmatprep.subr.bf16.mxu0 %v4622
      %6933 = vmatpush2.bf16.msra.mxu0 %v4621
      %6934 = vmatprep.subr.bf16.mxu0 %v4594
      %6935 = vmatpush2.bf16.msra.mxu0 %v4593
      %6936 = vmatprep.subr.bf16.mxu0 %v4566
      %6937 = vmatpush2.bf16.msra.mxu0 %v4565
      %6938 = vmatprep.subr.bf16.mxu0 %v4538
      %6939 = vmatpush2.bf16.msra.mxu0 %v4537
      %6940 = vmatprep.subr.bf16.mxu0 %v4510
      %6941 = vmatpush2.bf16.msra.mxu0 %v4509
      %6942 = vmatprep.subr.bf16.mxu0 %v4482
      %6943 = vmatpush2.bf16.msra.mxu0 %v4481
      %6944 = vmatprep.mubr.bf16.mxu0 %v1215
      %6945 = vmatmul.mubr.bf16.gmra.mxu0 %v1214
      %v6946 = vpop.f32.mrf.mxu0
      %v6947 = vadd.f32 %v1191, %v6946
      %v6948 = vpop.f32.mrf.mxu0
      %v6949 = vadd.f32 %v1191, %v6948
      %v6950 = vpop.f32.mrf.mxu0
      %v6951 = vadd.f32 %v1196, %v6950
      %v6952 = vpop.f32.mrf.mxu0
      %v6953 = vadd.f32 %v1196, %v6952
      %6954 = vdwg.mxu0
      %6955 = vmatprep.subr.bf16.mxu0 %v4902
      %6956 = vmatpush1.bf16.msra.mxu0 %v4901
      %6957 = vmatprep.subr.bf16.mxu0 %v4874
      %6958 = vmatpush1.bf16.msra.mxu0 %v4873
      %6959 = vmatprep.subr.bf16.mxu0 %v4846
      %6960 = vmatpush1.bf16.msra.mxu0 %v4845
      %6961 = vmatprep.subr.bf16.mxu0 %v4818
      %6962 = vmatpush1.bf16.msra.mxu0 %v4817
      %6963 = vmatprep.subr.bf16.mxu0 %v4790
      %6964 = vmatpush1.bf16.msra.mxu0 %v4789
      %6965 = vmatprep.subr.bf16.mxu0 %v4762
      %6966 = vmatpush1.bf16.msra.mxu0 %v4761
      %6967 = vmatprep.subr.bf16.mxu0 %v4734
      %6968 = vmatpush1.bf16.msra.mxu0 %v4733
      %6969 = vmatprep.subr.bf16.mxu0 %v4706
      %6970 = vmatpush1.bf16.msra.mxu0 %v4705
      %6971 = vmatprep.subr.bf16.mxu0 %v5126
      %6972 = vmatpush2.bf16.msra.mxu0 %v5125
      %6973 = vmatprep.subr.bf16.mxu0 %v5098
      %6974 = vmatpush2.bf16.msra.mxu0 %v5097
      %6975 = vmatprep.subr.bf16.mxu0 %v5070
      %6976 = vmatpush2.bf16.msra.mxu0 %v5069
      %6977 = vmatprep.subr.bf16.mxu0 %v5042
      %6978 = vmatpush2.bf16.msra.mxu0 %v5041
      %6979 = vmatprep.subr.bf16.mxu0 %v5014
      %6980 = vmatpush2.bf16.msra.mxu0 %v5013
      %6981 = vmatprep.subr.bf16.mxu0 %v4986
      %6982 = vmatpush2.bf16.msra.mxu0 %v4985
      %6983 = vmatprep.subr.bf16.mxu0 %v4958
      %6984 = vmatpush2.bf16.msra.mxu0 %v4957
      %6985 = vmatprep.subr.bf16.mxu0 %v4930
      %6986 = vmatpush2.bf16.msra.mxu0 %v4929
      %6987 = vmatprep.mubr.bf16.mxu0 %v1217
      %6988 = vmatmul.mubr.bf16.gmra.mxu0 %v1216
      %v6989 = vpop.f32.mrf.mxu0
      %v6990 = vadd.f32 %v6947, %v6989
      %v6991 = vpop.f32.mrf.mxu0
      %v6992 = vadd.f32 %v6949, %v6991
      %v6993 = vpop.f32.mrf.mxu0
      %v6994 = vadd.f32 %v6951, %v6993
      %v6995 = vpop.f32.mrf.mxu0
      %v6996 = vadd.f32 %v6953, %v6995
      %6997 = vdwg.mxu0
      %6998 = vmatprep.subr.bf16.mxu0 0
      %6999 = vmatpush1.bf16.msra.mxu0 0
      %7000 = vmatprep.subr.bf16.mxu0 0
      %7001 = vmatpush1.bf16.msra.mxu0 0
      %7002 = vmatprep.subr.bf16.mxu0 0
      %7003 = vmatpush1.bf16.msra.mxu0 0
      %7004 = vmatprep.subr.bf16.mxu0 0
      %7005 = vmatpush1.bf16.msra.mxu0 0
      %7006 = vmatprep.subr.bf16.mxu0 %v5238
      %7007 = vmatpush1.bf16.msra.mxu0 %v5237
      %7008 = vmatprep.subr.bf16.mxu0 %v5210
      %7009 = vmatpush1.bf16.msra.mxu0 %v5209
      %7010 = vmatprep.subr.bf16.mxu0 %v5182
      %7011 = vmatpush1.bf16.msra.mxu0 %v5181
      %7012 = vmatprep.subr.bf16.mxu0 %v5154
      %7013 = vmatpush1.bf16.msra.mxu0 %v5153
      %7014 = vmatprep.subr.bf16.mxu0 0
      %7015 = vmatpush2.bf16.msra.mxu0 0
      %7016 = vmatprep.subr.bf16.mxu0 0
      %7017 = vmatpush2.bf16.msra.mxu0 0
      %7018 = vmatprep.subr.bf16.mxu0 0
      %7019 = vmatpush2.bf16.msra.mxu0 0
      %7020 = vmatprep.subr.bf16.mxu0 0
      %7021 = vmatpush2.bf16.msra.mxu0 0
      %7022 = vmatprep.subr.bf16.mxu0 0
      %7023 = vmatpush2.bf16.msra.mxu0 0
      %7024 = vmatprep.subr.bf16.mxu0 0
      %7025 = vmatpush2.bf16.msra.mxu0 0
      %7026 = vmatprep.subr.bf16.mxu0 0
      %7027 = vmatpush2.bf16.msra.mxu0 0
      %7028 = vmatprep.subr.bf16.mxu0 0
      %7029 = vmatpush2.bf16.msra.mxu0 0
      %7030 = vmatprep.mubr.bf16.mxu0 0
      %7031 = vmatmul.mubr.bf16.gmra.mxu0 %v6265
      %v7032 = vpop.f32.mrf.mxu0
      %v7033 = vadd.f32 %v6990, %v7032
      %v7034 = vpop.f32.mrf.mxu0
      %v7035 = vadd.f32 %v6992, %v7034
      %v7036 = vpop.f32.mrf.mxu0
      %v7037 = vadd.f32 %v6994, %v7036
      %v7038 = vpop.f32.mrf.mxu0
      %v7039 = vadd.f32 %v6996, %v7038
      %7040 = vdwg.mxu0
      %7041 = vmatprep.subr.bf16.mxu0 %v4456
      %7042 = vmatpush1.bf16.msra.mxu0 %v4455
      %7043 = vmatprep.subr.bf16.mxu0 %v4428
      %7044 = vmatpush1.bf16.msra.mxu0 %v4427
      %7045 = vmatprep.subr.bf16.mxu0 %v4400
      %7046 = vmatpush1.bf16.msra.mxu0 %v4399
      %7047 = vmatprep.subr.bf16.mxu0 %v4372
      %7048 = vmatpush1.bf16.msra.mxu0 %v4371
      %7049 = vmatprep.subr.bf16.mxu0 %v4344
      %7050 = vmatpush1.bf16.msra.mxu0 %v4343
      %7051 = vmatprep.subr.bf16.mxu0 %v4316
      %7052 = vmatpush1.bf16.msra.mxu0 %v4315
      %7053 = vmatprep.subr.bf16.mxu0 %v4288
      %7054 = vmatpush1.bf16.msra.mxu0 %v4287
      %7055 = vmatprep.subr.bf16.mxu0 %v4260
      %7056 = vmatpush1.bf16.msra.mxu0 %v4259
      %7057 = vmatprep.subr.bf16.mxu0 %v4680
      %7058 = vmatpush2.bf16.msra.mxu0 %v4679
      %7059 = vmatprep.subr.bf16.mxu0 %v4652
      %7060 = vmatpush2.bf16.msra.mxu0 %v4651
      %7061 = vmatprep.subr.bf16.mxu0 %v4624
      %7062 = vmatpush2.bf16.msra.mxu0 %v4623
      %7063 = vmatprep.subr.bf16.mxu0 %v4596
      %7064 = vmatpush2.bf16.msra.mxu0 %v4595
      %7065 = vmatprep.subr.bf16.mxu0 %v4568
      %7066 = vmatpush2.bf16.msra.mxu0 %v4567
      %7067 = vmatprep.subr.bf16.mxu0 %v4540
      %7068 = vmatpush2.bf16.msra.mxu0 %v4539
      %7069 = vmatprep.subr.bf16.mxu0 %v4512
      %7070 = vmatpush2.bf16.msra.mxu0 %v4511
      %7071 = vmatprep.subr.bf16.mxu0 %v4484
      %7072 = vmatpush2.bf16.msra.mxu0 %v4483
      %7073 = vmatprep.mubr.bf16.mxu0 %v1215
      %7074 = vmatmul.mubr.bf16.gmra.mxu0 %v1214
      %v7075 = vpop.f32.mrf.mxu0
      %v7076 = vadd.f32 %v1191, %v7075
      %v7077 = vpop.f32.mrf.mxu0
      %v7078 = vadd.f32 %v1191, %v7077
      %v7079 = vpop.f32.mrf.mxu0
      %v7080 = vadd.f32 %v1196, %v7079
      %v7081 = vpop.f32.mrf.mxu0
      %v7082 = vadd.f32 %v1196, %v7081
      %7083 = vdwg.mxu0
      %7084 = vmatprep.subr.bf16.mxu0 %v4904
      %7085 = vmatpush1.bf16.msra.mxu0 %v4903
      %7086 = vmatprep.subr.bf16.mxu0 %v4876
      %7087 = vmatpush1.bf16.msra.mxu0 %v4875
      %7088 = vmatprep.subr.bf16.mxu0 %v4848
      %7089 = vmatpush1.bf16.msra.mxu0 %v4847
      %7090 = vmatprep.subr.bf16.mxu0 %v4820
      %7091 = vmatpush1.bf16.msra.mxu0 %v4819
      %7092 = vmatprep.subr.bf16.mxu0 %v4792
      %7093 = vmatpush1.bf16.msra.mxu0 %v4791
      %7094 = vmatprep.subr.bf16.mxu0 %v4764
      %7095 = vmatpush1.bf16.msra.mxu0 %v4763
      %7096 = vmatprep.subr.bf16.mxu0 %v4736
      %7097 = vmatpush1.bf16.msra.mxu0 %v4735
      %7098 = vmatprep.subr.bf16.mxu0 %v4708
      %7099 = vmatpush1.bf16.msra.mxu0 %v4707
      %7100 = vmatprep.subr.bf16.mxu0 %v5128
      %7101 = vmatpush2.bf16.msra.mxu0 %v5127
      %7102 = vmatprep.subr.bf16.mxu0 %v5100
      %7103 = vmatpush2.bf16.msra.mxu0 %v5099
      %7104 = vmatprep.subr.bf16.mxu0 %v5072
      %7105 = vmatpush2.bf16.msra.mxu0 %v5071
      %7106 = vmatprep.subr.bf16.mxu0 %v5044
      %7107 = vmatpush2.bf16.msra.mxu0 %v5043
      %7108 = vmatprep.subr.bf16.mxu0 %v5016
      %7109 = vmatpush2.bf16.msra.mxu0 %v5015
      %7110 = vmatprep.subr.bf16.mxu0 %v4988
      %7111 = vmatpush2.bf16.msra.mxu0 %v4987
      %7112 = vmatprep.subr.bf16.mxu0 %v4960
      %7113 = vmatpush2.bf16.msra.mxu0 %v4959
      %7114 = vmatprep.subr.bf16.mxu0 %v4932
      %7115 = vmatpush2.bf16.msra.mxu0 %v4931
      %7116 = vmatprep.mubr.bf16.mxu0 %v1217
      %7117 = vmatmul.mubr.bf16.gmra.mxu0 %v1216
      %v7118 = vpop.f32.mrf.mxu0
      %v7119 = vadd.f32 %v7076, %v7118
      %v7120 = vpop.f32.mrf.mxu0
      %v7121 = vadd.f32 %v7078, %v7120
      %v7122 = vpop.f32.mrf.mxu0
      %v7123 = vadd.f32 %v7080, %v7122
      %v7124 = vpop.f32.mrf.mxu0
      %v7125 = vadd.f32 %v7082, %v7124
      %7126 = vdwg.mxu0
      %7127 = vmatprep.subr.bf16.mxu0 0
      %7128 = vmatpush1.bf16.msra.mxu0 0
      %7129 = vmatprep.subr.bf16.mxu0 0
      %7130 = vmatpush1.bf16.msra.mxu0 0
      %7131 = vmatprep.subr.bf16.mxu0 0
      %7132 = vmatpush1.bf16.msra.mxu0 0
      %7133 = vmatprep.subr.bf16.mxu0 0
      %7134 = vmatpush1.bf16.msra.mxu0 0
      %7135 = vmatprep.subr.bf16.mxu0 %v5240
      %7136 = vmatpush1.bf16.msra.mxu0 %v5239
      %7137 = vmatprep.subr.bf16.mxu0 %v5212
      %7138 = vmatpush1.bf16.msra.mxu0 %v5211
      %7139 = vmatprep.subr.bf16.mxu0 %v5184
      %7140 = vmatpush1.bf16.msra.mxu0 %v5183
      %7141 = vmatprep.subr.bf16.mxu0 %v5156
      %7142 = vmatpush1.bf16.msra.mxu0 %v5155
      %7143 = vmatprep.subr.bf16.mxu0 0
      %7144 = vmatpush2.bf16.msra.mxu0 0
      %7145 = vmatprep.subr.bf16.mxu0 0
      %7146 = vmatpush2.bf16.msra.mxu0 0
      %7147 = vmatprep.subr.bf16.mxu0 0
      %7148 = vmatpush2.bf16.msra.mxu0 0
      %7149 = vmatprep.subr.bf16.mxu0 0
      %7150 = vmatpush2.bf16.msra.mxu0 0
      %7151 = vmatprep.subr.bf16.mxu0 0
      %7152 = vmatpush2.bf16.msra.mxu0 0
      %7153 = vmatprep.subr.bf16.mxu0 0
      %7154 = vmatpush2.bf16.msra.mxu0 0
      %7155 = vmatprep.subr.bf16.mxu0 0
      %7156 = vmatpush2.bf16.msra.mxu0 0
      %7157 = vmatprep.subr.bf16.mxu0 0
      %7158 = vmatpush2.bf16.msra.mxu0 0
      %7159 = vmatprep.mubr.bf16.mxu0 0
      %7160 = vmatmul.mubr.bf16.gmra.mxu0 %v6265
      %v7161 = vpop.f32.mrf.mxu0
      %v7162 = vadd.f32 %v7119, %v7161
      %v7163 = vpop.f32.mrf.mxu0
      %v7164 = vadd.f32 %v7121, %v7163
      %v7165 = vpop.f32.mrf.mxu0
      %v7166 = vadd.f32 %v7123, %v7165
      %v7167 = vpop.f32.mrf.mxu0
      %v7168 = vadd.f32 %v7125, %v7167
      %7169 = vdwg.mxu0
      %7170 = vmatprep.subr.bf16.mxu0 %v4458
      %7171 = vmatpush1.bf16.msra.mxu0 %v4457
      %7172 = vmatprep.subr.bf16.mxu0 %v4430
      %7173 = vmatpush1.bf16.msra.mxu0 %v4429
      %7174 = vmatprep.subr.bf16.mxu0 %v4402
      %7175 = vmatpush1.bf16.msra.mxu0 %v4401
      %7176 = vmatprep.subr.bf16.mxu0 %v4374
      %7177 = vmatpush1.bf16.msra.mxu0 %v4373
      %7178 = vmatprep.subr.bf16.mxu0 %v4346
      %7179 = vmatpush1.bf16.msra.mxu0 %v4345
      %7180 = vmatprep.subr.bf16.mxu0 %v4318
      %7181 = vmatpush1.bf16.msra.mxu0 %v4317
      %7182 = vmatprep.subr.bf16.mxu0 %v4290
      %7183 = vmatpush1.bf16.msra.mxu0 %v4289
      %7184 = vmatprep.subr.bf16.mxu0 %v4262
      %7185 = vmatpush1.bf16.msra.mxu0 %v4261
      %7186 = vmatprep.subr.bf16.mxu0 %v4682
      %7187 = vmatpush2.bf16.msra.mxu0 %v4681
      %7188 = vmatprep.subr.bf16.mxu0 %v4654
      %7189 = vmatpush2.bf16.msra.mxu0 %v4653
      %7190 = vmatprep.subr.bf16.mxu0 %v4626
      %7191 = vmatpush2.bf16.msra.mxu0 %v4625
      %7192 = vmatprep.subr.bf16.mxu0 %v4598
      %7193 = vmatpush2.bf16.msra.mxu0 %v4597
      %7194 = vmatprep.subr.bf16.mxu0 %v4570
      %7195 = vmatpush2.bf16.msra.mxu0 %v4569
      %7196 = vmatprep.subr.bf16.mxu0 %v4542
      %7197 = vmatpush2.bf16.msra.mxu0 %v4541
      %7198 = vmatprep.subr.bf16.mxu0 %v4514
      %7199 = vmatpush2.bf16.msra.mxu0 %v4513
      %7200 = vmatprep.subr.bf16.mxu0 %v4486
      %7201 = vmatpush2.bf16.msra.mxu0 %v4485
      %7202 = vmatprep.mubr.bf16.mxu0 %v1215
      %7203 = vmatmul.mubr.bf16.gmra.mxu0 %v1214
      %v7204 = vpop.f32.mrf.mxu0
      %v7205 = vadd.f32 %v1191, %v7204
      %v7206 = vpop.f32.mrf.mxu0
      %v7207 = vadd.f32 %v1191, %v7206
      %v7208 = vpop.f32.mrf.mxu0
      %v7209 = vadd.f32 %v1196, %v7208
      %v7210 = vpop.f32.mrf.mxu0
      %v7211 = vadd.f32 %v1196, %v7210
      %7212 = vdwg.mxu0
      %7213 = vmatprep.subr.bf16.mxu0 %v4906
      %7214 = vmatpush1.bf16.msra.mxu0 %v4905
      %7215 = vmatprep.subr.bf16.mxu0 %v4878
      %7216 = vmatpush1.bf16.msra.mxu0 %v4877
      %7217 = vmatprep.subr.bf16.mxu0 %v4850
      %7218 = vmatpush1.bf16.msra.mxu0 %v4849
      %7219 = vmatprep.subr.bf16.mxu0 %v4822
      %7220 = vmatpush1.bf16.msra.mxu0 %v4821
      %7221 = vmatprep.subr.bf16.mxu0 %v4794
      %7222 = vmatpush1.bf16.msra.mxu0 %v4793
      %7223 = vmatprep.subr.bf16.mxu0 %v4766
      %7224 = vmatpush1.bf16.msra.mxu0 %v4765
      %7225 = vmatprep.subr.bf16.mxu0 %v4738
      %7226 = vmatpush1.bf16.msra.mxu0 %v4737
      %7227 = vmatprep.subr.bf16.mxu0 %v4710
      %7228 = vmatpush1.bf16.msra.mxu0 %v4709
      %7229 = vmatprep.subr.bf16.mxu0 %v5130
      %7230 = vmatpush2.bf16.msra.mxu0 %v5129
      %7231 = vmatprep.subr.bf16.mxu0 %v5102
      %7232 = vmatpush2.bf16.msra.mxu0 %v5101
      %7233 = vmatprep.subr.bf16.mxu0 %v5074
      %7234 = vmatpush2.bf16.msra.mxu0 %v5073
      %7235 = vmatprep.subr.bf16.mxu0 %v5046
      %7236 = vmatpush2.bf16.msra.mxu0 %v5045
      %7237 = vmatprep.subr.bf16.mxu0 %v5018
      %7238 = vmatpush2.bf16.msra.mxu0 %v5017
      %7239 = vmatprep.subr.bf16.mxu0 %v4990
      %7240 = vmatpush2.bf16.msra.mxu0 %v4989
      %7241 = vmatprep.subr.bf16.mxu0 %v4962
      %7242 = vmatpush2.bf16.msra.mxu0 %v4961
      %7243 = vmatprep.subr.bf16.mxu0 %v4934
      %7244 = vmatpush2.bf16.msra.mxu0 %v4933
      %7245 = vmatprep.mubr.bf16.mxu0 %v1217
      %7246 = vmatmul.mubr.bf16.gmra.mxu0 %v1216
      %v7247 = vpop.f32.mrf.mxu0
      %v7248 = vadd.f32 %v7205, %v7247
      %v7249 = vpop.f32.mrf.mxu0
      %v7250 = vadd.f32 %v7207, %v7249
      %v7251 = vpop.f32.mrf.mxu0
      %v7252 = vadd.f32 %v7209, %v7251
      %v7253 = vpop.f32.mrf.mxu0
      %v7254 = vadd.f32 %v7211, %v7253
      %7255 = vdwg.mxu0
      %7256 = vmatprep.subr.bf16.mxu0 0
      %7257 = vmatpush1.bf16.msra.mxu0 0
      %7258 = vmatprep.subr.bf16.mxu0 0
      %7259 = vmatpush1.bf16.msra.mxu0 0
      %7260 = vmatprep.subr.bf16.mxu0 0
      %7261 = vmatpush1.bf16.msra.mxu0 0
      %7262 = vmatprep.subr.bf16.mxu0 0
      %7263 = vmatpush1.bf16.msra.mxu0 0
      %7264 = vmatprep.subr.bf16.mxu0 %v5242
      %7265 = vmatpush1.bf16.msra.mxu0 %v5241
      %7266 = vmatprep.subr.bf16.mxu0 %v5214
      %7267 = vmatpush1.bf16.msra.mxu0 %v5213
      %7268 = vmatprep.subr.bf16.mxu0 %v5186
      %7269 = vmatpush1.bf16.msra.mxu0 %v5185
      %7270 = vmatprep.subr.bf16.mxu0 %v5158
      %7271 = vmatpush1.bf16.msra.mxu0 %v5157
      %7272 = vmatprep.subr.bf16.mxu0 0
      %7273 = vmatpush2.bf16.msra.mxu0 0
      %7274 = vmatprep.subr.bf16.mxu0 0
      %7275 = vmatpush2.bf16.msra.mxu0 0
      %7276 = vmatprep.subr.bf16.mxu0 0
      %7277 = vmatpush2.bf16.msra.mxu0 0
      %7278 = vmatprep.subr.bf16.mxu0 0
      %7279 = vmatpush2.bf16.msra.mxu0 0
      %7280 = vmatprep.subr.bf16.mxu0 0
      %7281 = vmatpush2.bf16.msra.mxu0 0
      %7282 = vmatprep.subr.bf16.mxu0 0
      %7283 = vmatpush2.bf16.msra.mxu0 0
      %7284 = vmatprep.subr.bf16.mxu0 0
      %7285 = vmatpush2.bf16.msra.mxu0 0
      %7286 = vmatprep.subr.bf16.mxu0 0
      %7287 = vmatpush2.bf16.msra.mxu0 0
      %7288 = vmatprep.mubr.bf16.mxu0 0
      %7289 = vmatmul.mubr.bf16.gmra.mxu0 %v6265
      %v7290 = vpop.f32.mrf.mxu0
      %v7291 = vadd.f32 %v7248, %v7290
      %v7292 = vpop.f32.mrf.mxu0
      %v7293 = vadd.f32 %v7250, %v7292
      %v7294 = vpop.f32.mrf.mxu0
      %v7295 = vadd.f32 %v7252, %v7294
      %v7296 = vpop.f32.mrf.mxu0
      %v7297 = vadd.f32 %v7254, %v7296
      %7298 = vdwg.mxu0
      %7299 = vmatprep.subr.bf16.mxu0 %v4460
      %7300 = vmatpush1.bf16.msra.mxu0 %v4459
      %7301 = vmatprep.subr.bf16.mxu0 %v4432
      %7302 = vmatpush1.bf16.msra.mxu0 %v4431
      %7303 = vmatprep.subr.bf16.mxu0 %v4404
      %7304 = vmatpush1.bf16.msra.mxu0 %v4403
      %7305 = vmatprep.subr.bf16.mxu0 %v4376
      %7306 = vmatpush1.bf16.msra.mxu0 %v4375
      %7307 = vmatprep.subr.bf16.mxu0 %v4348
      %7308 = vmatpush1.bf16.msra.mxu0 %v4347
      %7309 = vmatprep.subr.bf16.mxu0 %v4320
      %7310 = vmatpush1.bf16.msra.mxu0 %v4319
      %7311 = vmatprep.subr.bf16.mxu0 %v4292
      %7312 = vmatpush1.bf16.msra.mxu0 %v4291
      %7313 = vmatprep.subr.bf16.mxu0 %v4264
      %7314 = vmatpush1.bf16.msra.mxu0 %v4263
      %7315 = vmatprep.subr.bf16.mxu0 %v4684
      %7316 = vmatpush2.bf16.msra.mxu0 %v4683
      %7317 = vmatprep.subr.bf16.mxu0 %v4656
      %7318 = vmatpush2.bf16.msra.mxu0 %v4655
      %7319 = vmatprep.subr.bf16.mxu0 %v4628
      %7320 = vmatpush2.bf16.msra.mxu0 %v4627
      %7321 = vmatprep.subr.bf16.mxu0 %v4600
      %7322 = vmatpush2.bf16.msra.mxu0 %v4599
      %7323 = vmatprep.subr.bf16.mxu0 %v4572
      %7324 = vmatpush2.bf16.msra.mxu0 %v4571
      %7325 = vmatprep.subr.bf16.mxu0 %v4544
      %7326 = vmatpush2.bf16.msra.mxu0 %v4543
      %7327 = vmatprep.subr.bf16.mxu0 %v4516
      %7328 = vmatpush2.bf16.msra.mxu0 %v4515
      %7329 = vmatprep.subr.bf16.mxu0 %v4488
      %7330 = vmatpush2.bf16.msra.mxu0 %v4487
      %7331 = vmatprep.mubr.bf16.mxu0 %v1215
      %7332 = vmatmul.mubr.bf16.gmra.mxu0 %v1214
      %v7333 = vpop.f32.mrf.mxu0
      %v7334 = vadd.f32 %v1191, %v7333
      %v7335 = vpop.f32.mrf.mxu0
      %v7336 = vadd.f32 %v1191, %v7335
      %v7337 = vpop.f32.mrf.mxu0
      %v7338 = vadd.f32 %v1196, %v7337
      %v7339 = vpop.f32.mrf.mxu0
      %v7340 = vadd.f32 %v1196, %v7339
      %7341 = vdwg.mxu0
      %7342 = vmatprep.subr.bf16.mxu0 %v4908
      %7343 = vmatpush1.bf16.msra.mxu0 %v4907
      %7344 = vmatprep.subr.bf16.mxu0 %v4880
      %7345 = vmatpush1.bf16.msra.mxu0 %v4879
      %7346 = vmatprep.subr.bf16.mxu0 %v4852
      %7347 = vmatpush1.bf16.msra.mxu0 %v4851
      %7348 = vmatprep.subr.bf16.mxu0 %v4824
      %7349 = vmatpush1.bf16.msra.mxu0 %v4823
      %7350 = vmatprep.subr.bf16.mxu0 %v4796
      %7351 = vmatpush1.bf16.msra.mxu0 %v4795
      %7352 = vmatprep.subr.bf16.mxu0 %v4768
      %7353 = vmatpush1.bf16.msra.mxu0 %v4767
      %7354 = vmatprep.subr.bf16.mxu0 %v4740
      %7355 = vmatpush1.bf16.msra.mxu0 %v4739
      %7356 = vmatprep.subr.bf16.mxu0 %v4712
      %7357 = vmatpush1.bf16.msra.mxu0 %v4711
      %7358 = vmatprep.subr.bf16.mxu0 %v5132
      %7359 = vmatpush2.bf16.msra.mxu0 %v5131
      %7360 = vmatprep.subr.bf16.mxu0 %v5104
      %7361 = vmatpush2.bf16.msra.mxu0 %v5103
      %7362 = vmatprep.subr.bf16.mxu0 %v5076
      %7363 = vmatpush2.bf16.msra.mxu0 %v5075
      %7364 = vmatprep.subr.bf16.mxu0 %v5048
      %7365 = vmatpush2.bf16.msra.mxu0 %v5047
      %7366 = vmatprep.subr.bf16.mxu0 %v5020
      %7367 = vmatpush2.bf16.msra.mxu0 %v5019
      %7368 = vmatprep.subr.bf16.mxu0 %v4992
      %7369 = vmatpush2.bf16.msra.mxu0 %v4991
      %7370 = vmatprep.subr.bf16.mxu0 %v4964
      %7371 = vmatpush2.bf16.msra.mxu0 %v4963
      %7372 = vmatprep.subr.bf16.mxu0 %v4936
      %7373 = vmatpush2.bf16.msra.mxu0 %v4935
      %7374 = vmatprep.mubr.bf16.mxu0 %v1217
      %7375 = vmatmul.mubr.bf16.gmra.mxu0 %v1216
      %v7376 = vpop.f32.mrf.mxu0
      %v7377 = vadd.f32 %v7334, %v7376
      %v7378 = vpop.f32.mrf.mxu0
      %v7379 = vadd.f32 %v7336, %v7378
      %v7380 = vpop.f32.mrf.mxu0
      %v7381 = vadd.f32 %v7338, %v7380
      %v7382 = vpop.f32.mrf.mxu0
      %v7383 = vadd.f32 %v7340, %v7382
      %7384 = vdwg.mxu0
      %7385 = vmatprep.subr.bf16.mxu0 0
      %7386 = vmatpush1.bf16.msra.mxu0 0
      %7387 = vmatprep.subr.bf16.mxu0 0
      %7388 = vmatpush1.bf16.msra.mxu0 0
      %7389 = vmatprep.subr.bf16.mxu0 0
      %7390 = vmatpush1.bf16.msra.mxu0 0
      %7391 = vmatprep.subr.bf16.mxu0 0
      %7392 = vmatpush1.bf16.msra.mxu0 0
      %7393 = vmatprep.subr.bf16.mxu0 %v5244
      %7394 = vmatpush1.bf16.msra.mxu0 %v5243
      %7395 = vmatprep.subr.bf16.mxu0 %v5216
      %7396 = vmatpush1.bf16.msra.mxu0 %v5215
      %7397 = vmatprep.subr.bf16.mxu0 %v5188
      %7398 = vmatpush1.bf16.msra.mxu0 %v5187
      %7399 = vmatprep.subr.bf16.mxu0 %v5160
      %7400 = vmatpush1.bf16.msra.mxu0 %v5159
      %7401 = vmatprep.subr.bf16.mxu0 0
      %7402 = vmatpush2.bf16.msra.mxu0 0
      %7403 = vmatprep.subr.bf16.mxu0 0
      %7404 = vmatpush2.bf16.msra.mxu0 0
      %7405 = vmatprep.subr.bf16.mxu0 0
      %7406 = vmatpush2.bf16.msra.mxu0 0
      %7407 = vmatprep.subr.bf16.mxu0 0
      %7408 = vmatpush2.bf16.msra.mxu0 0
      %7409 = vmatprep.subr.bf16.mxu0 0
      %7410 = vmatpush2.bf16.msra.mxu0 0
      %7411 = vmatprep.subr.bf16.mxu0 0
      %7412 = vmatpush2.bf16.msra.mxu0 0
      %7413 = vmatprep.subr.bf16.mxu0 0
      %7414 = vmatpush2.bf16.msra.mxu0 0
      %7415 = vmatprep.subr.bf16.mxu0 0
      %7416 = vmatpush2.bf16.msra.mxu0 0
      %7417 = vmatprep.mubr.bf16.mxu0 0
      %7418 = vmatmul.mubr.bf16.gmra.mxu0 %v6265
      %v7419 = vpop.f32.mrf.mxu0
      %v7420 = vadd.f32 %v7377, %v7419
      %v7421 = vpop.f32.mrf.mxu0
      %v7422 = vadd.f32 %v7379, %v7421
      %v7423 = vpop.f32.mrf.mxu0
      %v7424 = vadd.f32 %v7381, %v7423
      %v7425 = vpop.f32.mrf.mxu0
      %v7426 = vadd.f32 %v7383, %v7425
      %7427 = vdwg.mxu0
      %7428 = vmatprep.subr.bf16.mxu0 %v4462
      %7429 = vmatpush1.bf16.msra.mxu0 %v4461
      %7430 = vmatprep.subr.bf16.mxu0 %v4434
      %7431 = vmatpush1.bf16.msra.mxu0 %v4433
      %7432 = vmatprep.subr.bf16.mxu0 %v4406
      %7433 = vmatpush1.bf16.msra.mxu0 %v4405
      %7434 = vmatprep.subr.bf16.mxu0 %v4378
      %7435 = vmatpush1.bf16.msra.mxu0 %v4377
      %7436 = vmatprep.subr.bf16.mxu0 %v4350
      %7437 = vmatpush1.bf16.msra.mxu0 %v4349
      %7438 = vmatprep.subr.bf16.mxu0 %v4322
      %7439 = vmatpush1.bf16.msra.mxu0 %v4321
      %7440 = vmatprep.subr.bf16.mxu0 %v4294
      %7441 = vmatpush1.bf16.msra.mxu0 %v4293
      %7442 = vmatprep.subr.bf16.mxu0 %v4266
      %7443 = vmatpush1.bf16.msra.mxu0 %v4265
      %7444 = vmatprep.subr.bf16.mxu0 %v4686
      %7445 = vmatpush2.bf16.msra.mxu0 %v4685
      %7446 = vmatprep.subr.bf16.mxu0 %v4658
      %7447 = vmatpush2.bf16.msra.mxu0 %v4657
      %7448 = vmatprep.subr.bf16.mxu0 %v4630
      %7449 = vmatpush2.bf16.msra.mxu0 %v4629
      %7450 = vmatprep.subr.bf16.mxu0 %v4602
      %7451 = vmatpush2.bf16.msra.mxu0 %v4601
      %7452 = vmatprep.subr.bf16.mxu0 %v4574
      %7453 = vmatpush2.bf16.msra.mxu0 %v4573
      %7454 = vmatprep.subr.bf16.mxu0 %v4546
      %7455 = vmatpush2.bf16.msra.mxu0 %v4545
      %7456 = vmatprep.subr.bf16.mxu0 %v4518
      %7457 = vmatpush2.bf16.msra.mxu0 %v4517
      %7458 = vmatprep.subr.bf16.mxu0 %v4490
      %7459 = vmatpush2.bf16.msra.mxu0 %v4489
      %7460 = vmatprep.mubr.bf16.mxu0 %v1215
      %7461 = vmatmul.mubr.bf16.gmra.mxu0 %v1214
      %v7462 = vpop.f32.mrf.mxu0
      %v7463 = vadd.f32 %v1191, %v7462
      %v7464 = vpop.f32.mrf.mxu0
      %v7465 = vadd.f32 %v1191, %v7464
      %v7466 = vpop.f32.mrf.mxu0
      %v7467 = vadd.f32 %v1196, %v7466
      %v7468 = vpop.f32.mrf.mxu0
      %v7469 = vadd.f32 %v1196, %v7468
      %7470 = vdwg.mxu0
      %7471 = vmatprep.subr.bf16.mxu0 %v4910
      %7472 = vmatpush1.bf16.msra.mxu0 %v4909
      %7473 = vmatprep.subr.bf16.mxu0 %v4882
      %7474 = vmatpush1.bf16.msra.mxu0 %v4881
      %7475 = vmatprep.subr.bf16.mxu0 %v4854
      %7476 = vmatpush1.bf16.msra.mxu0 %v4853
      %7477 = vmatprep.subr.bf16.mxu0 %v4826
      %7478 = vmatpush1.bf16.msra.mxu0 %v4825
      %7479 = vmatprep.subr.bf16.mxu0 %v4798
      %7480 = vmatpush1.bf16.msra.mxu0 %v4797
      %7481 = vmatprep.subr.bf16.mxu0 %v4770
      %7482 = vmatpush1.bf16.msra.mxu0 %v4769
      %7483 = vmatprep.subr.bf16.mxu0 %v4742
      %7484 = vmatpush1.bf16.msra.mxu0 %v4741
      %7485 = vmatprep.subr.bf16.mxu0 %v4714
      %7486 = vmatpush1.bf16.msra.mxu0 %v4713
      %7487 = vmatprep.subr.bf16.mxu0 %v5134
      %7488 = vmatpush2.bf16.msra.mxu0 %v5133
      %7489 = vmatprep.subr.bf16.mxu0 %v5106
      %7490 = vmatpush2.bf16.msra.mxu0 %v5105
      %7491 = vmatprep.subr.bf16.mxu0 %v5078
      %7492 = vmatpush2.bf16.msra.mxu0 %v5077
      %7493 = vmatprep.subr.bf16.mxu0 %v5050
      %7494 = vmatpush2.bf16.msra.mxu0 %v5049
      %7495 = vmatprep.subr.bf16.mxu0 %v5022
      %7496 = vmatpush2.bf16.msra.mxu0 %v5021
      %7497 = vmatprep.subr.bf16.mxu0 %v4994
      %7498 = vmatpush2.bf16.msra.mxu0 %v4993
      %7499 = vmatprep.subr.bf16.mxu0 %v4966
      %7500 = vmatpush2.bf16.msra.mxu0 %v4965
      %7501 = vmatprep.subr.bf16.mxu0 %v4938
      %7502 = vmatpush2.bf16.msra.mxu0 %v4937
      %7503 = vmatprep.mubr.bf16.mxu0 %v1217
      %7504 = vmatmul.mubr.bf16.gmra.mxu0 %v1216
      %v7505 = vpop.f32.mrf.mxu0
      %v7506 = vadd.f32 %v7463, %v7505
      %v7507 = vpop.f32.mrf.mxu0
      %v7508 = vadd.f32 %v7465, %v7507
      %v7509 = vpop.f32.mrf.mxu0
      %v7510 = vadd.f32 %v7467, %v7509
      %v7511 = vpop.f32.mrf.mxu0
      %v7512 = vadd.f32 %v7469, %v7511
      %7513 = vdwg.mxu0
      %7514 = vmatprep.subr.bf16.mxu0 0
      %7515 = vmatpush1.bf16.msra.mxu0 0
      %7516 = vmatprep.subr.bf16.mxu0 0
      %7517 = vmatpush1.bf16.msra.mxu0 0
      %7518 = vmatprep.subr.bf16.mxu0 0
      %7519 = vmatpush1.bf16.msra.mxu0 0
      %7520 = vmatprep.subr.bf16.mxu0 0
      %7521 = vmatpush1.bf16.msra.mxu0 0
      %7522 = vmatprep.subr.bf16.mxu0 %v5246
      %7523 = vmatpush1.bf16.msra.mxu0 %v5245
      %7524 = vmatprep.subr.bf16.mxu0 %v5218
      %7525 = vmatpush1.bf16.msra.mxu0 %v5217
      %7526 = vmatprep.subr.bf16.mxu0 %v5190
      %7527 = vmatpush1.bf16.msra.mxu0 %v5189
      %7528 = vmatprep.subr.bf16.mxu0 %v5162
      %7529 = vmatpush1.bf16.msra.mxu0 %v5161
      %7530 = vmatprep.subr.bf16.mxu0 0
      %7531 = vmatpush2.bf16.msra.mxu0 0
      %7532 = vmatprep.subr.bf16.mxu0 0
      %7533 = vmatpush2.bf16.msra.mxu0 0
      %7534 = vmatprep.subr.bf16.mxu0 0
      %7535 = vmatpush2.bf16.msra.mxu0 0
      %7536 = vmatprep.subr.bf16.mxu0 0
      %7537 = vmatpush2.bf16.msra.mxu0 0
      %7538 = vmatprep.subr.bf16.mxu0 0
      %7539 = vmatpush2.bf16.msra.mxu0 0
      %7540 = vmatprep.subr.bf16.mxu0 0
      %7541 = vmatpush2.bf16.msra.mxu0 0
      %7542 = vmatprep.subr.bf16.mxu0 0
      %7543 = vmatpush2.bf16.msra.mxu0 0
      %7544 = vmatprep.subr.bf16.mxu0 0
      %7545 = vmatpush2.bf16.msra.mxu0 0
      %7546 = vmatprep.mubr.bf16.mxu0 0
      %7547 = vmatmul.mubr.bf16.gmra.mxu0 %v6265
      %v7548 = vpop.f32.mrf.mxu0
      %v7549 = vadd.f32 %v7506, %v7548
      %v7550 = vpop.f32.mrf.mxu0
      %v7551 = vadd.f32 %v7508, %v7550
      %v7552 = vpop.f32.mrf.mxu0
      %v7553 = vadd.f32 %v7510, %v7552
      %v7554 = vpop.f32.mrf.mxu0
      %v7555 = vadd.f32 %v7512, %v7554
      %7556 = vdwg.mxu0
      %7557 = vmatprep.subr.bf16.mxu0 %v4464
      %7558 = vmatpush1.bf16.msra.mxu0 %v4463
      %7559 = vmatprep.subr.bf16.mxu0 %v4436
      %7560 = vmatpush1.bf16.msra.mxu0 %v4435
      %7561 = vmatprep.subr.bf16.mxu0 %v4408
      %7562 = vmatpush1.bf16.msra.mxu0 %v4407
      %7563 = vmatprep.subr.bf16.mxu0 %v4380
      %7564 = vmatpush1.bf16.msra.mxu0 %v4379
      %7565 = vmatprep.subr.bf16.mxu0 %v4352
      %7566 = vmatpush1.bf16.msra.mxu0 %v4351
      %7567 = vmatprep.subr.bf16.mxu0 %v4324
      %7568 = vmatpush1.bf16.msra.mxu0 %v4323
      %7569 = vmatprep.subr.bf16.mxu0 %v4296
      %7570 = vmatpush1.bf16.msra.mxu0 %v4295
      %7571 = vmatprep.subr.bf16.mxu0 %v4268
      %7572 = vmatpush1.bf16.msra.mxu0 %v4267
      %7573 = vmatprep.subr.bf16.mxu0 %v4688
      %7574 = vmatpush2.bf16.msra.mxu0 %v4687
      %7575 = vmatprep.subr.bf16.mxu0 %v4660
      %7576 = vmatpush2.bf16.msra.mxu0 %v4659
      %7577 = vmatprep.subr.bf16.mxu0 %v4632
      %7578 = vmatpush2.bf16.msra.mxu0 %v4631
      %7579 = vmatprep.subr.bf16.mxu0 %v4604
      %7580 = vmatpush2.bf16.msra.mxu0 %v4603
      %7581 = vmatprep.subr.bf16.mxu0 %v4576
      %7582 = vmatpush2.bf16.msra.mxu0 %v4575
      %7583 = vmatprep.subr.bf16.mxu0 %v4548
      %7584 = vmatpush2.bf16.msra.mxu0 %v4547
      %7585 = vmatprep.subr.bf16.mxu0 %v4520
      %7586 = vmatpush2.bf16.msra.mxu0 %v4519
      %7587 = vmatprep.subr.bf16.mxu0 %v4492
      %7588 = vmatpush2.bf16.msra.mxu0 %v4491
      %7589 = vmatprep.mubr.bf16.mxu0 %v1215
      %7590 = vmatmul.mubr.bf16.gmra.mxu0 %v1214
      %v7591 = vpop.f32.mrf.mxu0
      %v7592 = vadd.f32 %v1191, %v7591
      %v7593 = vpop.f32.mrf.mxu0
      %v7594 = vadd.f32 %v1191, %v7593
      %v7595 = vpop.f32.mrf.mxu0
      %v7596 = vadd.f32 %v1196, %v7595
      %v7597 = vpop.f32.mrf.mxu0
      %v7598 = vadd.f32 %v1196, %v7597
      %7599 = vdwg.mxu0
      %7600 = vmatprep.subr.bf16.mxu0 %v4912
      %7601 = vmatpush1.bf16.msra.mxu0 %v4911
      %7602 = vmatprep.subr.bf16.mxu0 %v4884
      %7603 = vmatpush1.bf16.msra.mxu0 %v4883
      %7604 = vmatprep.subr.bf16.mxu0 %v4856
      %7605 = vmatpush1.bf16.msra.mxu0 %v4855
      %7606 = vmatprep.subr.bf16.mxu0 %v4828
      %7607 = vmatpush1.bf16.msra.mxu0 %v4827
      %7608 = vmatprep.subr.bf16.mxu0 %v4800
      %7609 = vmatpush1.bf16.msra.mxu0 %v4799
      %7610 = vmatprep.subr.bf16.mxu0 %v4772
      %7611 = vmatpush1.bf16.msra.mxu0 %v4771
      %7612 = vmatprep.subr.bf16.mxu0 %v4744
      %7613 = vmatpush1.bf16.msra.mxu0 %v4743
      %7614 = vmatprep.subr.bf16.mxu0 %v4716
      %7615 = vmatpush1.bf16.msra.mxu0 %v4715
      %7616 = vmatprep.subr.bf16.mxu0 %v5136
      %7617 = vmatpush2.bf16.msra.mxu0 %v5135
      %7618 = vmatprep.subr.bf16.mxu0 %v5108
      %7619 = vmatpush2.bf16.msra.mxu0 %v5107
      %7620 = vmatprep.subr.bf16.mxu0 %v5080
      %7621 = vmatpush2.bf16.msra.mxu0 %v5079
      %7622 = vmatprep.subr.bf16.mxu0 %v5052
      %7623 = vmatpush2.bf16.msra.mxu0 %v5051
      %7624 = vmatprep.subr.bf16.mxu0 %v5024
      %7625 = vmatpush2.bf16.msra.mxu0 %v5023
      %7626 = vmatprep.subr.bf16.mxu0 %v4996
      %7627 = vmatpush2.bf16.msra.mxu0 %v4995
      %7628 = vmatprep.subr.bf16.mxu0 %v4968
      %7629 = vmatpush2.bf16.msra.mxu0 %v4967
      %7630 = vmatprep.subr.bf16.mxu0 %v4940
      %7631 = vmatpush2.bf16.msra.mxu0 %v4939
      %7632 = vmatprep.mubr.bf16.mxu0 %v1217
      %7633 = vmatmul.mubr.bf16.gmra.mxu0 %v1216
      %v7634 = vpop.f32.mrf.mxu0
      %v7635 = vadd.f32 %v7592, %v7634
      %v7636 = vpop.f32.mrf.mxu0
      %v7637 = vadd.f32 %v7594, %v7636
      %v7638 = vpop.f32.mrf.mxu0
      %v7639 = vadd.f32 %v7596, %v7638
      %v7640 = vpop.f32.mrf.mxu0
      %v7641 = vadd.f32 %v7598, %v7640
      %7642 = vdwg.mxu0
      %7643 = vmatprep.subr.bf16.mxu0 0
      %7644 = vmatpush1.bf16.msra.mxu0 0
      %7645 = vmatprep.subr.bf16.mxu0 0
      %7646 = vmatpush1.bf16.msra.mxu0 0
      %7647 = vmatprep.subr.bf16.mxu0 0
      %7648 = vmatpush1.bf16.msra.mxu0 0
      %7649 = vmatprep.subr.bf16.mxu0 0
      %7650 = vmatpush1.bf16.msra.mxu0 0
      %7651 = vmatprep.subr.bf16.mxu0 %v5248
      %7652 = vmatpush1.bf16.msra.mxu0 %v5247
      %7653 = vmatprep.subr.bf16.mxu0 %v5220
      %7654 = vmatpush1.bf16.msra.mxu0 %v5219
      %7655 = vmatprep.subr.bf16.mxu0 %v5192
      %7656 = vmatpush1.bf16.msra.mxu0 %v5191
      %7657 = vmatprep.subr.bf16.mxu0 %v5164
      %7658 = vmatpush1.bf16.msra.mxu0 %v5163
      %7659 = vmatprep.subr.bf16.mxu0 0
      %7660 = vmatpush2.bf16.msra.mxu0 0
      %7661 = vmatprep.subr.bf16.mxu0 0
      %7662 = vmatpush2.bf16.msra.mxu0 0
      %7663 = vmatprep.subr.bf16.mxu0 0
      %7664 = vmatpush2.bf16.msra.mxu0 0
      %7665 = vmatprep.subr.bf16.mxu0 0
      %7666 = vmatpush2.bf16.msra.mxu0 0
      %7667 = vmatprep.subr.bf16.mxu0 0
      %7668 = vmatpush2.bf16.msra.mxu0 0
      %7669 = vmatprep.subr.bf16.mxu0 0
      %7670 = vmatpush2.bf16.msra.mxu0 0
      %7671 = vmatprep.subr.bf16.mxu0 0
      %7672 = vmatpush2.bf16.msra.mxu0 0
      %7673 = vmatprep.subr.bf16.mxu0 0
      %7674 = vmatpush2.bf16.msra.mxu0 0
      %7675 = vmatprep.mubr.bf16.mxu0 0
      %7676 = vmatmul.mubr.bf16.gmra.mxu0 %v6265
      %v7677 = vpop.f32.mrf.mxu0
      %v7678 = vadd.f32 %v7635, %v7677
      %v7679 = vpop.f32.mrf.mxu0
      %v7680 = vadd.f32 %v7637, %v7679
      %v7681 = vpop.f32.mrf.mxu0
      %v7682 = vadd.f32 %v7639, %v7681
      %v7683 = vpop.f32.mrf.mxu0
      %v7684 = vadd.f32 %v7641, %v7683
      %7685 = vdwg.mxu0
      %7686 = vmatprep.subr.bf16.mxu0 %v4466
      %7687 = vmatpush1.bf16.msra.mxu0 %v4465
      %7688 = vmatprep.subr.bf16.mxu0 %v4438
      %7689 = vmatpush1.bf16.msra.mxu0 %v4437
      %7690 = vmatprep.subr.bf16.mxu0 %v4410
      %7691 = vmatpush1.bf16.msra.mxu0 %v4409
      %7692 = vmatprep.subr.bf16.mxu0 %v4382
      %7693 = vmatpush1.bf16.msra.mxu0 %v4381
      %7694 = vmatprep.subr.bf16.mxu0 %v4354
      %7695 = vmatpush1.bf16.msra.mxu0 %v4353
      %7696 = vmatprep.subr.bf16.mxu0 %v4326
      %7697 = vmatpush1.bf16.msra.mxu0 %v4325
      %7698 = vmatprep.subr.bf16.mxu0 %v4298
      %7699 = vmatpush1.bf16.msra.mxu0 %v4297
      %7700 = vmatprep.subr.bf16.mxu0 %v4270
      %7701 = vmatpush1.bf16.msra.mxu0 %v4269
      %7702 = vmatprep.subr.bf16.mxu0 %v4690
      %7703 = vmatpush2.bf16.msra.mxu0 %v4689
      %7704 = vmatprep.subr.bf16.mxu0 %v4662
      %7705 = vmatpush2.bf16.msra.mxu0 %v4661
      %7706 = vmatprep.subr.bf16.mxu0 %v4634
      %7707 = vmatpush2.bf16.msra.mxu0 %v4633
      %7708 = vmatprep.subr.bf16.mxu0 %v4606
      %7709 = vmatpush2.bf16.msra.mxu0 %v4605
      %7710 = vmatprep.subr.bf16.mxu0 %v4578
      %7711 = vmatpush2.bf16.msra.mxu0 %v4577
      %7712 = vmatprep.subr.bf16.mxu0 %v4550
      %7713 = vmatpush2.bf16.msra.mxu0 %v4549
      %7714 = vmatprep.subr.bf16.mxu0 %v4522
      %7715 = vmatpush2.bf16.msra.mxu0 %v4521
      %7716 = vmatprep.subr.bf16.mxu0 %v4494
      %7717 = vmatpush2.bf16.msra.mxu0 %v4493
      %7718 = vmatprep.mubr.bf16.mxu0 %v1215
      %7719 = vmatmul.mubr.bf16.gmra.mxu0 %v1214
      %v7720 = vpop.f32.mrf.mxu0
      %v7721 = vadd.f32 %v1191, %v7720
      %v7722 = vpop.f32.mrf.mxu0
      %v7723 = vadd.f32 %v1191, %v7722
      %v7724 = vpop.f32.mrf.mxu0
      %v7725 = vadd.f32 %v1196, %v7724
      %v7726 = vpop.f32.mrf.mxu0
      %v7727 = vadd.f32 %v1196, %v7726
      %7728 = vdwg.mxu0
      %7729 = vmatprep.subr.bf16.mxu0 %v4914
      %7730 = vmatpush1.bf16.msra.mxu0 %v4913
      %7731 = vmatprep.subr.bf16.mxu0 %v4886
      %7732 = vmatpush1.bf16.msra.mxu0 %v4885
      %7733 = vmatprep.subr.bf16.mxu0 %v4858
      %7734 = vmatpush1.bf16.msra.mxu0 %v4857
      %7735 = vmatprep.subr.bf16.mxu0 %v4830
      %7736 = vmatpush1.bf16.msra.mxu0 %v4829
      %7737 = vmatprep.subr.bf16.mxu0 %v4802
      %7738 = vmatpush1.bf16.msra.mxu0 %v4801
      %7739 = vmatprep.subr.bf16.mxu0 %v4774
      %7740 = vmatpush1.bf16.msra.mxu0 %v4773
      %7741 = vmatprep.subr.bf16.mxu0 %v4746
      %7742 = vmatpush1.bf16.msra.mxu0 %v4745
      %7743 = vmatprep.subr.bf16.mxu0 %v4718
      %7744 = vmatpush1.bf16.msra.mxu0 %v4717
      %7745 = vmatprep.subr.bf16.mxu0 %v5138
      %7746 = vmatpush2.bf16.msra.mxu0 %v5137
      %7747 = vmatprep.subr.bf16.mxu0 %v5110
      %7748 = vmatpush2.bf16.msra.mxu0 %v5109
      %7749 = vmatprep.subr.bf16.mxu0 %v5082
      %7750 = vmatpush2.bf16.msra.mxu0 %v5081
      %7751 = vmatprep.subr.bf16.mxu0 %v5054
      %7752 = vmatpush2.bf16.msra.mxu0 %v5053
      %7753 = vmatprep.subr.bf16.mxu0 %v5026
      %7754 = vmatpush2.bf16.msra.mxu0 %v5025
      %7755 = vmatprep.subr.bf16.mxu0 %v4998
      %7756 = vmatpush2.bf16.msra.mxu0 %v4997
      %7757 = vmatprep.subr.bf16.mxu0 %v4970
      %7758 = vmatpush2.bf16.msra.mxu0 %v4969
      %7759 = vmatprep.subr.bf16.mxu0 %v4942
      %7760 = vmatpush2.bf16.msra.mxu0 %v4941
      %7761 = vmatprep.mubr.bf16.mxu0 %v1217
      %7762 = vmatmul.mubr.bf16.gmra.mxu0 %v1216
      %v7763 = vpop.f32.mrf.mxu0
      %v7764 = vadd.f32 %v7721, %v7763
      %v7765 = vpop.f32.mrf.mxu0
      %v7766 = vadd.f32 %v7723, %v7765
      %v7767 = vpop.f32.mrf.mxu0
      %v7768 = vadd.f32 %v7725, %v7767
      %v7769 = vpop.f32.mrf.mxu0
      %v7770 = vadd.f32 %v7727, %v7769
      %7771 = vdwg.mxu0
      %7772 = vmatprep.subr.bf16.mxu0 0
      %7773 = vmatpush1.bf16.msra.mxu0 0
      %7774 = vmatprep.subr.bf16.mxu0 0
      %7775 = vmatpush1.bf16.msra.mxu0 0
      %7776 = vmatprep.subr.bf16.mxu0 0
      %7777 = vmatpush1.bf16.msra.mxu0 0
      %7778 = vmatprep.subr.bf16.mxu0 0
      %7779 = vmatpush1.bf16.msra.mxu0 0
      %7780 = vmatprep.subr.bf16.mxu0 %v5250
      %7781 = vmatpush1.bf16.msra.mxu0 %v5249
      %7782 = vmatprep.subr.bf16.mxu0 %v5222
      %7783 = vmatpush1.bf16.msra.mxu0 %v5221
      %7784 = vmatprep.subr.bf16.mxu0 %v5194
      %7785 = vmatpush1.bf16.msra.mxu0 %v5193
      %7786 = vmatprep.subr.bf16.mxu0 %v5166
      %7787 = vmatpush1.bf16.msra.mxu0 %v5165
      %7788 = vmatprep.subr.bf16.mxu0 0
      %7789 = vmatpush2.bf16.msra.mxu0 0
      %7790 = vmatprep.subr.bf16.mxu0 0
      %7791 = vmatpush2.bf16.msra.mxu0 0
      %7792 = vmatprep.subr.bf16.mxu0 0
      %7793 = vmatpush2.bf16.msra.mxu0 0
      %7794 = vmatprep.subr.bf16.mxu0 0
      %7795 = vmatpush2.bf16.msra.mxu0 0
      %7796 = vmatprep.subr.bf16.mxu0 0
      %7797 = vmatpush2.bf16.msra.mxu0 0
      %7798 = vmatprep.subr.bf16.mxu0 0
      %7799 = vmatpush2.bf16.msra.mxu0 0
      %7800 = vmatprep.subr.bf16.mxu0 0
      %7801 = vmatpush2.bf16.msra.mxu0 0
      %7802 = vmatprep.subr.bf16.mxu0 0
      %7803 = vmatpush2.bf16.msra.mxu0 0
      %7804 = vmatprep.mubr.bf16.mxu0 0
      %7805 = vmatmul.mubr.bf16.gmra.mxu0 %v6265
      %v7806 = vpop.f32.mrf.mxu0
      %v7807 = vadd.f32 %v7764, %v7806
      %v7808 = vpop.f32.mrf.mxu0
      %v7809 = vadd.f32 %v7766, %v7808
      %v7810 = vpop.f32.mrf.mxu0
      %v7811 = vadd.f32 %v7768, %v7810
      %v7812 = vpop.f32.mrf.mxu0
      %v7813 = vadd.f32 %v7770, %v7812
      %7814 = vdwg.mxu0
      %7815 = vmatprep.subr.bf16.mxu0 %v4468
      %7816 = vmatpush1.bf16.msra.mxu0 %v4467
      %7817 = vmatprep.subr.bf16.mxu0 %v4440
      %7818 = vmatpush1.bf16.msra.mxu0 %v4439
      %7819 = vmatprep.subr.bf16.mxu0 %v4412
      %7820 = vmatpush1.bf16.msra.mxu0 %v4411
      %7821 = vmatprep.subr.bf16.mxu0 %v4384
      %7822 = vmatpush1.bf16.msra.mxu0 %v4383
      %7823 = vmatprep.subr.bf16.mxu0 %v4356
      %7824 = vmatpush1.bf16.msra.mxu0 %v4355
      %7825 = vmatprep.subr.bf16.mxu0 %v4328
      %7826 = vmatpush1.bf16.msra.mxu0 %v4327
      %7827 = vmatprep.subr.bf16.mxu0 %v4300
      %7828 = vmatpush1.bf16.msra.mxu0 %v4299
      %7829 = vmatprep.subr.bf16.mxu0 %v4272
      %7830 = vmatpush1.bf16.msra.mxu0 %v4271
      %7831 = vmatprep.subr.bf16.mxu0 %v4692
      %7832 = vmatpush2.bf16.msra.mxu0 %v4691
      %7833 = vmatprep.subr.bf16.mxu0 %v4664
      %7834 = vmatpush2.bf16.msra.mxu0 %v4663
      %7835 = vmatprep.subr.bf16.mxu0 %v4636
      %7836 = vmatpush2.bf16.msra.mxu0 %v4635
      %7837 = vmatprep.subr.bf16.mxu0 %v4608
      %7838 = vmatpush2.bf16.msra.mxu0 %v4607
      %7839 = vmatprep.subr.bf16.mxu0 %v4580
      %7840 = vmatpush2.bf16.msra.mxu0 %v4579
      %7841 = vmatprep.subr.bf16.mxu0 %v4552
      %7842 = vmatpush2.bf16.msra.mxu0 %v4551
      %7843 = vmatprep.subr.bf16.mxu0 %v4524
      %7844 = vmatpush2.bf16.msra.mxu0 %v4523
      %7845 = vmatprep.subr.bf16.mxu0 %v4496
      %7846 = vmatpush2.bf16.msra.mxu0 %v4495
      %7847 = vmatprep.mubr.bf16.mxu0 %v1215
      %7848 = vmatmul.mubr.bf16.gmra.mxu0 %v1214
      %v7849 = vpop.f32.mrf.mxu0
      %v7850 = vadd.f32 %v1191, %v7849
      %v7851 = vpop.f32.mrf.mxu0
      %v7852 = vadd.f32 %v1191, %v7851
      %v7853 = vpop.f32.mrf.mxu0
      %v7854 = vadd.f32 %v1196, %v7853
      %v7855 = vpop.f32.mrf.mxu0
      %v7856 = vadd.f32 %v1196, %v7855
      %7857 = vdwg.mxu0
      %7858 = vmatprep.subr.bf16.mxu0 %v4916
      %7859 = vmatpush1.bf16.msra.mxu0 %v4915
      %7860 = vmatprep.subr.bf16.mxu0 %v4888
      %7861 = vmatpush1.bf16.msra.mxu0 %v4887
      %7862 = vmatprep.subr.bf16.mxu0 %v4860
      %7863 = vmatpush1.bf16.msra.mxu0 %v4859
      %7864 = vmatprep.subr.bf16.mxu0 %v4832
      %7865 = vmatpush1.bf16.msra.mxu0 %v4831
      %7866 = vmatprep.subr.bf16.mxu0 %v4804
      %7867 = vmatpush1.bf16.msra.mxu0 %v4803
      %7868 = vmatprep.subr.bf16.mxu0 %v4776
      %7869 = vmatpush1.bf16.msra.mxu0 %v4775
      %7870 = vmatprep.subr.bf16.mxu0 %v4748
      %7871 = vmatpush1.bf16.msra.mxu0 %v4747
      %7872 = vmatprep.subr.bf16.mxu0 %v4720
      %7873 = vmatpush1.bf16.msra.mxu0 %v4719
      %7874 = vmatprep.subr.bf16.mxu0 %v5140
      %7875 = vmatpush2.bf16.msra.mxu0 %v5139
      %7876 = vmatprep.subr.bf16.mxu0 %v5112
      %7877 = vmatpush2.bf16.msra.mxu0 %v5111
      %7878 = vmatprep.subr.bf16.mxu0 %v5084
      %7879 = vmatpush2.bf16.msra.mxu0 %v5083
      %7880 = vmatprep.subr.bf16.mxu0 %v5056
      %7881 = vmatpush2.bf16.msra.mxu0 %v5055
      %7882 = vmatprep.subr.bf16.mxu0 %v5028
      %7883 = vmatpush2.bf16.msra.mxu0 %v5027
      %7884 = vmatprep.subr.bf16.mxu0 %v5000
      %7885 = vmatpush2.bf16.msra.mxu0 %v4999
      %7886 = vmatprep.subr.bf16.mxu0 %v4972
      %7887 = vmatpush2.bf16.msra.mxu0 %v4971
      %7888 = vmatprep.subr.bf16.mxu0 %v4944
      %7889 = vmatpush2.bf16.msra.mxu0 %v4943
      %7890 = vmatprep.mubr.bf16.mxu0 %v1217
      %7891 = vmatmul.mubr.bf16.gmra.mxu0 %v1216
      %v7892 = vpop.f32.mrf.mxu0
      %v7893 = vadd.f32 %v7850, %v7892
      %v7894 = vpop.f32.mrf.mxu0
      %v7895 = vadd.f32 %v7852, %v7894
      %v7896 = vpop.f32.mrf.mxu0
      %v7897 = vadd.f32 %v7854, %v7896
      %v7898 = vpop.f32.mrf.mxu0
      %v7899 = vadd.f32 %v7856, %v7898
      %7900 = vdwg.mxu0
      %7901 = vmatprep.subr.bf16.mxu0 0
      %7902 = vmatpush1.bf16.msra.mxu0 0
      %7903 = vmatprep.subr.bf16.mxu0 0
      %7904 = vmatpush1.bf16.msra.mxu0 0
      %7905 = vmatprep.subr.bf16.mxu0 0
      %7906 = vmatpush1.bf16.msra.mxu0 0
      %7907 = vmatprep.subr.bf16.mxu0 0
      %7908 = vmatpush1.bf16.msra.mxu0 0
      %7909 = vmatprep.subr.bf16.mxu0 %v5252
      %7910 = vmatpush1.bf16.msra.mxu0 %v5251
      %7911 = vmatprep.subr.bf16.mxu0 %v5224
      %7912 = vmatpush1.bf16.msra.mxu0 %v5223
      %7913 = vmatprep.subr.bf16.mxu0 %v5196
      %7914 = vmatpush1.bf16.msra.mxu0 %v5195
      %7915 = vmatprep.subr.bf16.mxu0 %v5168
      %7916 = vmatpush1.bf16.msra.mxu0 %v5167
      %7917 = vmatprep.subr.bf16.mxu0 0
      %7918 = vmatpush2.bf16.msra.mxu0 0
      %7919 = vmatprep.subr.bf16.mxu0 0
      %7920 = vmatpush2.bf16.msra.mxu0 0
      %7921 = vmatprep.subr.bf16.mxu0 0
      %7922 = vmatpush2.bf16.msra.mxu0 0
      %7923 = vmatprep.subr.bf16.mxu0 0
      %7924 = vmatpush2.bf16.msra.mxu0 0
      %7925 = vmatprep.subr.bf16.mxu0 0
      %7926 = vmatpush2.bf16.msra.mxu0 0
      %7927 = vmatprep.subr.bf16.mxu0 0
      %7928 = vmatpush2.bf16.msra.mxu0 0
      %7929 = vmatprep.subr.bf16.mxu0 0
      %7930 = vmatpush2.bf16.msra.mxu0 0
      %7931 = vmatprep.subr.bf16.mxu0 0
      %7932 = vmatpush2.bf16.msra.mxu0 0
      %7933 = vmatprep.mubr.bf16.mxu0 0
      %7934 = vmatmul.mubr.bf16.gmra.mxu0 %v6265
      %v7935 = vpop.f32.mrf.mxu0
      %v7936 = vadd.f32 %v7893, %v7935
      %v7937 = vpop.f32.mrf.mxu0
      %v7938 = vadd.f32 %v7895, %v7937
      %v7939 = vpop.f32.mrf.mxu0
      %v7940 = vadd.f32 %v7897, %v7939
      %v7941 = vpop.f32.mrf.mxu0
      %v7942 = vadd.f32 %v7899, %v7941
      %7943 = vdwg.mxu0
      %7944 = vmatprep.subr.bf16.mxu0 %v4470
      %7945 = vmatpush1.bf16.msra.mxu0 %v4469
      %7946 = vmatprep.subr.bf16.mxu0 %v4442
      %7947 = vmatpush1.bf16.msra.mxu0 %v4441
      %7948 = vmatprep.subr.bf16.mxu0 %v4414
      %7949 = vmatpush1.bf16.msra.mxu0 %v4413
      %7950 = vmatprep.subr.bf16.mxu0 %v4386
      %7951 = vmatpush1.bf16.msra.mxu0 %v4385
      %7952 = vmatprep.subr.bf16.mxu0 %v4358
      %7953 = vmatpush1.bf16.msra.mxu0 %v4357
      %7954 = vmatprep.subr.bf16.mxu0 %v4330
      %7955 = vmatpush1.bf16.msra.mxu0 %v4329
      %7956 = vmatprep.subr.bf16.mxu0 %v4302
      %7957 = vmatpush1.bf16.msra.mxu0 %v4301
      %7958 = vmatprep.subr.bf16.mxu0 %v4274
      %7959 = vmatpush1.bf16.msra.mxu0 %v4273
      %7960 = vmatprep.subr.bf16.mxu0 %v4694
      %7961 = vmatpush2.bf16.msra.mxu0 %v4693
      %7962 = vmatprep.subr.bf16.mxu0 %v4666
      %7963 = vmatpush2.bf16.msra.mxu0 %v4665
      %7964 = vmatprep.subr.bf16.mxu0 %v4638
      %7965 = vmatpush2.bf16.msra.mxu0 %v4637
      %7966 = vmatprep.subr.bf16.mxu0 %v4610
      %7967 = vmatpush2.bf16.msra.mxu0 %v4609
      %7968 = vmatprep.subr.bf16.mxu0 %v4582
      %7969 = vmatpush2.bf16.msra.mxu0 %v4581
      %7970 = vmatprep.subr.bf16.mxu0 %v4554
      %7971 = vmatpush2.bf16.msra.mxu0 %v4553
      %7972 = vmatprep.subr.bf16.mxu0 %v4526
      %7973 = vmatpush2.bf16.msra.mxu0 %v4525
      %7974 = vmatprep.subr.bf16.mxu0 %v4498
      %7975 = vmatpush2.bf16.msra.mxu0 %v4497
      %7976 = vmatprep.mubr.bf16.mxu0 %v1215
      %7977 = vmatmul.mubr.bf16.gmra.mxu0 %v1214
      %v7978 = vpop.f32.mrf.mxu0
      %v7979 = vadd.f32 %v1191, %v7978
      %v7980 = vpop.f32.mrf.mxu0
      %v7981 = vadd.f32 %v1191, %v7980
      %v7982 = vpop.f32.mrf.mxu0
      %v7983 = vadd.f32 %v1196, %v7982
      %v7984 = vpop.f32.mrf.mxu0
      %v7985 = vadd.f32 %v1196, %v7984
      %7986 = vdwg.mxu0
      %7987 = vmatprep.subr.bf16.mxu0 %v4918
      %7988 = vmatpush1.bf16.msra.mxu0 %v4917
      %7989 = vmatprep.subr.bf16.mxu0 %v4890
      %7990 = vmatpush1.bf16.msra.mxu0 %v4889
      %7991 = vmatprep.subr.bf16.mxu0 %v4862
      %7992 = vmatpush1.bf16.msra.mxu0 %v4861
      %7993 = vmatprep.subr.bf16.mxu0 %v4834
      %7994 = vmatpush1.bf16.msra.mxu0 %v4833
      %7995 = vmatprep.subr.bf16.mxu0 %v4806
      %7996 = vmatpush1.bf16.msra.mxu0 %v4805
      %7997 = vmatprep.subr.bf16.mxu0 %v4778
      %7998 = vmatpush1.bf16.msra.mxu0 %v4777
      %7999 = vmatprep.subr.bf16.mxu0 %v4750
      %8000 = vmatpush1.bf16.msra.mxu0 %v4749
      %8001 = vmatprep.subr.bf16.mxu0 %v4722
      %8002 = vmatpush1.bf16.msra.mxu0 %v4721
      %8003 = vmatprep.subr.bf16.mxu0 %v5142
      %8004 = vmatpush2.bf16.msra.mxu0 %v5141
      %8005 = vmatprep.subr.bf16.mxu0 %v5114
      %8006 = vmatpush2.bf16.msra.mxu0 %v5113
      %8007 = vmatprep.subr.bf16.mxu0 %v5086
      %8008 = vmatpush2.bf16.msra.mxu0 %v5085
      %8009 = vmatprep.subr.bf16.mxu0 %v5058
      %8010 = vmatpush2.bf16.msra.mxu0 %v5057
      %8011 = vmatprep.subr.bf16.mxu0 %v5030
      %8012 = vmatpush2.bf16.msra.mxu0 %v5029
      %8013 = vmatprep.subr.bf16.mxu0 %v5002
      %8014 = vmatpush2.bf16.msra.mxu0 %v5001
      %8015 = vmatprep.subr.bf16.mxu0 %v4974
      %8016 = vmatpush2.bf16.msra.mxu0 %v4973
      %8017 = vmatprep.subr.bf16.mxu0 %v4946
      %8018 = vmatpush2.bf16.msra.mxu0 %v4945
      %8019 = vmatprep.mubr.bf16.mxu0 %v1217
      %8020 = vmatmul.mubr.bf16.gmra.mxu0 %v1216
      %v8021 = vpop.f32.mrf.mxu0
      %v8022 = vadd.f32 %v7979, %v8021
      %v8023 = vpop.f32.mrf.mxu0
      %v8024 = vadd.f32 %v7981, %v8023
      %v8025 = vpop.f32.mrf.mxu0
      %v8026 = vadd.f32 %v7983, %v8025
      %v8027 = vpop.f32.mrf.mxu0
      %v8028 = vadd.f32 %v7985, %v8027
      %8029 = vdwg.mxu0
      %8030 = vmatprep.subr.bf16.mxu0 0
      %8031 = vmatpush1.bf16.msra.mxu0 0
      %8032 = vmatprep.subr.bf16.mxu0 0
      %8033 = vmatpush1.bf16.msra.mxu0 0
      %8034 = vmatprep.subr.bf16.mxu0 0
      %8035 = vmatpush1.bf16.msra.mxu0 0
      %8036 = vmatprep.subr.bf16.mxu0 0
      %8037 = vmatpush1.bf16.msra.mxu0 0
      %8038 = vmatprep.subr.bf16.mxu0 %v5254
      %8039 = vmatpush1.bf16.msra.mxu0 %v5253
      %8040 = vmatprep.subr.bf16.mxu0 %v5226
      %8041 = vmatpush1.bf16.msra.mxu0 %v5225
      %8042 = vmatprep.subr.bf16.mxu0 %v5198
      %8043 = vmatpush1.bf16.msra.mxu0 %v5197
      %8044 = vmatprep.subr.bf16.mxu0 %v5170
      %8045 = vmatpush1.bf16.msra.mxu0 %v5169
      %8046 = vmatprep.subr.bf16.mxu0 0
      %8047 = vmatpush2.bf16.msra.mxu0 0
      %8048 = vmatprep.subr.bf16.mxu0 0
      %8049 = vmatpush2.bf16.msra.mxu0 0
      %8050 = vmatprep.subr.bf16.mxu0 0
      %8051 = vmatpush2.bf16.msra.mxu0 0
      %8052 = vmatprep.subr.bf16.mxu0 0
      %8053 = vmatpush2.bf16.msra.mxu0 0
      %8054 = vmatprep.subr.bf16.mxu0 0
      %8055 = vmatpush2.bf16.msra.mxu0 0
      %8056 = vmatprep.subr.bf16.mxu0 0
      %8057 = vmatpush2.bf16.msra.mxu0 0
      %8058 = vmatprep.subr.bf16.mxu0 0
      %8059 = vmatpush2.bf16.msra.mxu0 0
      %8060 = vmatprep.subr.bf16.mxu0 0
      %8061 = vmatpush2.bf16.msra.mxu0 0
      %8062 = vmatprep.mubr.bf16.mxu0 0
      %8063 = vmatmul.mubr.bf16.gmra.mxu0 %v6265
      %v8064 = vpop.f32.mrf.mxu0
      %v8065 = vadd.f32 %v8022, %v8064
      %v8066 = vpop.f32.mrf.mxu0
      %v8067 = vadd.f32 %v8024, %v8066
      %v8068 = vpop.f32.mrf.mxu0
      %v8069 = vadd.f32 %v8026, %v8068
      %v8070 = vpop.f32.mrf.mxu0
      %v8071 = vadd.f32 %v8028, %v8070
      %8072 = vdwg.mxu0
      %8081 = vrot.lane.b32.xlu0 %v6519, 122
      %v8082 = vpop.permute.xlu0 %8081
      %8083 = vrot.lane.b32.xlu0 %v6646, 122
      %v8084 = vpop.permute.xlu0 %8083
      %8085 = vrot.lane.b32.xlu0 %v6648, 122
      %v8086 = vpop.permute.xlu0 %8085
      %8087 = vrot.lane.b32.xlu0 %v6775, 122
      %v8088 = vpop.permute.xlu0 %8087
      %8089 = vrot.lane.b32.xlu0 %v6523, 122
      %v8090 = vpop.permute.xlu0 %8089
      %8091 = vrot.lane.b32.xlu0 %v6650, 122
      %v8092 = vpop.permute.xlu0 %8091
      %8093 = vrot.lane.b32.xlu0 %v6652, 122
      %v8094 = vpop.permute.xlu0 %8093
      %8095 = vrot.lane.b32.xlu0 %v6779, 122
      %v8096 = vpop.permute.xlu0 %8095
      %vm8097 = vcmask 998400
      %v8098 = vsel %vm8097, %v8082, %v8084
      %v8099 = vsel %vm8097, %v8084, %v8086
      %v8100 = vsel %vm8097, %v8086, %v8088
      %v8101 = vsel %vm8097, %v8090, %v8092
      %v8102 = vsel %vm8097, %v8092, %v8094
      %v8103 = vsel %vm8097, %v8094, %v8096
      %v8112 = vmax.f32 %v6388, %v8098
      %v8113 = vmax.f32 %v6390, %v8099
      %v8114 = vmax.f32 %v6517, %v8100
      %v8115 = vmax.f32 %v6519, %v8088
      %v8116 = vmax.f32 %v6392, %v8101
      %v8117 = vmax.f32 %v6394, %v8102
      %v8118 = vmax.f32 %v6521, %v8103
      %v8119 = vmax.f32 %v6523, %v8096
      %8126 = vrot.lane.b32.xlu0 %v6775, 116
      %v8127 = vpop.permute.xlu0 %8126
      %8128 = vrot.lane.b32.xlu0 %v6777, 116
      %v8129 = vpop.permute.xlu0 %8128
      %8130 = vrot.lane.b32.xlu0 %v6904, 116
      %v8131 = vpop.permute.xlu0 %8130
      %8132 = vrot.lane.b32.xlu0 %v6906, 116
      %v8133 = vpop.permute.xlu0 %8132
      %8134 = vrot.lane.b32.xlu0 %v6779, 116
      %v8135 = vpop.permute.xlu0 %8134
      %8136 = vrot.lane.b32.xlu0 %v6781, 116
      %v8137 = vpop.permute.xlu0 %8136
      %8138 = vrot.lane.b32.xlu0 %v6908, 116
      %v8139 = vpop.permute.xlu0 %8138
      %8140 = vrot.lane.b32.xlu0 %v6910, 116
      %v8141 = vpop.permute.xlu0 %8140
      %vm8142 = vcmask 949248
      %v8143 = vsel %vm8142, %v8127, %v8129
      %v8144 = vsel %vm8142, %v8129, %v8131
      %v8145 = vsel %vm8142, %v8131, %v8133
      %v8146 = vsel %vm8142, %v8135, %v8137
      %v8147 = vsel %vm8142, %v8137, %v8139
      %v8148 = vsel %vm8142, %v8139, %v8141
      %v8157 = vmax.f32 %v8112, %v8143
      %v8158 = vmax.f32 %v8113, %v8144
      %v8159 = vmax.f32 %v8114, %v8145
      %v8160 = vmax.f32 %v8115, %v8133
      %v8161 = vmax.f32 %v8116, %v8146
      %v8162 = vmax.f32 %v8117, %v8147
      %v8163 = vmax.f32 %v8118, %v8148
      %v8164 = vmax.f32 %v8119, %v8141
      %8171 = vrot.lane.b32.xlu0 %v6906, 110
      %v8172 = vpop.permute.xlu0 %8171
      %8173 = vrot.lane.b32.xlu0 %v7033, 110
      %v8174 = vpop.permute.xlu0 %8173
      %8175 = vrot.lane.b32.xlu0 %v7035, 110
      %v8176 = vpop.permute.xlu0 %8175
      %8177 = vrot.lane.b32.xlu0 %v7162, 110
      %v8178 = vpop.permute.xlu0 %8177
      %8179 = vrot.lane.b32.xlu0 %v6910, 110
      %v8180 = vpop.permute.xlu0 %8179
      %8181 = vrot.lane.b32.xlu0 %v7037, 110
      %v8182 = vpop.permute.xlu0 %8181
      %8183 = vrot.lane.b32.xlu0 %v7039, 110
      %v8184 = vpop.permute.xlu0 %8183
      %8185 = vrot.lane.b32.xlu0 %v7166, 110
      %v8186 = vpop.permute.xlu0 %8185
      %vm8187 = vcmask 900096
      %v8188 = vsel %vm8187, %v8172, %v8174
      %v8189 = vsel %vm8187, %v8174, %v8176
      %v8190 = vsel %vm8187, %v8176, %v8178
      %v8191 = vsel %vm8187, %v8180, %v8182
      %v8192 = vsel %vm8187, %v8182, %v8184
      %v8193 = vsel %vm8187, %v8184, %v8186
      %v8202 = vmax.f32 %v8157, %v8188
      %v8203 = vmax.f32 %v8158, %v8189
      %v8204 = vmax.f32 %v8159, %v8190
      %v8205 = vmax.f32 %v8160, %v8178
      %v8206 = vmax.f32 %v8161, %v8191
      %v8207 = vmax.f32 %v8162, %v8192
      %v8208 = vmax.f32 %v8163, %v8193
      %v8209 = vmax.f32 %v8164, %v8186
      %8216 = vrot.lane.b32.xlu0 %v7162, 104
      %v8217 = vpop.permute.xlu0 %8216
      %8218 = vrot.lane.b32.xlu0 %v7164, 104
      %v8219 = vpop.permute.xlu0 %8218
      %8220 = vrot.lane.b32.xlu0 %v7291, 104
      %v8221 = vpop.permute.xlu0 %8220
      %8222 = vrot.lane.b32.xlu0 %v7293, 104
      %v8223 = vpop.permute.xlu0 %8222
      %8224 = vrot.lane.b32.xlu0 %v7166, 104
      %v8225 = vpop.permute.xlu0 %8224
      %8226 = vrot.lane.b32.xlu0 %v7168, 104
      %v8227 = vpop.permute.xlu0 %8226
      %8228 = vrot.lane.b32.xlu0 %v7295, 104
      %v8229 = vpop.permute.xlu0 %8228
      %8230 = vrot.lane.b32.xlu0 %v7297, 104
      %v8231 = vpop.permute.xlu0 %8230
      %vm8232 = vcmask 850944
      %v8233 = vsel %vm8232, %v8217, %v8219
      %v8234 = vsel %vm8232, %v8219, %v8221
      %v8235 = vsel %vm8232, %v8221, %v8223
      %v8236 = vsel %vm8232, %v8225, %v8227
      %v8237 = vsel %vm8232, %v8227, %v8229
      %v8238 = vsel %vm8232, %v8229, %v8231
      %v8247 = vmax.f32 %v8202, %v8233
      %v8248 = vmax.f32 %v8203, %v8234
      %v8249 = vmax.f32 %v8204, %v8235
      %v8250 = vmax.f32 %v8205, %v8223
      %v8251 = vmax.f32 %v8206, %v8236
      %v8252 = vmax.f32 %v8207, %v8237
      %v8253 = vmax.f32 %v8208, %v8238
      %v8254 = vmax.f32 %v8209, %v8231
      %8261 = vrot.lane.b32.xlu0 %v7293, 98
      %v8262 = vpop.permute.xlu0 %8261
      %8263 = vrot.lane.b32.xlu0 %v7420, 98
      %v8264 = vpop.permute.xlu0 %8263
      %8265 = vrot.lane.b32.xlu0 %v7422, 98
      %v8266 = vpop.permute.xlu0 %8265
      %8267 = vrot.lane.b32.xlu0 %v7549, 98
      %v8268 = vpop.permute.xlu0 %8267
      %8269 = vrot.lane.b32.xlu0 %v7297, 98
      %v8270 = vpop.permute.xlu0 %8269
      %8271 = vrot.lane.b32.xlu0 %v7424, 98
      %v8272 = vpop.permute.xlu0 %8271
      %8273 = vrot.lane.b32.xlu0 %v7426, 98
      %v8274 = vpop.permute.xlu0 %8273
      %8275 = vrot.lane.b32.xlu0 %v7553, 98
      %v8276 = vpop.permute.xlu0 %8275
      %vm8277 = vcmask 801792
      %v8278 = vsel %vm8277, %v8262, %v8264
      %v8279 = vsel %vm8277, %v8264, %v8266
      %v8280 = vsel %vm8277, %v8266, %v8268
      %v8281 = vsel %vm8277, %v8270, %v8272
      %v8282 = vsel %vm8277, %v8272, %v8274
      %v8283 = vsel %vm8277, %v8274, %v8276
      %v8292 = vmax.f32 %v8247, %v8278
      %v8293 = vmax.f32 %v8248, %v8279
      %v8294 = vmax.f32 %v8249, %v8280
      %v8295 = vmax.f32 %v8250, %v8268
      %v8296 = vmax.f32 %v8251, %v8281
      %v8297 = vmax.f32 %v8252, %v8282
      %v8298 = vmax.f32 %v8253, %v8283
      %v8299 = vmax.f32 %v8254, %v8276
      %8306 = vrot.lane.b32.xlu0 %v7549, 92
      %v8307 = vpop.permute.xlu0 %8306
      %8308 = vrot.lane.b32.xlu0 %v7551, 92
      %v8309 = vpop.permute.xlu0 %8308
      %8310 = vrot.lane.b32.xlu0 %v7678, 92
      %v8311 = vpop.permute.xlu0 %8310
      %8312 = vrot.lane.b32.xlu0 %v7680, 92
      %v8313 = vpop.permute.xlu0 %8312
      %8314 = vrot.lane.b32.xlu0 %v7553, 92
      %v8315 = vpop.permute.xlu0 %8314
      %8316 = vrot.lane.b32.xlu0 %v7555, 92
      %v8317 = vpop.permute.xlu0 %8316
      %8318 = vrot.lane.b32.xlu0 %v7682, 92
      %v8319 = vpop.permute.xlu0 %8318
      %8320 = vrot.lane.b32.xlu0 %v7684, 92
      %v8321 = vpop.permute.xlu0 %8320
      %vm8322 = vcmask 752640
      %v8323 = vsel %vm8322, %v8307, %v8309
      %v8324 = vsel %vm8322, %v8309, %v8311
      %v8325 = vsel %vm8322, %v8311, %v8313
      %v8326 = vsel %vm8322, %v8315, %v8317
      %v8327 = vsel %vm8322, %v8317, %v8319
      %v8328 = vsel %vm8322, %v8319, %v8321
      %v8337 = vmax.f32 %v8292, %v8323
      %v8338 = vmax.f32 %v8293, %v8324
      %v8339 = vmax.f32 %v8294, %v8325
      %v8340 = vmax.f32 %v8295, %v8313
      %v8341 = vmax.f32 %v8296, %v8326
      %v8342 = vmax.f32 %v8297, %v8327
      %v8343 = vmax.f32 %v8298, %v8328
      %v8344 = vmax.f32 %v8299, %v8321
      %8351 = vrot.lane.b32.xlu0 %v7680, 86
      %v8352 = vpop.permute.xlu0 %8351
      %8353 = vrot.lane.b32.xlu0 %v7807, 86
      %v8354 = vpop.permute.xlu0 %8353
      %8355 = vrot.lane.b32.xlu0 %v7809, 86
      %v8356 = vpop.permute.xlu0 %8355
      %8357 = vrot.lane.b32.xlu0 %v7936, 86
      %v8358 = vpop.permute.xlu0 %8357
      %8359 = vrot.lane.b32.xlu0 %v7684, 86
      %v8360 = vpop.permute.xlu0 %8359
      %8361 = vrot.lane.b32.xlu0 %v7811, 86
      %v8362 = vpop.permute.xlu0 %8361
      %8363 = vrot.lane.b32.xlu0 %v7813, 86
      %v8364 = vpop.permute.xlu0 %8363
      %8365 = vrot.lane.b32.xlu0 %v7940, 86
      %v8366 = vpop.permute.xlu0 %8365
      %vm8367 = vcmask 703488
      %v8368 = vsel %vm8367, %v8352, %v8354
      %v8369 = vsel %vm8367, %v8354, %v8356
      %v8370 = vsel %vm8367, %v8356, %v8358
      %v8371 = vsel %vm8367, %v8360, %v8362
      %v8372 = vsel %vm8367, %v8362, %v8364
      %v8373 = vsel %vm8367, %v8364, %v8366
      %v8382 = vmax.f32 %v8337, %v8368
      %v8383 = vmax.f32 %v8338, %v8369
      %v8384 = vmax.f32 %v8339, %v8370
      %v8385 = vmax.f32 %v8340, %v8358
      %v8386 = vmax.f32 %v8341, %v8371
      %v8387 = vmax.f32 %v8342, %v8372
      %v8388 = vmax.f32 %v8343, %v8373
      %v8389 = vmax.f32 %v8344, %v8366
      %8396 = vrot.lane.b32.xlu0 %v7936, 80
      %v8397 = vpop.permute.xlu0 %8396
      %8398 = vrot.lane.b32.xlu0 %v7938, 80
      %v8399 = vpop.permute.xlu0 %8398
      %8400 = vrot.lane.b32.xlu0 %v8065, 80
      %v8401 = vpop.permute.xlu0 %8400
      %8402 = vrot.lane.b32.xlu0 %v8067, 80
      %v8403 = vpop.permute.xlu0 %8402
      %8404 = vrot.lane.b32.xlu0 %v7940, 80
      %v8405 = vpop.permute.xlu0 %8404
      %8406 = vrot.lane.b32.xlu0 %v7942, 80
      %v8407 = vpop.permute.xlu0 %8406
      %8408 = vrot.lane.b32.xlu0 %v8069, 80
      %v8409 = vpop.permute.xlu0 %8408
      %8410 = vrot.lane.b32.xlu0 %v8071, 80
      %v8411 = vpop.permute.xlu0 %8410
      %vm8412 = vcmask 654336
      %v8413 = vsel %vm8412, %v8397, %v8399
      %v8414 = vsel %vm8412, %v8399, %v8401
      %v8415 = vsel %vm8412, %v8401, %v8403
      %v8416 = vsel %vm8412, %v8405, %v8407
      %v8417 = vsel %vm8412, %v8407, %v8409
      %v8418 = vsel %vm8412, %v8409, %v8411
      %v8427 = vmax.f32 %v8382, %v8413
      %v8428 = vmax.f32 %v8383, %v8414
      %v8429 = vmax.f32 %v8384, %v8415
      %v8430 = vmax.f32 %v8385, %v8403
      %v8431 = vmax.f32 %v8386, %v8416
      %v8432 = vmax.f32 %v8387, %v8417
      %v8433 = vmax.f32 %v8388, %v8418
      %v8434 = vmax.f32 %v8389, %v8411
      %v8435 = vmul.f32 %v8427, 0.5
      %v8436 = vmul.f32 %v8428, 0.5
      %v8437 = vmul.f32 %v8429, 0.5
      %v8438 = vmul.f32 %v8430, 0.5
      %v8439 = vmul.f32 %v8431, 0.5
      %v8440 = vmul.f32 %v8432, 0.5
      %v8441 = vmul.f32 %v8433, 0.5
      %v8442 = vmul.f32 %v8434, 0.5
      %v8443 = vmul.f32 %v8427, 0.70710677
      %v8444 = vmul.f32 %v8428, 0.70710677
      %v8445 = vmul.f32 %v8429, 0.70710677
      %v8446 = vmul.f32 %v8430, 0.70710677
      %v8447 = vmul.f32 %v8431, 0.70710677
      %v8448 = vmul.f32 %v8432, 0.70710677
      %v8449 = vmul.f32 %v8433, 0.70710677
      %v8450 = vmul.f32 %v8434, 0.70710677
      %vm8451 = vcmp.lt.f32.partialorder %v8443, 0.0
      %vm8452 = vcmp.lt.f32.partialorder %v8444, 0.0
      %vm8453 = vcmp.lt.f32.partialorder %v8445, 0.0
      %vm8454 = vcmp.lt.f32.partialorder %v8446, 0.0
      %vm8455 = vcmp.lt.f32.partialorder %v8447, 0.0
      %vm8456 = vcmp.lt.f32.partialorder %v8448, 0.0
      %vm8457 = vcmp.lt.f32.partialorder %v8449, 0.0
      %vm8458 = vcmp.lt.f32.partialorder %v8450, 0.0
      %v8459 = vsel %vm8451, -1.0, 1.0
      %v8460 = vsel %vm8452, -1.0, 1.0
      %v8461 = vsel %vm8453, -1.0, 1.0
      %v8462 = vsel %vm8454, -1.0, 1.0
      %v8463 = vsel %vm8455, -1.0, 1.0
      %v8464 = vsel %vm8456, -1.0, 1.0
      %v8465 = vsel %vm8457, -1.0, 1.0
      %v8466 = vsel %vm8458, -1.0, 1.0
      %v8467 = vand.u32 2147483647, %v8443
      %v8468 = vand.u32 2147483647, %v8444
      %v8469 = vand.u32 2147483647, %v8445
      %v8470 = vand.u32 2147483647, %v8446
      %v8471 = vand.u32 2147483647, %v8447
      %v8472 = vand.u32 2147483647, %v8448
      %v8473 = vand.u32 2147483647, %v8449
      %v8474 = vand.u32 2147483647, %v8450
      %v8475 = vmul.f32 %v8467, 0.3275911
      %v8476 = vmul.f32 %v8468, 0.3275911
      %v8477 = vmul.f32 %v8469, 0.3275911
      %v8478 = vmul.f32 %v8470, 0.3275911
      %v8479 = vmul.f32 %v8471, 0.3275911
      %v8480 = vmul.f32 %v8472, 0.3275911
      %v8481 = vmul.f32 %v8473, 0.3275911
      %v8482 = vmul.f32 %v8474, 0.3275911
      %v8483 = vadd.f32 %v8475, 1.0
      %v8484 = vadd.f32 %v8476, 1.0
      %v8485 = vadd.f32 %v8477, 1.0
      %v8486 = vadd.f32 %v8478, 1.0
      %v8487 = vadd.f32 %v8479, 1.0
      %v8488 = vadd.f32 %v8480, 1.0
      %v8489 = vadd.f32 %v8481, 1.0
      %v8490 = vadd.f32 %v8482, 1.0
      %v8491 = vrcp.pop %v8483
      %v8492 = vmul.f32 1.0, %v8491
      %v8493 = vrcp.pop %v8484
      %v8494 = vmul.f32 1.0, %v8493
      %v8495 = vrcp.pop %v8485
      %v8496 = vmul.f32 1.0, %v8495
      %v8497 = vrcp.pop %v8486
      %v8498 = vmul.f32 1.0, %v8497
      %v8499 = vrcp.pop %v8487
      %v8500 = vmul.f32 1.0, %v8499
      %v8501 = vrcp.pop %v8488
      %v8502 = vmul.f32 1.0, %v8501
      %v8503 = vrcp.pop %v8489
      %v8504 = vmul.f32 1.0, %v8503
      %v8505 = vrcp.pop %v8490
      %v8506 = vmul.f32 1.0, %v8505
      %v8507 = vmul.f32 %v8492, 1.0614054
      %v8508 = vmul.f32 %v8494, 1.0614054
      %v8509 = vmul.f32 %v8496, 1.0614054
      %v8510 = vmul.f32 %v8498, 1.0614054
      %v8511 = vmul.f32 %v8500, 1.0614054
      %v8512 = vmul.f32 %v8502, 1.0614054
      %v8513 = vmul.f32 %v8504, 1.0614054
      %v8514 = vmul.f32 %v8506, 1.0614054
      %v8515 = vadd.f32 %v8507, -1.4531521
      %v8516 = vadd.f32 %v8508, -1.4531521
      %v8517 = vadd.f32 %v8509, -1.4531521
      %v8518 = vadd.f32 %v8510, -1.4531521
      %v8519 = vadd.f32 %v8511, -1.4531521
      %v8520 = vadd.f32 %v8512, -1.4531521
      %v8521 = vadd.f32 %v8513, -1.4531521
      %v8522 = vadd.f32 %v8514, -1.4531521
      %v8523 = vmul.f32 %v8515, %v8492
      %v8524 = vmul.f32 %v8516, %v8494
      %v8525 = vmul.f32 %v8517, %v8496
      %v8526 = vmul.f32 %v8518, %v8498
      %v8527 = vmul.f32 %v8519, %v8500
      %v8528 = vmul.f32 %v8520, %v8502
      %v8529 = vmul.f32 %v8521, %v8504
      %v8530 = vmul.f32 %v8522, %v8506
      %v8531 = vadd.f32 %v8523, 1.4214138
      %v8532 = vadd.f32 %v8524, 1.4214138
      %v8533 = vadd.f32 %v8525, 1.4214138
      %v8534 = vadd.f32 %v8526, 1.4214138
      %v8535 = vadd.f32 %v8527, 1.4214138
      %v8536 = vadd.f32 %v8528, 1.4214138
      %v8537 = vadd.f32 %v8529, 1.4214138
      %v8538 = vadd.f32 %v8530, 1.4214138
      %v8539 = vmul.f32 %v8531, %v8492
      %v8540 = vmul.f32 %v8532, %v8494
      %v8541 = vmul.f32 %v8533, %v8496
      %v8542 = vmul.f32 %v8534, %v8498
      %v8543 = vmul.f32 %v8535, %v8500
      %v8544 = vmul.f32 %v8536, %v8502
      %v8545 = vmul.f32 %v8537, %v8504
      %v8546 = vmul.f32 %v8538, %v8506
      %v8547 = vadd.f32 %v8539, -0.28449672
      %v8548 = vadd.f32 %v8540, -0.28449672
      %v8549 = vadd.f32 %v8541, -0.28449672
      %v8550 = vadd.f32 %v8542, -0.28449672
      %v8551 = vadd.f32 %v8543, -0.28449672
      %v8552 = vadd.f32 %v8544, -0.28449672
      %v8553 = vadd.f32 %v8545, -0.28449672
      %v8554 = vadd.f32 %v8546, -0.28449672
      %v8555 = vmul.f32 %v8547, %v8492
      %v8556 = vmul.f32 %v8548, %v8494
      %v8557 = vmul.f32 %v8549, %v8496
      %v8558 = vmul.f32 %v8550, %v8498
      %v8559 = vmul.f32 %v8551, %v8500
      %v8560 = vmul.f32 %v8552, %v8502
      %v8561 = vmul.f32 %v8553, %v8504
      %v8562 = vmul.f32 %v8554, %v8506
      %v8563 = vadd.f32 %v8555, 0.2548296
      %v8564 = vadd.f32 %v8556, 0.2548296
      %v8565 = vadd.f32 %v8557, 0.2548296
      %v8566 = vadd.f32 %v8558, 0.2548296
      %v8567 = vadd.f32 %v8559, 0.2548296
      %v8568 = vadd.f32 %v8560, 0.2548296
      %v8569 = vadd.f32 %v8561, 0.2548296
      %v8570 = vadd.f32 %v8562, 0.2548296
      %v8571 = vmul.f32 %v8563, %v8492
      %v8572 = vmul.f32 %v8564, %v8494
      %v8573 = vmul.f32 %v8565, %v8496
      %v8574 = vmul.f32 %v8566, %v8498
      %v8575 = vmul.f32 %v8567, %v8500
      %v8576 = vmul.f32 %v8568, %v8502
      %v8577 = vmul.f32 %v8569, %v8504
      %v8578 = vmul.f32 %v8570, %v8506
      %v8579 = vsub.f32 0.0, %v8467
      %v8580 = vsub.f32 0.0, %v8468
      %v8581 = vsub.f32 0.0, %v8469
      %v8582 = vsub.f32 0.0, %v8470
      %v8583 = vsub.f32 0.0, %v8471
      %v8584 = vsub.f32 0.0, %v8472
      %v8585 = vsub.f32 0.0, %v8473
      %v8586 = vsub.f32 0.0, %v8474
      %v8587 = vmul.f32 %v8579, %v8467
      %v8588 = vmul.f32 %v8580, %v8468
      %v8589 = vmul.f32 %v8581, %v8469
      %v8590 = vmul.f32 %v8582, %v8470
      %v8591 = vmul.f32 %v8583, %v8471
      %v8592 = vmul.f32 %v8584, %v8472
      %v8593 = vmul.f32 %v8585, %v8473
      %v8594 = vmul.f32 %v8586, %v8474
      %v8595 = vmul.f32 %v8587, 1.442695
      %v8596 = vpow.pop %v8595
      %v8597 = vmul.f32 %v8588, 1.442695
      %v8598 = vpow.pop %v8597
      %v8599 = vmul.f32 %v8589, 1.442695
      %v8600 = vpow.pop %v8599
      %v8601 = vmul.f32 %v8590, 1.442695
      %v8602 = vpow.pop %v8601
      %v8603 = vmul.f32 %v8591, 1.442695
      %v8604 = vpow.pop %v8603
      %v8605 = vmul.f32 %v8592, 1.442695
      %v8606 = vpow.pop %v8605
      %v8607 = vmul.f32 %v8593, 1.442695
      %v8608 = vpow.pop %v8607
      %v8609 = vmul.f32 %v8594, 1.442695
      %v8610 = vpow.pop %v8609
      %v8611 = vmul.f32 %v8571, %v8596
      %v8612 = vmul.f32 %v8572, %v8598
      %v8613 = vmul.f32 %v8573, %v8600
      %v8614 = vmul.f32 %v8574, %v8602
      %v8615 = vmul.f32 %v8575, %v8604
      %v8616 = vmul.f32 %v8576, %v8606
      %v8617 = vmul.f32 %v8577, %v8608
      %v8618 = vmul.f32 %v8578, %v8610
      %v8619 = vsub.f32 1.0, %v8611
      %v8620 = vsub.f32 1.0, %v8612
      %v8621 = vsub.f32 1.0, %v8613
      %v8622 = vsub.f32 1.0, %v8614
      %v8623 = vsub.f32 1.0, %v8615
      %v8624 = vsub.f32 1.0, %v8616
      %v8625 = vsub.f32 1.0, %v8617
      %v8626 = vsub.f32 1.0, %v8618
      %v8627 = vmul.f32 %v8459, %v8619
      %v8628 = vmul.f32 %v8460, %v8620
      %v8629 = vmul.f32 %v8461, %v8621
      %v8630 = vmul.f32 %v8462, %v8622
      %v8631 = vmul.f32 %v8463, %v8623
      %v8632 = vmul.f32 %v8464, %v8624
      %v8633 = vmul.f32 %v8465, %v8625
      %v8634 = vmul.f32 %v8466, %v8626
      %v8635 = vadd.f32 %v8627, 1.0
      %v8636 = vadd.f32 %v8628, 1.0
      %v8637 = vadd.f32 %v8629, 1.0
      %v8638 = vadd.f32 %v8630, 1.0
      %v8639 = vadd.f32 %v8631, 1.0
      %v8640 = vadd.f32 %v8632, 1.0
      %v8641 = vadd.f32 %v8633, 1.0
      %v8642 = vadd.f32 %v8634, 1.0
      %v8643 = vmul.f32 %v8435, %v8635
      %v8644 = vmul.f32 %v8436, %v8636
      %v8645 = vmul.f32 %v8437, %v8637
      %v8646 = vmul.f32 %v8438, %v8638
      %v8647 = vmul.f32 %v8439, %v8639
      %v8648 = vmul.f32 %v8440, %v8640
      %v8649 = vmul.f32 %v8441, %v8641
      %v8650 = vmul.f32 %v8442, %v8642
      %8651 = vst [vmem:[%s170] sm:$0xff] %v8643
      %8652 = vst [vmem:[%s170 + $0x8] sm:$0xff] %v8644
      %8653 = vst [vmem:[%s170 + $0x10] sm:$0xff] %v8645
      %vm8654 = vcmask 48128
      %8655 = vst.msk [vmem:[%s170 + $0x18] sm:$0xff] %vm8654, %v8646
      %8656 = vst [vmem:[%s170 + $0x20] sm:$0xff] %v8647
      %8657 = vst [vmem:[%s170 + $0x28] sm:$0xff] %v8648
      %8658 = vst [vmem:[%s170 + $0x30] sm:$0xff] %v8649
      %8659 = vst.msk [vmem:[%s170 + $0x38] sm:$0xff] %vm8654, %v8650
      %p8660 = scmp.lt.s32.totalorder %s14, 1
      %s8661 = scalar_select %p8660, %s14, 1
      %s8662 = smul.addr %s8661, 8
      %s8663 = smul.addr %s8662, 8
      %s8664 = scalar_lea.vmem %s3, %s8663
      // Predicated region
      $region33: #{visual_perception_forward.9} parent=31 // pred_check
        %p8665 = pneg %p100
      $region34: #{visual_perception_forward.9} parent=31 // pred_check_branch
        %8667 = sbr.rel (%p8665) target = $region36
      $region35: #{visual_perception_forward.9} parent=31 // pred_region
        _
      $region36: #{visual_perception_forward.9} parent=31 // pred_fallthru
        _
    $region32: #{visual_perception_forward.9} parent=5 // pred_fallthru
      _
    %p8668 = scmp.le.s32.totalorder 2, %s9
    // Predicated region
    $region37: #{visual_perception_forward.9} parent=5 // pred_check
      %p8669 = pneg %p8668
    $region38: #{visual_perception_forward.9} parent=5 // pred_check_branch
      %8671 = sbr.rel (%p8669) target = $region40
    $region39: #{visual_perception_forward.9} parent=5 // pred_region
      %s8672 = ssub.s32 %s9, 2
      // Predicated region
      $region41: #{visual_perception_forward.9} parent=39 // pred_check
        %p8673 = pneg %p106
      $region42: #{visual_perception_forward.9} parent=39 // pred_check_branch
        %8675 = sbr.rel (%p8673) target = $region44
      $region43: #{visual_perception_forward.9} parent=39 // pred_region
        %p8676 = scmp.lt.s32.totalorder %s15, 1
        %s8677 = scalar_select %p8676, %s15, 1
        %s8678 = smul.addr %s8677, 8
        %s8679 = smul.addr %s8678, 8
        %s8680 = scalar_lea.vmem %s3, %s8679
      $region44: #{visual_perception_forward.9} parent=39 // pred_fallthru
        _
    $region40: #{visual_perception_forward.9} parent=5 // pred_fallthru
      _
  $region6: #{visual_perception_forward.9} parent=0 // loop_footer
    %s13 = sadd.s32 1, %s9
  $region7: #{visual_perception_forward.9} parent=0 // loop_footer_branch
    %8 = sbr.rel target = $region3
  $region8: #{visual_perception_forward.9} parent=0 // loop_exit
    _

// kernel: visual_perception_forward.10
$region0: #{visual_perception_forward.10}
  #allocation0 [shape = 'u32[]', space=smem, size = 0x4, offset = 0x4, fixed_abs, tag = 'smem constant byte address 0x4 - core index']
  #allocation1 [shape = 'u32[144,128]{1,0:T(1,128)}', space=vmem, size = 0x12000, scoped, tag = 'internal scratch']
  %s0 = inlined_call_operand.vmem [shape: f32[2,2304,16], index: 0, kind: input, shape index: {}]
  %s1 = inlined_call_operand.vmem [shape: f32[32,2304], index: 1, kind: input, shape index: {}]
  %s2 = inlined_call_operand.vmem [shape: f32[32,1], index: 2, kind: input, shape index: {}]
  %s3 = inlined_call_operand.vmem [shape: f32[2,32,1], index: 3, kind: output, shape index: {}]
  %s4 = sld [smem:[#allocation0]]
  $region45: #{visual_perception_forward.10} parent=0
    _
  %s6 = ssub.s32 1, %s4
  %s7 = scalar_select 0, %s6, %s4
  loop: start=0, step=1, limit=4
  $region2: #{visual_perception_forward.10} parent=0 // loop_pre_header
    _
  $region3: #{visual_perception_forward.10} parent=0 // loop_header
    %s9 = sphi 0, %s13
    %p10 = scmp.ge.s32.totalorder %s9, 4
    %s19 = sphi 0, %s21
    %s22 = sphi 0, %s19
    %s23 = sphi 0, %s22
    %s39 = sphi 0, %s23
    %s43 = sphi 0, %s43
    %s45 = sphi 0, %s43
    %s46 = sphi 0, %s45
    %s60 = sphi 0, %s46
    %s64 = sphi 0, %s64
    %s66 = sphi 0, %s64
    %s67 = sphi 0, %s66
    %s81 = sphi 0, %s67
    %s87 = sphi 0, %s89
    %s90 = sphi 0, %s87
    %s91 = sphi 0, %s90
    %s107 = sphi 0, %s91
  $region4: #{visual_perception_forward.10} parent=0 // loop_header_branch
    %12 = sbr.rel (%p10) target = $region8
  $region5: #{visual_perception_forward.10} parent=0 // loop_body
    %s14 = ssub.s32 %s9, 1
    %s15 = ssub.s32 %s9, 2
    %s16 = sadd.s32 %s9, 1
    %s17 = ssub.s32 %s9, %s16
    %p18 = scmp.eq.s32.totalorder %s17, 0
    %s20 = sadd.s32 %s19, 1
    %s21 = scalar_select %p18, %s19, %s20
    %p24 = pneg %p18
    %p25 = scmp.eq.s32.totalorder %s9, 1
    %p26 = por %p24, %p25
    %p27 = scmp.ne.s32.totalorder %s19, %s22
    %p28 = scmp.eq.s32.totalorder %s9, 0
    %p29 = por %p27, %p28
    %p30 = scmp.ne.s32.totalorder %s19, %s22
    %p31 = scmp.eq.s32.totalorder %s14, 1
    %p32 = por %p30, %p31
    %p33 = scmp.ne.s32.totalorder %s22, %s23
    %p34 = scmp.eq.s32.totalorder %s14, 0
    %p35 = por %p33, %p34
    %p36 = scmp.ne.s32.totalorder %s22, %s23
    %p37 = scmp.eq.s32.totalorder %s15, 1
    %p38 = por %p36, %p37
    %p40 = scmp.ne.s32.totalorder %s23, %s39
    %p41 = scmp.eq.s32.totalorder %s15, 0
    %p42 = por %p40, %p41
    %s44 = sadd.s32 %s43, 1
    %p47 = scmp.eq.s32.totalorder %s9, 1
    %p48 = scmp.ne.s32.totalorder %s43, %s45
    %p49 = scmp.eq.s32.totalorder %s9, 0
    %p50 = por %p48, %p49
    %p51 = scmp.ne.s32.totalorder %s43, %s45
    %p52 = scmp.eq.s32.totalorder %s14, 1
    %p53 = por %p51, %p52
    %p54 = scmp.ne.s32.totalorder %s45, %s46
    %p55 = scmp.eq.s32.totalorder %s14, 0
    %p56 = por %p54, %p55
    %p57 = scmp.ne.s32.totalorder %s45, %s46
    %p58 = scmp.eq.s32.totalorder %s15, 1
    %p59 = por %p57, %p58
    %p61 = scmp.ne.s32.totalorder %s46, %s60
    %p62 = scmp.eq.s32.totalorder %s15, 0
    %p63 = por %p61, %p62
    %s65 = sadd.s32 %s64, 1
    %p68 = scmp.eq.s32.totalorder %s9, 1
    %p69 = scmp.ne.s32.totalorder %s64, %s66
    %p70 = scmp.eq.s32.totalorder %s9, 0
    %p71 = por %p69, %p70
    %p72 = scmp.ne.s32.totalorder %s64, %s66
    %p73 = scmp.eq.s32.totalorder %s14, 1
    %p74 = por %p72, %p73
    %p75 = scmp.ne.s32.totalorder %s66, %s67
    %p76 = scmp.eq.s32.totalorder %s14, 0
    %p77 = por %p75, %p76
    %p78 = scmp.ne.s32.totalorder %s66, %s67
    %p79 = scmp.eq.s32.totalorder %s15, 1
    %p80 = por %p78, %p79
    %p82 = scmp.ne.s32.totalorder %s67, %s81
    %p83 = scmp.eq.s32.totalorder %s15, 0
    %p84 = por %p82, %p83
    %s85 = ssub.s32 %s9, %s16
    %p86 = scmp.eq.s32.totalorder %s85, 0
    %s88 = sadd.s32 %s87, 1
    %s89 = scalar_select %p86, %s87, %s88
    %p92 = pneg %p86
    %p93 = scmp.eq.s32.totalorder %s9, 1
    %p94 = por %p92, %p93
    %p95 = scmp.ne.s32.totalorder %s87, %s90
    %p96 = scmp.eq.s32.totalorder %s9, 0
    %p97 = por %p95, %p96
    %p98 = scmp.ne.s32.totalorder %s87, %s90
    %p99 = scmp.eq.s32.totalorder %s14, 1
    %p100 = por %p98, %p99
    %p101 = scmp.ne.s32.totalorder %s90, %s91
    %p102 = scmp.eq.s32.totalorder %s14, 0
    %p103 = por %p101, %p102
    %p104 = scmp.ne.s32.totalorder %s90, %s91
    %p105 = scmp.eq.s32.totalorder %s15, 1
    %p106 = por %p104, %p105
    %p108 = scmp.ne.s32.totalorder %s91, %s107
    %p109 = scmp.eq.s32.totalorder %s15, 0
    %p110 = por %p108, %p109
    %p111 = scmp.le.s32.totalorder 1, %s9
    %p112 = scmp.lt.s32.totalorder %s9, 3
    %p113 = pnand %p111, %p112
    %p114 = pneg %p113
    // Predicated region
    $region9: #{visual_perception_forward.10} parent=5 // pred_check
      _
    $region10: #{visual_perception_forward.10} parent=5 // pred_check_branch
      %116 = sbr.rel (%p113) target = $region12
    $region11: #{visual_perception_forward.10} parent=5 // pred_region
      %s117 = ssub.s32 %s9, 1
      // Predicated region
      $region13: #{visual_perception_forward.10} parent=11 // pred_check
        %p118 = pneg %p56
      $region14: #{visual_perception_forward.10} parent=11 // pred_check_branch
        %120 = sbr.rel (%p118) target = $region16
      $region15: #{visual_perception_forward.10} parent=11 // pred_region
        _
      $region16: #{visual_perception_forward.10} parent=11 // pred_fallthru
        _
      // Predicated region
      $region17: #{visual_perception_forward.10} parent=11 // pred_check
        %p121 = pneg %p77
      $region18: #{visual_perception_forward.10} parent=11 // pred_check_branch
        %123 = sbr.rel (%p121) target = $region20
      $region19: #{visual_perception_forward.10} parent=11 // pred_region
        _
      $region20: #{visual_perception_forward.10} parent=11 // pred_fallthru
        _
    $region12: #{visual_perception_forward.10} parent=5 // pred_fallthru
      _
    %p124 = scmp.lt.s32.totalorder %s9, 2
    // Predicated region
    $region21: #{visual_perception_forward.10} parent=5 // pred_check
      %p125 = pneg %p124
    $region22: #{visual_perception_forward.10} parent=5 // pred_check_branch
      %127 = sbr.rel (%p125) target = $region24
    $region23: #{visual_perception_forward.10} parent=5 // pred_region
      // Predicated region
      $region25: #{visual_perception_forward.10} parent=23 // pred_check
        %p128 = pneg %p29
      $region26: #{visual_perception_forward.10} parent=23 // pred_check_branch
        %130 = sbr.rel (%p128) target = $region28
      $region27: #{visual_perception_forward.10} parent=23 // pred_region
        %p131 = scmp.lt.s32.totalorder %s9, 1
        %s132 = scalar_select %p131, %s9, 1
        %s133 = smul.addr %s132, 288
        %s134 = smul.addr %s133, 8
        %s135 = scalar_lea.vmem %s0, %s134
      $region28: #{visual_perception_forward.10} parent=23 // pred_fallthru
        _
    $region24: #{visual_perception_forward.10} parent=5 // pred_fallthru
      _
    %p136 = scmp.le.s32.totalorder 1, %s9
    %p137 = scmp.lt.s32.totalorder %s9, 3
    %p138 = pnand %p136, %p137
    %p139 = pneg %p138
    // Predicated region
    $region29: #{visual_perception_forward.10} parent=5 // pred_check
      _
    $region30: #{visual_perception_forward.10} parent=5 // pred_check_branch
      %141 = sbr.rel (%p138) target = $region32
    $region31: #{visual_perception_forward.10} parent=5 // pred_region
      %s142 = ssub.s32 %s9, 1
      %p143 = scmp.lt.s32.totalorder %s14, 1
      %s144 = scalar_select %p143, %s14, 1
      %s145 = smul.addr %s144, 288
      %s146 = smul.addr %s145, 8
      %s147 = scalar_lea.vmem %s0, %s146
      %p148 = pneg %p35
      %p149 = pneg %p32
      %p150 = pneg %p56
      %p151 = pneg %p53
      %p152 = pneg %p77
      %p153 = pneg %p74
      %p154 = pneg %p103
      %p155 = pneg %p100
      %p156 = scmp.lt.s32.totalorder %s14, 1
      %s157 = scalar_select %p156, %s14, 1
      %s158 = smul.addr %s157, 4
      %s159 = smul.addr %s158, 8
      %s160 = scalar_lea.vmem %s3, %s159
      %p161 = scmp.lt.s32.totalorder %s14, 1
      %s162 = scalar_select %p161, %s14, 1
      %s163 = smul.addr %s162, 288
      %s164 = smul.addr %s163, 8
      %s165 = scalar_lea.vmem %s0, %s164
      %p166 = scmp.lt.s32.totalorder %s14, 1
      %s167 = scalar_select %p166, %s14, 1
      %s168 = smul.addr %s167, 4
      %s169 = smul.addr %s168, 8
      %s170 = scalar_lea.vmem %s3, %s169
      %v171 = vld [vmem:[%s1] sm:$0xff]
      %v172 = vld [vmem:[%s1 + $0x8] sm:$0xff]
      %v173 = vld [vmem:[%s1 + $0x10] sm:$0xff]
      %v174 = vld [vmem:[%s1 + $0x18] sm:$0xff]
      %v175 = vld [vmem:[%s1 + $0x20] sm:$0xff]
      %v176 = vld [vmem:[%s1 + $0x28] sm:$0xff]
      %v177 = vld [vmem:[%s1 + $0x30] sm:$0xff]
      %v178 = vld [vmem:[%s1 + $0x38] sm:$0xff]
      %v179 = vld [vmem:[%s1 + $0x40] sm:$0xff]
      %v180 = vld [vmem:[%s1 + $0x48] sm:$0xff]
      %v181 = vld [vmem:[%s1 + $0x50] sm:$0xff]
      %v182 = vld [vmem:[%s1 + $0x58] sm:$0xff]
      %v183 = vld [vmem:[%s1 + $0x60] sm:$0xff]
      %v184 = vld [vmem:[%s1 + $0x68] sm:$0xff]
      %v185 = vld [vmem:[%s1 + $0x70] sm:$0xff]
      %v186 = vld [vmem:[%s1 + $0x78] sm:$0xff]
      %v187 = vld [vmem:[%s1 + $0x80] sm:$0xff]
      %v188 = vld [vmem:[%s1 + $0x88] sm:$0xff]
      %v189 = vld [vmem:[%s1 + $0x90] sm:$0xff]
      %v190 = vld [vmem:[%s1 + $0x98] sm:$0xff]
      %v191 = vld [vmem:[%s1 + $0xa0] sm:$0xff]
      %v192 = vld [vmem:[%s1 + $0xa8] sm:$0xff]
      %v193 = vld [vmem:[%s1 + $0xb0] sm:$0xff]
      %v194 = vld [vmem:[%s1 + $0xb8] sm:$0xff]
      %v195 = vld [vmem:[%s1 + $0xc0] sm:$0xff]
      %v196 = vld [vmem:[%s1 + $0xc8] sm:$0xff]
      %v197 = vld [vmem:[%s1 + $0xd0] sm:$0xff]
      %v198 = vld [vmem:[%s1 + $0xd8] sm:$0xff]
      %v199 = vld [vmem:[%s1 + $0xe0] sm:$0xff]
      %v200 = vld [vmem:[%s1 + $0xe8] sm:$0xff]
      %v201 = vld [vmem:[%s1 + $0xf0] sm:$0xff]
      %v202 = vld [vmem:[%s1 + $0xf8] sm:$0xff]
      %v203 = vld [vmem:[%s1 + $0x100] sm:$0xff]
      %v204 = vld [vmem:[%s1 + $0x108] sm:$0xff]
      %v205 = vld [vmem:[%s1 + $0x110] sm:$0xff]
      %v206 = vld [vmem:[%s1 + $0x118] sm:$0xff]
      %v207 = vld [vmem:[%s1 + $0x120] sm:$0xff]
      %v208 = vld [vmem:[%s1 + $0x128] sm:$0xff]
      %v209 = vld [vmem:[%s1 + $0x130] sm:$0xff]
      %v210 = vld [vmem:[%s1 + $0x138] sm:$0xff]
      %v211 = vld [vmem:[%s1 + $0x140] sm:$0xff]
      %v212 = vld [vmem:[%s1 + $0x148] sm:$0xff]
      %v213 = vld [vmem:[%s1 + $0x150] sm:$0xff]
      %v214 = vld [vmem:[%s1 + $0x158] sm:$0xff]
      %v215 = vld [vmem:[%s1 + $0x160] sm:$0xff]
      %v216 = vld [vmem:[%s1 + $0x168] sm:$0xff]
      %v217 = vld [vmem:[%s1 + $0x170] sm:$0xff]
      %v218 = vld [vmem:[%s1 + $0x178] sm:$0xff]
      %v219 = vld [vmem:[%s1 + $0x180] sm:$0xff]
      %v220 = vld [vmem:[%s1 + $0x188] sm:$0xff]
      %v221 = vld [vmem:[%s1 + $0x190] sm:$0xff]
      %v222 = vld [vmem:[%s1 + $0x198] sm:$0xff]
      %v223 = vld [vmem:[%s1 + $0x1a0] sm:$0xff]
      %v224 = vld [vmem:[%s1 + $0x1a8] sm:$0xff]
      %v225 = vld [vmem:[%s1 + $0x1b0] sm:$0xff]
      %v226 = vld [vmem:[%s1 + $0x1b8] sm:$0xff]
      %v227 = vld [vmem:[%s1 + $0x1c0] sm:$0xff]
      %v228 = vld [vmem:[%s1 + $0x1c8] sm:$0xff]
      %v229 = vld [vmem:[%s1 + $0x1d0] sm:$0xff]
      %v230 = vld [vmem:[%s1 + $0x1d8] sm:$0xff]
      %v231 = vld [vmem:[%s1 + $0x1e0] sm:$0xff]
      %v232 = vld [vmem:[%s1 + $0x1e8] sm:$0xff]
      %v233 = vld [vmem:[%s1 + $0x1f0] sm:$0xff]
      %v234 = vld [vmem:[%s1 + $0x1f8] sm:$0xff]
      %v235 = vld [vmem:[%s1 + $0x200] sm:$0xff]
      %v236 = vld [vmem:[%s1 + $0x208] sm:$0xff]
      %v237 = vld [vmem:[%s1 + $0x210] sm:$0xff]
      %v238 = vld [vmem:[%s1 + $0x218] sm:$0xff]
      %v239 = vld [vmem:[%s1 + $0x220] sm:$0xff]
      %v240 = vld [vmem:[%s1 + $0x228] sm:$0xff]
      %v241 = vld [vmem:[%s1 + $0x230] sm:$0xff]
      %v242 = vld [vmem:[%s1 + $0x238] sm:$0xff]
      %v243 = vld [vmem:[%s165] sm:$0xff]
      %v244 = vld [vmem:[%s165 + $0x8] sm:$0xff]
      %v245 = vld [vmem:[%s165 + $0x10] sm:$0xff]
      %v246 = vld [vmem:[%s165 + $0x18] sm:$0xff]
      %v247 = vld [vmem:[%s165 + $0x20] sm:$0xff]
      %v248 = vld [vmem:[%s165 + $0x28] sm:$0xff]
      %v249 = vld [vmem:[%s165 + $0x30] sm:$0xff]
      %v250 = vld [vmem:[%s165 + $0x38] sm:$0xff]
      %v251 = vld [vmem:[%s165 + $0x40] sm:$0xff]
      %v252 = vld [vmem:[%s165 + $0x48] sm:$0xff]
      %v253 = vld [vmem:[%s165 + $0x50] sm:$0xff]
      %v254 = vld [vmem:[%s165 + $0x58] sm:$0xff]
      %v255 = vld [vmem:[%s165 + $0x60] sm:$0xff]
      %v256 = vld [vmem:[%s165 + $0x68] sm:$0xff]
      %v257 = vld [vmem:[%s165 + $0x70] sm:$0xff]
      %v258 = vld [vmem:[%s165 + $0x78] sm:$0xff]
      %v259 = vld [vmem:[%s165 + $0x80] sm:$0xff]
      %v260 = vld [vmem:[%s165 + $0x88] sm:$0xff]
      %v261 = vld [vmem:[%s165 + $0x90] sm:$0xff]
      %v262 = vld [vmem:[%s165 + $0x98] sm:$0xff]
      %v263 = vld [vmem:[%s165 + $0xa0] sm:$0xff]
      %v264 = vld [vmem:[%s165 + $0xa8] sm:$0xff]
      %v265 = vld [vmem:[%s165 + $0xb0] sm:$0xff]
      %v266 = vld [vmem:[%s165 + $0xb8] sm:$0xff]
      %v267 = vld [vmem:[%s165 + $0xc0] sm:$0xff]
      %v268 = vld [vmem:[%s165 + $0xc8] sm:$0xff]
      %v269 = vld [vmem:[%s165 + $0xd0] sm:$0xff]
      %v270 = vld [vmem:[%s165 + $0xd8] sm:$0xff]
      %v271 = vld [vmem:[%s165 + $0xe0] sm:$0xff]
      %v272 = vld [vmem:[%s165 + $0xe8] sm:$0xff]
      %v273 = vld [vmem:[%s165 + $0xf0] sm:$0xff]
      %v274 = vld [vmem:[%s165 + $0xf8] sm:$0xff]
      %v275 = vld [vmem:[%s165 + $0x100] sm:$0xff]
      %v276 = vld [vmem:[%s165 + $0x108] sm:$0xff]
      %v277 = vld [vmem:[%s165 + $0x110] sm:$0xff]
      %v278 = vld [vmem:[%s165 + $0x118] sm:$0xff]
      %v279 = vld [vmem:[%s165 + $0x120] sm:$0xff]
      %v280 = vld [vmem:[%s165 + $0x128] sm:$0xff]
      %v281 = vld [vmem:[%s165 + $0x130] sm:$0xff]
      %v282 = vld [vmem:[%s165 + $0x138] sm:$0xff]
      %v283 = vld [vmem:[%s165 + $0x140] sm:$0xff]
      %v284 = vld [vmem:[%s165 + $0x148] sm:$0xff]
      %v285 = vld [vmem:[%s165 + $0x150] sm:$0xff]
      %v286 = vld [vmem:[%s165 + $0x158] sm:$0xff]
      %v287 = vld [vmem:[%s165 + $0x160] sm:$0xff]
      %v288 = vld [vmem:[%s165 + $0x168] sm:$0xff]
      %v289 = vld [vmem:[%s165 + $0x170] sm:$0xff]
      %v290 = vld [vmem:[%s165 + $0x178] sm:$0xff]
      %v291 = vld [vmem:[%s165 + $0x180] sm:$0xff]
      %v292 = vld [vmem:[%s165 + $0x188] sm:$0xff]
      %v293 = vld [vmem:[%s165 + $0x190] sm:$0xff]
      %v294 = vld [vmem:[%s165 + $0x198] sm:$0xff]
      %v295 = vld [vmem:[%s165 + $0x1a0] sm:$0xff]
      %v296 = vld [vmem:[%s165 + $0x1a8] sm:$0xff]
      %v297 = vld [vmem:[%s165 + $0x1b0] sm:$0xff]
      %v298 = vld [vmem:[%s165 + $0x1b8] sm:$0xff]
      %v299 = vld [vmem:[%s165 + $0x1c0] sm:$0xff]
      %v300 = vld [vmem:[%s165 + $0x1c8] sm:$0xff]
      %v301 = vld [vmem:[%s165 + $0x1d0] sm:$0xff]
      %v302 = vld [vmem:[%s165 + $0x1d8] sm:$0xff]
      %v303 = vld [vmem:[%s165 + $0x1e0] sm:$0xff]
      %v304 = vld [vmem:[%s165 + $0x1e8] sm:$0xff]
      %v305 = vld [vmem:[%s165 + $0x1f0] sm:$0xff]
      %v306 = vld [vmem:[%s165 + $0x1f8] sm:$0xff]
      %v307 = vld [vmem:[%s165 + $0x200] sm:$0xff]
      %v308 = vld [vmem:[%s165 + $0x208] sm:$0xff]
      %v309 = vld [vmem:[%s165 + $0x210] sm:$0xff]
      %v310 = vld [vmem:[%s165 + $0x218] sm:$0xff]
      %v311 = vld [vmem:[%s165 + $0x220] sm:$0xff]
      %v312 = vld [vmem:[%s165 + $0x228] sm:$0xff]
      %v313 = vld [vmem:[%s165 + $0x230] sm:$0xff]
      %v314 = vld [vmem:[%s165 + $0x238] sm:$0xff]
      %v315 = vld [vmem:[%s165 + $0x240] sm:$0xff]
      %v316 = vld [vmem:[%s165 + $0x248] sm:$0xff]
      %v317 = vld [vmem:[%s165 + $0x250] sm:$0xff]
      %v318 = vld [vmem:[%s165 + $0x258] sm:$0xff]
      %v319 = vld [vmem:[%s165 + $0x260] sm:$0xff]
      %v320 = vld [vmem:[%s165 + $0x268] sm:$0xff]
      %v321 = vld [vmem:[%s165 + $0x270] sm:$0xff]
      %v322 = vld [vmem:[%s165 + $0x278] sm:$0xff]
      %v323 = vld [vmem:[%s165 + $0x280] sm:$0xff]
      %v324 = vld [vmem:[%s165 + $0x288] sm:$0xff]
      %v325 = vld [vmem:[%s165 + $0x290] sm:$0xff]
      %v326 = vld [vmem:[%s165 + $0x298] sm:$0xff]
      %v327 = vld [vmem:[%s165 + $0x2a0] sm:$0xff]
      %v328 = vld [vmem:[%s165 + $0x2a8] sm:$0xff]
      %v329 = vld [vmem:[%s165 + $0x2b0] sm:$0xff]
      %v330 = vld [vmem:[%s165 + $0x2b8] sm:$0xff]
      %v331 = vld [vmem:[%s165 + $0x2c0] sm:$0xff]
      %v332 = vld [vmem:[%s165 + $0x2c8] sm:$0xff]
      %v333 = vld [vmem:[%s165 + $0x2d0] sm:$0xff]
      %v334 = vld [vmem:[%s165 + $0x2d8] sm:$0xff]
      %v335 = vld [vmem:[%s165 + $0x2e0] sm:$0xff]
      %v336 = vld [vmem:[%s165 + $0x2e8] sm:$0xff]
      %v337 = vld [vmem:[%s165 + $0x2f0] sm:$0xff]
      %v338 = vld [vmem:[%s165 + $0x2f8] sm:$0xff]
      %v339 = vld [vmem:[%s165 + $0x300] sm:$0xff]
      %v340 = vld [vmem:[%s165 + $0x308] sm:$0xff]
      %v341 = vld [vmem:[%s165 + $0x310] sm:$0xff]
      %v342 = vld [vmem:[%s165 + $0x318] sm:$0xff]
      %v343 = vld [vmem:[%s165 + $0x320] sm:$0xff]
      %v344 = vld [vmem:[%s165 + $0x328] sm:$0xff]
      %v345 = vld [vmem:[%s165 + $0x330] sm:$0xff]
      %v346 = vld [vmem:[%s165 + $0x338] sm:$0xff]
      %v347 = vld [vmem:[%s165 + $0x340] sm:$0xff]
      %v348 = vld [vmem:[%s165 + $0x348] sm:$0xff]
      %v349 = vld [vmem:[%s165 + $0x350] sm:$0xff]
      %v350 = vld [vmem:[%s165 + $0x358] sm:$0xff]
      %v351 = vld [vmem:[%s165 + $0x360] sm:$0xff]
      %v352 = vld [vmem:[%s165 + $0x368] sm:$0xff]
      %v353 = vld [vmem:[%s165 + $0x370] sm:$0xff]
      %v354 = vld [vmem:[%s165 + $0x378] sm:$0xff]
      %v355 = vld [vmem:[%s165 + $0x380] sm:$0xff]
      %v356 = vld [vmem:[%s165 + $0x388] sm:$0xff]
      %v357 = vld [vmem:[%s165 + $0x390] sm:$0xff]
      %v358 = vld [vmem:[%s165 + $0x398] sm:$0xff]
      %v359 = vld [vmem:[%s165 + $0x3a0] sm:$0xff]
      %v360 = vld [vmem:[%s165 + $0x3a8] sm:$0xff]
      %v361 = vld [vmem:[%s165 + $0x3b0] sm:$0xff]
      %v362 = vld [vmem:[%s165 + $0x3b8] sm:$0xff]
      %v363 = vld [vmem:[%s165 + $0x3c0] sm:$0xff]
      %v364 = vld [vmem:[%s165 + $0x3c8] sm:$0xff]
      %v365 = vld [vmem:[%s165 + $0x3d0] sm:$0xff]
      %v366 = vld [vmem:[%s165 + $0x3d8] sm:$0xff]
      %v367 = vld [vmem:[%s165 + $0x3e0] sm:$0xff]
      %v368 = vld [vmem:[%s165 + $0x3e8] sm:$0xff]
      %v369 = vld [vmem:[%s165 + $0x3f0] sm:$0xff]
      %v370 = vld [vmem:[%s165 + $0x3f8] sm:$0xff]
      %v371 = vld [vmem:[%s165 + $0x400] sm:$0xff]
      %v372 = vld [vmem:[%s165 + $0x408] sm:$0xff]
      %v373 = vld [vmem:[%s165 + $0x410] sm:$0xff]
      %v374 = vld [vmem:[%s165 + $0x418] sm:$0xff]
      %v375 = vld [vmem:[%s165 + $0x420] sm:$0xff]
      %v376 = vld [vmem:[%s165 + $0x428] sm:$0xff]
      %v377 = vld [vmem:[%s165 + $0x430] sm:$0xff]
      %v378 = vld [vmem:[%s165 + $0x438] sm:$0xff]
      %v379 = vld [vmem:[%s165 + $0x440] sm:$0xff]
      %v380 = vld [vmem:[%s165 + $0x448] sm:$0xff]
      %v381 = vld [vmem:[%s165 + $0x450] sm:$0xff]
      %v382 = vld [vmem:[%s165 + $0x458] sm:$0xff]
      %v383 = vld [vmem:[%s165 + $0x460] sm:$0xff]
      %v384 = vld [vmem:[%s165 + $0x468] sm:$0xff]
      %v385 = vld [vmem:[%s165 + $0x470] sm:$0xff]
      %v386 = vld [vmem:[%s165 + $0x478] sm:$0xff]
      %v387 = vld [vmem:[%s165 + $0x480] sm:$0xff]
      %v388 = vld [vmem:[%s165 + $0x488] sm:$0xff]
      %v389 = vld [vmem:[%s165 + $0x490] sm:$0xff]
      %v390 = vld [vmem:[%s165 + $0x498] sm:$0xff]
      %v391 = vld [vmem:[%s165 + $0x4a0] sm:$0xff]
      %v392 = vld [vmem:[%s165 + $0x4a8] sm:$0xff]
      %v393 = vld [vmem:[%s165 + $0x4b0] sm:$0xff]
      %v394 = vld [vmem:[%s165 + $0x4b8] sm:$0xff]
      %v395 = vld [vmem:[%s165 + $0x4c0] sm:$0xff]
      %v396 = vld [vmem:[%s165 + $0x4c8] sm:$0xff]
      %v397 = vld [vmem:[%s165 + $0x4d0] sm:$0xff]
      %v398 = vld [vmem:[%s165 + $0x4d8] sm:$0xff]
      %v399 = vld [vmem:[%s165 + $0x4e0] sm:$0xff]
      %v400 = vld [vmem:[%s165 + $0x4e8] sm:$0xff]
      %v401 = vld [vmem:[%s165 + $0x4f0] sm:$0xff]
      %v402 = vld [vmem:[%s165 + $0x4f8] sm:$0xff]
      %v403 = vld [vmem:[%s165 + $0x500] sm:$0xff]
      %v404 = vld [vmem:[%s165 + $0x508] sm:$0xff]
      %v405 = vld [vmem:[%s165 + $0x510] sm:$0xff]
      %v406 = vld [vmem:[%s165 + $0x518] sm:$0xff]
      %v407 = vld [vmem:[%s165 + $0x520] sm:$0xff]
      %v408 = vld [vmem:[%s165 + $0x528] sm:$0xff]
      %v409 = vld [vmem:[%s165 + $0x530] sm:$0xff]
      %v410 = vld [vmem:[%s165 + $0x538] sm:$0xff]
      %v411 = vld [vmem:[%s165 + $0x540] sm:$0xff]
      %v412 = vld [vmem:[%s165 + $0x548] sm:$0xff]
      %v413 = vld [vmem:[%s165 + $0x550] sm:$0xff]
      %v414 = vld [vmem:[%s165 + $0x558] sm:$0xff]
      %v415 = vld [vmem:[%s165 + $0x560] sm:$0xff]
      %v416 = vld [vmem:[%s165 + $0x568] sm:$0xff]
      %v417 = vld [vmem:[%s165 + $0x570] sm:$0xff]
      %v418 = vld [vmem:[%s165 + $0x578] sm:$0xff]
      %v419 = vld [vmem:[%s165 + $0x580] sm:$0xff]
      %v420 = vld [vmem:[%s165 + $0x588] sm:$0xff]
      %v421 = vld [vmem:[%s165 + $0x590] sm:$0xff]
      %v422 = vld [vmem:[%s165 + $0x598] sm:$0xff]
      %v423 = vld [vmem:[%s165 + $0x5a0] sm:$0xff]
      %v424 = vld [vmem:[%s165 + $0x5a8] sm:$0xff]
      %v425 = vld [vmem:[%s165 + $0x5b0] sm:$0xff]
      %v426 = vld [vmem:[%s165 + $0x5b8] sm:$0xff]
      %v427 = vld [vmem:[%s165 + $0x5c0] sm:$0xff]
      %v428 = vld [vmem:[%s165 + $0x5c8] sm:$0xff]
      %v429 = vld [vmem:[%s165 + $0x5d0] sm:$0xff]
      %v430 = vld [vmem:[%s165 + $0x5d8] sm:$0xff]
      %v431 = vld [vmem:[%s165 + $0x5e0] sm:$0xff]
      %v432 = vld [vmem:[%s165 + $0x5e8] sm:$0xff]
      %v433 = vld [vmem:[%s165 + $0x5f0] sm:$0xff]
      %v434 = vld [vmem:[%s165 + $0x5f8] sm:$0xff]
      %v435 = vld [vmem:[%s165 + $0x600] sm:$0xff]
      %v436 = vld [vmem:[%s165 + $0x608] sm:$0xff]
      %v437 = vld [vmem:[%s165 + $0x610] sm:$0xff]
      %v438 = vld [vmem:[%s165 + $0x618] sm:$0xff]
      %v439 = vld [vmem:[%s165 + $0x620] sm:$0xff]
      %v440 = vld [vmem:[%s165 + $0x628] sm:$0xff]
      %v441 = vld [vmem:[%s165 + $0x630] sm:$0xff]
      %v442 = vld [vmem:[%s165 + $0x638] sm:$0xff]
      %v443 = vld [vmem:[%s165 + $0x640] sm:$0xff]
      %v444 = vld [vmem:[%s165 + $0x648] sm:$0xff]
      %v445 = vld [vmem:[%s165 + $0x650] sm:$0xff]
      %v446 = vld [vmem:[%s165 + $0x658] sm:$0xff]
      %v447 = vld [vmem:[%s165 + $0x660] sm:$0xff]
      %v448 = vld [vmem:[%s165 + $0x668] sm:$0xff]
      %v449 = vld [vmem:[%s165 + $0x670] sm:$0xff]
      %v450 = vld [vmem:[%s165 + $0x678] sm:$0xff]
      %v451 = vld [vmem:[%s165 + $0x680] sm:$0xff]
      %v452 = vld [vmem:[%s165 + $0x688] sm:$0xff]
      %v453 = vld [vmem:[%s165 + $0x690] sm:$0xff]
      %v454 = vld [vmem:[%s165 + $0x698] sm:$0xff]
      %v455 = vld [vmem:[%s165 + $0x6a0] sm:$0xff]
      %v456 = vld [vmem:[%s165 + $0x6a8] sm:$0xff]
      %v457 = vld [vmem:[%s165 + $0x6b0] sm:$0xff]
      %v458 = vld [vmem:[%s165 + $0x6b8] sm:$0xff]
      %v459 = vld [vmem:[%s165 + $0x6c0] sm:$0xff]
      %v460 = vld [vmem:[%s165 + $0x6c8] sm:$0xff]
      %v461 = vld [vmem:[%s165 + $0x6d0] sm:$0xff]
      %v462 = vld [vmem:[%s165 + $0x6d8] sm:$0xff]
      %v463 = vld [vmem:[%s165 + $0x6e0] sm:$0xff]
      %v464 = vld [vmem:[%s165 + $0x6e8] sm:$0xff]
      %v465 = vld [vmem:[%s165 + $0x6f0] sm:$0xff]
      %v466 = vld [vmem:[%s165 + $0x6f8] sm:$0xff]
      %v467 = vld [vmem:[%s165 + $0x700] sm:$0xff]
      %v468 = vld [vmem:[%s165 + $0x708] sm:$0xff]
      %v469 = vld [vmem:[%s165 + $0x710] sm:$0xff]
      %v470 = vld [vmem:[%s165 + $0x718] sm:$0xff]
      %v471 = vld [vmem:[%s165 + $0x720] sm:$0xff]
      %v472 = vld [vmem:[%s165 + $0x728] sm:$0xff]
      %v473 = vld [vmem:[%s165 + $0x730] sm:$0xff]
      %v474 = vld [vmem:[%s165 + $0x738] sm:$0xff]
      %v475 = vld [vmem:[%s165 + $0x740] sm:$0xff]
      %v476 = vld [vmem:[%s165 + $0x748] sm:$0xff]
      %v477 = vld [vmem:[%s165 + $0x750] sm:$0xff]
      %v478 = vld [vmem:[%s165 + $0x758] sm:$0xff]
      %v479 = vld [vmem:[%s165 + $0x760] sm:$0xff]
      %v480 = vld [vmem:[%s165 + $0x768] sm:$0xff]
      %v481 = vld [vmem:[%s165 + $0x770] sm:$0xff]
      %v482 = vld [vmem:[%s165 + $0x778] sm:$0xff]
      %v483 = vld [vmem:[%s165 + $0x780] sm:$0xff]
      %v484 = vld [vmem:[%s165 + $0x788] sm:$0xff]
      %v485 = vld [vmem:[%s165 + $0x790] sm:$0xff]
      %v486 = vld [vmem:[%s165 + $0x798] sm:$0xff]
      %v487 = vld [vmem:[%s165 + $0x7a0] sm:$0xff]
      %v488 = vld [vmem:[%s165 + $0x7a8] sm:$0xff]
      %v489 = vld [vmem:[%s165 + $0x7b0] sm:$0xff]
      %v490 = vld [vmem:[%s165 + $0x7b8] sm:$0xff]
      %v491 = vld [vmem:[%s165 + $0x7c0] sm:$0xff]
      %v492 = vld [vmem:[%s165 + $0x7c8] sm:$0xff]
      %v493 = vld [vmem:[%s165 + $0x7d0] sm:$0xff]
      %v494 = vld [vmem:[%s165 + $0x7d8] sm:$0xff]
      %v495 = vld [vmem:[%s165 + $0x7e0] sm:$0xff]
      %v496 = vld [vmem:[%s165 + $0x7e8] sm:$0xff]
      %v497 = vld [vmem:[%s165 + $0x7f0] sm:$0xff]
      %v498 = vld [vmem:[%s165 + $0x7f8] sm:$0xff]
      %v499 = vld [vmem:[%s165 + $0x800] sm:$0xff]
      %v500 = vld [vmem:[%s165 + $0x808] sm:$0xff]
      %v501 = vld [vmem:[%s165 + $0x810] sm:$0xff]
      %v502 = vld [vmem:[%s165 + $0x818] sm:$0xff]
      %v503 = vld [vmem:[%s165 + $0x820] sm:$0xff]
      %v504 = vld [vmem:[%s165 + $0x828] sm:$0xff]
      %v505 = vld [vmem:[%s165 + $0x830] sm:$0xff]
      %v506 = vld [vmem:[%s165 + $0x838] sm:$0xff]
      %v507 = vld [vmem:[%s165 + $0x840] sm:$0xff]
      %v508 = vld [vmem:[%s165 + $0x848] sm:$0xff]
      %v509 = vld [vmem:[%s165 + $0x850] sm:$0xff]
      %v510 = vld [vmem:[%s165 + $0x858] sm:$0xff]
      %v511 = vld [vmem:[%s165 + $0x860] sm:$0xff]
      %v512 = vld [vmem:[%s165 + $0x868] sm:$0xff]
      %v513 = vld [vmem:[%s165 + $0x870] sm:$0xff]
      %v514 = vld [vmem:[%s165 + $0x878] sm:$0xff]
      %v515 = vld [vmem:[%s165 + $0x880] sm:$0xff]
      %v516 = vld [vmem:[%s165 + $0x888] sm:$0xff]
      %v517 = vld [vmem:[%s165 + $0x890] sm:$0xff]
      %v518 = vld [vmem:[%s165 + $0x898] sm:$0xff]
      %v519 = vld [vmem:[%s165 + $0x8a0] sm:$0xff]
      %v520 = vld [vmem:[%s165 + $0x8a8] sm:$0xff]
      %v521 = vld [vmem:[%s165 + $0x8b0] sm:$0xff]
      %v522 = vld [vmem:[%s165 + $0x8b8] sm:$0xff]
      %v523 = vld [vmem:[%s165 + $0x8c0] sm:$0xff]
      %v524 = vld [vmem:[%s165 + $0x8c8] sm:$0xff]
      %v525 = vld [vmem:[%s165 + $0x8d0] sm:$0xff]
      %v526 = vld [vmem:[%s165 + $0x8d8] sm:$0xff]
      %v527 = vld [vmem:[%s165 + $0x8e0] sm:$0xff]
      %v528 = vld [vmem:[%s165 + $0x8e8] sm:$0xff]
      %v529 = vld [vmem:[%s165 + $0x8f0] sm:$0xff]
      %v530 = vld [vmem:[%s165 + $0x8f8] sm:$0xff]
      %v531 = vld [vmem:[%s2] sm:$0xff]
      %v532 = vld [vmem:[%s2 + $0x8] sm:$0xff]
      %v533 = vld [vmem:[%s2 + $0x10] sm:$0xff]
      %v534 = vld [vmem:[%s2 + $0x18] sm:$0xff]
      %536 = vset.pattern.permute.xlu0 0
      %537 = vperm.xlu0 %536, %v531
      %v538 = vpop.permute.xlu0 %537
      %541 = vset.pattern.permute.xlu0 0
      %542 = vperm.xlu0 %541, %v532
      %v543 = vpop.permute.xlu0 %542
      %546 = vset.pattern.permute.xlu0 0
      %547 = vperm.xlu0 %546, %v533
      %v548 = vpop.permute.xlu0 %547
      %551 = vset.pattern.permute.xlu0 0
      %552 = vperm.xlu0 %551, %v534
      %v553 = vpop.permute.xlu0 %552
      %555 = vmatprep.subr.mxu0 0.0
      %556 = vmatpush1.msra.mxu0 %v258
      %557 = vmatprep.subr.mxu0 0.0
      %558 = vmatpush1.msra.mxu0 %v257
      %559 = vmatprep.subr.mxu0 0.0
      %560 = vmatpush1.msra.mxu0 %v256
      %561 = vmatprep.subr.mxu0 0.0
      %562 = vmatpush1.msra.mxu0 %v255
      %563 = vmatprep.subr.mxu0 0.0
      %564 = vmatpush1.msra.mxu0 %v254
      %565 = vmatprep.subr.mxu0 0.0
      %566 = vmatpush1.msra.mxu0 %v253
      %567 = vmatprep.subr.mxu0 0.0
      %568 = vmatpush1.msra.mxu0 %v252
      %569 = vmatprep.subr.mxu0 0.0
      %570 = vmatpush1.msra.mxu0 %v251
      %571 = vmatprep.subr.mxu0 0.0
      %572 = vmatpush1.msra.mxu0 %v250
      %573 = vmatprep.subr.mxu0 0.0
      %574 = vmatpush1.msra.mxu0 %v249
      %575 = vmatprep.subr.mxu0 0.0
      %576 = vmatpush1.msra.mxu0 %v248
      %577 = vmatprep.subr.mxu0 0.0
      %578 = vmatpush1.msra.mxu0 %v247
      %579 = vmatprep.subr.mxu0 0.0
      %580 = vmatpush1.msra.mxu0 %v246
      %581 = vmatprep.subr.mxu0 0.0
      %582 = vmatpush1.msra.mxu0 %v245
      %583 = vmatprep.subr.mxu0 0.0
      %584 = vmatpush1.msra.mxu0 %v244
      %585 = vmatprep.subr.mxu0 0.0
      %586 = vmatpush1.msra.mxu0 %v243
      %587 = vmatprep.subr.mxu0 0.0
      %588 = vmatpush2.msra.mxu0 %v274
      %589 = vmatprep.subr.mxu0 0.0
      %590 = vmatpush2.msra.mxu0 %v273
      %591 = vmatprep.subr.mxu0 0.0
      %592 = vmatpush2.msra.mxu0 %v272
      %593 = vmatprep.subr.mxu0 0.0
      %594 = vmatpush2.msra.mxu0 %v271
      %595 = vmatprep.subr.mxu0 0.0
      %596 = vmatpush2.msra.mxu0 %v270
      %597 = vmatprep.subr.mxu0 0.0
      %598 = vmatpush2.msra.mxu0 %v269
      %599 = vmatprep.subr.mxu0 0.0
      %600 = vmatpush2.msra.mxu0 %v268
      %601 = vmatprep.subr.mxu0 0.0
      %602 = vmatpush2.msra.mxu0 %v267
      %603 = vmatprep.subr.mxu0 0.0
      %604 = vmatpush2.msra.mxu0 %v266
      %605 = vmatprep.subr.mxu0 0.0
      %606 = vmatpush2.msra.mxu0 %v265
      %607 = vmatprep.subr.mxu0 0.0
      %608 = vmatpush2.msra.mxu0 %v264
      %609 = vmatprep.subr.mxu0 0.0
      %610 = vmatpush2.msra.mxu0 %v263
      %611 = vmatprep.subr.mxu0 0.0
      %612 = vmatpush2.msra.mxu0 %v262
      %613 = vmatprep.subr.mxu0 0.0
      %614 = vmatpush2.msra.mxu0 %v261
      %615 = vmatprep.subr.mxu0 0.0
      %616 = vmatpush2.msra.mxu0 %v260
      %617 = vmatprep.subr.mxu0 0.0
      %618 = vmatpush2.msra.mxu0 %v259
      %619 = vmatprep.mubr.f32.mxu0 %v172
      %620 = vmatmul.mubr.f32.gmra.mxu0 %v171
      %v621 = vpop.f32.mrf.mxu0
      %v622 = vadd.f32 %v538, %v621
      %v623 = vpop.f32.mrf.mxu0
      %624 = vmatprep.mubr.f32.mxu0 %v190
      %625 = vmatmul.mubr.f32.gmra.mxu0 %v189
      %v626 = vpop.f32.mrf.mxu0
      %v627 = vadd.f32 %v543, %v626
      %v628 = vpop.f32.mrf.mxu0
      %629 = vmatprep.mubr.f32.mxu0 %v208
      %630 = vmatmul.mubr.f32.gmra.mxu0 %v207
      %v631 = vpop.f32.mrf.mxu0
      %v632 = vadd.f32 %v548, %v631
      %v633 = vpop.f32.mrf.mxu0
      %634 = vmatprep.mubr.f32.mxu0 %v226
      %635 = vmatmul.mubr.f32.gmra.mxu0 %v225
      %v636 = vpop.f32.mrf.mxu0
      %v637 = vadd.f32 %v553, %v636
      %v638 = vpop.f32.mrf.mxu0
      %639 = vdwg.mxu0
      %640 = vmatprep.subr.mxu0 0.0
      %641 = vmatpush1.msra.mxu0 %v290
      %642 = vmatprep.subr.mxu0 0.0
      %643 = vmatpush1.msra.mxu0 %v289
      %644 = vmatprep.subr.mxu0 0.0
      %645 = vmatpush1.msra.mxu0 %v288
      %646 = vmatprep.subr.mxu0 0.0
      %647 = vmatpush1.msra.mxu0 %v287
      %648 = vmatprep.subr.mxu0 0.0
      %649 = vmatpush1.msra.mxu0 %v286
      %650 = vmatprep.subr.mxu0 0.0
      %651 = vmatpush1.msra.mxu0 %v285
      %652 = vmatprep.subr.mxu0 0.0
      %653 = vmatpush1.msra.mxu0 %v284
      %654 = vmatprep.subr.mxu0 0.0
      %655 = vmatpush1.msra.mxu0 %v283
      %656 = vmatprep.subr.mxu0 0.0
      %657 = vmatpush1.msra.mxu0 %v282
      %658 = vmatprep.subr.mxu0 0.0
      %659 = vmatpush1.msra.mxu0 %v281
      %660 = vmatprep.subr.mxu0 0.0
      %661 = vmatpush1.msra.mxu0 %v280
      %662 = vmatprep.subr.mxu0 0.0
      %663 = vmatpush1.msra.mxu0 %v279
      %664 = vmatprep.subr.mxu0 0.0
      %665 = vmatpush1.msra.mxu0 %v278
      %666 = vmatprep.subr.mxu0 0.0
      %667 = vmatpush1.msra.mxu0 %v277
      %668 = vmatprep.subr.mxu0 0.0
      %669 = vmatpush1.msra.mxu0 %v276
      %670 = vmatprep.subr.mxu0 0.0
      %671 = vmatpush1.msra.mxu0 %v275
      %672 = vmatprep.subr.mxu0 0.0
      %673 = vmatpush2.msra.mxu0 %v306
      %674 = vmatprep.subr.mxu0 0.0
      %675 = vmatpush2.msra.mxu0 %v305
      %676 = vmatprep.subr.mxu0 0.0
      %677 = vmatpush2.msra.mxu0 %v304
      %678 = vmatprep.subr.mxu0 0.0
      %679 = vmatpush2.msra.mxu0 %v303
      %680 = vmatprep.subr.mxu0 0.0
      %681 = vmatpush2.msra.mxu0 %v302
      %682 = vmatprep.subr.mxu0 0.0
      %683 = vmatpush2.msra.mxu0 %v301
      %684 = vmatprep.subr.mxu0 0.0
      %685 = vmatpush2.msra.mxu0 %v300
      %686 = vmatprep.subr.mxu0 0.0
      %687 = vmatpush2.msra.mxu0 %v299
      %688 = vmatprep.subr.mxu0 0.0
      %689 = vmatpush2.msra.mxu0 %v298
      %690 = vmatprep.subr.mxu0 0.0
      %691 = vmatpush2.msra.mxu0 %v297
      %692 = vmatprep.subr.mxu0 0.0
      %693 = vmatpush2.msra.mxu0 %v296
      %694 = vmatprep.subr.mxu0 0.0
      %695 = vmatpush2.msra.mxu0 %v295
      %696 = vmatprep.subr.mxu0 0.0
      %697 = vmatpush2.msra.mxu0 %v294
      %698 = vmatprep.subr.mxu0 0.0
      %699 = vmatpush2.msra.mxu0 %v293
      %700 = vmatprep.subr.mxu0 0.0
      %701 = vmatpush2.msra.mxu0 %v292
      %702 = vmatprep.subr.mxu0 0.0
      %703 = vmatpush2.msra.mxu0 %v291
      %704 = vmatprep.mubr.f32.mxu0 %v174
      %705 = vmatmul.mubr.f32.gmra.mxu0 %v173
      %v706 = vpop.f32.mrf.mxu0
      %v707 = vadd.f32 %v622, %v706
      %v708 = vpop.f32.mrf.mxu0
      %709 = vmatprep.mubr.f32.mxu0 %v192
      %710 = vmatmul.mubr.f32.gmra.mxu0 %v191
      %v711 = vpop.f32.mrf.mxu0
      %v712 = vadd.f32 %v627, %v711
      %v713 = vpop.f32.mrf.mxu0
      %714 = vmatprep.mubr.f32.mxu0 %v210
      %715 = vmatmul.mubr.f32.gmra.mxu0 %v209
      %v716 = vpop.f32.mrf.mxu0
      %v717 = vadd.f32 %v632, %v716
      %v718 = vpop.f32.mrf.mxu0
      %719 = vmatprep.mubr.f32.mxu0 %v228
      %720 = vmatmul.mubr.f32.gmra.mxu0 %v227
      %v721 = vpop.f32.mrf.mxu0
      %v722 = vadd.f32 %v637, %v721
      %v723 = vpop.f32.mrf.mxu0
      %724 = vdwg.mxu0
      %725 = vmatprep.subr.mxu0 0.0
      %726 = vmatpush1.msra.mxu0 %v322
      %727 = vmatprep.subr.mxu0 0.0
      %728 = vmatpush1.msra.mxu0 %v321
      %729 = vmatprep.subr.mxu0 0.0
      %730 = vmatpush1.msra.mxu0 %v320
      %731 = vmatprep.subr.mxu0 0.0
      %732 = vmatpush1.msra.mxu0 %v319
      %733 = vmatprep.subr.mxu0 0.0
      %734 = vmatpush1.msra.mxu0 %v318
      %735 = vmatprep.subr.mxu0 0.0
      %736 = vmatpush1.msra.mxu0 %v317
      %737 = vmatprep.subr.mxu0 0.0
      %738 = vmatpush1.msra.mxu0 %v316
      %739 = vmatprep.subr.mxu0 0.0
      %740 = vmatpush1.msra.mxu0 %v315
      %741 = vmatprep.subr.mxu0 0.0
      %742 = vmatpush1.msra.mxu0 %v314
      %743 = vmatprep.subr.mxu0 0.0
      %744 = vmatpush1.msra.mxu0 %v313
      %745 = vmatprep.subr.mxu0 0.0
      %746 = vmatpush1.msra.mxu0 %v312
      %747 = vmatprep.subr.mxu0 0.0
      %748 = vmatpush1.msra.mxu0 %v311
      %749 = vmatprep.subr.mxu0 0.0
      %750 = vmatpush1.msra.mxu0 %v310
      %751 = vmatprep.subr.mxu0 0.0
      %752 = vmatpush1.msra.mxu0 %v309
      %753 = vmatprep.subr.mxu0 0.0
      %754 = vmatpush1.msra.mxu0 %v308
      %755 = vmatprep.subr.mxu0 0.0
      %756 = vmatpush1.msra.mxu0 %v307
      %757 = vmatprep.subr.mxu0 0.0
      %758 = vmatpush2.msra.mxu0 %v338
      %759 = vmatprep.subr.mxu0 0.0
      %760 = vmatpush2.msra.mxu0 %v337
      %761 = vmatprep.subr.mxu0 0.0
      %762 = vmatpush2.msra.mxu0 %v336
      %763 = vmatprep.subr.mxu0 0.0
      %764 = vmatpush2.msra.mxu0 %v335
      %765 = vmatprep.subr.mxu0 0.0
      %766 = vmatpush2.msra.mxu0 %v334
      %767 = vmatprep.subr.mxu0 0.0
      %768 = vmatpush2.msra.mxu0 %v333
      %769 = vmatprep.subr.mxu0 0.0
      %770 = vmatpush2.msra.mxu0 %v332
      %771 = vmatprep.subr.mxu0 0.0
      %772 = vmatpush2.msra.mxu0 %v331
      %773 = vmatprep.subr.mxu0 0.0
      %774 = vmatpush2.msra.mxu0 %v330
      %775 = vmatprep.subr.mxu0 0.0
      %776 = vmatpush2.msra.mxu0 %v329
      %777 = vmatprep.subr.mxu0 0.0
      %778 = vmatpush2.msra.mxu0 %v328
      %779 = vmatprep.subr.mxu0 0.0
      %780 = vmatpush2.msra.mxu0 %v327
      %781 = vmatprep.subr.mxu0 0.0
      %782 = vmatpush2.msra.mxu0 %v326
      %783 = vmatprep.subr.mxu0 0.0
      %784 = vmatpush2.msra.mxu0 %v325
      %785 = vmatprep.subr.mxu0 0.0
      %786 = vmatpush2.msra.mxu0 %v324
      %787 = vmatprep.subr.mxu0 0.0
      %788 = vmatpush2.msra.mxu0 %v323
      %789 = vmatprep.mubr.f32.mxu0 %v176
      %790 = vmatmul.mubr.f32.gmra.mxu0 %v175
      %v791 = vpop.f32.mrf.mxu0
      %v792 = vadd.f32 %v707, %v791
      %v793 = vpop.f32.mrf.mxu0
      %794 = vmatprep.mubr.f32.mxu0 %v194
      %795 = vmatmul.mubr.f32.gmra.mxu0 %v193
      %v796 = vpop.f32.mrf.mxu0
      %v797 = vadd.f32 %v712, %v796
      %v798 = vpop.f32.mrf.mxu0
      %799 = vmatprep.mubr.f32.mxu0 %v212
      %800 = vmatmul.mubr.f32.gmra.mxu0 %v211
      %v801 = vpop.f32.mrf.mxu0
      %v802 = vadd.f32 %v717, %v801
      %v803 = vpop.f32.mrf.mxu0
      %804 = vmatprep.mubr.f32.mxu0 %v230
      %805 = vmatmul.mubr.f32.gmra.mxu0 %v229
      %v806 = vpop.f32.mrf.mxu0
      %v807 = vadd.f32 %v722, %v806
      %v808 = vpop.f32.mrf.mxu0
      %809 = vdwg.mxu0
      %810 = vmatprep.subr.mxu0 0.0
      %811 = vmatpush1.msra.mxu0 %v354
      %812 = vmatprep.subr.mxu0 0.0
      %813 = vmatpush1.msra.mxu0 %v353
      %814 = vmatprep.subr.mxu0 0.0
      %815 = vmatpush1.msra.mxu0 %v352
      %816 = vmatprep.subr.mxu0 0.0
      %817 = vmatpush1.msra.mxu0 %v351
      %818 = vmatprep.subr.mxu0 0.0
      %819 = vmatpush1.msra.mxu0 %v350
      %820 = vmatprep.subr.mxu0 0.0
      %821 = vmatpush1.msra.mxu0 %v349
      %822 = vmatprep.subr.mxu0 0.0
      %823 = vmatpush1.msra.mxu0 %v348
      %824 = vmatprep.subr.mxu0 0.0
      %825 = vmatpush1.msra.mxu0 %v347
      %826 = vmatprep.subr.mxu0 0.0
      %827 = vmatpush1.msra.mxu0 %v346
      %828 = vmatprep.subr.mxu0 0.0
      %829 = vmatpush1.msra.mxu0 %v345
      %830 = vmatprep.subr.mxu0 0.0
      %831 = vmatpush1.msra.mxu0 %v344
      %832 = vmatprep.subr.mxu0 0.0
      %833 = vmatpush1.msra.mxu0 %v343
      %834 = vmatprep.subr.mxu0 0.0
      %835 = vmatpush1.msra.mxu0 %v342
      %836 = vmatprep.subr.mxu0 0.0
      %837 = vmatpush1.msra.mxu0 %v341
      %838 = vmatprep.subr.mxu0 0.0
      %839 = vmatpush1.msra.mxu0 %v340
      %840 = vmatprep.subr.mxu0 0.0
      %841 = vmatpush1.msra.mxu0 %v339
      %842 = vmatprep.subr.mxu0 0.0
      %843 = vmatpush2.msra.mxu0 %v370
      %844 = vmatprep.subr.mxu0 0.0
      %845 = vmatpush2.msra.mxu0 %v369
      %846 = vmatprep.subr.mxu0 0.0
      %847 = vmatpush2.msra.mxu0 %v368
      %848 = vmatprep.subr.mxu0 0.0
      %849 = vmatpush2.msra.mxu0 %v367
      %850 = vmatprep.subr.mxu0 0.0
      %851 = vmatpush2.msra.mxu0 %v366
      %852 = vmatprep.subr.mxu0 0.0
      %853 = vmatpush2.msra.mxu0 %v365
      %854 = vmatprep.subr.mxu0 0.0
      %855 = vmatpush2.msra.mxu0 %v364
      %856 = vmatprep.subr.mxu0 0.0
      %857 = vmatpush2.msra.mxu0 %v363
      %858 = vmatprep.subr.mxu0 0.0
      %859 = vmatpush2.msra.mxu0 %v362
      %860 = vmatprep.subr.mxu0 0.0
      %861 = vmatpush2.msra.mxu0 %v361
      %862 = vmatprep.subr.mxu0 0.0
      %863 = vmatpush2.msra.mxu0 %v360
      %864 = vmatprep.subr.mxu0 0.0
      %865 = vmatpush2.msra.mxu0 %v359
      %866 = vmatprep.subr.mxu0 0.0
      %867 = vmatpush2.msra.mxu0 %v358
      %868 = vmatprep.subr.mxu0 0.0
      %869 = vmatpush2.msra.mxu0 %v357
      %870 = vmatprep.subr.mxu0 0.0
      %871 = vmatpush2.msra.mxu0 %v356
      %872 = vmatprep.subr.mxu0 0.0
      %873 = vmatpush2.msra.mxu0 %v355
      %874 = vmatprep.mubr.f32.mxu0 %v178
      %875 = vmatmul.mubr.f32.gmra.mxu0 %v177
      %v876 = vpop.f32.mrf.mxu0
      %v877 = vadd.f32 %v792, %v876
      %v878 = vpop.f32.mrf.mxu0
      %879 = vmatprep.mubr.f32.mxu0 %v196
      %880 = vmatmul.mubr.f32.gmra.mxu0 %v195
      %v881 = vpop.f32.mrf.mxu0
      %v882 = vadd.f32 %v797, %v881
      %v883 = vpop.f32.mrf.mxu0
      %884 = vmatprep.mubr.f32.mxu0 %v214
      %885 = vmatmul.mubr.f32.gmra.mxu0 %v213
      %v886 = vpop.f32.mrf.mxu0
      %v887 = vadd.f32 %v802, %v886
      %v888 = vpop.f32.mrf.mxu0
      %889 = vmatprep.mubr.f32.mxu0 %v232
      %890 = vmatmul.mubr.f32.gmra.mxu0 %v231
      %v891 = vpop.f32.mrf.mxu0
      %v892 = vadd.f32 %v807, %v891
      %v893 = vpop.f32.mrf.mxu0
      %894 = vdwg.mxu0
      %895 = vmatprep.subr.mxu0 0.0
      %896 = vmatpush1.msra.mxu0 %v386
      %897 = vmatprep.subr.mxu0 0.0
      %898 = vmatpush1.msra.mxu0 %v385
      %899 = vmatprep.subr.mxu0 0.0
      %900 = vmatpush1.msra.mxu0 %v384
      %901 = vmatprep.subr.mxu0 0.0
      %902 = vmatpush1.msra.mxu0 %v383
      %903 = vmatprep.subr.mxu0 0.0
      %904 = vmatpush1.msra.mxu0 %v382
      %905 = vmatprep.subr.mxu0 0.0
      %906 = vmatpush1.msra.mxu0 %v381
      %907 = vmatprep.subr.mxu0 0.0
      %908 = vmatpush1.msra.mxu0 %v380
      %909 = vmatprep.subr.mxu0 0.0
      %910 = vmatpush1.msra.mxu0 %v379
      %911 = vmatprep.subr.mxu0 0.0
      %912 = vmatpush1.msra.mxu0 %v378
      %913 = vmatprep.subr.mxu0 0.0
      %914 = vmatpush1.msra.mxu0 %v377
      %915 = vmatprep.subr.mxu0 0.0
      %916 = vmatpush1.msra.mxu0 %v376
      %917 = vmatprep.subr.mxu0 0.0
      %918 = vmatpush1.msra.mxu0 %v375
      %919 = vmatprep.subr.mxu0 0.0
      %920 = vmatpush1.msra.mxu0 %v374
      %921 = vmatprep.subr.mxu0 0.0
      %922 = vmatpush1.msra.mxu0 %v373
      %923 = vmatprep.subr.mxu0 0.0
      %924 = vmatpush1.msra.mxu0 %v372
      %925 = vmatprep.subr.mxu0 0.0
      %926 = vmatpush1.msra.mxu0 %v371
      %927 = vmatprep.subr.mxu0 0.0
      %928 = vmatpush2.msra.mxu0 %v402
      %929 = vmatprep.subr.mxu0 0.0
      %930 = vmatpush2.msra.mxu0 %v401
      %931 = vmatprep.subr.mxu0 0.0
      %932 = vmatpush2.msra.mxu0 %v400
      %933 = vmatprep.subr.mxu0 0.0
      %934 = vmatpush2.msra.mxu0 %v399
      %935 = vmatprep.subr.mxu0 0.0
      %936 = vmatpush2.msra.mxu0 %v398
      %937 = vmatprep.subr.mxu0 0.0
      %938 = vmatpush2.msra.mxu0 %v397
      %939 = vmatprep.subr.mxu0 0.0
      %940 = vmatpush2.msra.mxu0 %v396
      %941 = vmatprep.subr.mxu0 0.0
      %942 = vmatpush2.msra.mxu0 %v395
      %943 = vmatprep.subr.mxu0 0.0
      %944 = vmatpush2.msra.mxu0 %v394
      %945 = vmatprep.subr.mxu0 0.0
      %946 = vmatpush2.msra.mxu0 %v393
      %947 = vmatprep.subr.mxu0 0.0
      %948 = vmatpush2.msra.mxu0 %v392
      %949 = vmatprep.subr.mxu0 0.0
      %950 = vmatpush2.msra.mxu0 %v391
      %951 = vmatprep.subr.mxu0 0.0
      %952 = vmatpush2.msra.mxu0 %v390
      %953 = vmatprep.subr.mxu0 0.0
      %954 = vmatpush2.msra.mxu0 %v389
      %955 = vmatprep.subr.mxu0 0.0
      %956 = vmatpush2.msra.mxu0 %v388
      %957 = vmatprep.subr.mxu0 0.0
      %958 = vmatpush2.msra.mxu0 %v387
      %959 = vmatprep.mubr.f32.mxu0 %v180
      %960 = vmatmul.mubr.f32.gmra.mxu0 %v179
      %v961 = vpop.f32.mrf.mxu0
      %v962 = vadd.f32 %v877, %v961
      %v963 = vpop.f32.mrf.mxu0
      %964 = vmatprep.mubr.f32.mxu0 %v198
      %965 = vmatmul.mubr.f32.gmra.mxu0 %v197
      %v966 = vpop.f32.mrf.mxu0
      %v967 = vadd.f32 %v882, %v966
      %v968 = vpop.f32.mrf.mxu0
      %969 = vmatprep.mubr.f32.mxu0 %v216
      %970 = vmatmul.mubr.f32.gmra.mxu0 %v215
      %v971 = vpop.f32.mrf.mxu0
      %v972 = vadd.f32 %v887, %v971
      %v973 = vpop.f32.mrf.mxu0
      %974 = vmatprep.mubr.f32.mxu0 %v234
      %975 = vmatmul.mubr.f32.gmra.mxu0 %v233
      %v976 = vpop.f32.mrf.mxu0
      %v977 = vadd.f32 %v892, %v976
      %v978 = vpop.f32.mrf.mxu0
      %979 = vdwg.mxu0
      %980 = vmatprep.subr.mxu0 0.0
      %981 = vmatpush1.msra.mxu0 %v418
      %982 = vmatprep.subr.mxu0 0.0
      %983 = vmatpush1.msra.mxu0 %v417
      %984 = vmatprep.subr.mxu0 0.0
      %985 = vmatpush1.msra.mxu0 %v416
      %986 = vmatprep.subr.mxu0 0.0
      %987 = vmatpush1.msra.mxu0 %v415
      %988 = vmatprep.subr.mxu0 0.0
      %989 = vmatpush1.msra.mxu0 %v414
      %990 = vmatprep.subr.mxu0 0.0
      %991 = vmatpush1.msra.mxu0 %v413
      %992 = vmatprep.subr.mxu0 0.0
      %993 = vmatpush1.msra.mxu0 %v412
      %994 = vmatprep.subr.mxu0 0.0
      %995 = vmatpush1.msra.mxu0 %v411
      %996 = vmatprep.subr.mxu0 0.0
      %997 = vmatpush1.msra.mxu0 %v410
      %998 = vmatprep.subr.mxu0 0.0
      %999 = vmatpush1.msra.mxu0 %v409
      %1000 = vmatprep.subr.mxu0 0.0
      %1001 = vmatpush1.msra.mxu0 %v408
      %1002 = vmatprep.subr.mxu0 0.0
      %1003 = vmatpush1.msra.mxu0 %v407
      %1004 = vmatprep.subr.mxu0 0.0
      %1005 = vmatpush1.msra.mxu0 %v406
      %1006 = vmatprep.subr.mxu0 0.0
      %1007 = vmatpush1.msra.mxu0 %v405
      %1008 = vmatprep.subr.mxu0 0.0
      %1009 = vmatpush1.msra.mxu0 %v404
      %1010 = vmatprep.subr.mxu0 0.0
      %1011 = vmatpush1.msra.mxu0 %v403
      %1012 = vmatprep.subr.mxu0 0.0
      %1013 = vmatpush2.msra.mxu0 %v434
      %1014 = vmatprep.subr.mxu0 0.0
      %1015 = vmatpush2.msra.mxu0 %v433
      %1016 = vmatprep.subr.mxu0 0.0
      %1017 = vmatpush2.msra.mxu0 %v432
      %1018 = vmatprep.subr.mxu0 0.0
      %1019 = vmatpush2.msra.mxu0 %v431
      %1020 = vmatprep.subr.mxu0 0.0
      %1021 = vmatpush2.msra.mxu0 %v430
      %1022 = vmatprep.subr.mxu0 0.0
      %1023 = vmatpush2.msra.mxu0 %v429
      %1024 = vmatprep.subr.mxu0 0.0
      %1025 = vmatpush2.msra.mxu0 %v428
      %1026 = vmatprep.subr.mxu0 0.0
      %1027 = vmatpush2.msra.mxu0 %v427
      %1028 = vmatprep.subr.mxu0 0.0
      %1029 = vmatpush2.msra.mxu0 %v426
      %1030 = vmatprep.subr.mxu0 0.0
      %1031 = vmatpush2.msra.mxu0 %v425
      %1032 = vmatprep.subr.mxu0 0.0
      %1033 = vmatpush2.msra.mxu0 %v424
      %1034 = vmatprep.subr.mxu0 0.0
      %1035 = vmatpush2.msra.mxu0 %v423
      %1036 = vmatprep.subr.mxu0 0.0
      %1037 = vmatpush2.msra.mxu0 %v422
      %1038 = vmatprep.subr.mxu0 0.0
      %1039 = vmatpush2.msra.mxu0 %v421
      %1040 = vmatprep.subr.mxu0 0.0
      %1041 = vmatpush2.msra.mxu0 %v420
      %1042 = vmatprep.subr.mxu0 0.0
      %1043 = vmatpush2.msra.mxu0 %v419
      %1044 = vmatprep.mubr.f32.mxu0 %v182
      %1045 = vmatmul.mubr.f32.gmra.mxu0 %v181
      %v1046 = vpop.f32.mrf.mxu0
      %v1047 = vadd.f32 %v962, %v1046
      %v1048 = vpop.f32.mrf.mxu0
      %1049 = vmatprep.mubr.f32.mxu0 %v200
      %1050 = vmatmul.mubr.f32.gmra.mxu0 %v199
      %v1051 = vpop.f32.mrf.mxu0
      %v1052 = vadd.f32 %v967, %v1051
      %v1053 = vpop.f32.mrf.mxu0
      %1054 = vmatprep.mubr.f32.mxu0 %v218
      %1055 = vmatmul.mubr.f32.gmra.mxu0 %v217
      %v1056 = vpop.f32.mrf.mxu0
      %v1057 = vadd.f32 %v972, %v1056
      %v1058 = vpop.f32.mrf.mxu0
      %1059 = vmatprep.mubr.f32.mxu0 %v236
      %1060 = vmatmul.mubr.f32.gmra.mxu0 %v235
      %v1061 = vpop.f32.mrf.mxu0
      %v1062 = vadd.f32 %v977, %v1061
      %v1063 = vpop.f32.mrf.mxu0
      %1064 = vdwg.mxu0
      %1065 = vmatprep.subr.mxu0 0.0
      %1066 = vmatpush1.msra.mxu0 %v450
      %1067 = vmatprep.subr.mxu0 0.0
      %1068 = vmatpush1.msra.mxu0 %v449
      %1069 = vmatprep.subr.mxu0 0.0
      %1070 = vmatpush1.msra.mxu0 %v448
      %1071 = vmatprep.subr.mxu0 0.0
      %1072 = vmatpush1.msra.mxu0 %v447
      %1073 = vmatprep.subr.mxu0 0.0
      %1074 = vmatpush1.msra.mxu0 %v446
      %1075 = vmatprep.subr.mxu0 0.0
      %1076 = vmatpush1.msra.mxu0 %v445
      %1077 = vmatprep.subr.mxu0 0.0
      %1078 = vmatpush1.msra.mxu0 %v444
      %1079 = vmatprep.subr.mxu0 0.0
      %1080 = vmatpush1.msra.mxu0 %v443
      %1081 = vmatprep.subr.mxu0 0.0
      %1082 = vmatpush1.msra.mxu0 %v442
      %1083 = vmatprep.subr.mxu0 0.0
      %1084 = vmatpush1.msra.mxu0 %v441
      %1085 = vmatprep.subr.mxu0 0.0
      %1086 = vmatpush1.msra.mxu0 %v440
      %1087 = vmatprep.subr.mxu0 0.0
      %1088 = vmatpush1.msra.mxu0 %v439
      %1089 = vmatprep.subr.mxu0 0.0
      %1090 = vmatpush1.msra.mxu0 %v438
      %1091 = vmatprep.subr.mxu0 0.0
      %1092 = vmatpush1.msra.mxu0 %v437
      %1093 = vmatprep.subr.mxu0 0.0
      %1094 = vmatpush1.msra.mxu0 %v436
      %1095 = vmatprep.subr.mxu0 0.0
      %1096 = vmatpush1.msra.mxu0 %v435
      %1097 = vmatprep.subr.mxu0 0.0
      %1098 = vmatpush2.msra.mxu0 %v466
      %1099 = vmatprep.subr.mxu0 0.0
      %1100 = vmatpush2.msra.mxu0 %v465
      %1101 = vmatprep.subr.mxu0 0.0
      %1102 = vmatpush2.msra.mxu0 %v464
      %1103 = vmatprep.subr.mxu0 0.0
      %1104 = vmatpush2.msra.mxu0 %v463
      %1105 = vmatprep.subr.mxu0 0.0
      %1106 = vmatpush2.msra.mxu0 %v462
      %1107 = vmatprep.subr.mxu0 0.0
      %1108 = vmatpush2.msra.mxu0 %v461
      %1109 = vmatprep.subr.mxu0 0.0
      %1110 = vmatpush2.msra.mxu0 %v460
      %1111 = vmatprep.subr.mxu0 0.0
      %1112 = vmatpush2.msra.mxu0 %v459
      %1113 = vmatprep.subr.mxu0 0.0
      %1114 = vmatpush2.msra.mxu0 %v458
      %1115 = vmatprep.subr.mxu0 0.0
      %1116 = vmatpush2.msra.mxu0 %v457
      %1117 = vmatprep.subr.mxu0 0.0
      %1118 = vmatpush2.msra.mxu0 %v456
      %1119 = vmatprep.subr.mxu0 0.0
      %1120 = vmatpush2.msra.mxu0 %v455
      %1121 = vmatprep.subr.mxu0 0.0
      %1122 = vmatpush2.msra.mxu0 %v454
      %1123 = vmatprep.subr.mxu0 0.0
      %1124 = vmatpush2.msra.mxu0 %v453
      %1125 = vmatprep.subr.mxu0 0.0
      %1126 = vmatpush2.msra.mxu0 %v452
      %1127 = vmatprep.subr.mxu0 0.0
      %1128 = vmatpush2.msra.mxu0 %v451
      %1129 = vmatprep.mubr.f32.mxu0 %v184
      %1130 = vmatmul.mubr.f32.gmra.mxu0 %v183
      %v1131 = vpop.f32.mrf.mxu0
      %v1132 = vadd.f32 %v1047, %v1131
      %v1133 = vpop.f32.mrf.mxu0
      %1134 = vmatprep.mubr.f32.mxu0 %v202
      %1135 = vmatmul.mubr.f32.gmra.mxu0 %v201
      %v1136 = vpop.f32.mrf.mxu0
      %v1137 = vadd.f32 %v1052, %v1136
      %v1138 = vpop.f32.mrf.mxu0
      %1139 = vmatprep.mubr.f32.mxu0 %v220
      %1140 = vmatmul.mubr.f32.gmra.mxu0 %v219
      %v1141 = vpop.f32.mrf.mxu0
      %v1142 = vadd.f32 %v1057, %v1141
      %v1143 = vpop.f32.mrf.mxu0
      %1144 = vmatprep.mubr.f32.mxu0 %v238
      %1145 = vmatmul.mubr.f32.gmra.mxu0 %v237
      %v1146 = vpop.f32.mrf.mxu0
      %v1147 = vadd.f32 %v1062, %v1146
      %v1148 = vpop.f32.mrf.mxu0
      %1149 = vdwg.mxu0
      %1150 = vmatprep.subr.mxu0 0.0
      %1151 = vmatpush1.msra.mxu0 %v482
      %1152 = vmatprep.subr.mxu0 0.0
      %1153 = vmatpush1.msra.mxu0 %v481
      %1154 = vmatprep.subr.mxu0 0.0
      %1155 = vmatpush1.msra.mxu0 %v480
      %1156 = vmatprep.subr.mxu0 0.0
      %1157 = vmatpush1.msra.mxu0 %v479
      %1158 = vmatprep.subr.mxu0 0.0
      %1159 = vmatpush1.msra.mxu0 %v478
      %1160 = vmatprep.subr.mxu0 0.0
      %1161 = vmatpush1.msra.mxu0 %v477
      %1162 = vmatprep.subr.mxu0 0.0
      %1163 = vmatpush1.msra.mxu0 %v476
      %1164 = vmatprep.subr.mxu0 0.0
      %1165 = vmatpush1.msra.mxu0 %v475
      %1166 = vmatprep.subr.mxu0 0.0
      %1167 = vmatpush1.msra.mxu0 %v474
      %1168 = vmatprep.subr.mxu0 0.0
      %1169 = vmatpush1.msra.mxu0 %v473
      %1170 = vmatprep.subr.mxu0 0.0
      %1171 = vmatpush1.msra.mxu0 %v472
      %1172 = vmatprep.subr.mxu0 0.0
      %1173 = vmatpush1.msra.mxu0 %v471
      %1174 = vmatprep.subr.mxu0 0.0
      %1175 = vmatpush1.msra.mxu0 %v470
      %1176 = vmatprep.subr.mxu0 0.0
      %1177 = vmatpush1.msra.mxu0 %v469
      %1178 = vmatprep.subr.mxu0 0.0
      %1179 = vmatpush1.msra.mxu0 %v468
      %1180 = vmatprep.subr.mxu0 0.0
      %1181 = vmatpush1.msra.mxu0 %v467
      %1182 = vmatprep.subr.mxu0 0.0
      %1183 = vmatpush2.msra.mxu0 %v498
      %1184 = vmatprep.subr.mxu0 0.0
      %1185 = vmatpush2.msra.mxu0 %v497
      %1186 = vmatprep.subr.mxu0 0.0
      %1187 = vmatpush2.msra.mxu0 %v496
      %1188 = vmatprep.subr.mxu0 0.0
      %1189 = vmatpush2.msra.mxu0 %v495
      %1190 = vmatprep.subr.mxu0 0.0
      %1191 = vmatpush2.msra.mxu0 %v494
      %1192 = vmatprep.subr.mxu0 0.0
      %1193 = vmatpush2.msra.mxu0 %v493
      %1194 = vmatprep.subr.mxu0 0.0
      %1195 = vmatpush2.msra.mxu0 %v492
      %1196 = vmatprep.subr.mxu0 0.0
      %1197 = vmatpush2.msra.mxu0 %v491
      %1198 = vmatprep.subr.mxu0 0.0
      %1199 = vmatpush2.msra.mxu0 %v490
      %1200 = vmatprep.subr.mxu0 0.0
      %1201 = vmatpush2.msra.mxu0 %v489
      %1202 = vmatprep.subr.mxu0 0.0
      %1203 = vmatpush2.msra.mxu0 %v488
      %1204 = vmatprep.subr.mxu0 0.0
      %1205 = vmatpush2.msra.mxu0 %v487
      %1206 = vmatprep.subr.mxu0 0.0
      %1207 = vmatpush2.msra.mxu0 %v486
      %1208 = vmatprep.subr.mxu0 0.0
      %1209 = vmatpush2.msra.mxu0 %v485
      %1210 = vmatprep.subr.mxu0 0.0
      %1211 = vmatpush2.msra.mxu0 %v484
      %1212 = vmatprep.subr.mxu0 0.0
      %1213 = vmatpush2.msra.mxu0 %v483
      %1214 = vmatprep.mubr.f32.mxu0 %v186
      %1215 = vmatmul.mubr.f32.gmra.mxu0 %v185
      %v1216 = vpop.f32.mrf.mxu0
      %v1217 = vadd.f32 %v1132, %v1216
      %v1218 = vpop.f32.mrf.mxu0
      %1219 = vmatprep.mubr.f32.mxu0 %v204
      %1220 = vmatmul.mubr.f32.gmra.mxu0 %v203
      %v1221 = vpop.f32.mrf.mxu0
      %v1222 = vadd.f32 %v1137, %v1221
      %v1223 = vpop.f32.mrf.mxu0
      %1224 = vmatprep.mubr.f32.mxu0 %v222
      %1225 = vmatmul.mubr.f32.gmra.mxu0 %v221
      %v1226 = vpop.f32.mrf.mxu0
      %v1227 = vadd.f32 %v1142, %v1226
      %v1228 = vpop.f32.mrf.mxu0
      %1229 = vmatprep.mubr.f32.mxu0 %v240
      %1230 = vmatmul.mubr.f32.gmra.mxu0 %v239
      %v1231 = vpop.f32.mrf.mxu0
      %v1232 = vadd.f32 %v1147, %v1231
      %v1233 = vpop.f32.mrf.mxu0
      %1234 = vdwg.mxu0
      %1235 = vmatprep.subr.mxu0 0.0
      %1236 = vmatpush1.msra.mxu0 %v514
      %1237 = vmatprep.subr.mxu0 0.0
      %1238 = vmatpush1.msra.mxu0 %v513
      %1239 = vmatprep.subr.mxu0 0.0
      %1240 = vmatpush1.msra.mxu0 %v512
      %1241 = vmatprep.subr.mxu0 0.0
      %1242 = vmatpush1.msra.mxu0 %v511
      %1243 = vmatprep.subr.mxu0 0.0
      %1244 = vmatpush1.msra.mxu0 %v510
      %1245 = vmatprep.subr.mxu0 0.0
      %1246 = vmatpush1.msra.mxu0 %v509
      %1247 = vmatprep.subr.mxu0 0.0
      %1248 = vmatpush1.msra.mxu0 %v508
      %1249 = vmatprep.subr.mxu0 0.0
      %1250 = vmatpush1.msra.mxu0 %v507
      %1251 = vmatprep.subr.mxu0 0.0
      %1252 = vmatpush1.msra.mxu0 %v506
      %1253 = vmatprep.subr.mxu0 0.0
      %1254 = vmatpush1.msra.mxu0 %v505
      %1255 = vmatprep.subr.mxu0 0.0
      %1256 = vmatpush1.msra.mxu0 %v504
      %1257 = vmatprep.subr.mxu0 0.0
      %1258 = vmatpush1.msra.mxu0 %v503
      %1259 = vmatprep.subr.mxu0 0.0
      %1260 = vmatpush1.msra.mxu0 %v502
      %1261 = vmatprep.subr.mxu0 0.0
      %1262 = vmatpush1.msra.mxu0 %v501
      %1263 = vmatprep.subr.mxu0 0.0
      %1264 = vmatpush1.msra.mxu0 %v500
      %1265 = vmatprep.subr.mxu0 0.0
      %1266 = vmatpush1.msra.mxu0 %v499
      %1267 = vmatprep.subr.mxu0 0.0
      %1268 = vmatpush2.msra.mxu0 %v530
      %1269 = vmatprep.subr.mxu0 0.0
      %1270 = vmatpush2.msra.mxu0 %v529
      %1271 = vmatprep.subr.mxu0 0.0
      %1272 = vmatpush2.msra.mxu0 %v528
      %1273 = vmatprep.subr.mxu0 0.0
      %1274 = vmatpush2.msra.mxu0 %v527
      %1275 = vmatprep.subr.mxu0 0.0
      %1276 = vmatpush2.msra.mxu0 %v526
      %1277 = vmatprep.subr.mxu0 0.0
      %1278 = vmatpush2.msra.mxu0 %v525
      %1279 = vmatprep.subr.mxu0 0.0
      %1280 = vmatpush2.msra.mxu0 %v524
      %1281 = vmatprep.subr.mxu0 0.0
      %1282 = vmatpush2.msra.mxu0 %v523
      %1283 = vmatprep.subr.mxu0 0.0
      %1284 = vmatpush2.msra.mxu0 %v522
      %1285 = vmatprep.subr.mxu0 0.0
      %1286 = vmatpush2.msra.mxu0 %v521
      %1287 = vmatprep.subr.mxu0 0.0
      %1288 = vmatpush2.msra.mxu0 %v520
      %1289 = vmatprep.subr.mxu0 0.0
      %1290 = vmatpush2.msra.mxu0 %v519
      %1291 = vmatprep.subr.mxu0 0.0
      %1292 = vmatpush2.msra.mxu0 %v518
      %1293 = vmatprep.subr.mxu0 0.0
      %1294 = vmatpush2.msra.mxu0 %v517
      %1295 = vmatprep.subr.mxu0 0.0
      %1296 = vmatpush2.msra.mxu0 %v516
      %1297 = vmatprep.subr.mxu0 0.0
      %1298 = vmatpush2.msra.mxu0 %v515
      %1299 = vmatprep.mubr.f32.mxu0 %v188
      %1300 = vmatmul.mubr.f32.gmra.mxu0 %v187
      %v1301 = vpop.f32.mrf.mxu0
      %v1302 = vadd.f32 %v1217, %v1301
      %v1303 = vpop.f32.mrf.mxu0
      %1304 = vmatprep.mubr.f32.mxu0 %v206
      %1305 = vmatmul.mubr.f32.gmra.mxu0 %v205
      %v1306 = vpop.f32.mrf.mxu0
      %v1307 = vadd.f32 %v1222, %v1306
      %v1308 = vpop.f32.mrf.mxu0
      %1309 = vmatprep.mubr.f32.mxu0 %v224
      %1310 = vmatmul.mubr.f32.gmra.mxu0 %v223
      %v1311 = vpop.f32.mrf.mxu0
      %v1312 = vadd.f32 %v1227, %v1311
      %v1313 = vpop.f32.mrf.mxu0
      %1314 = vmatprep.mubr.f32.mxu0 %v242
      %1315 = vmatmul.mubr.f32.gmra.mxu0 %v241
      %v1316 = vpop.f32.mrf.mxu0
      %v1317 = vadd.f32 %v1232, %v1316
      %v1318 = vpop.f32.mrf.mxu0
      %1319 = vdwg.mxu0
      %vm1320 = vcmask 130048
      %v1321 = vsel %vm1320, %v1302, -inf
      %1322 = vmax.xlane.f32.xlu0 %v1321
      %v1323 = vpop.xlane.xlu0 %1322
      %v1324 = vsel %vm1320, %v1307, -inf
      %1325 = vmax.xlane.f32.xlu0 %v1324
      %v1326 = vpop.xlane.xlu0 %1325
      %v1327 = vsel %vm1320, %v1312, -inf
      %1328 = vmax.xlane.f32.xlu0 %v1327
      %v1329 = vpop.xlane.xlu0 %1328
      %v1330 = vsel %vm1320, %v1317, -inf
      %1331 = vmax.xlane.f32.xlu0 %v1330
      %v1332 = vpop.xlane.xlu0 %1331
      %v1333 = vmul.f32 %v1323, 0.5
      %v1334 = vmul.f32 %v1326, 0.5
      %v1335 = vmul.f32 %v1329, 0.5
      %v1336 = vmul.f32 %v1332, 0.5
      %v1337 = vmul.f32 %v1323, 0.70710677
      %v1338 = vmul.f32 %v1326, 0.70710677
      %v1339 = vmul.f32 %v1329, 0.70710677
      %v1340 = vmul.f32 %v1332, 0.70710677
      %vm1341 = vcmp.lt.f32.partialorder %v1337, 0.0
      %vm1342 = vcmp.lt.f32.partialorder %v1338, 0.0
      %vm1343 = vcmp.lt.f32.partialorder %v1339, 0.0
      %vm1344 = vcmp.lt.f32.partialorder %v1340, 0.0
      %v1345 = vsel %vm1341, -1.0, 1.0
      %v1346 = vsel %vm1342, -1.0, 1.0
      %v1347 = vsel %vm1343, -1.0, 1.0
      %v1348 = vsel %vm1344, -1.0, 1.0
      %v1349 = vand.u32 2147483647, %v1337
      %v1350 = vand.u32 2147483647, %v1338
      %v1351 = vand.u32 2147483647, %v1339
      %v1352 = vand.u32 2147483647, %v1340
      %v1353 = vmul.f32 %v1349, 0.3275911
      %v1354 = vmul.f32 %v1350, 0.3275911
      %v1355 = vmul.f32 %v1351, 0.3275911
      %v1356 = vmul.f32 %v1352, 0.3275911
      %v1357 = vadd.f32 %v1353, 1.0
      %v1358 = vadd.f32 %v1354, 1.0
      %v1359 = vadd.f32 %v1355, 1.0
      %v1360 = vadd.f32 %v1356, 1.0
      %v1361 = vrcp.pop %v1357
      %v1362 = vmul.f32 1.0, %v1361
      %v1363 = vrcp.pop %v1358
      %v1364 = vmul.f32 1.0, %v1363
      %v1365 = vrcp.pop %v1359
      %v1366 = vmul.f32 1.0, %v1365
      %v1367 = vrcp.pop %v1360
      %v1368 = vmul.f32 1.0, %v1367
      %v1369 = vmul.f32 %v1362, 1.0614054
      %v1370 = vmul.f32 %v1364, 1.0614054
      %v1371 = vmul.f32 %v1366, 1.0614054
      %v1372 = vmul.f32 %v1368, 1.0614054
      %v1373 = vadd.f32 %v1369, -1.4531521
      %v1374 = vadd.f32 %v1370, -1.4531521
      %v1375 = vadd.f32 %v1371, -1.4531521
      %v1376 = vadd.f32 %v1372, -1.4531521
      %v1377 = vmul.f32 %v1373, %v1362
      %v1378 = vmul.f32 %v1374, %v1364
      %v1379 = vmul.f32 %v1375, %v1366
      %v1380 = vmul.f32 %v1376, %v1368
      %v1381 = vadd.f32 %v1377, 1.4214138
      %v1382 = vadd.f32 %v1378, 1.4214138
      %v1383 = vadd.f32 %v1379, 1.4214138
      %v1384 = vadd.f32 %v1380, 1.4214138
      %v1385 = vmul.f32 %v1381, %v1362
      %v1386 = vmul.f32 %v1382, %v1364
      %v1387 = vmul.f32 %v1383, %v1366
      %v1388 = vmul.f32 %v1384, %v1368
      %v1389 = vadd.f32 %v1385, -0.28449672
      %v1390 = vadd.f32 %v1386, -0.28449672
      %v1391 = vadd.f32 %v1387, -0.28449672
      %v1392 = vadd.f32 %v1388, -0.28449672
      %v1393 = vmul.f32 %v1389, %v1362
      %v1394 = vmul.f32 %v1390, %v1364
      %v1395 = vmul.f32 %v1391, %v1366
      %v1396 = vmul.f32 %v1392, %v1368
      %v1397 = vadd.f32 %v1393, 0.2548296
      %v1398 = vadd.f32 %v1394, 0.2548296
      %v1399 = vadd.f32 %v1395, 0.2548296
      %v1400 = vadd.f32 %v1396, 0.2548296
      %v1401 = vmul.f32 %v1397, %v1362
      %v1402 = vmul.f32 %v1398, %v1364
      %v1403 = vmul.f32 %v1399, %v1366
      %v1404 = vmul.f32 %v1400, %v1368
      %v1405 = vsub.f32 0.0, %v1349
      %v1406 = vsub.f32 0.0, %v1350
      %v1407 = vsub.f32 0.0, %v1351
      %v1408 = vsub.f32 0.0, %v1352
      %v1409 = vmul.f32 %v1405, %v1349
      %v1410 = vmul.f32 %v1406, %v1350
      %v1411 = vmul.f32 %v1407, %v1351
      %v1412 = vmul.f32 %v1408, %v1352
      %v1413 = vmul.f32 %v1409, 1.442695
      %v1414 = vpow.pop %v1413
      %v1415 = vmul.f32 %v1410, 1.442695
      %v1416 = vpow.pop %v1415
      %v1417 = vmul.f32 %v1411, 1.442695
      %v1418 = vpow.pop %v1417
      %v1419 = vmul.f32 %v1412, 1.442695
      %v1420 = vpow.pop %v1419
      %v1421 = vmul.f32 %v1401, %v1414
      %v1422 = vmul.f32 %v1402, %v1416
      %v1423 = vmul.f32 %v1403, %v1418
      %v1424 = vmul.f32 %v1404, %v1420
      %v1425 = vsub.f32 1.0, %v1421
      %v1426 = vsub.f32 1.0, %v1422
      %v1427 = vsub.f32 1.0, %v1423
      %v1428 = vsub.f32 1.0, %v1424
      %v1429 = vmul.f32 %v1345, %v1425
      %v1430 = vmul.f32 %v1346, %v1426
      %v1431 = vmul.f32 %v1347, %v1427
      %v1432 = vmul.f32 %v1348, %v1428
      %v1433 = vadd.f32 %v1429, 1.0
      %v1434 = vadd.f32 %v1430, 1.0
      %v1435 = vadd.f32 %v1431, 1.0
      %v1436 = vadd.f32 %v1432, 1.0
      %v1437 = vmul.f32 %v1333, %v1433
      %v1438 = vmul.f32 %v1334, %v1434
      %v1439 = vmul.f32 %v1335, %v1435
      %v1440 = vmul.f32 %v1336, %v1436
      %vm1441 = vcmask 7168
      %1442 = vst.msk [vmem:[%s170] sm:$0xff] %vm1441, %v1437
      %1443 = vst.msk [vmem:[%s170 + $0x8] sm:$0xff] %vm1441, %v1438
      %1444 = vst.msk [vmem:[%s170 + $0x10] sm:$0xff] %vm1441, %v1439
      %1445 = vst.msk [vmem:[%s170 + $0x18] sm:$0xff] %vm1441, %v1440
      %p1446 = scmp.lt.s32.totalorder %s14, 1
      %s1447 = scalar_select %p1446, %s14, 1
      %s1448 = smul.addr %s1447, 4
      %s1449 = smul.addr %s1448, 8
      %s1450 = scalar_lea.vmem %s3, %s1449
      // Predicated region
      $region33: #{visual_perception_forward.10} parent=31 // pred_check
        %p1451 = pneg %p100
      $region34: #{visual_perception_forward.10} parent=31 // pred_check_branch
        %1453 = sbr.rel (%p1451) target = $region36
      $region35: #{visual_perception_forward.10} parent=31 // pred_region
        _
      $region36: #{visual_perception_forward.10} parent=31 // pred_fallthru
        _
    $region32: #{visual_perception_forward.10} parent=5 // pred_fallthru
      _
    %p1454 = scmp.le.s32.totalorder 2, %s9
    // Predicated region
    $region37: #{visual_perception_forward.10} parent=5 // pred_check
      %p1455 = pneg %p1454
    $region38: #{visual_perception_forward.10} parent=5 // pred_check_branch
      %1457 = sbr.rel (%p1455) target = $region40
    $region39: #{visual_perception_forward.10} parent=5 // pred_region
      %s1458 = ssub.s32 %s9, 2
      // Predicated region
      $region41: #{visual_perception_forward.10} parent=39 // pred_check
        %p1459 = pneg %p106
      $region42: #{visual_perception_forward.10} parent=39 // pred_check_branch
        %1461 = sbr.rel (%p1459) target = $region44
      $region43: #{visual_perception_forward.10} parent=39 // pred_region
        %p1462 = scmp.lt.s32.totalorder %s15, 1
        %s1463 = scalar_select %p1462, %s15, 1
        %s1464 = smul.addr %s1463, 4
        %s1465 = smul.addr %s1464, 8
        %s1466 = scalar_lea.vmem %s3, %s1465
      $region44: #{visual_perception_forward.10} parent=39 // pred_fallthru
        _
    $region40: #{visual_perception_forward.10} parent=5 // pred_fallthru
      _
  $region6: #{visual_perception_forward.10} parent=0 // loop_footer
    %s13 = sadd.s32 1, %s9
  $region7: #{visual_perception_forward.10} parent=0 // loop_footer_branch
    %8 = sbr.rel target = $region3
  $region8: #{visual_perception_forward.10} parent=0 // loop_exit
    _

// kernel: visual_perception_forward.6
$region0: #{visual_perception_forward.6}
  #allocation0 [shape = 'u32[]', space=smem, size = 0x4, offset = 0x4, fixed_abs, tag = 'smem constant byte address 0x4 - core index']
  #allocation1 [shape = 'u32[144,128]{1,0:T(1,128)}', space=vmem, size = 0x12000, scoped, tag = 'internal scratch']
  %s0 = inlined_call_operand.vmem [shape: f32[2,27,900], index: 0, kind: input, shape index: {}]
  %s1 = inlined_call_operand.vmem [shape: f32[10,27], index: 1, kind: input, shape index: {}]
  %s2 = inlined_call_operand.vmem [shape: f32[10,1], index: 2, kind: input, shape index: {}]
  %s3 = inlined_call_operand.vmem [shape: f32[2,10,225], index: 3, kind: output, shape index: {}]
  %s4 = sld [smem:[#allocation0]]
  $region45: #{visual_perception_forward.6} parent=0
    _
  %s6 = ssub.s32 1, %s4
  %s7 = scalar_select 0, %s6, %s4
  loop: start=0, step=1, limit=4
  $region2: #{visual_perception_forward.6} parent=0 // loop_pre_header
    _
  $region3: #{visual_perception_forward.6} parent=0 // loop_header
    %s9 = sphi 0, %s13
    %p10 = scmp.ge.s32.totalorder %s9, 4
    %s19 = sphi 0, %s21
    %s22 = sphi 0, %s19
    %s23 = sphi 0, %s22
    %s39 = sphi 0, %s23
    %s43 = sphi 0, %s43
    %s45 = sphi 0, %s43
    %s46 = sphi 0, %s45
    %s60 = sphi 0, %s46
    %s64 = sphi 0, %s64
    %s66 = sphi 0, %s64
    %s67 = sphi 0, %s66
    %s81 = sphi 0, %s67
    %s87 = sphi 0, %s89
    %s90 = sphi 0, %s87
    %s91 = sphi 0, %s90
    %s107 = sphi 0, %s91
  $region4: #{visual_perception_forward.6} parent=0 // loop_header_branch
    %12 = sbr.rel (%p10) target = $region8
  $region5: #{visual_perception_forward.6} parent=0 // loop_body
    %s14 = ssub.s32 %s9, 1
    %s15 = ssub.s32 %s9, 2
    %s16 = sadd.s32 %s9, 1
    %s17 = ssub.s32 %s9, %s16
    %p18 = scmp.eq.s32.totalorder %s17, 0
    %s20 = sadd.s32 %s19, 1
    %s21 = scalar_select %p18, %s19, %s20
    %p24 = pneg %p18
    %p25 = scmp.eq.s32.totalorder %s9, 1
    %p26 = por %p24, %p25
    %p27 = scmp.ne.s32.totalorder %s19, %s22
    %p28 = scmp.eq.s32.totalorder %s9, 0
    %p29 = por %p27, %p28
    %p30 = scmp.ne.s32.totalorder %s19, %s22
    %p31 = scmp.eq.s32.totalorder %s14, 1
    %p32 = por %p30, %p31
    %p33 = scmp.ne.s32.totalorder %s22, %s23
    %p34 = scmp.eq.s32.totalorder %s14, 0
    %p35 = por %p33, %p34
    %p36 = scmp.ne.s32.totalorder %s22, %s23
    %p37 = scmp.eq.s32.totalorder %s15, 1
    %p38 = por %p36, %p37
    %p40 = scmp.ne.s32.totalorder %s23, %s39
    %p41 = scmp.eq.s32.totalorder %s15, 0
    %p42 = por %p40, %p41
    %s44 = sadd.s32 %s43, 1
    %p47 = scmp.eq.s32.totalorder %s9, 1
    %p48 = scmp.ne.s32.totalorder %s43, %s45
    %p49 = scmp.eq.s32.totalorder %s9, 0
    %p50 = por %p48, %p49
    %p51 = scmp.ne.s32.totalorder %s43, %s45
    %p52 = scmp.eq.s32.totalorder %s14, 1
    %p53 = por %p51, %p52
    %p54 = scmp.ne.s32.totalorder %s45, %s46
    %p55 = scmp.eq.s32.totalorder %s14, 0
    %p56 = por %p54, %p55
    %p57 = scmp.ne.s32.totalorder %s45, %s46
    %p58 = scmp.eq.s32.totalorder %s15, 1
    %p59 = por %p57, %p58
    %p61 = scmp.ne.s32.totalorder %s46, %s60
    %p62 = scmp.eq.s32.totalorder %s15, 0
    %p63 = por %p61, %p62
    %s65 = sadd.s32 %s64, 1
    %p68 = scmp.eq.s32.totalorder %s9, 1
    %p69 = scmp.ne.s32.totalorder %s64, %s66
    %p70 = scmp.eq.s32.totalorder %s9, 0
    %p71 = por %p69, %p70
    %p72 = scmp.ne.s32.totalorder %s64, %s66
    %p73 = scmp.eq.s32.totalorder %s14, 1
    %p74 = por %p72, %p73
    %p75 = scmp.ne.s32.totalorder %s66, %s67
    %p76 = scmp.eq.s32.totalorder %s14, 0
    %p77 = por %p75, %p76
    %p78 = scmp.ne.s32.totalorder %s66, %s67
    %p79 = scmp.eq.s32.totalorder %s15, 1
    %p80 = por %p78, %p79
    %p82 = scmp.ne.s32.totalorder %s67, %s81
    %p83 = scmp.eq.s32.totalorder %s15, 0
    %p84 = por %p82, %p83
    %s85 = ssub.s32 %s9, %s16
    %p86 = scmp.eq.s32.totalorder %s85, 0
    %s88 = sadd.s32 %s87, 1
    %s89 = scalar_select %p86, %s87, %s88
    %p92 = pneg %p86
    %p93 = scmp.eq.s32.totalorder %s9, 1
    %p94 = por %p92, %p93
    %p95 = scmp.ne.s32.totalorder %s87, %s90
    %p96 = scmp.eq.s32.totalorder %s9, 0
    %p97 = por %p95, %p96
    %p98 = scmp.ne.s32.totalorder %s87, %s90
    %p99 = scmp.eq.s32.totalorder %s14, 1
    %p100 = por %p98, %p99
    %p101 = scmp.ne.s32.totalorder %s90, %s91
    %p102 = scmp.eq.s32.totalorder %s14, 0
    %p103 = por %p101, %p102
    %p104 = scmp.ne.s32.totalorder %s90, %s91
    %p105 = scmp.eq.s32.totalorder %s15, 1
    %p106 = por %p104, %p105
    %p108 = scmp.ne.s32.totalorder %s91, %s107
    %p109 = scmp.eq.s32.totalorder %s15, 0
    %p110 = por %p108, %p109
    %p111 = scmp.le.s32.totalorder 1, %s9
    %p112 = scmp.lt.s32.totalorder %s9, 3
    %p113 = pnand %p111, %p112
    %p114 = pneg %p113
    // Predicated region
    $region9: #{visual_perception_forward.6} parent=5 // pred_check
      _
    $region10: #{visual_perception_forward.6} parent=5 // pred_check_branch
      %116 = sbr.rel (%p113) target = $region12
    $region11: #{visual_perception_forward.6} parent=5 // pred_region
      %s117 = ssub.s32 %s9, 1
      // Predicated region
      $region13: #{visual_perception_forward.6} parent=11 // pred_check
        %p118 = pneg %p56
      $region14: #{visual_perception_forward.6} parent=11 // pred_check_branch
        %120 = sbr.rel (%p118) target = $region16
      $region15: #{visual_perception_forward.6} parent=11 // pred_region
        _
      $region16: #{visual_perception_forward.6} parent=11 // pred_fallthru
        _
      // Predicated region
      $region17: #{visual_perception_forward.6} parent=11 // pred_check
        %p121 = pneg %p77
      $region18: #{visual_perception_forward.6} parent=11 // pred_check_branch
        %123 = sbr.rel (%p121) target = $region20
      $region19: #{visual_perception_forward.6} parent=11 // pred_region
        _
      $region20: #{visual_perception_forward.6} parent=11 // pred_fallthru
        _
    $region12: #{visual_perception_forward.6} parent=5 // pred_fallthru
      _
    %p124 = scmp.lt.s32.totalorder %s9, 2
    // Predicated region
    $region21: #{visual_perception_forward.6} parent=5 // pred_check
      %p125 = pneg %p124
    $region22: #{visual_perception_forward.6} parent=5 // pred_check_branch
      %127 = sbr.rel (%p125) target = $region24
    $region23: #{visual_perception_forward.6} parent=5 // pred_region
      // Predicated region
      $region25: #{visual_perception_forward.6} parent=23 // pred_check
        %p128 = pneg %p29
      $region26: #{visual_perception_forward.6} parent=23 // pred_check_branch
        %130 = sbr.rel (%p128) target = $region28
      $region27: #{visual_perception_forward.6} parent=23 // pred_region
        %p131 = scmp.lt.s32.totalorder %s9, 1
        %s132 = scalar_select %p131, %s9, 1
        %s133 = smul.addr %s132, 32
        %s134 = smul.addr %s133, 8
        %s135 = scalar_lea.vmem %s0, %s134
      $region28: #{visual_perception_forward.6} parent=23 // pred_fallthru
        _
    $region24: #{visual_perception_forward.6} parent=5 // pred_fallthru
      _
    %p136 = scmp.le.s32.totalorder 1, %s9
    %p137 = scmp.lt.s32.totalorder %s9, 3
    %p138 = pnand %p136, %p137
    %p139 = pneg %p138
    // Predicated region
    $region29: #{visual_perception_forward.6} parent=5 // pred_check
      _
    $region30: #{visual_perception_forward.6} parent=5 // pred_check_branch
      %141 = sbr.rel (%p138) target = $region32
    $region31: #{visual_perception_forward.6} parent=5 // pred_region
      %s142 = ssub.s32 %s9, 1
      %p143 = scmp.lt.s32.totalorder %s14, 1
      %s144 = scalar_select %p143, %s14, 1
      %s145 = smul.addr %s144, 32
      %s146 = smul.addr %s145, 8
      %s147 = scalar_lea.vmem %s0, %s146
      %p148 = pneg %p35
      %p149 = pneg %p32
      %p150 = pneg %p56
      %p151 = pneg %p53
      %p152 = pneg %p77
      %p153 = pneg %p74
      %p154 = pneg %p103
      %p155 = pneg %p100
      %p156 = scmp.lt.s32.totalorder %s14, 1
      %s157 = scalar_select %p156, %s14, 1
      %s158 = smul.addr %s157, 4
      %s159 = smul.addr %s158, 8
      %s160 = scalar_lea.vmem %s3, %s159
      %p161 = scmp.lt.s32.totalorder %s14, 1
      %s162 = scalar_select %p161, %s14, 1
      %s163 = smul.addr %s162, 32
      %s164 = smul.addr %s163, 8
      %s165 = scalar_lea.vmem %s0, %s164
      %p166 = scmp.lt.s32.totalorder %s14, 1
      %s167 = scalar_select %p166, %s14, 1
      %s168 = smul.addr %s167, 4
      %s169 = smul.addr %s168, 8
      %s170 = scalar_lea.vmem %s3, %s169
      %v171 = vld [vmem:[%s1] sm:$0xff]
      %v172 = vld [vmem:[%s1 + $0x8] sm:$0x3]
      %v173 = vld [vmem:[%s165] sm:$0xff]
      %v174 = vld [vmem:[%s165 + $0x8] sm:$0xff]
      %v175 = vld [vmem:[%s165 + $0x10] sm:$0xff]
      %v176 = vld [vmem:[%s165 + $0x18] sm:$0xff]
      %v177 = vld [vmem:[%s165 + $0x20] sm:$0xff]
      %v178 = vld [vmem:[%s165 + $0x28] sm:$0xff]
      %v179 = vld [vmem:[%s165 + $0x30] sm:$0xff]
      %v180 = vld [vmem:[%s165 + $0x38] sm:$0xff]
      %v181 = vld [vmem:[%s165 + $0x40] sm:$0xff]
      %v182 = vld [vmem:[%s165 + $0x48] sm:$0xff]
      %v183 = vld [vmem:[%s165 + $0x50] sm:$0xff]
      %v184 = vld [vmem:[%s165 + $0x58] sm:$0xff]
      %v185 = vld [vmem:[%s165 + $0x60] sm:$0xff]
      %v186 = vld [vmem:[%s165 + $0x68] sm:$0xff]
      %v187 = vld [vmem:[%s165 + $0x70] sm:$0xff]
      %v188 = vld [vmem:[%s165 + $0x78] sm:$0xff]
      %v189 = vld [vmem:[%s165 + $0x80] sm:$0xff]
      %v190 = vld [vmem:[%s165 + $0x88] sm:$0xff]
      %v191 = vld [vmem:[%s165 + $0x90] sm:$0xff]
      %v192 = vld [vmem:[%s165 + $0x98] sm:$0xff]
      %v193 = vld [vmem:[%s165 + $0xa0] sm:$0xff]
      %v194 = vld [vmem:[%s165 + $0xa8] sm:$0xff]
      %v195 = vld [vmem:[%s165 + $0xb0] sm:$0xff]
      %v196 = vld [vmem:[%s165 + $0xb8] sm:$0xff]
      %v197 = vld [vmem:[%s165 + $0xc0] sm:$0x7]
      %v198 = vld [vmem:[%s165 + $0xc8] sm:$0x7]
      %v199 = vld [vmem:[%s165 + $0xd0] sm:$0x7]
      %v200 = vld [vmem:[%s165 + $0xd8] sm:$0x7]
      %v201 = vld [vmem:[%s165 + $0xe0] sm:$0x7]
      %v202 = vld [vmem:[%s165 + $0xe8] sm:$0x7]
      %v203 = vld [vmem:[%s165 + $0xf0] sm:$0x7]
      %v204 = vld [vmem:[%s165 + $0xf8] sm:$0x7]
      %v205 = vld [vmem:[%s2] sm:$0xff]
      %v206 = vld [vmem:[%s2 + $0x8] sm:$0x3]
      %208 = vset.pattern.permute.xlu0 0
      %209 = vperm.xlu0 %208, %v205
      %v210 = vpop.permute.xlu0 %209
      %213 = vset.pattern.permute.xlu0 0
      %214 = vperm.xlu0 %213, %v206
      %v215 = vpop.permute.xlu0 %214
      %vm217 = vcmask 220160
      %v219 = vsel %vm217, %v171, 0
      %v222 = vsel %vm217, %v172, 0
      %vm224 = vcmask 1042432
      %v226 = vsel %vm224, %v197, 0
      %v229 = vsel %vm224, %v198, 0
      %v232 = vsel %vm224, %v199, 0
      %v235 = vsel %vm224, %v200, 0
      %v238 = vsel %vm224, %v201, 0
      %v241 = vsel %vm224, %v202, 0
      %v244 = vsel %vm224, %v203, 0
      %v247 = vsel %vm224, %v204, 0
      %249 = vmatprep.subr.mxu0 0.0
      %250 = vmatpush1.msra.mxu0 0.0
      %251 = vmatprep.subr.mxu0 0.0
      %252 = vmatpush1.msra.mxu0 0.0
      %253 = vmatprep.subr.mxu0 0.0
      %254 = vmatpush1.msra.mxu0 0.0
      %255 = vmatprep.subr.mxu0 0.0
      %256 = vmatpush1.msra.mxu0 0.0
      %257 = vmatprep.subr.mxu0 0.0
      %258 = vmatpush1.msra.mxu0 0.0
      %259 = vmatprep.subr.mxu0 0.0
      %260 = vmatpush1.msra.mxu0 0.0
      %261 = vmatprep.subr.mxu0 0.0
      %262 = vmatpush1.msra.mxu0 0.0
      %263 = vmatprep.subr.mxu0 0.0
      %264 = vmatpush1.msra.mxu0 0.0
      %265 = vmatprep.subr.mxu0 0.0
      %266 = vmatpush1.msra.mxu0 0.0
      %267 = vmatprep.subr.mxu0 0.0
      %268 = vmatpush1.msra.mxu0 0.0
      %269 = vmatprep.subr.mxu0 0.0
      %270 = vmatpush1.msra.mxu0 0.0
      %271 = vmatprep.subr.mxu0 0.0
      %272 = vmatpush1.msra.mxu0 0.0
      %273 = vmatprep.subr.mxu0 %v229
      %274 = vmatpush1.msra.mxu0 %v226
      %275 = vmatprep.subr.mxu0 %v190
      %276 = vmatpush1.msra.mxu0 %v189
      %277 = vmatprep.subr.mxu0 %v182
      %278 = vmatpush1.msra.mxu0 %v181
      %279 = vmatprep.subr.mxu0 %v174
      %280 = vmatpush1.msra.mxu0 %v173
      %281 = vmatprep.subr.mxu0 0.0
      %282 = vmatpush2.msra.mxu0 0.0
      %283 = vmatprep.subr.mxu0 0.0
      %284 = vmatpush2.msra.mxu0 0.0
      %285 = vmatprep.subr.mxu0 0.0
      %286 = vmatpush2.msra.mxu0 0.0
      %287 = vmatprep.subr.mxu0 0.0
      %288 = vmatpush2.msra.mxu0 0.0
      %289 = vmatprep.subr.mxu0 0.0
      %290 = vmatpush2.msra.mxu0 0.0
      %291 = vmatprep.subr.mxu0 0.0
      %292 = vmatpush2.msra.mxu0 0.0
      %293 = vmatprep.subr.mxu0 0.0
      %294 = vmatpush2.msra.mxu0 0.0
      %295 = vmatprep.subr.mxu0 0.0
      %296 = vmatpush2.msra.mxu0 0.0
      %297 = vmatprep.subr.mxu0 0.0
      %298 = vmatpush2.msra.mxu0 0.0
      %299 = vmatprep.subr.mxu0 0.0
      %300 = vmatpush2.msra.mxu0 0.0
      %301 = vmatprep.subr.mxu0 0.0
      %302 = vmatpush2.msra.mxu0 0.0
      %303 = vmatprep.subr.mxu0 0.0
      %304 = vmatpush2.msra.mxu0 0.0
      %305 = vmatprep.subr.mxu0 0.0
      %306 = vmatpush2.msra.mxu0 0.0
      %307 = vmatprep.subr.mxu0 0.0
      %308 = vmatpush2.msra.mxu0 0.0
      %309 = vmatprep.subr.mxu0 0.0
      %310 = vmatpush2.msra.mxu0 0.0
      %311 = vmatprep.subr.mxu0 0.0
      %312 = vmatpush2.msra.mxu0 0.0
      %313 = vmatprep.mubr.f32.mxu0 0.0
      %314 = vmatmul.mubr.f32.gmra.mxu0 %v219
      %v315 = vpop.f32.mrf.mxu0
      %v316 = vadd.f32 %v210, %v315
      %v317 = vpop.f32.mrf.mxu0
      %v318 = vadd.f32 %v210, %v317
      %319 = vmatprep.mubr.f32.mxu0 0.0
      %320 = vmatmul.mubr.f32.gmra.mxu0 %v222
      %v321 = vpop.f32.mrf.mxu0
      %v322 = vadd.f32 %v215, %v321
      %v323 = vpop.f32.mrf.mxu0
      %v324 = vadd.f32 %v215, %v323
      %325 = vdwg.mxu0
      %326 = vmatprep.subr.mxu0 0.0
      %327 = vmatpush1.msra.mxu0 0.0
      %328 = vmatprep.subr.mxu0 0.0
      %329 = vmatpush1.msra.mxu0 0.0
      %330 = vmatprep.subr.mxu0 0.0
      %331 = vmatpush1.msra.mxu0 0.0
      %332 = vmatprep.subr.mxu0 0.0
      %333 = vmatpush1.msra.mxu0 0.0
      %334 = vmatprep.subr.mxu0 0.0
      %335 = vmatpush1.msra.mxu0 0.0
      %336 = vmatprep.subr.mxu0 0.0
      %337 = vmatpush1.msra.mxu0 0.0
      %338 = vmatprep.subr.mxu0 0.0
      %339 = vmatpush1.msra.mxu0 0.0
      %340 = vmatprep.subr.mxu0 0.0
      %341 = vmatpush1.msra.mxu0 0.0
      %342 = vmatprep.subr.mxu0 0.0
      %343 = vmatpush1.msra.mxu0 0.0
      %344 = vmatprep.subr.mxu0 0.0
      %345 = vmatpush1.msra.mxu0 0.0
      %346 = vmatprep.subr.mxu0 0.0
      %347 = vmatpush1.msra.mxu0 0.0
      %348 = vmatprep.subr.mxu0 0.0
      %349 = vmatpush1.msra.mxu0 0.0
      %350 = vmatprep.subr.mxu0 %v235
      %351 = vmatpush1.msra.mxu0 %v232
      %352 = vmatprep.subr.mxu0 %v192
      %353 = vmatpush1.msra.mxu0 %v191
      %354 = vmatprep.subr.mxu0 %v184
      %355 = vmatpush1.msra.mxu0 %v183
      %356 = vmatprep.subr.mxu0 %v176
      %357 = vmatpush1.msra.mxu0 %v175
      %358 = vmatprep.subr.mxu0 0.0
      %359 = vmatpush2.msra.mxu0 0.0
      %360 = vmatprep.subr.mxu0 0.0
      %361 = vmatpush2.msra.mxu0 0.0
      %362 = vmatprep.subr.mxu0 0.0
      %363 = vmatpush2.msra.mxu0 0.0
      %364 = vmatprep.subr.mxu0 0.0
      %365 = vmatpush2.msra.mxu0 0.0
      %366 = vmatprep.subr.mxu0 0.0
      %367 = vmatpush2.msra.mxu0 0.0
      %368 = vmatprep.subr.mxu0 0.0
      %369 = vmatpush2.msra.mxu0 0.0
      %370 = vmatprep.subr.mxu0 0.0
      %371 = vmatpush2.msra.mxu0 0.0
      %372 = vmatprep.subr.mxu0 0.0
      %373 = vmatpush2.msra.mxu0 0.0
      %374 = vmatprep.subr.mxu0 0.0
      %375 = vmatpush2.msra.mxu0 0.0
      %376 = vmatprep.subr.mxu0 0.0
      %377 = vmatpush2.msra.mxu0 0.0
      %378 = vmatprep.subr.mxu0 0.0
      %379 = vmatpush2.msra.mxu0 0.0
      %380 = vmatprep.subr.mxu0 0.0
      %381 = vmatpush2.msra.mxu0 0.0
      %382 = vmatprep.subr.mxu0 0.0
      %383 = vmatpush2.msra.mxu0 0.0
      %384 = vmatprep.subr.mxu0 0.0
      %385 = vmatpush2.msra.mxu0 0.0
      %386 = vmatprep.subr.mxu0 0.0
      %387 = vmatpush2.msra.mxu0 0.0
      %388 = vmatprep.subr.mxu0 0.0
      %389 = vmatpush2.msra.mxu0 0.0
      %390 = vmatprep.mubr.f32.mxu0 0.0
      %391 = vmatmul.mubr.f32.gmra.mxu0 %v219
      %v392 = vpop.f32.mrf.mxu0
      %v393 = vadd.f32 %v210, %v392
      %v394 = vpop.f32.mrf.mxu0
      %v395 = vadd.f32 %v210, %v394
      %396 = vmatprep.mubr.f32.mxu0 0.0
      %397 = vmatmul.mubr.f32.gmra.mxu0 %v222
      %v398 = vpop.f32.mrf.mxu0
      %v399 = vadd.f32 %v215, %v398
      %v400 = vpop.f32.mrf.mxu0
      %v401 = vadd.f32 %v215, %v400
      %402 = vdwg.mxu0
      %403 = vmatprep.subr.mxu0 0.0
      %404 = vmatpush1.msra.mxu0 0.0
      %405 = vmatprep.subr.mxu0 0.0
      %406 = vmatpush1.msra.mxu0 0.0
      %407 = vmatprep.subr.mxu0 0.0
      %408 = vmatpush1.msra.mxu0 0.0
      %409 = vmatprep.subr.mxu0 0.0
      %410 = vmatpush1.msra.mxu0 0.0
      %411 = vmatprep.subr.mxu0 0.0
      %412 = vmatpush1.msra.mxu0 0.0
      %413 = vmatprep.subr.mxu0 0.0
      %414 = vmatpush1.msra.mxu0 0.0
      %415 = vmatprep.subr.mxu0 0.0
      %416 = vmatpush1.msra.mxu0 0.0
      %417 = vmatprep.subr.mxu0 0.0
      %418 = vmatpush1.msra.mxu0 0.0
      %419 = vmatprep.subr.mxu0 0.0
      %420 = vmatpush1.msra.mxu0 0.0
      %421 = vmatprep.subr.mxu0 0.0
      %422 = vmatpush1.msra.mxu0 0.0
      %423 = vmatprep.subr.mxu0 0.0
      %424 = vmatpush1.msra.mxu0 0.0
      %425 = vmatprep.subr.mxu0 0.0
      %426 = vmatpush1.msra.mxu0 0.0
      %427 = vmatprep.subr.mxu0 %v241
      %428 = vmatpush1.msra.mxu0 %v238
      %429 = vmatprep.subr.mxu0 %v194
      %430 = vmatpush1.msra.mxu0 %v193
      %431 = vmatprep.subr.mxu0 %v186
      %432 = vmatpush1.msra.mxu0 %v185
      %433 = vmatprep.subr.mxu0 %v178
      %434 = vmatpush1.msra.mxu0 %v177
      %435 = vmatprep.subr.mxu0 0.0
      %436 = vmatpush2.msra.mxu0 0.0
      %437 = vmatprep.subr.mxu0 0.0
      %438 = vmatpush2.msra.mxu0 0.0
      %439 = vmatprep.subr.mxu0 0.0
      %440 = vmatpush2.msra.mxu0 0.0
      %441 = vmatprep.subr.mxu0 0.0
      %442 = vmatpush2.msra.mxu0 0.0
      %443 = vmatprep.subr.mxu0 0.0
      %444 = vmatpush2.msra.mxu0 0.0
      %445 = vmatprep.subr.mxu0 0.0
      %446 = vmatpush2.msra.mxu0 0.0
      %447 = vmatprep.subr.mxu0 0.0
      %448 = vmatpush2.msra.mxu0 0.0
      %449 = vmatprep.subr.mxu0 0.0
      %450 = vmatpush2.msra.mxu0 0.0
      %451 = vmatprep.subr.mxu0 0.0
      %452 = vmatpush2.msra.mxu0 0.0
      %453 = vmatprep.subr.mxu0 0.0
      %454 = vmatpush2.msra.mxu0 0.0
      %455 = vmatprep.subr.mxu0 0.0
      %456 = vmatpush2.msra.mxu0 0.0
      %457 = vmatprep.subr.mxu0 0.0
      %458 = vmatpush2.msra.mxu0 0.0
      %459 = vmatprep.subr.mxu0 0.0
      %460 = vmatpush2.msra.mxu0 0.0
      %461 = vmatprep.subr.mxu0 0.0
      %462 = vmatpush2.msra.mxu0 0.0
      %463 = vmatprep.subr.mxu0 0.0
      %464 = vmatpush2.msra.mxu0 0.0
      %465 = vmatprep.subr.mxu0 0.0
      %466 = vmatpush2.msra.mxu0 0.0
      %467 = vmatprep.mubr.f32.mxu0 0.0
      %468 = vmatmul.mubr.f32.gmra.mxu0 %v219
      %v469 = vpop.f32.mrf.mxu0
      %v470 = vadd.f32 %v210, %v469
      %v471 = vpop.f32.mrf.mxu0
      %v472 = vadd.f32 %v210, %v471
      %473 = vmatprep.mubr.f32.mxu0 0.0
      %474 = vmatmul.mubr.f32.gmra.mxu0 %v222
      %v475 = vpop.f32.mrf.mxu0
      %v476 = vadd.f32 %v215, %v475
      %v477 = vpop.f32.mrf.mxu0
      %v478 = vadd.f32 %v215, %v477
      %479 = vdwg.mxu0
      %480 = vmatprep.subr.mxu0 0.0
      %481 = vmatpush1.msra.mxu0 0.0
      %482 = vmatprep.subr.mxu0 0.0
      %483 = vmatpush1.msra.mxu0 0.0
      %484 = vmatprep.subr.mxu0 0.0
      %485 = vmatpush1.msra.mxu0 0.0
      %486 = vmatprep.subr.mxu0 0.0
      %487 = vmatpush1.msra.mxu0 0.0
      %488 = vmatprep.subr.mxu0 0.0
      %489 = vmatpush1.msra.mxu0 0.0
      %490 = vmatprep.subr.mxu0 0.0
      %491 = vmatpush1.msra.mxu0 0.0
      %492 = vmatprep.subr.mxu0 0.0
      %493 = vmatpush1.msra.mxu0 0.0
      %494 = vmatprep.subr.mxu0 0.0
      %495 = vmatpush1.msra.mxu0 0.0
      %496 = vmatprep.subr.mxu0 0.0
      %497 = vmatpush1.msra.mxu0 0.0
      %498 = vmatprep.subr.mxu0 0.0
      %499 = vmatpush1.msra.mxu0 0.0
      %500 = vmatprep.subr.mxu0 0.0
      %501 = vmatpush1.msra.mxu0 0.0
      %502 = vmatprep.subr.mxu0 0.0
      %503 = vmatpush1.msra.mxu0 0.0
      %504 = vmatprep.subr.mxu0 %v247
      %505 = vmatpush1.msra.mxu0 %v244
      %506 = vmatprep.subr.mxu0 %v196
      %507 = vmatpush1.msra.mxu0 %v195
      %508 = vmatprep.subr.mxu0 %v188
      %509 = vmatpush1.msra.mxu0 %v187
      %510 = vmatprep.subr.mxu0 %v180
      %511 = vmatpush1.msra.mxu0 %v179
      %512 = vmatprep.subr.mxu0 0.0
      %513 = vmatpush2.msra.mxu0 0.0
      %514 = vmatprep.subr.mxu0 0.0
      %515 = vmatpush2.msra.mxu0 0.0
      %516 = vmatprep.subr.mxu0 0.0
      %517 = vmatpush2.msra.mxu0 0.0
      %518 = vmatprep.subr.mxu0 0.0
      %519 = vmatpush2.msra.mxu0 0.0
      %520 = vmatprep.subr.mxu0 0.0
      %521 = vmatpush2.msra.mxu0 0.0
      %522 = vmatprep.subr.mxu0 0.0
      %523 = vmatpush2.msra.mxu0 0.0
      %524 = vmatprep.subr.mxu0 0.0
      %525 = vmatpush2.msra.mxu0 0.0
      %526 = vmatprep.subr.mxu0 0.0
      %527 = vmatpush2.msra.mxu0 0.0
      %528 = vmatprep.subr.mxu0 0.0
      %529 = vmatpush2.msra.mxu0 0.0
      %530 = vmatprep.subr.mxu0 0.0
      %531 = vmatpush2.msra.mxu0 0.0
      %532 = vmatprep.subr.mxu0 0.0
      %533 = vmatpush2.msra.mxu0 0.0
      %534 = vmatprep.subr.mxu0 0.0
      %535 = vmatpush2.msra.mxu0 0.0
      %536 = vmatprep.subr.mxu0 0.0
      %537 = vmatpush2.msra.mxu0 0.0
      %538 = vmatprep.subr.mxu0 0.0
      %539 = vmatpush2.msra.mxu0 0.0
      %540 = vmatprep.subr.mxu0 0.0
      %541 = vmatpush2.msra.mxu0 0.0
      %542 = vmatprep.subr.mxu0 0.0
      %543 = vmatpush2.msra.mxu0 0.0
      %544 = vmatprep.mubr.f32.mxu0 0.0
      %545 = vmatmul.mubr.f32.gmra.mxu0 %v219
      %v546 = vpop.f32.mrf.mxu0
      %v547 = vadd.f32 %v210, %v546
      %v548 = vpop.f32.mrf.mxu0
      %v549 = vadd.f32 %v210, %v548
      %550 = vmatprep.mubr.f32.mxu0 0.0
      %551 = vmatmul.mubr.f32.gmra.mxu0 %v222
      %v552 = vpop.f32.mrf.mxu0
      %v553 = vadd.f32 %v215, %v552
      %v554 = vpop.f32.mrf.mxu0
      %v555 = vadd.f32 %v215, %v554
      %556 = vdwg.mxu0
      %563 = vrot.lane.b32.xlu0 %v318, 31
      %v564 = vpop.permute.xlu0 %563
      %565 = vrot.lane.b32.xlu0 %v393, 31
      %v566 = vpop.permute.xlu0 %565
      %567 = vrot.lane.b32.xlu0 %v395, 31
      %v568 = vpop.permute.xlu0 %567
      %569 = vrot.lane.b32.xlu0 %v324, 31
      %v570 = vpop.permute.xlu0 %569
      %571 = vrot.lane.b32.xlu0 %v399, 31
      %v572 = vpop.permute.xlu0 %571
      %573 = vrot.lane.b32.xlu0 %v401, 31
      %v574 = vpop.permute.xlu0 %573
      %vm575 = vcmask 252928
      %v576 = vsel %vm575, %v564, %v566
      %v577 = vsel %vm575, %v566, %v568
      %v578 = vsel %vm575, %v570, %v572
      %v579 = vsel %vm575, %v572, %v574
      %v584 = vmax.f32 %v316, %v576
      %v585 = vmax.f32 %v318, %v577
      %v586 = vmax.f32 %v322, %v578
      %v587 = vmax.f32 %v324, %v579
      %592 = vrot.lane.b32.xlu0 %v395, 62
      %v593 = vpop.permute.xlu0 %592
      %594 = vrot.lane.b32.xlu0 %v470, 62
      %v595 = vpop.permute.xlu0 %594
      %596 = vrot.lane.b32.xlu0 %v472, 62
      %v597 = vpop.permute.xlu0 %596
      %598 = vrot.lane.b32.xlu0 %v401, 62
      %v599 = vpop.permute.xlu0 %598
      %600 = vrot.lane.b32.xlu0 %v476, 62
      %v601 = vpop.permute.xlu0 %600
      %602 = vrot.lane.b32.xlu0 %v478, 62
      %v603 = vpop.permute.xlu0 %602
      %vm604 = vcmask 506880
      %v605 = vsel %vm604, %v593, %v595
      %v606 = vsel %vm604, %v595, %v597
      %v607 = vsel %vm604, %v599, %v601
      %v608 = vsel %vm604, %v601, %v603
      %v613 = vmax.f32 %v584, %v605
      %v614 = vmax.f32 %v585, %v606
      %v615 = vmax.f32 %v586, %v607
      %v616 = vmax.f32 %v587, %v608
      %621 = vrot.lane.b32.xlu0 %v472, 93
      %v622 = vpop.permute.xlu0 %621
      %623 = vrot.lane.b32.xlu0 %v547, 93
      %v624 = vpop.permute.xlu0 %623
      %625 = vrot.lane.b32.xlu0 %v549, 93
      %v626 = vpop.permute.xlu0 %625
      %627 = vrot.lane.b32.xlu0 %v478, 93
      %v628 = vpop.permute.xlu0 %627
      %629 = vrot.lane.b32.xlu0 %v553, 93
      %v630 = vpop.permute.xlu0 %629
      %631 = vrot.lane.b32.xlu0 %v555, 93
      %v632 = vpop.permute.xlu0 %631
      %vm633 = vcmask 760832
      %v634 = vsel %vm633, %v622, %v624
      %v635 = vsel %vm633, %v624, %v626
      %v636 = vsel %vm633, %v628, %v630
      %v637 = vsel %vm633, %v630, %v632
      %v642 = vmax.f32 %v613, %v634
      %v643 = vmax.f32 %v614, %v635
      %v644 = vmax.f32 %v615, %v636
      %v645 = vmax.f32 %v616, %v637
      %v646 = vmul.f32 %v642, 0.5
      %v647 = vmul.f32 %v643, 0.5
      %v648 = vmul.f32 %v644, 0.5
      %v649 = vmul.f32 %v645, 0.5
      %v650 = vmul.f32 %v642, 0.70710677
      %v651 = vmul.f32 %v643, 0.70710677
      %v652 = vmul.f32 %v644, 0.70710677
      %v653 = vmul.f32 %v645, 0.70710677
      %vm654 = vcmp.lt.f32.partialorder %v650, 0.0
      %vm655 = vcmp.lt.f32.partialorder %v651, 0.0
      %vm656 = vcmp.lt.f32.partialorder %v652, 0.0
      %vm657 = vcmp.lt.f32.partialorder %v653, 0.0
      %v658 = vsel %vm654, -1.0, 1.0
      %v659 = vsel %vm655, -1.0, 1.0
      %v660 = vsel %vm656, -1.0, 1.0
      %v661 = vsel %vm657, -1.0, 1.0
      %v662 = vand.u32 2147483647, %v650
      %v663 = vand.u32 2147483647, %v651
      %v664 = vand.u32 2147483647, %v652
      %v665 = vand.u32 2147483647, %v653
      %v666 = vmul.f32 %v662, 0.3275911
      %v667 = vmul.f32 %v663, 0.3275911
      %v668 = vmul.f32 %v664, 0.3275911
      %v669 = vmul.f32 %v665, 0.3275911
      %v670 = vadd.f32 %v666, 1.0
      %v671 = vadd.f32 %v667, 1.0
      %v672 = vadd.f32 %v668, 1.0
      %v673 = vadd.f32 %v669, 1.0
      %v674 = vrcp.pop %v670
      %v675 = vmul.f32 1.0, %v674
      %v676 = vrcp.pop %v671
      %v677 = vmul.f32 1.0, %v676
      %v678 = vrcp.pop %v672
      %v679 = vmul.f32 1.0, %v678
      %v680 = vrcp.pop %v673
      %v681 = vmul.f32 1.0, %v680
      %v682 = vmul.f32 %v675, 1.0614054
      %v683 = vmul.f32 %v677, 1.0614054
      %v684 = vmul.f32 %v679, 1.0614054
      %v685 = vmul.f32 %v681, 1.0614054
      %v686 = vadd.f32 %v682, -1.4531521
      %v687 = vadd.f32 %v683, -1.4531521
      %v688 = vadd.f32 %v684, -1.4531521
      %v689 = vadd.f32 %v685, -1.4531521
      %v690 = vmul.f32 %v686, %v675
      %v691 = vmul.f32 %v687, %v677
      %v692 = vmul.f32 %v688, %v679
      %v693 = vmul.f32 %v689, %v681
      %v694 = vadd.f32 %v690, 1.4214138
      %v695 = vadd.f32 %v691, 1.4214138
      %v696 = vadd.f32 %v692, 1.4214138
      %v697 = vadd.f32 %v693, 1.4214138
      %v698 = vmul.f32 %v694, %v675
      %v699 = vmul.f32 %v695, %v677
      %v700 = vmul.f32 %v696, %v679
      %v701 = vmul.f32 %v697, %v681
      %v702 = vadd.f32 %v698, -0.28449672
      %v703 = vadd.f32 %v699, -0.28449672
      %v704 = vadd.f32 %v700, -0.28449672
      %v705 = vadd.f32 %v701, -0.28449672
      %v706 = vmul.f32 %v702, %v675
      %v707 = vmul.f32 %v703, %v677
      %v708 = vmul.f32 %v704, %v679
      %v709 = vmul.f32 %v705, %v681
      %v710 = vadd.f32 %v706, 0.2548296
      %v711 = vadd.f32 %v707, 0.2548296
      %v712 = vadd.f32 %v708, 0.2548296
      %v713 = vadd.f32 %v709, 0.2548296
      %v714 = vmul.f32 %v710, %v675
      %v715 = vmul.f32 %v711, %v677
      %v716 = vmul.f32 %v712, %v679
      %v717 = vmul.f32 %v713, %v681
      %v718 = vsub.f32 0.0, %v662
      %v719 = vsub.f32 0.0, %v663
      %v720 = vsub.f32 0.0, %v664
      %v721 = vsub.f32 0.0, %v665
      %v722 = vmul.f32 %v718, %v662
      %v723 = vmul.f32 %v719, %v663
      %v724 = vmul.f32 %v720, %v664
      %v725 = vmul.f32 %v721, %v665
      %v726 = vmul.f32 %v722, 1.442695
      %v727 = vpow.pop %v726
      %v728 = vmul.f32 %v723, 1.442695
      %v729 = vpow.pop %v728
      %v730 = vmul.f32 %v724, 1.442695
      %v731 = vpow.pop %v730
      %v732 = vmul.f32 %v725, 1.442695
      %v733 = vpow.pop %v732
      %v734 = vmul.f32 %v714, %v727
      %v735 = vmul.f32 %v715, %v729
      %v736 = vmul.f32 %v716, %v731
      %v737 = vmul.f32 %v717, %v733
      %v738 = vsub.f32 1.0, %v734
      %v739 = vsub.f32 1.0, %v735
      %v740 = vsub.f32 1.0, %v736
      %v741 = vsub.f32 1.0, %v737
      %v742 = vmul.f32 %v658, %v738
      %v743 = vmul.f32 %v659, %v739
      %v744 = vmul.f32 %v660, %v740
      %v745 = vmul.f32 %v661, %v741
      %v746 = vadd.f32 %v742, 1.0
      %v747 = vadd.f32 %v743, 1.0
      %v748 = vadd.f32 %v744, 1.0
      %v749 = vadd.f32 %v745, 1.0
      %v750 = vmul.f32 %v646, %v746
      %v751 = vmul.f32 %v647, %v747
      %v752 = vmul.f32 %v648, %v748
      %v753 = vmul.f32 %v649, %v749
      %754 = vst [vmem:[%s170] sm:$0xff] %v750
      %vm755 = vcmask 793600
      %756 = vst.msk [vmem:[%s170 + $0x8] sm:$0xff] %vm755, %v751
      %757 = vst [vmem:[%s170 + $0x10] sm:$0x3] %v752
      %vm758 = vcmask 787456
      %759 = vst.msk [vmem:[%s170 + $0x18] sm:$0x3] %vm758, %v753
      %p760 = scmp.lt.s32.totalorder %s14, 1
      %s761 = scalar_select %p760, %s14, 1
      %s762 = smul.addr %s761, 4
      %s763 = smul.addr %s762, 8
      %s764 = scalar_lea.vmem %s3, %s763
      // Predicated region
      $region33: #{visual_perception_forward.6} parent=31 // pred_check
        %p765 = pneg %p100
      $region34: #{visual_perception_forward.6} parent=31 // pred_check_branch
        %767 = sbr.rel (%p765) target = $region36
      $region35: #{visual_perception_forward.6} parent=31 // pred_region
        _
      $region36: #{visual_perception_forward.6} parent=31 // pred_fallthru
        _
    $region32: #{visual_perception_forward.6} parent=5 // pred_fallthru
      _
    %p768 = scmp.le.s32.totalorder 2, %s9
    // Predicated region
    $region37: #{visual_perception_forward.6} parent=5 // pred_check
      %p769 = pneg %p768
    $region38: #{visual_perception_forward.6} parent=5 // pred_check_branch
      %771 = sbr.rel (%p769) target = $region40
    $region39: #{visual_perception_forward.6} parent=5 // pred_region
      %s772 = ssub.s32 %s9, 2
      // Predicated region
      $region41: #{visual_perception_forward.6} parent=39 // pred_check
        %p773 = pneg %p106
      $region42: #{visual_perception_forward.6} parent=39 // pred_check_branch
        %775 = sbr.rel (%p773) target = $region44
      $region43: #{visual_perception_forward.6} parent=39 // pred_region
        %p776 = scmp.lt.s32.totalorder %s15, 1
        %s777 = scalar_select %p776, %s15, 1
        %s778 = smul.addr %s777, 4
        %s779 = smul.addr %s778, 8
        %s780 = scalar_lea.vmem %s3, %s779
      $region44: #{visual_perception_forward.6} parent=39 // pred_fallthru
        _
    $region40: #{visual_perception_forward.6} parent=5 // pred_fallthru
      _
  $region6: #{visual_perception_forward.6} parent=0 // loop_footer
    %s13 = sadd.s32 1, %s9
  $region7: #{visual_perception_forward.6} parent=0 // loop_footer_branch
    %8 = sbr.rel target = $region3
  $region8: #{visual_perception_forward.6} parent=0 // loop_exit
    _

// kernel: visual_perception_forward.7
$region0: #{visual_perception_forward.7}
  #allocation0 [shape = 'u32[]', space=smem, size = 0x4, offset = 0x4, fixed_abs, tag = 'smem constant byte address 0x4 - core index']
  #allocation1 [shape = 'u32[144,128]{1,0:T(1,128)}', space=vmem, size = 0x12000, scoped, tag = 'internal scratch']
  %s0 = inlined_call_operand.vmem [shape: f32[2,90,144], index: 0, kind: input, shape index: {}]
  %s1 = inlined_call_operand.vmem [shape: f32[21,90], index: 1, kind: input, shape index: {}]
  %s2 = inlined_call_operand.vmem [shape: f32[21,1], index: 2, kind: input, shape index: {}]
  %s3 = inlined_call_operand.vmem [shape: f32[2,21,36], index: 3, kind: output, shape index: {}]
  %s4 = sld [smem:[#allocation0]]
  $region45: #{visual_perception_forward.7} parent=0
    _
  %s6 = ssub.s32 1, %s4
  %s7 = scalar_select 0, %s6, %s4
  loop: start=0, step=1, limit=4
  $region2: #{visual_perception_forward.7} parent=0 // loop_pre_header
    _
  $region3: #{visual_perception_forward.7} parent=0 // loop_header
    %s9 = sphi 0, %s13
    %p10 = scmp.ge.s32.totalorder %s9, 4
    %s19 = sphi 0, %s21
    %s22 = sphi 0, %s19
    %s23 = sphi 0, %s22
    %s39 = sphi 0, %s23
    %s43 = sphi 0, %s43
    %s45 = sphi 0, %s43
    %s46 = sphi 0, %s45
    %s60 = sphi 0, %s46
    %s64 = sphi 0, %s64
    %s66 = sphi 0, %s64
    %s67 = sphi 0, %s66
    %s81 = sphi 0, %s67
    %s87 = sphi 0, %s89
    %s90 = sphi 0, %s87
    %s91 = sphi 0, %s90
    %s107 = sphi 0, %s91
  $region4: #{visual_perception_forward.7} parent=0 // loop_header_branch
    %12 = sbr.rel (%p10) target = $region8
  $region5: #{visual_perception_forward.7} parent=0 // loop_body
    %s14 = ssub.s32 %s9, 1
    %s15 = ssub.s32 %s9, 2
    %s16 = sadd.s32 %s9, 1
    %s17 = ssub.s32 %s9, %s16
    %p18 = scmp.eq.s32.totalorder %s17, 0
    %s20 = sadd.s32 %s19, 1
    %s21 = scalar_select %p18, %s19, %s20
    %p24 = pneg %p18
    %p25 = scmp.eq.s32.totalorder %s9, 1
    %p26 = por %p24, %p25
    %p27 = scmp.ne.s32.totalorder %s19, %s22
    %p28 = scmp.eq.s32.totalorder %s9, 0
    %p29 = por %p27, %p28
    %p30 = scmp.ne.s32.totalorder %s19, %s22
    %p31 = scmp.eq.s32.totalorder %s14, 1
    %p32 = por %p30, %p31
    %p33 = scmp.ne.s32.totalorder %s22, %s23
    %p34 = scmp.eq.s32.totalorder %s14, 0
    %p35 = por %p33, %p34
    %p36 = scmp.ne.s32.totalorder %s22, %s23
    %p37 = scmp.eq.s32.totalorder %s15, 1
    %p38 = por %p36, %p37
    %p40 = scmp.ne.s32.totalorder %s23, %s39
    %p41 = scmp.eq.s32.totalorder %s15, 0
    %p42 = por %p40, %p41
    %s44 = sadd.s32 %s43, 1
    %p47 = scmp.eq.s32.totalorder %s9, 1
    %p48 = scmp.ne.s32.totalorder %s43, %s45
    %p49 = scmp.eq.s32.totalorder %s9, 0
    %p50 = por %p48, %p49
    %p51 = scmp.ne.s32.totalorder %s43, %s45
    %p52 = scmp.eq.s32.totalorder %s14, 1
    %p53 = por %p51, %p52
    %p54 = scmp.ne.s32.totalorder %s45, %s46
    %p55 = scmp.eq.s32.totalorder %s14, 0
    %p56 = por %p54, %p55
    %p57 = scmp.ne.s32.totalorder %s45, %s46
    %p58 = scmp.eq.s32.totalorder %s15, 1
    %p59 = por %p57, %p58
    %p61 = scmp.ne.s32.totalorder %s46, %s60
    %p62 = scmp.eq.s32.totalorder %s15, 0
    %p63 = por %p61, %p62
    %s65 = sadd.s32 %s64, 1
    %p68 = scmp.eq.s32.totalorder %s9, 1
    %p69 = scmp.ne.s32.totalorder %s64, %s66
    %p70 = scmp.eq.s32.totalorder %s9, 0
    %p71 = por %p69, %p70
    %p72 = scmp.ne.s32.totalorder %s64, %s66
    %p73 = scmp.eq.s32.totalorder %s14, 1
    %p74 = por %p72, %p73
    %p75 = scmp.ne.s32.totalorder %s66, %s67
    %p76 = scmp.eq.s32.totalorder %s14, 0
    %p77 = por %p75, %p76
    %p78 = scmp.ne.s32.totalorder %s66, %s67
    %p79 = scmp.eq.s32.totalorder %s15, 1
    %p80 = por %p78, %p79
    %p82 = scmp.ne.s32.totalorder %s67, %s81
    %p83 = scmp.eq.s32.totalorder %s15, 0
    %p84 = por %p82, %p83
    %s85 = ssub.s32 %s9, %s16
    %p86 = scmp.eq.s32.totalorder %s85, 0
    %s88 = sadd.s32 %s87, 1
    %s89 = scalar_select %p86, %s87, %s88
    %p92 = pneg %p86
    %p93 = scmp.eq.s32.totalorder %s9, 1
    %p94 = por %p92, %p93
    %p95 = scmp.ne.s32.totalorder %s87, %s90
    %p96 = scmp.eq.s32.totalorder %s9, 0
    %p97 = por %p95, %p96
    %p98 = scmp.ne.s32.totalorder %s87, %s90
    %p99 = scmp.eq.s32.totalorder %s14, 1
    %p100 = por %p98, %p99
    %p101 = scmp.ne.s32.totalorder %s90, %s91
    %p102 = scmp.eq.s32.totalorder %s14, 0
    %p103 = por %p101, %p102
    %p104 = scmp.ne.s32.totalorder %s90, %s91
    %p105 = scmp.eq.s32.totalorder %s15, 1
    %p106 = por %p104, %p105
    %p108 = scmp.ne.s32.totalorder %s91, %s107
    %p109 = scmp.eq.s32.totalorder %s15, 0
    %p110 = por %p108, %p109
    %p111 = scmp.le.s32.totalorder 1, %s9
    %p112 = scmp.lt.s32.totalorder %s9, 3
    %p113 = pnand %p111, %p112
    %p114 = pneg %p113
    // Predicated region
    $region9: #{visual_perception_forward.7} parent=5 // pred_check
      _
    $region10: #{visual_perception_forward.7} parent=5 // pred_check_branch
      %116 = sbr.rel (%p113) target = $region12
    $region11: #{visual_perception_forward.7} parent=5 // pred_region
      %s117 = ssub.s32 %s9, 1
      // Predicated region
      $region13: #{visual_perception_forward.7} parent=11 // pred_check
        %p118 = pneg %p56
      $region14: #{visual_perception_forward.7} parent=11 // pred_check_branch
        %120 = sbr.rel (%p118) target = $region16
      $region15: #{visual_perception_forward.7} parent=11 // pred_region
        _
      $region16: #{visual_perception_forward.7} parent=11 // pred_fallthru
        _
      // Predicated region
      $region17: #{visual_perception_forward.7} parent=11 // pred_check
        %p121 = pneg %p77
      $region18: #{visual_perception_forward.7} parent=11 // pred_check_branch
        %123 = sbr.rel (%p121) target = $region20
      $region19: #{visual_perception_forward.7} parent=11 // pred_region
        _
      $region20: #{visual_perception_forward.7} parent=11 // pred_fallthru
        _
    $region12: #{visual_perception_forward.7} parent=5 // pred_fallthru
      _
    %p124 = scmp.lt.s32.totalorder %s9, 2
    // Predicated region
    $region21: #{visual_perception_forward.7} parent=5 // pred_check
      %p125 = pneg %p124
    $region22: #{visual_perception_forward.7} parent=5 // pred_check_branch
      %127 = sbr.rel (%p125) target = $region24
    $region23: #{visual_perception_forward.7} parent=5 // pred_region
      // Predicated region
      $region25: #{visual_perception_forward.7} parent=23 // pred_check
        %p128 = pneg %p29
      $region26: #{visual_perception_forward.7} parent=23 // pred_check_branch
        %130 = sbr.rel (%p128) target = $region28
      $region27: #{visual_perception_forward.7} parent=23 // pred_region
        %p131 = scmp.lt.s32.totalorder %s9, 1
        %s132 = scalar_select %p131, %s9, 1
        %s133 = smul.addr %s132, 24
        %s134 = smul.addr %s133, 8
        %s135 = scalar_lea.vmem %s0, %s134
      $region28: #{visual_perception_forward.7} parent=23 // pred_fallthru
        _
    $region24: #{visual_perception_forward.7} parent=5 // pred_fallthru
      _
    %p136 = scmp.le.s32.totalorder 1, %s9
    %p137 = scmp.lt.s32.totalorder %s9, 3
    %p138 = pnand %p136, %p137
    %p139 = pneg %p138
    // Predicated region
    $region29: #{visual_perception_forward.7} parent=5 // pred_check
      _
    $region30: #{visual_perception_forward.7} parent=5 // pred_check_branch
      %141 = sbr.rel (%p138) target = $region32
    $region31: #{visual_perception_forward.7} parent=5 // pred_region
      %s142 = ssub.s32 %s9, 1
      %p143 = scmp.lt.s32.totalorder %s14, 1
      %s144 = scalar_select %p143, %s14, 1
      %s145 = smul.addr %s144, 24
      %s146 = smul.addr %s145, 8
      %s147 = scalar_lea.vmem %s0, %s146
      %p148 = pneg %p35
      %p149 = pneg %p32
      %p150 = pneg %p56
      %p151 = pneg %p53
      %p152 = pneg %p77
      %p153 = pneg %p74
      %p154 = pneg %p103
      %p155 = pneg %p100
      %p156 = scmp.lt.s32.totalorder %s14, 1
      %s157 = scalar_select %p156, %s14, 1
      %s158 = smul.addr %s157, 3
      %s159 = smul.addr %s158, 8
      %s160 = scalar_lea.vmem %s3, %s159
      %p161 = scmp.lt.s32.totalorder %s14, 1
      %s162 = scalar_select %p161, %s14, 1
      %s163 = smul.addr %s162, 24
      %s164 = smul.addr %s163, 8
      %s165 = scalar_lea.vmem %s0, %s164
      %p166 = scmp.lt.s32.totalorder %s14, 1
      %s167 = scalar_select %p166, %s14, 1
      %s168 = smul.addr %s167, 3
      %s169 = smul.addr %s168, 8
      %s170 = scalar_lea.vmem %s3, %s169
      %v171 = vld [vmem:[%s1] sm:$0xff]
      %v172 = vld [vmem:[%s1 + $0x8] sm:$0xff]
      %v173 = vld [vmem:[%s1 + $0x10] sm:$0x1f]
      %v174 = vld [vmem:[%s165] sm:$0xff]
      %v175 = vld [vmem:[%s165 + $0x8] sm:$0xff]
      %v176 = vld [vmem:[%s165 + $0x10] sm:$0xff]
      %v177 = vld [vmem:[%s165 + $0x18] sm:$0xff]
      %v178 = vld [vmem:[%s165 + $0x20] sm:$0xff]
      %v179 = vld [vmem:[%s165 + $0x28] sm:$0xff]
      %v180 = vld [vmem:[%s165 + $0x30] sm:$0xff]
      %v181 = vld [vmem:[%s165 + $0x38] sm:$0xff]
      %v182 = vld [vmem:[%s165 + $0x40] sm:$0xff]
      %v183 = vld [vmem:[%s165 + $0x48] sm:$0xff]
      %v184 = vld [vmem:[%s165 + $0x50] sm:$0xff]
      %v185 = vld [vmem:[%s165 + $0x58] sm:$0xff]
      %v186 = vld [vmem:[%s165 + $0x60] sm:$0xff]
      %v187 = vld [vmem:[%s165 + $0x68] sm:$0xff]
      %v188 = vld [vmem:[%s165 + $0x70] sm:$0xff]
      %v189 = vld [vmem:[%s165 + $0x78] sm:$0xff]
      %v190 = vld [vmem:[%s165 + $0x80] sm:$0xff]
      %v191 = vld [vmem:[%s165 + $0x88] sm:$0xff]
      %v192 = vld [vmem:[%s165 + $0x90] sm:$0xff]
      %v193 = vld [vmem:[%s165 + $0x98] sm:$0xff]
      %v194 = vld [vmem:[%s165 + $0xa0] sm:$0xff]
      %v195 = vld [vmem:[%s165 + $0xa8] sm:$0xff]
      %v196 = vld [vmem:[%s165 + $0xb0] sm:$0x3]
      %v197 = vld [vmem:[%s165 + $0xb8] sm:$0x3]
      %v198 = vld [vmem:[%s2] sm:$0xff]
      %v199 = vld [vmem:[%s2 + $0x8] sm:$0xff]
      %v200 = vld [vmem:[%s2 + $0x10] sm:$0x1f]
      %202 = vset.pattern.permute.xlu0 0
      %203 = vperm.xlu0 %202, %v198
      %v204 = vpop.permute.xlu0 %203
      %207 = vset.pattern.permute.xlu0 0
      %208 = vperm.xlu0 %207, %v199
      %v209 = vpop.permute.xlu0 %208
      %212 = vset.pattern.permute.xlu0 0
      %213 = vperm.xlu0 %212, %v200
      %v214 = vpop.permute.xlu0 %213
      %vm216 = vcmask 736256
      %v218 = vsel %vm216, %v171, 0
      %v221 = vsel %vm216, %v172, 0
      %v224 = vsel %vm216, %v173, 0
      %vm226 = vcmask 1041408
      %v228 = vsel %vm226, %v196, 0
      %v231 = vsel %vm226, %v197, 0
      %233 = vmatprep.subr.mxu0 0.0
      %234 = vmatpush1.msra.mxu0 0.0
      %235 = vmatprep.subr.mxu0 0.0
      %236 = vmatpush1.msra.mxu0 0.0
      %237 = vmatprep.subr.mxu0 0.0
      %238 = vmatpush1.msra.mxu0 0.0
      %239 = vmatprep.subr.mxu0 0.0
      %240 = vmatpush1.msra.mxu0 0.0
      %241 = vmatprep.subr.mxu0 %v231
      %242 = vmatpush1.msra.mxu0 %v228
      %243 = vmatprep.subr.mxu0 %v195
      %244 = vmatpush1.msra.mxu0 %v194
      %245 = vmatprep.subr.mxu0 %v193
      %246 = vmatpush1.msra.mxu0 %v192
      %247 = vmatprep.subr.mxu0 %v191
      %248 = vmatpush1.msra.mxu0 %v190
      %249 = vmatprep.subr.mxu0 %v189
      %250 = vmatpush1.msra.mxu0 %v188
      %251 = vmatprep.subr.mxu0 %v187
      %252 = vmatpush1.msra.mxu0 %v186
      %253 = vmatprep.subr.mxu0 %v185
      %254 = vmatpush1.msra.mxu0 %v184
      %255 = vmatprep.subr.mxu0 %v183
      %256 = vmatpush1.msra.mxu0 %v182
      %257 = vmatprep.subr.mxu0 %v181
      %258 = vmatpush1.msra.mxu0 %v180
      %259 = vmatprep.subr.mxu0 %v179
      %260 = vmatpush1.msra.mxu0 %v178
      %261 = vmatprep.subr.mxu0 %v177
      %262 = vmatpush1.msra.mxu0 %v176
      %263 = vmatprep.subr.mxu0 %v175
      %264 = vmatpush1.msra.mxu0 %v174
      %265 = vmatprep.subr.mxu0 0.0
      %266 = vmatpush2.msra.mxu0 0.0
      %267 = vmatprep.subr.mxu0 0.0
      %268 = vmatpush2.msra.mxu0 0.0
      %269 = vmatprep.subr.mxu0 0.0
      %270 = vmatpush2.msra.mxu0 0.0
      %271 = vmatprep.subr.mxu0 0.0
      %272 = vmatpush2.msra.mxu0 0.0
      %273 = vmatprep.subr.mxu0 0.0
      %274 = vmatpush2.msra.mxu0 0.0
      %275 = vmatprep.subr.mxu0 0.0
      %276 = vmatpush2.msra.mxu0 0.0
      %277 = vmatprep.subr.mxu0 0.0
      %278 = vmatpush2.msra.mxu0 0.0
      %279 = vmatprep.subr.mxu0 0.0
      %280 = vmatpush2.msra.mxu0 0.0
      %281 = vmatprep.subr.mxu0 0.0
      %282 = vmatpush2.msra.mxu0 0.0
      %283 = vmatprep.subr.mxu0 0.0
      %284 = vmatpush2.msra.mxu0 0.0
      %285 = vmatprep.subr.mxu0 0.0
      %286 = vmatpush2.msra.mxu0 0.0
      %287 = vmatprep.subr.mxu0 0.0
      %288 = vmatpush2.msra.mxu0 0.0
      %289 = vmatprep.subr.mxu0 0.0
      %290 = vmatpush2.msra.mxu0 0.0
      %291 = vmatprep.subr.mxu0 0.0
      %292 = vmatpush2.msra.mxu0 0.0
      %293 = vmatprep.subr.mxu0 0.0
      %294 = vmatpush2.msra.mxu0 0.0
      %295 = vmatprep.subr.mxu0 0.0
      %296 = vmatpush2.msra.mxu0 0.0
      %297 = vmatprep.mubr.f32.mxu0 0.0
      %298 = vmatmul.mubr.f32.gmra.mxu0 %v218
      %v299 = vpop.f32.mrf.mxu0
      %v300 = vadd.f32 %v204, %v299
      %v301 = vpop.f32.mrf.mxu0
      %v302 = vadd.f32 %v204, %v301
      %303 = vmatprep.mubr.f32.mxu0 0.0
      %304 = vmatmul.mubr.f32.gmra.mxu0 %v221
      %v305 = vpop.f32.mrf.mxu0
      %v306 = vadd.f32 %v209, %v305
      %v307 = vpop.f32.mrf.mxu0
      %v308 = vadd.f32 %v209, %v307
      %309 = vmatprep.mubr.f32.mxu0 0.0
      %310 = vmatmul.mubr.f32.gmra.mxu0 %v224
      %v311 = vpop.f32.mrf.mxu0
      %v312 = vadd.f32 %v214, %v311
      %v313 = vpop.f32.mrf.mxu0
      %v314 = vadd.f32 %v214, %v313
      %315 = vdwg.mxu0
      %319 = vrot.lane.b32.xlu0 %v300, 92
      %v320 = vpop.permute.xlu0 %319
      %321 = vrot.lane.b32.xlu0 %v306, 92
      %v322 = vpop.permute.xlu0 %321
      %323 = vrot.lane.b32.xlu0 %v312, 92
      %v324 = vpop.permute.xlu0 %323
      %v328 = vmax.f32 %v300, %v320
      %v329 = vmax.f32 %v306, %v322
      %v330 = vmax.f32 %v312, %v324
      %331 = vrot.lane.b32.xlu0 %v300, 56
      %v332 = vpop.permute.xlu0 %331
      %333 = vrot.lane.b32.xlu0 %v306, 56
      %v334 = vpop.permute.xlu0 %333
      %335 = vrot.lane.b32.xlu0 %v312, 56
      %v336 = vpop.permute.xlu0 %335
      %v340 = vmax.f32 %v328, %v332
      %v341 = vmax.f32 %v329, %v334
      %v342 = vmax.f32 %v330, %v336
      %346 = vrot.lane.b32.xlu0 %v300, 20
      %v347 = vpop.permute.xlu0 %346
      %348 = vrot.lane.b32.xlu0 %v302, 20
      %v349 = vpop.permute.xlu0 %348
      %350 = vrot.lane.b32.xlu0 %v306, 20
      %v351 = vpop.permute.xlu0 %350
      %352 = vrot.lane.b32.xlu0 %v308, 20
      %v353 = vpop.permute.xlu0 %352
      %354 = vrot.lane.b32.xlu0 %v312, 20
      %v355 = vpop.permute.xlu0 %354
      %356 = vrot.lane.b32.xlu0 %v314, 20
      %v357 = vpop.permute.xlu0 %356
      %vm358 = vcmask 162816
      %v359 = vsel %vm358, %v347, %v349
      %v360 = vsel %vm358, %v351, %v353
      %v361 = vsel %vm358, %v355, %v357
      %v365 = vmax.f32 %v340, %v359
      %v366 = vmax.f32 %v341, %v360
      %v367 = vmax.f32 %v342, %v361
      %v368 = vmul.f32 %v365, 0.5
      %v369 = vmul.f32 %v366, 0.5
      %v370 = vmul.f32 %v367, 0.5
      %v371 = vmul.f32 %v365, 0.70710677
      %v372 = vmul.f32 %v366, 0.70710677
      %v373 = vmul.f32 %v367, 0.70710677
      %vm374 = vcmp.lt.f32.partialorder %v371, 0.0
      %vm375 = vcmp.lt.f32.partialorder %v372, 0.0
      %vm376 = vcmp.lt.f32.partialorder %v373, 0.0
      %v377 = vsel %vm374, -1.0, 1.0
      %v378 = vsel %vm375, -1.0, 1.0
      %v379 = vsel %vm376, -1.0, 1.0
      %v380 = vand.u32 2147483647, %v371
      %v381 = vand.u32 2147483647, %v372
      %v382 = vand.u32 2147483647, %v373
      %v383 = vmul.f32 %v380, 0.3275911
      %v384 = vmul.f32 %v381, 0.3275911
      %v385 = vmul.f32 %v382, 0.3275911
      %v386 = vadd.f32 %v383, 1.0
      %v387 = vadd.f32 %v384, 1.0
      %v388 = vadd.f32 %v385, 1.0
      %v389 = vrcp.pop %v386
      %v390 = vmul.f32 1.0, %v389
      %v391 = vrcp.pop %v387
      %v392 = vmul.f32 1.0, %v391
      %v393 = vrcp.pop %v388
      %v394 = vmul.f32 1.0, %v393
      %v395 = vmul.f32 %v390, 1.0614054
      %v396 = vmul.f32 %v392, 1.0614054
      %v397 = vmul.f32 %v394, 1.0614054
      %v398 = vadd.f32 %v395, -1.4531521
      %v399 = vadd.f32 %v396, -1.4531521
      %v400 = vadd.f32 %v397, -1.4531521
      %v401 = vmul.f32 %v398, %v390
      %v402 = vmul.f32 %v399, %v392
      %v403 = vmul.f32 %v400, %v394
      %v404 = vadd.f32 %v401, 1.4214138
      %v405 = vadd.f32 %v402, 1.4214138
      %v406 = vadd.f32 %v403, 1.4214138
      %v407 = vmul.f32 %v404, %v390
      %v408 = vmul.f32 %v405, %v392
      %v409 = vmul.f32 %v406, %v394
      %v410 = vadd.f32 %v407, -0.28449672
      %v411 = vadd.f32 %v408, -0.28449672
      %v412 = vadd.f32 %v409, -0.28449672
      %v413 = vmul.f32 %v410, %v390
      %v414 = vmul.f32 %v411, %v392
      %v415 = vmul.f32 %v412, %v394
      %v416 = vadd.f32 %v413, 0.2548296
      %v417 = vadd.f32 %v414, 0.2548296
      %v418 = vadd.f32 %v415, 0.2548296
      %v419 = vmul.f32 %v416, %v390
      %v420 = vmul.f32 %v417, %v392
      %v421 = vmul.f32 %v418, %v394
      %v422 = vsub.f32 0.0, %v380
      %v423 = vsub.f32 0.0, %v381
      %v424 = vsub.f32 0.0, %v382
      %v425 = vmul.f32 %v422, %v380
      %v426 = vmul.f32 %v423, %v381
      %v427 = vmul.f32 %v424, %v382
      %v428 = vmul.f32 %v425, 1.442695
      %v429 = vpow.pop %v428
      %v430 = vmul.f32 %v426, 1.442695
      %v431 = vpow.pop %v430
      %v432 = vmul.f32 %v427, 1.442695
      %v433 = vpow.pop %v432
      %v434 = vmul.f32 %v419, %v429
      %v435 = vmul.f32 %v420, %v431
      %v436 = vmul.f32 %v421, %v433
      %v437 = vsub.f32 1.0, %v434
      %v438 = vsub.f32 1.0, %v435
      %v439 = vsub.f32 1.0, %v436
      %v440 = vmul.f32 %v377, %v437
      %v441 = vmul.f32 %v378, %v438
      %v442 = vmul.f32 %v379, %v439
      %v443 = vadd.f32 %v440, 1.0
      %v444 = vadd.f32 %v441, 1.0
      %v445 = vadd.f32 %v442, 1.0
      %v446 = vmul.f32 %v368, %v443
      %v447 = vmul.f32 %v369, %v444
      %v448 = vmul.f32 %v370, %v445
      %vm449 = vcmask 293888
      %450 = vst.msk [vmem:[%s170] sm:$0xff] %vm449, %v446
      %451 = vst.msk [vmem:[%s170 + $0x8] sm:$0xff] %vm449, %v447
      %vm452 = vcmask 290816
      %453 = vst.msk [vmem:[%s170 + $0x10] sm:$0x1f] %vm452, %v448
      %p454 = scmp.lt.s32.totalorder %s14, 1
      %s455 = scalar_select %p454, %s14, 1
      %s456 = smul.addr %s455, 3
      %s457 = smul.addr %s456, 8
      %s458 = scalar_lea.vmem %s3, %s457
      // Predicated region
      $region33: #{visual_perception_forward.7} parent=31 // pred_check
        %p459 = pneg %p100
      $region34: #{visual_perception_forward.7} parent=31 // pred_check_branch
        %461 = sbr.rel (%p459) target = $region36
      $region35: #{visual_perception_forward.7} parent=31 // pred_region
        _
      $region36: #{visual_perception_forward.7} parent=31 // pred_fallthru
        _
    $region32: #{visual_perception_forward.7} parent=5 // pred_fallthru
      _
    %p462 = scmp.le.s32.totalorder 2, %s9
    // Predicated region
    $region37: #{visual_perception_forward.7} parent=5 // pred_check
      %p463 = pneg %p462
    $region38: #{visual_perception_forward.7} parent=5 // pred_check_branch
      %465 = sbr.rel (%p463) target = $region40
    $region39: #{visual_perception_forward.7} parent=5 // pred_region
      %s466 = ssub.s32 %s9, 2
      // Predicated region
      $region41: #{visual_perception_forward.7} parent=39 // pred_check
        %p467 = pneg %p106
      $region42: #{visual_perception_forward.7} parent=39 // pred_check_branch
        %469 = sbr.rel (%p467) target = $region44
      $region43: #{visual_perception_forward.7} parent=39 // pred_region
        %p470 = scmp.lt.s32.totalorder %s15, 1
        %s471 = scalar_select %p470, %s15, 1
        %s472 = smul.addr %s471, 3
        %s473 = smul.addr %s472, 8
        %s474 = scalar_lea.vmem %s3, %s473
      $region44: #{visual_perception_forward.7} parent=39 // pred_fallthru
        _
    $region40: #{visual_perception_forward.7} parent=5 // pred_fallthru
      _
  $region6: #{visual_perception_forward.7} parent=0 // loop_footer
    %s13 = sadd.s32 1, %s9
  $region7: #{visual_perception_forward.7} parent=0 // loop_footer_branch
    %8 = sbr.rel target = $region3
  $region8: #{visual_perception_forward.7} parent=0 // loop_exit
    _

// kernel: visual_perception_forward.8
$region0: #{visual_perception_forward.8}
  #allocation0 [shape = 'u32[]', space=smem, size = 0x4, offset = 0x4, fixed_abs, tag = 'smem constant byte address 0x4 - core index']
  #allocation1 [shape = 'u32[144,128]{1,0:T(1,128)}', space=vmem, size = 0x12000, scoped, tag = 'internal scratch']
  %s0 = inlined_call_operand.vmem [shape: f32[2,189,16], index: 0, kind: input, shape index: {}]
  %s1 = inlined_call_operand.vmem [shape: f32[32,189], index: 1, kind: input, shape index: {}]
  %s2 = inlined_call_operand.vmem [shape: f32[32,1], index: 2, kind: input, shape index: {}]
  %s3 = inlined_call_operand.vmem [shape: f32[2,32,1], index: 3, kind: output, shape index: {}]
  %s4 = sld [smem:[#allocation0]]
  $region45: #{visual_perception_forward.8} parent=0
    _
  %s6 = ssub.s32 1, %s4
  %s7 = scalar_select 0, %s6, %s4
  loop: start=0, step=1, limit=4
  $region2: #{visual_perception_forward.8} parent=0 // loop_pre_header
    _
  $region3: #{visual_perception_forward.8} parent=0 // loop_header
    %s9 = sphi 0, %s13
    %p10 = scmp.ge.s32.totalorder %s9, 4
    %s19 = sphi 0, %s21
    %s22 = sphi 0, %s19
    %s23 = sphi 0, %s22
    %s39 = sphi 0, %s23
    %s43 = sphi 0, %s43
    %s45 = sphi 0, %s43
    %s46 = sphi 0, %s45
    %s60 = sphi 0, %s46
    %s64 = sphi 0, %s64
    %s66 = sphi 0, %s64
    %s67 = sphi 0, %s66
    %s81 = sphi 0, %s67
    %s87 = sphi 0, %s89
    %s90 = sphi 0, %s87
    %s91 = sphi 0, %s90
    %s107 = sphi 0, %s91
  $region4: #{visual_perception_forward.8} parent=0 // loop_header_branch
    %12 = sbr.rel (%p10) target = $region8
  $region5: #{visual_perception_forward.8} parent=0 // loop_body
    %s14 = ssub.s32 %s9, 1
    %s15 = ssub.s32 %s9, 2
    %s16 = sadd.s32 %s9, 1
    %s17 = ssub.s32 %s9, %s16
    %p18 = scmp.eq.s32.totalorder %s17, 0
    %s20 = sadd.s32 %s19, 1
    %s21 = scalar_select %p18, %s19, %s20
    %p24 = pneg %p18
    %p25 = scmp.eq.s32.totalorder %s9, 1
    %p26 = por %p24, %p25
    %p27 = scmp.ne.s32.totalorder %s19, %s22
    %p28 = scmp.eq.s32.totalorder %s9, 0
    %p29 = por %p27, %p28
    %p30 = scmp.ne.s32.totalorder %s19, %s22
    %p31 = scmp.eq.s32.totalorder %s14, 1
    %p32 = por %p30, %p31
    %p33 = scmp.ne.s32.totalorder %s22, %s23
    %p34 = scmp.eq.s32.totalorder %s14, 0
    %p35 = por %p33, %p34
    %p36 = scmp.ne.s32.totalorder %s22, %s23
    %p37 = scmp.eq.s32.totalorder %s15, 1
    %p38 = por %p36, %p37
    %p40 = scmp.ne.s32.totalorder %s23, %s39
    %p41 = scmp.eq.s32.totalorder %s15, 0
    %p42 = por %p40, %p41
    %s44 = sadd.s32 %s43, 1
    %p47 = scmp.eq.s32.totalorder %s9, 1
    %p48 = scmp.ne.s32.totalorder %s43, %s45
    %p49 = scmp.eq.s32.totalorder %s9, 0
    %p50 = por %p48, %p49
    %p51 = scmp.ne.s32.totalorder %s43, %s45
    %p52 = scmp.eq.s32.totalorder %s14, 1
    %p53 = por %p51, %p52
    %p54 = scmp.ne.s32.totalorder %s45, %s46
    %p55 = scmp.eq.s32.totalorder %s14, 0
    %p56 = por %p54, %p55
    %p57 = scmp.ne.s32.totalorder %s45, %s46
    %p58 = scmp.eq.s32.totalorder %s15, 1
    %p59 = por %p57, %p58
    %p61 = scmp.ne.s32.totalorder %s46, %s60
    %p62 = scmp.eq.s32.totalorder %s15, 0
    %p63 = por %p61, %p62
    %s65 = sadd.s32 %s64, 1
    %p68 = scmp.eq.s32.totalorder %s9, 1
    %p69 = scmp.ne.s32.totalorder %s64, %s66
    %p70 = scmp.eq.s32.totalorder %s9, 0
    %p71 = por %p69, %p70
    %p72 = scmp.ne.s32.totalorder %s64, %s66
    %p73 = scmp.eq.s32.totalorder %s14, 1
    %p74 = por %p72, %p73
    %p75 = scmp.ne.s32.totalorder %s66, %s67
    %p76 = scmp.eq.s32.totalorder %s14, 0
    %p77 = por %p75, %p76
    %p78 = scmp.ne.s32.totalorder %s66, %s67
    %p79 = scmp.eq.s32.totalorder %s15, 1
    %p80 = por %p78, %p79
    %p82 = scmp.ne.s32.totalorder %s67, %s81
    %p83 = scmp.eq.s32.totalorder %s15, 0
    %p84 = por %p82, %p83
    %s85 = ssub.s32 %s9, %s16
    %p86 = scmp.eq.s32.totalorder %s85, 0
    %s88 = sadd.s32 %s87, 1
    %s89 = scalar_select %p86, %s87, %s88
    %p92 = pneg %p86
    %p93 = scmp.eq.s32.totalorder %s9, 1
    %p94 = por %p92, %p93
    %p95 = scmp.ne.s32.totalorder %s87, %s90
    %p96 = scmp.eq.s32.totalorder %s9, 0
    %p97 = por %p95, %p96
    %p98 = scmp.ne.s32.totalorder %s87, %s90
    %p99 = scmp.eq.s32.totalorder %s14, 1
    %p100 = por %p98, %p99
    %p101 = scmp.ne.s32.totalorder %s90, %s91
    %p102 = scmp.eq.s32.totalorder %s14, 0
    %p103 = por %p101, %p102
    %p104 = scmp.ne.s32.totalorder %s90, %s91
    %p105 = scmp.eq.s32.totalorder %s15, 1
    %p106 = por %p104, %p105
    %p108 = scmp.ne.s32.totalorder %s91, %s107
    %p109 = scmp.eq.s32.totalorder %s15, 0
    %p110 = por %p108, %p109
    %p111 = scmp.le.s32.totalorder 1, %s9
    %p112 = scmp.lt.s32.totalorder %s9, 3
    %p113 = pnand %p111, %p112
    %p114 = pneg %p113
    // Predicated region
    $region9: #{visual_perception_forward.8} parent=5 // pred_check
      _
    $region10: #{visual_perception_forward.8} parent=5 // pred_check_branch
      %116 = sbr.rel (%p113) target = $region12
    $region11: #{visual_perception_forward.8} parent=5 // pred_region
      %s117 = ssub.s32 %s9, 1
      // Predicated region
      $region13: #{visual_perception_forward.8} parent=11 // pred_check
        %p118 = pneg %p56
      $region14: #{visual_perception_forward.8} parent=11 // pred_check_branch
        %120 = sbr.rel (%p118) target = $region16
      $region15: #{visual_perception_forward.8} parent=11 // pred_region
        _
      $region16: #{visual_perception_forward.8} parent=11 // pred_fallthru
        _
      // Predicated region
      $region17: #{visual_perception_forward.8} parent=11 // pred_check
        %p121 = pneg %p77
      $region18: #{visual_perception_forward.8} parent=11 // pred_check_branch
        %123 = sbr.rel (%p121) target = $region20
      $region19: #{visual_perception_forward.8} parent=11 // pred_region
        _
      $region20: #{visual_perception_forward.8} parent=11 // pred_fallthru
        _
    $region12: #{visual_perception_forward.8} parent=5 // pred_fallthru
      _
    %p124 = scmp.lt.s32.totalorder %s9, 2
    // Predicated region
    $region21: #{visual_perception_forward.8} parent=5 // pred_check
      %p125 = pneg %p124
    $region22: #{visual_perception_forward.8} parent=5 // pred_check_branch
      %127 = sbr.rel (%p125) target = $region24
    $region23: #{visual_perception_forward.8} parent=5 // pred_region
      // Predicated region
      $region25: #{visual_perception_forward.8} parent=23 // pred_check
        %p128 = pneg %p29
      $region26: #{visual_perception_forward.8} parent=23 // pred_check_branch
        %130 = sbr.rel (%p128) target = $region28
      $region27: #{visual_perception_forward.8} parent=23 // pred_region
        %p131 = scmp.lt.s32.totalorder %s9, 1
        %s132 = scalar_select %p131, %s9, 1
        %s133 = smul.addr %s132, 24
        %s134 = smul.addr %s133, 8
        %s135 = scalar_lea.vmem %s0, %s134
      $region28: #{visual_perception_forward.8} parent=23 // pred_fallthru
        _
    $region24: #{visual_perception_forward.8} parent=5 // pred_fallthru
      _
    %p136 = scmp.le.s32.totalorder 1, %s9
    %p137 = scmp.lt.s32.totalorder %s9, 3
    %p138 = pnand %p136, %p137
    %p139 = pneg %p138
    // Predicated region
    $region29: #{visual_perception_forward.8} parent=5 // pred_check
      _
    $region30: #{visual_perception_forward.8} parent=5 // pred_check_branch
      %141 = sbr.rel (%p138) target = $region32
    $region31: #{visual_perception_forward.8} parent=5 // pred_region
      %s142 = ssub.s32 %s9, 1
      %p143 = scmp.lt.s32.totalorder %s14, 1
      %s144 = scalar_select %p143, %s14, 1
      %s145 = smul.addr %s144, 24
      %s146 = smul.addr %s145, 8
      %s147 = scalar_lea.vmem %s0, %s146
      %p148 = pneg %p35
      %p149 = pneg %p32
      %p150 = pneg %p56
      %p151 = pneg %p53
      %p152 = pneg %p77
      %p153 = pneg %p74
      %p154 = pneg %p103
      %p155 = pneg %p100
      %p156 = scmp.lt.s32.totalorder %s14, 1
      %s157 = scalar_select %p156, %s14, 1
      %s158 = smul.addr %s157, 4
      %s159 = smul.addr %s158, 8
      %s160 = scalar_lea.vmem %s3, %s159
      %p161 = scmp.lt.s32.totalorder %s14, 1
      %s162 = scalar_select %p161, %s14, 1
      %s163 = smul.addr %s162, 24
      %s164 = smul.addr %s163, 8
      %s165 = scalar_lea.vmem %s0, %s164
      %p166 = scmp.lt.s32.totalorder %s14, 1
      %s167 = scalar_select %p166, %s14, 1
      %s168 = smul.addr %s167, 4
      %s169 = smul.addr %s168, 8
      %s170 = scalar_lea.vmem %s3, %s169
      %v171 = vld [vmem:[%s1] sm:$0xff]
      %v172 = vld [vmem:[%s1 + $0x8] sm:$0xff]
      %v173 = vld [vmem:[%s1 + $0x10] sm:$0xff]
      %v174 = vld [vmem:[%s1 + $0x18] sm:$0xff]
      %v175 = vld [vmem:[%s1 + $0x20] sm:$0xff]
      %v176 = vld [vmem:[%s1 + $0x28] sm:$0xff]
      %v177 = vld [vmem:[%s1 + $0x30] sm:$0xff]
      %v178 = vld [vmem:[%s1 + $0x38] sm:$0xff]
      %v179 = vld [vmem:[%s165] sm:$0xff]
      %v180 = vld [vmem:[%s165 + $0x8] sm:$0xff]
      %v181 = vld [vmem:[%s165 + $0x10] sm:$0xff]
      %v182 = vld [vmem:[%s165 + $0x18] sm:$0xff]
      %v183 = vld [vmem:[%s165 + $0x20] sm:$0xff]
      %v184 = vld [vmem:[%s165 + $0x28] sm:$0xff]
      %v185 = vld [vmem:[%s165 + $0x30] sm:$0xff]
      %v186 = vld [vmem:[%s165 + $0x38] sm:$0xff]
      %v187 = vld [vmem:[%s165 + $0x40] sm:$0xff]
      %v188 = vld [vmem:[%s165 + $0x48] sm:$0xff]
      %v189 = vld [vmem:[%s165 + $0x50] sm:$0xff]
      %v190 = vld [vmem:[%s165 + $0x58] sm:$0xff]
      %v191 = vld [vmem:[%s165 + $0x60] sm:$0xff]
      %v192 = vld [vmem:[%s165 + $0x68] sm:$0xff]
      %v193 = vld [vmem:[%s165 + $0x70] sm:$0xff]
      %v194 = vld [vmem:[%s165 + $0x78] sm:$0xff]
      %v195 = vld [vmem:[%s165 + $0x80] sm:$0xff]
      %v196 = vld [vmem:[%s165 + $0x88] sm:$0xff]
      %v197 = vld [vmem:[%s165 + $0x90] sm:$0xff]
      %v198 = vld [vmem:[%s165 + $0x98] sm:$0xff]
      %v199 = vld [vmem:[%s165 + $0xa0] sm:$0xff]
      %v200 = vld [vmem:[%s165 + $0xa8] sm:$0xff]
      %v201 = vld [vmem:[%s165 + $0xb0] sm:$0xff]
      %v202 = vld [vmem:[%s165 + $0xb8] sm:$0x1f]
      %v203 = vld [vmem:[%s2] sm:$0xff]
      %v204 = vld [vmem:[%s2 + $0x8] sm:$0xff]
      %v205 = vld [vmem:[%s2 + $0x10] sm:$0xff]
      %v206 = vld [vmem:[%s2 + $0x18] sm:$0xff]
      %208 = vset.pattern.permute.xlu0 0
      %209 = vperm.xlu0 %208, %v203
      %v210 = vpop.permute.xlu0 %209
      %213 = vset.pattern.permute.xlu0 0
      %214 = vperm.xlu0 %213, %v204
      %v215 = vpop.permute.xlu0 %214
      %218 = vset.pattern.permute.xlu0 0
      %219 = vperm.xlu0 %218, %v205
      %v220 = vpop.permute.xlu0 %219
      %223 = vset.pattern.permute.xlu0 0
      %224 = vperm.xlu0 %223, %v206
      %v225 = vpop.permute.xlu0 %224
      %vm227 = vcmask 498688
      %v229 = vsel %vm227, %v172, 0
      %v232 = vsel %vm227, %v174, 0
      %v235 = vsel %vm227, %v176, 0
      %v238 = vsel %vm227, %v178, 0
      %vm240 = vcmask 1044480
      %v242 = vsel %vm240, %v202, 0
      %244 = vmatprep.subr.mxu0 0.0
      %245 = vmatpush1.msra.mxu0 %v194
      %246 = vmatprep.subr.mxu0 0.0
      %247 = vmatpush1.msra.mxu0 %v193
      %248 = vmatprep.subr.mxu0 0.0
      %249 = vmatpush1.msra.mxu0 %v192
      %250 = vmatprep.subr.mxu0 0.0
      %251 = vmatpush1.msra.mxu0 %v191
      %252 = vmatprep.subr.mxu0 0.0
      %253 = vmatpush1.msra.mxu0 %v190
      %254 = vmatprep.subr.mxu0 0.0
      %255 = vmatpush1.msra.mxu0 %v189
      %256 = vmatprep.subr.mxu0 0.0
      %257 = vmatpush1.msra.mxu0 %v188
      %258 = vmatprep.subr.mxu0 0.0
      %259 = vmatpush1.msra.mxu0 %v187
      %260 = vmatprep.subr.mxu0 0.0
      %261 = vmatpush1.msra.mxu0 %v186
      %262 = vmatprep.subr.mxu0 0.0
      %263 = vmatpush1.msra.mxu0 %v185
      %264 = vmatprep.subr.mxu0 0.0
      %265 = vmatpush1.msra.mxu0 %v184
      %266 = vmatprep.subr.mxu0 0.0
      %267 = vmatpush1.msra.mxu0 %v183
      %268 = vmatprep.subr.mxu0 0.0
      %269 = vmatpush1.msra.mxu0 %v182
      %270 = vmatprep.subr.mxu0 0.0
      %271 = vmatpush1.msra.mxu0 %v181
      %272 = vmatprep.subr.mxu0 0.0
      %273 = vmatpush1.msra.mxu0 %v180
      %274 = vmatprep.subr.mxu0 0.0
      %275 = vmatpush1.msra.mxu0 %v179
      %276 = vmatprep.subr.mxu0 0.0
      %277 = vmatpush2.msra.mxu0 0.0
      %278 = vmatprep.subr.mxu0 0.0
      %279 = vmatpush2.msra.mxu0 0.0
      %280 = vmatprep.subr.mxu0 0.0
      %281 = vmatpush2.msra.mxu0 0.0
      %282 = vmatprep.subr.mxu0 0.0
      %283 = vmatpush2.msra.mxu0 0.0
      %284 = vmatprep.subr.mxu0 0.0
      %285 = vmatpush2.msra.mxu0 0.0
      %286 = vmatprep.subr.mxu0 0.0
      %287 = vmatpush2.msra.mxu0 0.0
      %288 = vmatprep.subr.mxu0 0.0
      %289 = vmatpush2.msra.mxu0 0.0
      %290 = vmatprep.subr.mxu0 0.0
      %291 = vmatpush2.msra.mxu0 0.0
      %292 = vmatprep.subr.mxu0 0.0
      %293 = vmatpush2.msra.mxu0 %v242
      %294 = vmatprep.subr.mxu0 0.0
      %295 = vmatpush2.msra.mxu0 %v201
      %296 = vmatprep.subr.mxu0 0.0
      %297 = vmatpush2.msra.mxu0 %v200
      %298 = vmatprep.subr.mxu0 0.0
      %299 = vmatpush2.msra.mxu0 %v199
      %300 = vmatprep.subr.mxu0 0.0
      %301 = vmatpush2.msra.mxu0 %v198
      %302 = vmatprep.subr.mxu0 0.0
      %303 = vmatpush2.msra.mxu0 %v197
      %304 = vmatprep.subr.mxu0 0.0
      %305 = vmatpush2.msra.mxu0 %v196
      %306 = vmatprep.subr.mxu0 0.0
      %307 = vmatpush2.msra.mxu0 %v195
      %308 = vmatprep.mubr.f32.mxu0 %v229
      %309 = vmatmul.mubr.f32.gmra.mxu0 %v171
      %v310 = vpop.f32.mrf.mxu0
      %v311 = vadd.f32 %v210, %v310
      %v312 = vpop.f32.mrf.mxu0
      %313 = vmatprep.mubr.f32.mxu0 %v232
      %314 = vmatmul.mubr.f32.gmra.mxu0 %v173
      %v315 = vpop.f32.mrf.mxu0
      %v316 = vadd.f32 %v215, %v315
      %v317 = vpop.f32.mrf.mxu0
      %318 = vmatprep.mubr.f32.mxu0 %v235
      %319 = vmatmul.mubr.f32.gmra.mxu0 %v175
      %v320 = vpop.f32.mrf.mxu0
      %v321 = vadd.f32 %v220, %v320
      %v322 = vpop.f32.mrf.mxu0
      %323 = vmatprep.mubr.f32.mxu0 %v238
      %324 = vmatmul.mubr.f32.gmra.mxu0 %v177
      %v325 = vpop.f32.mrf.mxu0
      %v326 = vadd.f32 %v225, %v325
      %v327 = vpop.f32.mrf.mxu0
      %328 = vdwg.mxu0
      %vm329 = vcmask 130048
      %v330 = vsel %vm329, %v311, -inf
      %331 = vmax.xlane.f32.xlu0 %v330
      %v332 = vpop.xlane.xlu0 %331
      %v333 = vsel %vm329, %v316, -inf
      %334 = vmax.xlane.f32.xlu0 %v333
      %v335 = vpop.xlane.xlu0 %334
      %v336 = vsel %vm329, %v321, -inf
      %337 = vmax.xlane.f32.xlu0 %v336
      %v338 = vpop.xlane.xlu0 %337
      %v339 = vsel %vm329, %v326, -inf
      %340 = vmax.xlane.f32.xlu0 %v339
      %v341 = vpop.xlane.xlu0 %340
      %v342 = vmul.f32 %v332, 0.5
      %v343 = vmul.f32 %v335, 0.5
      %v344 = vmul.f32 %v338, 0.5
      %v345 = vmul.f32 %v341, 0.5
      %v346 = vmul.f32 %v332, 0.70710677
      %v347 = vmul.f32 %v335, 0.70710677
      %v348 = vmul.f32 %v338, 0.70710677
      %v349 = vmul.f32 %v341, 0.70710677
      %vm350 = vcmp.lt.f32.partialorder %v346, 0.0
      %vm351 = vcmp.lt.f32.partialorder %v347, 0.0
      %vm352 = vcmp.lt.f32.partialorder %v348, 0.0
      %vm353 = vcmp.lt.f32.partialorder %v349, 0.0
      %v354 = vsel %vm350, -1.0, 1.0
      %v355 = vsel %vm351, -1.0, 1.0
      %v356 = vsel %vm352, -1.0, 1.0
      %v357 = vsel %vm353, -1.0, 1.0
      %v358 = vand.u32 2147483647, %v346
      %v359 = vand.u32 2147483647, %v347
      %v360 = vand.u32 2147483647, %v348
      %v361 = vand.u32 2147483647, %v349
      %v362 = vmul.f32 %v358, 0.3275911
      %v363 = vmul.f32 %v359, 0.3275911
      %v364 = vmul.f32 %v360, 0.3275911
      %v365 = vmul.f32 %v361, 0.3275911
      %v366 = vadd.f32 %v362, 1.0
      %v367 = vadd.f32 %v363, 1.0
      %v368 = vadd.f32 %v364, 1.0
      %v369 = vadd.f32 %v365, 1.0
      %v370 = vrcp.pop %v366
      %v371 = vmul.f32 1.0, %v370
      %v372 = vrcp.pop %v367
      %v373 = vmul.f32 1.0, %v372
      %v374 = vrcp.pop %v368
      %v375 = vmul.f32 1.0, %v374
      %v376 = vrcp.pop %v369
      %v377 = vmul.f32 1.0, %v376
      %v378 = vmul.f32 %v371, 1.0614054
      %v379 = vmul.f32 %v373, 1.0614054
      %v380 = vmul.f32 %v375, 1.0614054
      %v381 = vmul.f32 %v377, 1.0614054
      %v382 = vadd.f32 %v378, -1.4531521
      %v383 = vadd.f32 %v379, -1.4531521
      %v384 = vadd.f32 %v380, -1.4531521
      %v385 = vadd.f32 %v381, -1.4531521
      %v386 = vmul.f32 %v382, %v371
      %v387 = vmul.f32 %v383, %v373
      %v388 = vmul.f32 %v384, %v375
      %v389 = vmul.f32 %v385, %v377
      %v390 = vadd.f32 %v386, 1.4214138
      %v391 = vadd.f32 %v387, 1.4214138
      %v392 = vadd.f32 %v388, 1.4214138
      %v393 = vadd.f32 %v389, 1.4214138
      %v394 = vmul.f32 %v390, %v371
      %v395 = vmul.f32 %v391, %v373
      %v396 = vmul.f32 %v392, %v375
      %v397 = vmul.f32 %v393, %v377
      %v398 = vadd.f32 %v394, -0.28449672
      %v399 = vadd.f32 %v395, -0.28449672
      %v400 = vadd.f32 %v396, -0.28449672
      %v401 = vadd.f32 %v397, -0.28449672
      %v402 = vmul.f32 %v398, %v371
      %v403 = vmul.f32 %v399, %v373
      %v404 = vmul.f32 %v400, %v375
      %v405 = vmul.f32 %v401, %v377
      %v406 = vadd.f32 %v402, 0.2548296
      %v407 = vadd.f32 %v403, 0.2548296
      %v408 = vadd.f32 %v404, 0.2548296
      %v409 = vadd.f32 %v405, 0.2548296
      %v410 = vmul.f32 %v406, %v371
      %v411 = vmul.f32 %v407, %v373
      %v412 = vmul.f32 %v408, %v375
      %v413 = vmul.f32 %v409, %v377
      %v414 = vsub.f32 0.0, %v358
      %v415 = vsub.f32 0.0, %v359
      %v416 = vsub.f32 0.0, %v360
      %v417 = vsub.f32 0.0, %v361
      %v418 = vmul.f32 %v414, %v358
      %v419 = vmul.f32 %v415, %v359
      %v420 = vmul.f32 %v416, %v360
      %v421 = vmul.f32 %v417, %v361
      %v422 = vmul.f32 %v418, 1.442695
      %v423 = vpow.pop %v422
      %v424 = vmul.f32 %v419, 1.442695
      %v425 = vpow.pop %v424
      %v426 = vmul.f32 %v420, 1.442695
      %v427 = vpow.pop %v426
      %v428 = vmul.f32 %v421, 1.442695
      %v429 = vpow.pop %v428
      %v430 = vmul.f32 %v410, %v423
      %v431 = vmul.f32 %v411, %v425
      %v432 = vmul.f32 %v412, %v427
      %v433 = vmul.f32 %v413, %v429
      %v434 = vsub.f32 1.0, %v430
      %v435 = vsub.f32 1.0, %v431
      %v436 = vsub.f32 1.0, %v432
      %v437 = vsub.f32 1.0, %v433
      %v438 = vmul.f32 %v354, %v434
      %v439 = vmul.f32 %v355, %v435
      %v440 = vmul.f32 %v356, %v436
      %v441 = vmul.f32 %v357, %v437
      %v442 = vadd.f32 %v438, 1.0
      %v443 = vadd.f32 %v439, 1.0
      %v444 = vadd.f32 %v440, 1.0
      %v445 = vadd.f32 %v441, 1.0
      %v446 = vmul.f32 %v342, %v442
      %v447 = vmul.f32 %v343, %v443
      %v448 = vmul.f32 %v344, %v444
      %v449 = vmul.f32 %v345, %v445
      %vm450 = vcmask 7168
      %451 = vst.msk [vmem:[%s170] sm:$0xff] %vm450, %v446
      %452 = vst.msk [vmem:[%s170 + $0x8] sm:$0xff] %vm450, %v447
      %453 = vst.msk [vmem:[%s170 + $0x10] sm:$0xff] %vm450, %v448
      %454 = vst.msk [vmem:[%s170 + $0x18] sm:$0xff] %vm450, %v449
      %p455 = scmp.lt.s32.totalorder %s14, 1
      %s456 = scalar_select %p455, %s14, 1
      %s457 = smul.addr %s456, 4
      %s458 = smul.addr %s457, 8
      %s459 = scalar_lea.vmem %s3, %s458
      // Predicated region
      $region33: #{visual_perception_forward.8} parent=31 // pred_check
        %p460 = pneg %p100
      $region34: #{visual_perception_forward.8} parent=31 // pred_check_branch
        %462 = sbr.rel (%p460) target = $region36
      $region35: #{visual_perception_forward.8} parent=31 // pred_region
        _
      $region36: #{visual_perception_forward.8} parent=31 // pred_fallthru
        _
    $region32: #{visual_perception_forward.8} parent=5 // pred_fallthru
      _
    %p463 = scmp.le.s32.totalorder 2, %s9
    // Predicated region
    $region37: #{visual_perception_forward.8} parent=5 // pred_check
      %p464 = pneg %p463
    $region38: #{visual_perception_forward.8} parent=5 // pred_check_branch
      %466 = sbr.rel (%p464) target = $region40
    $region39: #{visual_perception_forward.8} parent=5 // pred_region
      %s467 = ssub.s32 %s9, 2
      // Predicated region
      $region41: #{visual_perception_forward.8} parent=39 // pred_check
        %p468 = pneg %p106
      $region42: #{visual_perception_forward.8} parent=39 // pred_check_branch
        %470 = sbr.rel (%p468) target = $region44
      $region43: #{visual_perception_forward.8} parent=39 // pred_region
        %p471 = scmp.lt.s32.totalorder %s15, 1
        %s472 = scalar_select %p471, %s15, 1
        %s473 = smul.addr %s472, 4
        %s474 = smul.addr %s473, 8
        %s475 = scalar_lea.vmem %s3, %s474
      $region44: #{visual_perception_forward.8} parent=39 // pred_fallthru
        _
    $region40: #{visual_perception_forward.8} parent=5 // pred_fallthru
      _
  $region6: #{visual_perception_forward.8} parent=0 // loop_footer
    %s13 = sadd.s32 1, %s9
  $region7: #{visual_perception_forward.8} parent=0 // loop_footer_branch
    %8 = sbr.rel target = $region3
  $region8: #{visual_perception_forward.8} parent=0 // loop_exit
    _

// kernel: visual_perception_forward.11
$region0: #{visual_perception_forward.11}
  #allocation0 [shape = 'u32[]', space=smem, size = 0x4, offset = 0x4, fixed_abs, tag = 'smem constant byte address 0x4 - core index']
  #allocation1 [shape = 'u32[144,128]{1,0:T(1,128)}', space=vmem, size = 0x12000, scoped, tag = 'internal scratch']
  %s0 = inlined_call_operand.vmem [shape: f32[2,64], index: 0, kind: input, shape index: {}]
  %s1 = inlined_call_operand.vmem [shape: f32[64,64], index: 1, kind: input, shape index: {}]
  %s2 = inlined_call_operand.vmem [shape: f32[1,64], index: 2, kind: input, shape index: {}]
  %s3 = inlined_call_operand.vmem [shape: f32[64,64], index: 3, kind: input, shape index: {}]
  %s4 = inlined_call_operand.vmem [shape: f32[1,64], index: 4, kind: input, shape index: {}]
  %s5 = inlined_call_operand.hbm [shape: f32[2,64], index: 5, kind: output, shape index: {}]
  %s6 = sld [smem:[#allocation0]]
  $region30: #{visual_perception_forward.11} parent=0
    _
  %s8 = ssub.s32 1, %s6
  %s9 = scalar_select 0, %s8, %s6
  $region1: #{visual_perception_forward.11} parent=0
    #allocation2 [shape = 'u8[1024]{0}', space=vmem, size = 0x400, scoped, tag = 'output window, operand 0, single buffered']
    #allocation3 [shape = 's32[1]{0}', space=sflag, size = 0x4, scoped, tag = 'scoped memory for visual_perception_forward.11']
    %10 = vsyncpa [#allocation3], 0
    // Predicated region
    $region2: #{visual_perception_forward.11} parent=1 // pred_check
      _
    $region3: #{visual_perception_forward.11} parent=1 // pred_check_branch
      %12 = sbr.rel (0) target = $region5
    $region4: #{visual_perception_forward.11} parent=1 // pred_region
      _
    $region5: #{visual_perception_forward.11} parent=1 // pred_fallthru
      _
    // Predicated region
    $region6: #{visual_perception_forward.11} parent=1 // pred_check
      _
    $region7: #{visual_perception_forward.11} parent=1 // pred_check_branch
      %14 = sbr.rel (0) target = $region9
    $region8: #{visual_perception_forward.11} parent=1 // pred_region
      _
    $region9: #{visual_perception_forward.11} parent=1 // pred_fallthru
      _
    // Predicated region
    $region10: #{visual_perception_forward.11} parent=1 // pred_check
      _
    $region11: #{visual_perception_forward.11} parent=1 // pred_check_branch
      %16 = sbr.rel (0) target = $region13
    $region12: #{visual_perception_forward.11} parent=1 // pred_region
      _
    $region13: #{visual_perception_forward.11} parent=1 // pred_fallthru
      _
    // Predicated region
    $region14: #{visual_perception_forward.11} parent=1 // pred_check
      _
    $region15: #{visual_perception_forward.11} parent=1 // pred_check_branch
      %18 = sbr.rel (0) target = $region17
    $region16: #{visual_perception_forward.11} parent=1 // pred_region
      _
    $region17: #{visual_perception_forward.11} parent=1 // pred_fallthru
      _
    // Predicated region
    $region18: #{visual_perception_forward.11} parent=1 // pred_check
      _
    $region19: #{visual_perception_forward.11} parent=1 // pred_check_branch
      %20 = sbr.rel (0) target = $region21
    $region20: #{visual_perception_forward.11} parent=1 // pred_region
      _
    $region21: #{visual_perception_forward.11} parent=1 // pred_fallthru
      _
    %v21 = vld [vmem:[%s0] sm:$0x3]
    %v22 = vld [vmem:[%s1] sm:$0xff]
    %v23 = vld [vmem:[%s1 + $0x8] sm:$0xff]
    %v24 = vld [vmem:[%s1 + $0x10] sm:$0xff]
    %v25 = vld [vmem:[%s1 + $0x18] sm:$0xff]
    %v26 = vld [vmem:[%s1 + $0x20] sm:$0xff]
    %v27 = vld [vmem:[%s1 + $0x28] sm:$0xff]
    %v28 = vld [vmem:[%s1 + $0x30] sm:$0xff]
    %v29 = vld [vmem:[%s1 + $0x38] sm:$0xff]
    %v30 = vld [vmem:[%s2] sm:$0x1]
    %v32 = vlaneseq
    %v33 = vshrl.u32 %v32, 7
    %v34 = vsub.s32 0, %v33
    %v35 = vrot.slane %v30, %v34
    %vm37 = vcmask 523264
    %v39 = vsel %vm37, %v21, 0
    %41 = vmatprep.subr.mxu0 0.0
    %42 = vmatpush1.msra.mxu0 0.0
    %43 = vmatprep.subr.mxu0 0.0
    %44 = vmatpush1.msra.mxu0 0.0
    %45 = vmatprep.subr.mxu0 0.0
    %46 = vmatpush1.msra.mxu0 0.0
    %47 = vmatprep.subr.mxu0 0.0
    %48 = vmatpush1.msra.mxu0 0.0
    %49 = vmatprep.subr.mxu0 0.0
    %50 = vmatpush1.msra.mxu0 0.0
    %51 = vmatprep.subr.mxu0 0.0
    %52 = vmatpush1.msra.mxu0 0.0
    %53 = vmatprep.subr.mxu0 0.0
    %54 = vmatpush1.msra.mxu0 0.0
    %55 = vmatprep.subr.mxu0 0.0
    %56 = vmatpush1.msra.mxu0 0.0
    %57 = vmatprep.subr.mxu0 0.0
    %58 = vmatpush1.msra.mxu0 %v29
    %59 = vmatprep.subr.mxu0 0.0
    %60 = vmatpush1.msra.mxu0 %v28
    %61 = vmatprep.subr.mxu0 0.0
    %62 = vmatpush1.msra.mxu0 %v27
    %63 = vmatprep.subr.mxu0 0.0
    %64 = vmatpush1.msra.mxu0 %v26
    %65 = vmatprep.subr.mxu0 0.0
    %66 = vmatpush1.msra.mxu0 %v25
    %67 = vmatprep.subr.mxu0 0.0
    %68 = vmatpush1.msra.mxu0 %v24
    %69 = vmatprep.subr.mxu0 0.0
    %70 = vmatpush1.msra.mxu0 %v23
    %71 = vmatprep.subr.mxu0 0.0
    %72 = vmatpush1.msra.mxu0 %v22
    %73 = vmatprep.subr.mxu0 0.0
    %74 = vmatpush2.msra.mxu0 0.0
    %75 = vmatprep.subr.mxu0 0.0
    %76 = vmatpush2.msra.mxu0 0.0
    %77 = vmatprep.subr.mxu0 0.0
    %78 = vmatpush2.msra.mxu0 0.0
    %79 = vmatprep.subr.mxu0 0.0
    %80 = vmatpush2.msra.mxu0 0.0
    %81 = vmatprep.subr.mxu0 0.0
    %82 = vmatpush2.msra.mxu0 0.0
    %83 = vmatprep.subr.mxu0 0.0
    %84 = vmatpush2.msra.mxu0 0.0
    %85 = vmatprep.subr.mxu0 0.0
    %86 = vmatpush2.msra.mxu0 0.0
    %87 = vmatprep.subr.mxu0 0.0
    %88 = vmatpush2.msra.mxu0 0.0
    %89 = vmatprep.subr.mxu0 0.0
    %90 = vmatpush2.msra.mxu0 0.0
    %91 = vmatprep.subr.mxu0 0.0
    %92 = vmatpush2.msra.mxu0 0.0
    %93 = vmatprep.subr.mxu0 0.0
    %94 = vmatpush2.msra.mxu0 0.0
    %95 = vmatprep.subr.mxu0 0.0
    %96 = vmatpush2.msra.mxu0 0.0
    %97 = vmatprep.subr.mxu0 0.0
    %98 = vmatpush2.msra.mxu0 0.0
    %99 = vmatprep.subr.mxu0 0.0
    %100 = vmatpush2.msra.mxu0 0.0
    %101 = vmatprep.subr.mxu0 0.0
    %102 = vmatpush2.msra.mxu0 0.0
    %103 = vmatprep.subr.mxu0 0.0
    %104 = vmatpush2.msra.mxu0 0.0
    %105 = vmatprep.mubr.f32.mxu0 0.0
    %106 = vmatmul.mubr.f32.gmra.mxu0 %v39
    %v107 = vpop.f32.mrf.mxu0
    %v108 = vadd.f32 %v35, %v107
    %v109 = vpop.f32.mrf.mxu0
    %110 = vdwg.mxu0
    %v111 = vld [vmem:[%s3] sm:$0xff]
    %v112 = vld [vmem:[%s3 + $0x8] sm:$0xff]
    %v113 = vld [vmem:[%s3 + $0x10] sm:$0xff]
    %v114 = vld [vmem:[%s3 + $0x18] sm:$0xff]
    %v115 = vld [vmem:[%s3 + $0x20] sm:$0xff]
    %v116 = vld [vmem:[%s3 + $0x28] sm:$0xff]
    %v117 = vld [vmem:[%s3 + $0x30] sm:$0xff]
    %v118 = vld [vmem:[%s3 + $0x38] sm:$0xff]
    %v119 = vld [vmem:[%s4] sm:$0x1]
    %v121 = vlaneseq
    %v122 = vshrl.u32 %v121, 7
    %v123 = vsub.s32 0, %v122
    %v124 = vrot.slane %v119, %v123
    %v127 = vsel %vm37, %v108, 0
    %129 = vmatprep.subr.mxu0 0.0
    %130 = vmatpush1.msra.mxu0 0.0
    %131 = vmatprep.subr.mxu0 0.0
    %132 = vmatpush1.msra.mxu0 0.0
    %133 = vmatprep.subr.mxu0 0.0
    %134 = vmatpush1.msra.mxu0 0.0
    %135 = vmatprep.subr.mxu0 0.0
    %136 = vmatpush1.msra.mxu0 0.0
    %137 = vmatprep.subr.mxu0 0.0
    %138 = vmatpush1.msra.mxu0 0.0
    %139 = vmatprep.subr.mxu0 0.0
    %140 = vmatpush1.msra.mxu0 0.0
    %141 = vmatprep.subr.mxu0 0.0
    %142 = vmatpush1.msra.mxu0 0.0
    %143 = vmatprep.subr.mxu0 0.0
    %144 = vmatpush1.msra.mxu0 0.0
    %145 = vmatprep.subr.mxu0 0.0
    %146 = vmatpush1.msra.mxu0 %v118
    %147 = vmatprep.subr.mxu0 0.0
    %148 = vmatpush1.msra.mxu0 %v117
    %149 = vmatprep.subr.mxu0 0.0
    %150 = vmatpush1.msra.mxu0 %v116
    %151 = vmatprep.subr.mxu0 0.0
    %152 = vmatpush1.msra.mxu0 %v115
    %153 = vmatprep.subr.mxu0 0.0
    %154 = vmatpush1.msra.mxu0 %v114
    %155 = vmatprep.subr.mxu0 0.0
    %156 = vmatpush1.msra.mxu0 %v113
    %157 = vmatprep.subr.mxu0 0.0
    %158 = vmatpush1.msra.mxu0 %v112
    %159 = vmatprep.subr.mxu0 0.0
    %160 = vmatpush1.msra.mxu0 %v111
    %161 = vmatprep.subr.mxu0 0.0
    %162 = vmatpush2.msra.mxu0 0.0
    %163 = vmatprep.subr.mxu0 0.0
    %164 = vmatpush2.msra.mxu0 0.0
    %165 = vmatprep.subr.mxu0 0.0
    %166 = vmatpush2.msra.mxu0 0.0
    %167 = vmatprep.subr.mxu0 0.0
    %168 = vmatpush2.msra.mxu0 0.0
    %169 = vmatprep.subr.mxu0 0.0
    %170 = vmatpush2.msra.mxu0 0.0
    %171 = vmatprep.subr.mxu0 0.0
    %172 = vmatpush2.msra.mxu0 0.0
    %173 = vmatprep.subr.mxu0 0.0
    %174 = vmatpush2.msra.mxu0 0.0
    %175 = vmatprep.subr.mxu0 0.0
    %176 = vmatpush2.msra.mxu0 0.0
    %177 = vmatprep.subr.mxu0 0.0
    %178 = vmatpush2.msra.mxu0 0.0
    %179 = vmatprep.subr.mxu0 0.0
    %180 = vmatpush2.msra.mxu0 0.0
    %181 = vmatprep.subr.mxu0 0.0
    %182 = vmatpush2.msra.mxu0 0.0
    %183 = vmatprep.subr.mxu0 0.0
    %184 = vmatpush2.msra.mxu0 0.0
    %185 = vmatprep.subr.mxu0 0.0
    %186 = vmatpush2.msra.mxu0 0.0
    %187 = vmatprep.subr.mxu0 0.0
    %188 = vmatpush2.msra.mxu0 0.0
    %189 = vmatprep.subr.mxu0 0.0
    %190 = vmatpush2.msra.mxu0 0.0
    %191 = vmatprep.subr.mxu0 0.0
    %192 = vmatpush2.msra.mxu0 0.0
    %193 = vmatprep.mubr.f32.mxu0 0.0
    %194 = vmatmul.mubr.f32.gmra.mxu0 %v127
    %v195 = vpop.f32.mrf.mxu0
    %v196 = vadd.f32 %v124, %v195
    %v197 = vpop.f32.mrf.mxu0
    %198 = vdwg.mxu0
    %vm199 = vcmask 517120
    %200 = vst.msk [vmem:[#allocation2] sm:$0x3] %vm199, %v196
    // Predicated region
    $region22: #{visual_perception_forward.11} parent=1 // pred_check
      _
    $region23: #{visual_perception_forward.11} parent=1 // pred_check_branch
      %202 = sbr.rel (0) target = $region25
    $region24: #{visual_perception_forward.11} parent=1 // pred_region
      %s204 = ssub.s32 32, 32
      %205 = vsyncadd [#allocation3], %s204
      %s207 = sshll.u32 [#allocation2], 4
      %s208 = int_to_ptr.vmem [resolvable:$true] %s207
      %210 = dma.vmem_to_hbm [thread:$0]  %s208, 32, %s5, [#allocation3]
    $region25: #{visual_perception_forward.11} parent=1 // pred_fallthru
      _
    // Predicated region
    $region26: #{visual_perception_forward.11} parent=1 // pred_check
      _
    $region27: #{visual_perception_forward.11} parent=1 // pred_check_branch
      %212 = sbr.rel (0) target = $region29
    $region28: #{visual_perception_forward.11} parent=1 // pred_region
      %213 = dma.done [#allocation3], 32
    $region29: #{visual_perception_forward.11} parent=1 // pred_fallthru
      _
    %214 = vsyncpa [#allocation3], 1

</llo_original>
